<compile_context>
chip_gen: v7x
topology: tpu7x:2x2x1
jax: 0.10.0
libtpu: 0.0.40
codegen_flags: <defaults>
</compile_context>

<pallas_src>
import jax
import jax.numpy as jnp
from jax.experimental import pallas as pl
from jax.experimental.pallas import tpu as pltpu

# ---- small, module-consistent config ---------------------------------------
HIDDEN = 32        # config['hidden_size'] == embedding_dim
NUM_LAYERS = 2     # config['no_layers']
VOCAB = 50         # input_size
OUTPUT = 50        # output_size
BATCH = 2
SEQ = 8
DROPOUT_P = 0.1    # unused at inference

LANES = 128                       # gate width 4H and padded fc width
assert 4 * HIDDEN == LANES
OUT_PAD = LANES                   # lane-dense padded output width inside the kernel
V_PAD = 64                        # vocab rows padded to a sublane-aligned count

# ---- packed weight slab row layout (every row is exactly LANES wide) --------
SLAB_EMB = 0                                           # (V_PAD, 4H)  emb @ Wih0.T + b0
SLAB_WIH = V_PAD                                       # (H, 4H) per layer l>=1
SLAB_WFC = SLAB_WIH + (NUM_LAYERS - 1) * HIDDEN        # (H, OUT_PAD)
SLAB_BIAS = ((SLAB_WFC + HIDDEN + 7) // 8) * 8         # 8-row block per layer l>=1 bias
SLAB_BFC = SLAB_BIAS + 8 * (NUM_LAYERS - 1)            # 8-row block for fc bias
SLAB_ROWS = SLAB_BFC + 8


# ---- Pallas kernel -----------------------------------------------------------
def songrnn_kernel(tok_ref, slab_ref, whh_blk_ref, st0_ref,
                   out_ref, stn_ref, top_scr):
    # tok_ref    : (T*B, 1) int32   time-major tokens
    # slab_ref   : (SLAB_ROWS, 128) packed [emb_proj0 | W_ih[1:].T | W_fc.T | biases]
    # whh_blk_ref: (L*H, L*4H)      block-diagonal recurrent weights (pre-transposed)
    # st0_ref    : (2, L, B, H)     packed (h0, c0)
    # out_ref    : (B*T, OUT_PAD)   batch-first flattened, lane-dense logits
    # stn_ref    : (2, L, B, H)     packed (h_n, c_n)
    # top_scr    : (B*T, H)         VMEM scratch for the top-layer h per (b, t)
    H, L = HIDDEN, NUM_LAYERS
    G = 4 * H
    TB = tok_ref.shape[0]
    B = st0_ref.shape[2]
    T = TB // B
    HIGH = jax.lax.Precision.HIGHEST

    def cell(gates, c_prev):
        # Two full-tile EUP pushes (sigmoid + tanh) over the whole (B, 4H) gates,
        # then cheap lane slices for i/f/g/o (PyTorch gate order).
        sig = jax.nn.sigmoid(gates)
        tnh = jnp.tanh(gates)
        i_g = sig[:, 0 * H:1 * H]
        f_g = sig[:, 1 * H:2 * H]
        g_g = tnh[:, 2 * H:3 * H]
        o_g = sig[:, 3 * H:4 * H]
        c_new = f_g * c_prev + i_g * g_g
        h_new = o_g * jnp.tanh(c_new)
        return h_new, c_new

    # ---- Layer-0 gate pre-activations for ALL (t, b) in one off-path MXU push:
    # one-hot(tok) @ emb_proj0  (embedding lookup fused with the layer-0 input
    # projection and both layer-0 biases; never touches the recurrence chain).
    tok = tok_ref[...]                                             # (TB, 1) int32
    col = jax.lax.broadcasted_iota(jnp.int32, (TB, V_PAD), 1)
    onehot = (col == tok).astype(jnp.float32)                      # (TB, V_PAD)
    g0_all = jnp.dot(onehot, slab_ref[SLAB_EMB:SLAB_EMB + V_PAD, :],
                     precision=HIGH,
                     preferred_element_type=jnp.float32)           # (TB, 4H)

    # Recurrent state lives in registers for the whole kernel.
    hs = [st0_ref[0, l] for l in range(L)]
    cs = [st0_ref[1, l] for l in range(L)]

    # Statically unrolled time loop (T small, known at trace time).
    for t in range(T):
        # Fused block-diagonal recurrent matmul: depends only on t-1 state, so it
        # issues at the top of the step as a single 256-lane MXU push.
        hcat = jnp.concatenate(hs, axis=1)                         # (B, L*H)
        hmat = jnp.dot(hcat, whh_blk_ref[...], precision=HIGH,
                       preferred_element_type=jnp.float32)         # (B, L*4H)

        # Layer 0: x-projection and biases were folded into g0_all.
        gates = g0_all[t * B:(t + 1) * B, :] + hmat[:, 0:G]
        hs[0], cs[0] = cell(gates, cs[0])
        x = hs[0]

        for l in range(1, L):
            wih_l = slab_ref[SLAB_WIH + (l - 1) * H:SLAB_WIH + l * H, :]
            b_l = slab_ref[SLAB_BIAS + 8 * (l - 1):SLAB_BIAS + 8 * (l - 1) + 1, :]
            # Bias folds into the t-1-dependent half, off the x-matmul path.
            hpart = hmat[:, l * G:(l + 1) * G] + b_l
            gates = hpart + jnp.dot(x, wih_l, precision=HIGH,
                                    preferred_element_type=jnp.float32)
            hs[l], cs[l] = cell(gates, cs[l])
            x = hs[l]

        # Stash top-layer output batch-first (row = b*T + t); stores are off the
        # critical path and vst slots are idle.
        for b in range(B):
            r = b * T + t
            top_scr[r:r + 1, :] = x[b:b + 1, :]

    # Single batched output Linear over all timesteps; lane-dense (128-wide)
    # unmasked store, already batch-first so no wrapper transpose is needed.
    wfc = slab_ref[SLAB_WFC:SLAB_WFC + H, :]                       # (H, OUT_PAD)
    bfc = slab_ref[SLAB_BFC:SLAB_BFC + 1, :]                       # (1, OUT_PAD)
    logits = jnp.dot(top_scr[...], wfc, precision=HIGH,
                     preferred_element_type=jnp.float32) + bfc
    out_ref[...] = logits.astype(out_ref.dtype)

    for l in range(L):
        stn_ref[0, l] = hs[l]
        stn_ref[1, l] = cs[l]


# ---- wrapper -----------------------------------------------------------------
def songrnn_forward(seq_tokens, params, h0, c0):
    """seq_tokens: (B, T) int32. Returns (output (B, T, O), (h_n, c_n))."""
    B, T = seq_tokens.shape
    L, _, H = h0.shape
    O = params['out_dim']

    tok_tm = jnp.transpose(seq_tokens).reshape(T * B, 1)           # time-major tokens
    state0 = jnp.stack([h0, c0])                                   # (2, L, B, H)

    vmem = pltpu.MemorySpace.VMEM
    out_flat, state_n = pl.pallas_call(
        songrnn_kernel,
        out_shape=(
            jax.ShapeDtypeStruct((B * T, OUT_PAD), jnp.float32),
            jax.ShapeDtypeStruct((2, L, B, H), jnp.float32),
        ),
        in_specs=[pl.BlockSpec(memory_space=vmem)] * 4,
        out_specs=(pl.BlockSpec(memory_space=vmem),) * 2,
        scratch_shapes=[pltpu.VMEM((B * T, H), jnp.float32)],
    )(tok_tm, params['slab'], params['w_hh_blk'], state0)

    # Batch-first already; just split leading dim (free) and drop the lane padding.
    output = out_flat.reshape(B, T, OUT_PAD)[:, :, :O]
    return output, (state_n[0], state_n[1])


# ---- pure-JAX reference (mirrors torch.nn.LSTM + Linear) ---------------------
def reference_forward(seq_tokens, raw, h0, c0):
    emb = raw['embedding'][seq_tokens]            # (B, T, H)
    B, T, H = emb.shape
    L = h0.shape[0]
    h = [h0[l] for l in range(L)]
    c = [c0[l] for l in range(L)]
    outs = []
    for t in range(T):
        x = emb[:, t, :]
        for l in range(L):
            gates = (x @ raw['w_ih'][l].T + raw['b_ih'][l]
                     + h[l] @ raw['w_hh'][l].T + raw['b_hh'][l])
            i_g, f_g, g_g, o_g = jnp.split(gates, 4, axis=-1)
            i_g = jax.nn.sigmoid(i_g)
            f_g = jax.nn.sigmoid(f_g)
            g_g = jnp.tanh(g_g)
            o_g = jax.nn.sigmoid(o_g)
            c[l] = f_g * c[l] + i_g * g_g
            h[l] = o_g * jnp.tanh(c[l])
            x = h[l]
        outs.append(x @ raw['w_fc'].T + raw['b_fc'])
    out = jnp.stack(outs, axis=1)
    return out, jnp.stack(h), jnp.stack(c)


# ---- deterministic parameter init --------------------------------------------
def init_params(key):
    H, L, V, O = HIDDEN, NUM_LAYERS, VOCAB, OUTPUT
    ks = jax.random.split(key, 7)
    scale = 1.0 / (H ** 0.5)
    raw = {
        'embedding': jax.random.normal(ks[0], (V, H), jnp.float32),
        'w_ih': jax.random.uniform(ks[1], (L, 4 * H, H), jnp.float32, -scale, scale),
        'w_hh': jax.random.uniform(ks[2], (L, 4 * H, H), jnp.float32, -scale, scale),
        'b_ih': jax.random.uniform(ks[3], (L, 4 * H), jnp.float32, -scale, scale),
        'b_hh': jax.random.uniform(ks[4], (L, 4 * H), jnp.float32, -scale, scale),
        'w_fc': jax.random.uniform(ks[5], (O, H), jnp.float32, -scale, scale),
        'b_fc': jax.random.uniform(ks[6], (O,), jnp.float32, -scale, scale),
    }

    # Embedding rows pre-projected through layer-0 input weights with both layer-0
    # biases folded in; the kernel's one-hot matmul replaces the embedding lookup
    # AND the per-timestep layer-0 x-matmul.
    emb_proj0 = (raw['embedding'] @ raw['w_ih'][0].T
                 + raw['b_ih'][0] + raw['b_hh'][0])                 # (V, 4H)

    # One packed (SLAB_ROWS, 128) slab for all 128-lane weights/biases.
    slab = jnp.zeros((SLAB_ROWS, LANES), jnp.float32)
    slab = slab.at[SLAB_EMB:SLAB_EMB + V, :4 * H].set(emb_proj0)
    for l in range(1, L):
        slab = slab.at[SLAB_WIH + (l - 1) * H:SLAB_WIH + l * H, :4 * H].set(
            raw['w_ih'][l].T)
    slab = slab.at[SLAB_WFC:SLAB_WFC + H, :O].set(raw['w_fc'].T)
    for l in range(1, L):
        slab = slab.at[SLAB_BIAS + 8 * (l - 1), :4 * H].set(
            raw['b_ih'][l] + raw['b_hh'][l])
    slab = slab.at[SLAB_BFC, :O].set(raw['b_fc'])

    # Block-diagonal recurrent weight: one (L*H, L*4H) MXU push covers every
    # layer's h-matmul for a timestep.
    w_hh_blk = jnp.zeros((L * H, L * 4 * H), jnp.float32)
    for l in range(L):
        w_hh_blk = w_hh_blk.at[l * H:(l + 1) * H,
                               l * 4 * H:(l + 1) * 4 * H].set(raw['w_hh'][l].T)

    kernel_params = {
        'slab': slab,            # (144, 128)
        'w_hh_blk': w_hh_blk,    # (64, 256)
        'out_dim': O,
    }
    return raw, kernel_params


if __name__ == "__main__":
    key = jax.random.PRNGKey(0)
    pkey, skey = jax.random.split(key)
    raw, params = init_params(pkey)

    seq_tokens = jax.random.randint(skey, (BATCH, SEQ), 0, VOCAB, dtype=jnp.int32)

    # init_hidden: zeros for both hidden and cell state (LSTM)
    h0 = jnp.zeros((NUM_LAYERS, BATCH, HIDDEN), jnp.float32)
    c0 = jnp.zeros((NUM_LAYERS, BATCH, HIDDEN), jnp.float32)

    output, (hn, cn) = songrnn_forward(seq_tokens, params, h0, c0)
    output = jax.block_until_ready(output)
    hn = jax.block_until_ready(hn)
    cn = jax.block_until_ready(cn)

    ref_out, ref_hn, ref_cn = reference_forward(seq_tokens, raw, h0, c0)

    assert output.shape == (BATCH, SEQ, OUTPUT)
    assert hn.shape == (NUM_LAYERS, BATCH, HIDDEN)
    assert cn.shape == (NUM_LAYERS, BATCH, HIDDEN)
    assert jnp.allclose(output, ref_out, atol=1e-4, rtol=1e-4)
    assert jnp.allclose(hn, ref_hn, atol=1e-4, rtol=1e-4)
    assert jnp.allclose(cn, ref_cn, atol=1e-4, rtol=1e-4)

    print("KERNEL_OK")
</pallas_src>

<mosaic_0001>
module attributes {stable_mosaic.version = 11 : i64} {
  func.func @songrnn_kernel(%arg0: memref<16x1xi32, #tpu.memory_space<vmem>>, %arg1: memref<144x128xf32, #tpu.memory_space<vmem>>, %arg2: memref<64x256xf32, #tpu.memory_space<vmem>>, %arg3: memref<2x2x2x32xf32, #tpu.memory_space<vmem>>, %arg4: memref<16x128xf32, #tpu.memory_space<vmem>>, %arg5: memref<2x2x2x32xf32, #tpu.memory_space<vmem>>, %arg6: memref<16x32xf32, #tpu.memory_space<vmem>>) attributes {dimension_semantics = [], scalar_prefetch = 0 : i64, scratch_operands = 1 : i64, tpu.core_type = #tpu.core_type<tc>} {
    %c0 = arith.constant 0 : index
    %c0_0 = arith.constant 0 : index
    %0 = vector.load %arg0[%c0, %c0_0] : memref<16x1xi32, #tpu.memory_space<vmem>>, vector<16x1xi32>
    %1 = tpu.iota {dimensions = array<i32: 1>} : vector<16x64xi32>
    %2 = vector.broadcast %0 : vector<16x1xi32> to vector<16x64xi32>
    %3 = arith.cmpi eq, %1, %2 : vector<16x64xi32>
    %4 = arith.extui %3 : vector<16x64xi1> to vector<16x64xi32>
    %5 = arith.sitofp %4 : vector<16x64xi32> to vector<16x64xf32>
    %c0_1 = arith.constant 0 : index
    %c0_2 = arith.constant 0 : index
    %6 = vector.load %arg1[%c0_1, %c0_2] : memref<144x128xf32, #tpu.memory_space<vmem>>, vector<64x128xf32>
    %cst = arith.constant dense<0.000000e+00> : vector<16x128xf32>
    %7 = tpu.matmul %5, %6, %cst {dimension_numbers = #tpu.dot_dimension_numbers<[1], [0], [0], [1], [0, 0, 1, 1], [], []>, precision = #tpu.contract_precision<fp32>} : vector<16x64xf32>, vector<64x128xf32>, vector<16x128xf32> -> vector<16x128xf32>
    %c0_3 = arith.constant 0 : index
    %c0_4 = arith.constant 0 : index
    %c0_5 = arith.constant 0 : index
    %c0_6 = arith.constant 0 : index
    %8 = vector.load %arg3[%c0_3, %c0_4, %c0_5, %c0_6] : memref<2x2x2x32xf32, #tpu.memory_space<vmem>>, vector<1x1x2x32xf32>
    %9 = vector.shape_cast %8 : vector<1x1x2x32xf32> to vector<2x32xf32>
    %c0_7 = arith.constant 0 : index
    %c1 = arith.constant 1 : index
    %c0_8 = arith.constant 0 : index
    %c0_9 = arith.constant 0 : index
    %10 = vector.load %arg3[%c0_7, %c1, %c0_8, %c0_9] : memref<2x2x2x32xf32, #tpu.memory_space<vmem>>, vector<1x1x2x32xf32>
    %11 = vector.shape_cast %10 : vector<1x1x2x32xf32> to vector<2x32xf32>
    %c1_10 = arith.constant 1 : index
    %c0_11 = arith.constant 0 : index
    %c0_12 = arith.constant 0 : index
    %c0_13 = arith.constant 0 : index
    %12 = vector.load %arg3[%c1_10, %c0_11, %c0_12, %c0_13] : memref<2x2x2x32xf32, #tpu.memory_space<vmem>>, vector<1x1x2x32xf32>
    %13 = vector.shape_cast %12 : vector<1x1x2x32xf32> to vector<2x32xf32>
    %c1_14 = arith.constant 1 : index
    %c1_15 = arith.constant 1 : index
    %c0_16 = arith.constant 0 : index
    %c0_17 = arith.constant 0 : index
    %14 = vector.load %arg3[%c1_14, %c1_15, %c0_16, %c0_17] : memref<2x2x2x32xf32, #tpu.memory_space<vmem>>, vector<1x1x2x32xf32>
    %15 = vector.shape_cast %14 : vector<1x1x2x32xf32> to vector<2x32xf32>
    %16 = tpu.concatenate %9, %11 in 1 : vector<2x32xf32>, vector<2x32xf32> -> vector<2x64xf32>
    %c0_18 = arith.constant 0 : index
    %c0_19 = arith.constant 0 : index
    %17 = vector.load %arg2[%c0_18, %c0_19] : memref<64x256xf32, #tpu.memory_space<vmem>>, vector<64x256xf32>
    %cst_20 = arith.constant dense<0.000000e+00> : vector<2x256xf32>
    %18 = tpu.matmul %16, %17, %cst_20 {dimension_numbers = #tpu.dot_dimension_numbers<[1], [0], [0], [1], [0, 0, 1, 1], [], []>, precision = #tpu.contract_precision<fp32>} : vector<2x64xf32>, vector<64x256xf32>, vector<2x256xf32> -> vector<2x256xf32>
    %19 = vector.extract_strided_slice %7 {offsets = [0, 0], sizes = [2, 128], strides = [1, 1]} : vector<16x128xf32> to vector<2x128xf32>
    %20 = vector.extract_strided_slice %18 {offsets = [0, 0], sizes = [2, 128], strides = [1, 1]} : vector<2x256xf32> to vector<2x128xf32>
    %21 = arith.addf %19, %20 : vector<2x128xf32>
    %22 = arith.negf %21 : vector<2x128xf32>
    %23 = math.exp %22 : vector<2x128xf32>
    %cst_21 = arith.constant 1.000000e+00 : f32
    %24 = vector.broadcast %cst_21 : f32 to vector<2x128xf32>
    %25 = arith.addf %24, %23 : vector<2x128xf32>
    %26 = arith.divf %24, %25 : vector<2x128xf32>
    %27 = math.tanh %21 : vector<2x128xf32>
    %28 = vector.extract_strided_slice %26 {offsets = [0, 0], sizes = [2, 32], strides = [1, 1]} : vector<2x128xf32> to vector<2x32xf32>
    %29 = vector.extract_strided_slice %26 {offsets = [0, 32], sizes = [2, 32], strides = [1, 1]} : vector<2x128xf32> to vector<2x32xf32>
    %30 = vector.extract_strided_slice %27 {offsets = [0, 64], sizes = [2, 32], strides = [1, 1]} : vector<2x128xf32> to vector<2x32xf32>
    %31 = vector.extract_strided_slice %26 {offsets = [0, 96], sizes = [2, 32], strides = [1, 1]} : vector<2x128xf32> to vector<2x32xf32>
    %32 = arith.mulf %29, %13 : vector<2x32xf32>
    %33 = arith.mulf %28, %30 : vector<2x32xf32>
    %34 = arith.addf %32, %33 : vector<2x32xf32>
    %35 = math.tanh %34 : vector<2x32xf32>
    %36 = arith.mulf %31, %35 : vector<2x32xf32>
    %c64 = arith.constant 64 : index
    %c0_22 = arith.constant 0 : index
    %37 = vector.load %arg1[%c64, %c0_22] : memref<144x128xf32, #tpu.memory_space<vmem>>, vector<32x128xf32>
    %c128 = arith.constant 128 : index
    %c0_23 = arith.constant 0 : index
    %38 = vector.load %arg1[%c128, %c0_23] : memref<144x128xf32, #tpu.memory_space<vmem>>, vector<1x128xf32>
    %39 = vector.extract_strided_slice %18 {offsets = [0, 128], sizes = [2, 128], strides = [1, 1]} : vector<2x256xf32> to vector<2x128xf32>
    %40 = vector.broadcast %38 : vector<1x128xf32> to vector<2x128xf32>
    %41 = arith.addf %39, %40 : vector<2x128xf32>
    %cst_24 = arith.constant dense<0.000000e+00> : vector<2x128xf32>
    %42 = tpu.matmul %36, %37, %cst_24 {dimension_numbers = #tpu.dot_dimension_numbers<[1], [0], [0], [1], [0, 0, 1, 1], [], []>, precision = #tpu.contract_precision<fp32>} : vector<2x32xf32>, vector<32x128xf32>, vector<2x128xf32> -> vector<2x128xf32>
    %43 = arith.addf %41, %42 : vector<2x128xf32>
    %44 = arith.negf %43 : vector<2x128xf32>
    %45 = math.exp %44 : vector<2x128xf32>
    %cst_25 = arith.constant 1.000000e+00 : f32
    %46 = vector.broadcast %cst_25 : f32 to vector<2x128xf32>
    %47 = arith.addf %46, %45 : vector<2x128xf32>
    %48 = arith.divf %46, %47 : vector<2x128xf32>
    %49 = math.tanh %43 : vector<2x128xf32>
    %50 = vector.extract_strided_slice %48 {offsets = [0, 0], sizes = [2, 32], strides = [1, 1]} : vector<2x128xf32> to vector<2x32xf32>
    %51 = vector.extract_strided_slice %48 {offsets = [0, 32], sizes = [2, 32], strides = [1, 1]} : vector<2x128xf32> to vector<2x32xf32>
    %52 = vector.extract_strided_slice %49 {offsets = [0, 64], sizes = [2, 32], strides = [1, 1]} : vector<2x128xf32> to vector<2x32xf32>
    %53 = vector.extract_strided_slice %48 {offsets = [0, 96], sizes = [2, 32], strides = [1, 1]} : vector<2x128xf32> to vector<2x32xf32>
    %54 = arith.mulf %51, %15 : vector<2x32xf32>
    %55 = arith.mulf %50, %52 : vector<2x32xf32>
    %56 = arith.addf %54, %55 : vector<2x32xf32>
    %57 = math.tanh %56 : vector<2x32xf32>
    %58 = arith.mulf %53, %57 : vector<2x32xf32>
    %59 = vector.extract_strided_slice %58 {offsets = [0, 0], sizes = [1, 32], strides = [1, 1]} : vector<2x32xf32> to vector<1x32xf32>
    %c0_26 = arith.constant 0 : index
    %c0_27 = arith.constant 0 : index
    %60 = vector.load %arg6[%c0_26, %c0_27] : memref<16x32xf32, #tpu.memory_space<vmem>>, vector<1x32xf32>
    tpu.vector_store %arg6[%c0_26, %c0_27], %59 {strides = array<i32>} : memref<16x32xf32, #tpu.memory_space<vmem>>, vector<1x32xf32>,
    %61 = vector.extract_strided_slice %58 {offsets = [1, 0], sizes = [1, 32], strides = [1, 1]} : vector<2x32xf32> to vector<1x32xf32>
    %c8 = arith.constant 8 : index
    %c0_28 = arith.constant 0 : index
    %62 = vector.load %arg6[%c8, %c0_28] : memref<16x32xf32, #tpu.memory_space<vmem>>, vector<1x32xf32>
    tpu.vector_store %arg6[%c8, %c0_28], %61 {strides = array<i32>} : memref<16x32xf32, #tpu.memory_space<vmem>>, vector<1x32xf32>,
    %63 = tpu.concatenate %36, %58 in 1 : vector<2x32xf32>, vector<2x32xf32> -> vector<2x64xf32>
    %c0_29 = arith.constant 0 : index
    %c0_30 = arith.constant 0 : index
    %64 = vector.load %arg2[%c0_29, %c0_30] : memref<64x256xf32, #tpu.memory_space<vmem>>, vector<64x256xf32>
    %cst_31 = arith.constant dense<0.000000e+00> : vector<2x256xf32>
    %65 = tpu.matmul %63, %64, %cst_31 {dimension_numbers = #tpu.dot_dimension_numbers<[1], [0], [0], [1], [0, 0, 1, 1], [], []>, precision = #tpu.contract_precision<fp32>} : vector<2x64xf32>, vector<64x256xf32>, vector<2x256xf32> -> vector<2x256xf32>
    %66 = vector.extract_strided_slice %7 {offsets = [2, 0], sizes = [2, 128], strides = [1, 1]} : vector<16x128xf32> to vector<2x128xf32>
    %67 = vector.extract_strided_slice %65 {offsets = [0, 0], sizes = [2, 128], strides = [1, 1]} : vector<2x256xf32> to vector<2x128xf32>
    %68 = arith.addf %66, %67 : vector<2x128xf32>
    %69 = arith.negf %68 : vector<2x128xf32>
    %70 = math.exp %69 : vector<2x128xf32>
    %cst_32 = arith.constant 1.000000e+00 : f32
    %71 = vector.broadcast %cst_32 : f32 to vector<2x128xf32>
    %72 = arith.addf %71, %70 : vector<2x128xf32>
    %73 = arith.divf %71, %72 : vector<2x128xf32>
    %74 = math.tanh %68 : vector<2x128xf32>
    %75 = vector.extract_strided_slice %73 {offsets = [0, 0], sizes = [2, 32], strides = [1, 1]} : vector<2x128xf32> to vector<2x32xf32>
    %76 = vector.extract_strided_slice %73 {offsets = [0, 32], sizes = [2, 32], strides = [1, 1]} : vector<2x128xf32> to vector<2x32xf32>
    %77 = vector.extract_strided_slice %74 {offsets = [0, 64], sizes = [2, 32], strides = [1, 1]} : vector<2x128xf32> to vector<2x32xf32>
    %78 = vector.extract_strided_slice %73 {offsets = [0, 96], sizes = [2, 32], strides = [1, 1]} : vector<2x128xf32> to vector<2x32xf32>
    %79 = arith.mulf %76, %34 : vector<2x32xf32>
    %80 = arith.mulf %75, %77 : vector<2x32xf32>
    %81 = arith.addf %79, %80 : vector<2x32xf32>
    %82 = math.tanh %81 : vector<2x32xf32>
    %83 = arith.mulf %78, %82 : vector<2x32xf32>
    %c64_33 = arith.constant 64 : index
    %c0_34 = arith.constant 0 : index
    %84 = vector.load %arg1[%c64_33, %c0_34] : memref<144x128xf32, #tpu.memory_space<vmem>>, vector<32x128xf32>
    %c128_35 = arith.constant 128 : index
    %c0_36 = arith.constant 0 : index
    %85 = vector.load %arg1[%c128_35, %c0_36] : memref<144x128xf32, #tpu.memory_space<vmem>>, vector<1x128xf32>
    %86 = vector.extract_strided_slice %65 {offsets = [0, 128], sizes = [2, 128], strides = [1, 1]} : vector<2x256xf32> to vector<2x128xf32>
    %87 = vector.broadcast %85 : vector<1x128xf32> to vector<2x128xf32>
    %88 = arith.addf %86, %87 : vector<2x128xf32>
    %cst_37 = arith.constant dense<0.000000e+00> : vector<2x128xf32>
    %89 = tpu.matmul %83, %84, %cst_37 {dimension_numbers = #tpu.dot_dimension_numbers<[1], [0], [0], [1], [0, 0, 1, 1], [], []>, precision = #tpu.contract_precision<fp32>} : vector<2x32xf32>, vector<32x128xf32>, vector<2x128xf32> -> vector<2x128xf32>
    %90 = arith.addf %88, %89 : vector<2x128xf32>
    %91 = arith.negf %90 : vector<2x128xf32>
    %92 = math.exp %91 : vector<2x128xf32>
    %cst_38 = arith.constant 1.000000e+00 : f32
    %93 = vector.broadcast %cst_38 : f32 to vector<2x128xf32>
    %94 = arith.addf %93, %92 : vector<2x128xf32>
    %95 = arith.divf %93, %94 : vector<2x128xf32>
    %96 = math.tanh %90 : vector<2x128xf32>
    %97 = vector.extract_strided_slice %95 {offsets = [0, 0], sizes = [2, 32], strides = [1, 1]} : vector<2x128xf32> to vector<2x32xf32>
    %98 = vector.extract_strided_slice %95 {offsets = [0, 32], sizes = [2, 32], strides = [1, 1]} : vector<2x128xf32> to vector<2x32xf32>
    %99 = vector.extract_strided_slice %96 {offsets = [0, 64], sizes = [2, 32], strides = [1, 1]} : vector<2x128xf32> to vector<2x32xf32>
    %100 = vector.extract_strided_slice %95 {offsets = [0, 96], sizes = [2, 32], strides = [1, 1]} : vector<2x128xf32> to vector<2x32xf32>
    %101 = arith.mulf %98, %56 : vector<2x32xf32>
    %102 = arith.mulf %97, %99 : vector<2x32xf32>
    %103 = arith.addf %101, %102 : vector<2x32xf32>
    %104 = math.tanh %103 : vector<2x32xf32>
    %105 = arith.mulf %100, %104 : vector<2x32xf32>
    %106 = vector.extract_strided_slice %105 {offsets = [0, 0], sizes = [1, 32], strides = [1, 1]} : vector<2x32xf32> to vector<1x32xf32>
    %c1_39 = arith.constant 1 : index
    %c0_40 = arith.constant 0 : index
    %107 = vector.load %arg6[%c1_39, %c0_40] : memref<16x32xf32, #tpu.memory_space<vmem>>, vector<1x32xf32>
    tpu.vector_store %arg6[%c1_39, %c0_40], %106 {strides = array<i32>} : memref<16x32xf32, #tpu.memory_space<vmem>>, vector<1x32xf32>,
    %108 = vector.extract_strided_slice %105 {offsets = [1, 0], sizes = [1, 32], strides = [1, 1]} : vector<2x32xf32> to vector<1x32xf32>
    %c9 = arith.constant 9 : index
    %c0_41 = arith.constant 0 : index
    %109 = vector.load %arg6[%c9, %c0_41] : memref<16x32xf32, #tpu.memory_space<vmem>>, vector<1x32xf32>
    tpu.vector_store %arg6[%c9, %c0_41], %108 {strides = array<i32>} : memref<16x32xf32, #tpu.memory_space<vmem>>, vector<1x32xf32>,
    %110 = tpu.concatenate %83, %105 in 1 : vector<2x32xf32>, vector<2x32xf32> -> vector<2x64xf32>
    %c0_42 = arith.constant 0 : index
    %c0_43 = arith.constant 0 : index
    %111 = vector.load %arg2[%c0_42, %c0_43] : memref<64x256xf32, #tpu.memory_space<vmem>>, vector<64x256xf32>
    %cst_44 = arith.constant dense<0.000000e+00> : vector<2x256xf32>
    %112 = tpu.matmul %110, %111, %cst_44 {dimension_numbers = #tpu.dot_dimension_numbers<[1], [0], [0], [1], [0, 0, 1, 1], [], []>, precision = #tpu.contract_precision<fp32>} : vector<2x64xf32>, vector<64x256xf32>, vector<2x256xf32> -> vector<2x256xf32>
    %113 = vector.extract_strided_slice %7 {offsets = [4, 0], sizes = [2, 128], strides = [1, 1]} : vector<16x128xf32> to vector<2x128xf32>
    %114 = vector.extract_strided_slice %112 {offsets = [0, 0], sizes = [2, 128], strides = [1, 1]} : vector<2x256xf32> to vector<2x128xf32>
    %115 = arith.addf %113, %114 : vector<2x128xf32>
    %116 = arith.negf %115 : vector<2x128xf32>
    %117 = math.exp %116 : vector<2x128xf32>
    %cst_45 = arith.constant 1.000000e+00 : f32
    %118 = vector.broadcast %cst_45 : f32 to vector<2x128xf32>
    %119 = arith.addf %118, %117 : vector<2x128xf32>
    %120 = arith.divf %118, %119 : vector<2x128xf32>
    %121 = math.tanh %115 : vector<2x128xf32>
    %122 = vector.extract_strided_slice %120 {offsets = [0, 0], sizes = [2, 32], strides = [1, 1]} : vector<2x128xf32> to vector<2x32xf32>
    %123 = vector.extract_strided_slice %120 {offsets = [0, 32], sizes = [2, 32], strides = [1, 1]} : vector<2x128xf32> to vector<2x32xf32>
    %124 = vector.extract_strided_slice %121 {offsets = [0, 64], sizes = [2, 32], strides = [1, 1]} : vector<2x128xf32> to vector<2x32xf32>
    %125 = vector.extract_strided_slice %120 {offsets = [0, 96], sizes = [2, 32], strides = [1, 1]} : vector<2x128xf32> to vector<2x32xf32>
    %126 = arith.mulf %123, %81 : vector<2x32xf32>
    %127 = arith.mulf %122, %124 : vector<2x32xf32>
    %128 = arith.addf %126, %127 : vector<2x32xf32>
    %129 = math.tanh %128 : vector<2x32xf32>
    %130 = arith.mulf %125, %129 : vector<2x32xf32>
    %c64_46 = arith.constant 64 : index
    %c0_47 = arith.constant 0 : index
    %131 = vector.load %arg1[%c64_46, %c0_47] : memref<144x128xf32, #tpu.memory_space<vmem>>, vector<32x128xf32>
    %c128_48 = arith.constant 128 : index
    %c0_49 = arith.constant 0 : index
    %132 = vector.load %arg1[%c128_48, %c0_49] : memref<144x128xf32, #tpu.memory_space<vmem>>, vector<1x128xf32>
    %133 = vector.extract_strided_slice %112 {offsets = [0, 128], sizes = [2, 128], strides = [1, 1]} : vector<2x256xf32> to vector<2x128xf32>
    %134 = vector.broadcast %132 : vector<1x128xf32> to vector<2x128xf32>
    %135 = arith.addf %133, %134 : vector<2x128xf32>
    %cst_50 = arith.constant dense<0.000000e+00> : vector<2x128xf32>
    %136 = tpu.matmul %130, %131, %cst_50 {dimension_numbers = #tpu.dot_dimension_numbers<[1], [0], [0], [1], [0, 0, 1, 1], [], []>, precision = #tpu.contract_precision<fp32>} : vector<2x32xf32>, vector<32x128xf32>, vector<2x128xf32> -> vector<2x128xf32>
    %137 = arith.addf %135, %136 : vector<2x128xf32>
    %138 = arith.negf %137 : vector<2x128xf32>
    %139 = math.exp %138 : vector<2x128xf32>
    %cst_51 = arith.constant 1.000000e+00 : f32
    %140 = vector.broadcast %cst_51 : f32 to vector<2x128xf32>
    %141 = arith.addf %140, %139 : vector<2x128xf32>
    %142 = arith.divf %140, %141 : vector<2x128xf32>
    %143 = math.tanh %137 : vector<2x128xf32>
    %144 = vector.extract_strided_slice %142 {offsets = [0, 0], sizes = [2, 32], strides = [1, 1]} : vector<2x128xf32> to vector<2x32xf32>
    %145 = vector.extract_strided_slice %142 {offsets = [0, 32], sizes = [2, 32], strides = [1, 1]} : vector<2x128xf32> to vector<2x32xf32>
    %146 = vector.extract_strided_slice %143 {offsets = [0, 64], sizes = [2, 32], strides = [1, 1]} : vector<2x128xf32> to vector<2x32xf32>
    %147 = vector.extract_strided_slice %142 {offsets = [0, 96], sizes = [2, 32], strides = [1, 1]} : vector<2x128xf32> to vector<2x32xf32>
    %148 = arith.mulf %145, %103 : vector<2x32xf32>
    %149 = arith.mulf %144, %146 : vector<2x32xf32>
    %150 = arith.addf %148, %149 : vector<2x32xf32>
    %151 = math.tanh %150 : vector<2x32xf32>
    %152 = arith.mulf %147, %151 : vector<2x32xf32>
    %153 = vector.extract_strided_slice %152 {offsets = [0, 0], sizes = [1, 32], strides = [1, 1]} : vector<2x32xf32> to vector<1x32xf32>
    %c2 = arith.constant 2 : index
    %c0_52 = arith.constant 0 : index
    %154 = vector.load %arg6[%c2, %c0_52] : memref<16x32xf32, #tpu.memory_space<vmem>>, vector<1x32xf32>
    tpu.vector_store %arg6[%c2, %c0_52], %153 {strides = array<i32>} : memref<16x32xf32, #tpu.memory_space<vmem>>, vector<1x32xf32>,
    %155 = vector.extract_strided_slice %152 {offsets = [1, 0], sizes = [1, 32], strides = [1, 1]} : vector<2x32xf32> to vector<1x32xf32>
    %c10 = arith.constant 10 : index
    %c0_53 = arith.constant 0 : index
    %156 = vector.load %arg6[%c10, %c0_53] : memref<16x32xf32, #tpu.memory_space<vmem>>, vector<1x32xf32>
    tpu.vector_store %arg6[%c10, %c0_53], %155 {strides = array<i32>} : memref<16x32xf32, #tpu.memory_space<vmem>>, vector<1x32xf32>,
    %157 = tpu.concatenate %130, %152 in 1 : vector<2x32xf32>, vector<2x32xf32> -> vector<2x64xf32>
    %c0_54 = arith.constant 0 : index
    %c0_55 = arith.constant 0 : index
    %158 = vector.load %arg2[%c0_54, %c0_55] : memref<64x256xf32, #tpu.memory_space<vmem>>, vector<64x256xf32>
    %cst_56 = arith.constant dense<0.000000e+00> : vector<2x256xf32>
    %159 = tpu.matmul %157, %158, %cst_56 {dimension_numbers = #tpu.dot_dimension_numbers<[1], [0], [0], [1], [0, 0, 1, 1], [], []>, precision = #tpu.contract_precision<fp32>} : vector<2x64xf32>, vector<64x256xf32>, vector<2x256xf32> -> vector<2x256xf32>
    %160 = vector.extract_strided_slice %7 {offsets = [6, 0], sizes = [2, 128], strides = [1, 1]} : vector<16x128xf32> to vector<2x128xf32>
    %161 = vector.extract_strided_slice %159 {offsets = [0, 0], sizes = [2, 128], strides = [1, 1]} : vector<2x256xf32> to vector<2x128xf32>
    %162 = arith.addf %160, %161 : vector<2x128xf32>
    %163 = arith.negf %162 : vector<2x128xf32>
    %164 = math.exp %163 : vector<2x128xf32>
    %cst_57 = arith.constant 1.000000e+00 : f32
    %165 = vector.broadcast %cst_57 : f32 to vector<2x128xf32>
    %166 = arith.addf %165, %164 : vector<2x128xf32>
    %167 = arith.divf %165, %166 : vector<2x128xf32>
    %168 = math.tanh %162 : vector<2x128xf32>
    %169 = vector.extract_strided_slice %167 {offsets = [0, 0], sizes = [2, 32], strides = [1, 1]} : vector<2x128xf32> to vector<2x32xf32>
    %170 = vector.extract_strided_slice %167 {offsets = [0, 32], sizes = [2, 32], strides = [1, 1]} : vector<2x128xf32> to vector<2x32xf32>
    %171 = vector.extract_strided_slice %168 {offsets = [0, 64], sizes = [2, 32], strides = [1, 1]} : vector<2x128xf32> to vector<2x32xf32>
    %172 = vector.extract_strided_slice %167 {offsets = [0, 96], sizes = [2, 32], strides = [1, 1]} : vector<2x128xf32> to vector<2x32xf32>
    %173 = arith.mulf %170, %128 : vector<2x32xf32>
    %174 = arith.mulf %169, %171 : vector<2x32xf32>
    %175 = arith.addf %173, %174 : vector<2x32xf32>
    %176 = math.tanh %175 : vector<2x32xf32>
    %177 = arith.mulf %172, %176 : vector<2x32xf32>
    %c64_58 = arith.constant 64 : index
    %c0_59 = arith.constant 0 : index
    %178 = vector.load %arg1[%c64_58, %c0_59] : memref<144x128xf32, #tpu.memory_space<vmem>>, vector<32x128xf32>
    %c128_60 = arith.constant 128 : index
    %c0_61 = arith.constant 0 : index
    %179 = vector.load %arg1[%c128_60, %c0_61] : memref<144x128xf32, #tpu.memory_space<vmem>>, vector<1x128xf32>
    %180 = vector.extract_strided_slice %159 {offsets = [0, 128], sizes = [2, 128], strides = [1, 1]} : vector<2x256xf32> to vector<2x128xf32>
    %181 = vector.broadcast %179 : vector<1x128xf32> to vector<2x128xf32>
    %182 = arith.addf %180, %181 : vector<2x128xf32>
    %cst_62 = arith.constant dense<0.000000e+00> : vector<2x128xf32>
    %183 = tpu.matmul %177, %178, %cst_62 {dimension_numbers = #tpu.dot_dimension_numbers<[1], [0], [0], [1], [0, 0, 1, 1], [], []>, precision = #tpu.contract_precision<fp32>} : vector<2x32xf32>, vector<32x128xf32>, vector<2x128xf32> -> vector<2x128xf32>
    %184 = arith.addf %182, %183 : vector<2x128xf32>
    %185 = arith.negf %184 : vector<2x128xf32>
    %186 = math.exp %185 : vector<2x128xf32>
    %cst_63 = arith.constant 1.000000e+00 : f32
    %187 = vector.broadcast %cst_63 : f32 to vector<2x128xf32>
    %188 = arith.addf %187, %186 : vector<2x128xf32>
    %189 = arith.divf %187, %188 : vector<2x128xf32>
    %190 = math.tanh %184 : vector<2x128xf32>
    %191 = vector.extract_strided_slice %189 {offsets = [0, 0], sizes = [2, 32], strides = [1, 1]} : vector<2x128xf32> to vector<2x32xf32>
    %192 = vector.extract_strided_slice %189 {offsets = [0, 32], sizes = [2, 32], strides = [1, 1]} : vector<2x128xf32> to vector<2x32xf32>
    %193 = vector.extract_strided_slice %190 {offsets = [0, 64], sizes = [2, 32], strides = [1, 1]} : vector<2x128xf32> to vector<2x32xf32>
    %194 = vector.extract_strided_slice %189 {offsets = [0, 96], sizes = [2, 32], strides = [1, 1]} : vector<2x128xf32> to vector<2x32xf32>
    %195 = arith.mulf %192, %150 : vector<2x32xf32>
    %196 = arith.mulf %191, %193 : vector<2x32xf32>
    %197 = arith.addf %195, %196 : vector<2x32xf32>
    %198 = math.tanh %197 : vector<2x32xf32>
    %199 = arith.mulf %194, %198 : vector<2x32xf32>
    %200 = vector.extract_strided_slice %199 {offsets = [0, 0], sizes = [1, 32], strides = [1, 1]} : vector<2x32xf32> to vector<1x32xf32>
    %c3 = arith.constant 3 : index
    %c0_64 = arith.constant 0 : index
    %201 = vector.load %arg6[%c3, %c0_64] : memref<16x32xf32, #tpu.memory_space<vmem>>, vector<1x32xf32>
    tpu.vector_store %arg6[%c3, %c0_64], %200 {strides = array<i32>} : memref<16x32xf32, #tpu.memory_space<vmem>>, vector<1x32xf32>,
    %202 = vector.extract_strided_slice %199 {offsets = [1, 0], sizes = [1, 32], strides = [1, 1]} : vector<2x32xf32> to vector<1x32xf32>
    %c11 = arith.constant 11 : index
    %c0_65 = arith.constant 0 : index
    %203 = vector.load %arg6[%c11, %c0_65] : memref<16x32xf32, #tpu.memory_space<vmem>>, vector<1x32xf32>
    tpu.vector_store %arg6[%c11, %c0_65], %202 {strides = array<i32>} : memref<16x32xf32, #tpu.memory_space<vmem>>, vector<1x32xf32>,
    %204 = tpu.concatenate %177, %199 in 1 : vector<2x32xf32>, vector<2x32xf32> -> vector<2x64xf32>
    %c0_66 = arith.constant 0 : index
    %c0_67 = arith.constant 0 : index
    %205 = vector.load %arg2[%c0_66, %c0_67] : memref<64x256xf32, #tpu.memory_space<vmem>>, vector<64x256xf32>
    %cst_68 = arith.constant dense<0.000000e+00> : vector<2x256xf32>
    %206 = tpu.matmul %204, %205, %cst_68 {dimension_numbers = #tpu.dot_dimension_numbers<[1], [0], [0], [1], [0, 0, 1, 1], [], []>, precision = #tpu.contract_precision<fp32>} : vector<2x64xf32>, vector<64x256xf32>, vector<2x256xf32> -> vector<2x256xf32>
    %207 = vector.extract_strided_slice %7 {offsets = [8, 0], sizes = [2, 128], strides = [1, 1]} : vector<16x128xf32> to vector<2x128xf32>
    %208 = vector.extract_strided_slice %206 {offsets = [0, 0], sizes = [2, 128], strides = [1, 1]} : vector<2x256xf32> to vector<2x128xf32>
    %209 = arith.addf %207, %208 : vector<2x128xf32>
    %210 = arith.negf %209 : vector<2x128xf32>
    %211 = math.exp %210 : vector<2x128xf32>
    %cst_69 = arith.constant 1.000000e+00 : f32
    %212 = vector.broadcast %cst_69 : f32 to vector<2x128xf32>
    %213 = arith.addf %212, %211 : vector<2x128xf32>
    %214 = arith.divf %212, %213 : vector<2x128xf32>
    %215 = math.tanh %209 : vector<2x128xf32>
    %216 = vector.extract_strided_slice %214 {offsets = [0, 0], sizes = [2, 32], strides = [1, 1]} : vector<2x128xf32> to vector<2x32xf32>
    %217 = vector.extract_strided_slice %214 {offsets = [0, 32], sizes = [2, 32], strides = [1, 1]} : vector<2x128xf32> to vector<2x32xf32>
    %218 = vector.extract_strided_slice %215 {offsets = [0, 64], sizes = [2, 32], strides = [1, 1]} : vector<2x128xf32> to vector<2x32xf32>
    %219 = vector.extract_strided_slice %214 {offsets = [0, 96], sizes = [2, 32], strides = [1, 1]} : vector<2x128xf32> to vector<2x32xf32>
    %220 = arith.mulf %217, %175 : vector<2x32xf32>
    %221 = arith.mulf %216, %218 : vector<2x32xf32>
    %222 = arith.addf %220, %221 : vector<2x32xf32>
    %223 = math.tanh %222 : vector<2x32xf32>
    %224 = arith.mulf %219, %223 : vector<2x32xf32>
    %c64_70 = arith.constant 64 : index
    %c0_71 = arith.constant 0 : index
    %225 = vector.load %arg1[%c64_70, %c0_71] : memref<144x128xf32, #tpu.memory_space<vmem>>, vector<32x128xf32>
    %c128_72 = arith.constant 128 : index
    %c0_73 = arith.constant 0 : index
    %226 = vector.load %arg1[%c128_72, %c0_73] : memref<144x128xf32, #tpu.memory_space<vmem>>, vector<1x128xf32>
    %227 = vector.extract_strided_slice %206 {offsets = [0, 128], sizes = [2, 128], strides = [1, 1]} : vector<2x256xf32> to vector<2x128xf32>
    %228 = vector.broadcast %226 : vector<1x128xf32> to vector<2x128xf32>
    %229 = arith.addf %227, %228 : vector<2x128xf32>
    %cst_74 = arith.constant dense<0.000000e+00> : vector<2x128xf32>
    %230 = tpu.matmul %224, %225, %cst_74 {dimension_numbers = #tpu.dot_dimension_numbers<[1], [0], [0], [1], [0, 0, 1, 1], [], []>, precision = #tpu.contract_precision<fp32>} : vector<2x32xf32>, vector<32x128xf32>, vector<2x128xf32> -> vector<2x128xf32>
    %231 = arith.addf %229, %230 : vector<2x128xf32>
    %232 = arith.negf %231 : vector<2x128xf32>
    %233 = math.exp %232 : vector<2x128xf32>
    %cst_75 = arith.constant 1.000000e+00 : f32
    %234 = vector.broadcast %cst_75 : f32 to vector<2x128xf32>
    %235 = arith.addf %234, %233 : vector<2x128xf32>
    %236 = arith.divf %234, %235 : vector<2x128xf32>
    %237 = math.tanh %231 : vector<2x128xf32>
    %238 = vector.extract_strided_slice %236 {offsets = [0, 0], sizes = [2, 32], strides = [1, 1]} : vector<2x128xf32> to vector<2x32xf32>
    %239 = vector.extract_strided_slice %236 {offsets = [0, 32], sizes = [2, 32], strides = [1, 1]} : vector<2x128xf32> to vector<2x32xf32>
    %240 = vector.extract_strided_slice %237 {offsets = [0, 64], sizes = [2, 32], strides = [1, 1]} : vector<2x128xf32> to vector<2x32xf32>
    %241 = vector.extract_strided_slice %236 {offsets = [0, 96], sizes = [2, 32], strides = [1, 1]} : vector<2x128xf32> to vector<2x32xf32>
    %242 = arith.mulf %239, %197 : vector<2x32xf32>
    %243 = arith.mulf %238, %240 : vector<2x32xf32>
    %244 = arith.addf %242, %243 : vector<2x32xf32>
    %245 = math.tanh %244 : vector<2x32xf32>
    %246 = arith.mulf %241, %245 : vector<2x32xf32>
    %247 = vector.extract_strided_slice %246 {offsets = [0, 0], sizes = [1, 32], strides = [1, 1]} : vector<2x32xf32> to vector<1x32xf32>
    %c4 = arith.constant 4 : index
    %c0_76 = arith.constant 0 : index
    %248 = vector.load %arg6[%c4, %c0_76] : memref<16x32xf32, #tpu.memory_space<vmem>>, vector<1x32xf32>
    tpu.vector_store %arg6[%c4, %c0_76], %247 {strides = array<i32>} : memref<16x32xf32, #tpu.memory_space<vmem>>, vector<1x32xf32>,
    %249 = vector.extract_strided_slice %246 {offsets = [1, 0], sizes = [1, 32], strides = [1, 1]} : vector<2x32xf32> to vector<1x32xf32>
    %c12 = arith.constant 12 : index
    %c0_77 = arith.constant 0 : index
    %250 = vector.load %arg6[%c12, %c0_77] : memref<16x32xf32, #tpu.memory_space<vmem>>, vector<1x32xf32>
    tpu.vector_store %arg6[%c12, %c0_77], %249 {strides = array<i32>} : memref<16x32xf32, #tpu.memory_space<vmem>>, vector<1x32xf32>,
    %251 = tpu.concatenate %224, %246 in 1 : vector<2x32xf32>, vector<2x32xf32> -> vector<2x64xf32>
    %c0_78 = arith.constant 0 : index
    %c0_79 = arith.constant 0 : index
    %252 = vector.load %arg2[%c0_78, %c0_79] : memref<64x256xf32, #tpu.memory_space<vmem>>, vector<64x256xf32>
    %cst_80 = arith.constant dense<0.000000e+00> : vector<2x256xf32>
    %253 = tpu.matmul %251, %252, %cst_80 {dimension_numbers = #tpu.dot_dimension_numbers<[1], [0], [0], [1], [0, 0, 1, 1], [], []>, precision = #tpu.contract_precision<fp32>} : vector<2x64xf32>, vector<64x256xf32>, vector<2x256xf32> -> vector<2x256xf32>
    %254 = vector.extract_strided_slice %7 {offsets = [10, 0], sizes = [2, 128], strides = [1, 1]} : vector<16x128xf32> to vector<2x128xf32>
    %255 = vector.extract_strided_slice %253 {offsets = [0, 0], sizes = [2, 128], strides = [1, 1]} : vector<2x256xf32> to vector<2x128xf32>
    %256 = arith.addf %254, %255 : vector<2x128xf32>
    %257 = arith.negf %256 : vector<2x128xf32>
    %258 = math.exp %257 : vector<2x128xf32>
    %cst_81 = arith.constant 1.000000e+00 : f32
    %259 = vector.broadcast %cst_81 : f32 to vector<2x128xf32>
    %260 = arith.addf %259, %258 : vector<2x128xf32>
    %261 = arith.divf %259, %260 : vector<2x128xf32>
    %262 = math.tanh %256 : vector<2x128xf32>
    %263 = vector.extract_strided_slice %261 {offsets = [0, 0], sizes = [2, 32], strides = [1, 1]} : vector<2x128xf32> to vector<2x32xf32>
    %264 = vector.extract_strided_slice %261 {offsets = [0, 32], sizes = [2, 32], strides = [1, 1]} : vector<2x128xf32> to vector<2x32xf32>
    %265 = vector.extract_strided_slice %262 {offsets = [0, 64], sizes = [2, 32], strides = [1, 1]} : vector<2x128xf32> to vector<2x32xf32>
    %266 = vector.extract_strided_slice %261 {offsets = [0, 96], sizes = [2, 32], strides = [1, 1]} : vector<2x128xf32> to vector<2x32xf32>
    %267 = arith.mulf %264, %222 : vector<2x32xf32>
    %268 = arith.mulf %263, %265 : vector<2x32xf32>
    %269 = arith.addf %267, %268 : vector<2x32xf32>
    %270 = math.tanh %269 : vector<2x32xf32>
    %271 = arith.mulf %266, %270 : vector<2x32xf32>
    %c64_82 = arith.constant 64 : index
    %c0_83 = arith.constant 0 : index
    %272 = vector.load %arg1[%c64_82, %c0_83] : memref<144x128xf32, #tpu.memory_space<vmem>>, vector<32x128xf32>
    %c128_84 = arith.constant 128 : index
    %c0_85 = arith.constant 0 : index
    %273 = vector.load %arg1[%c128_84, %c0_85] : memref<144x128xf32, #tpu.memory_space<vmem>>, vector<1x128xf32>
    %274 = vector.extract_strided_slice %253 {offsets = [0, 128], sizes = [2, 128], strides = [1, 1]} : vector<2x256xf32> to vector<2x128xf32>
    %275 = vector.broadcast %273 : vector<1x128xf32> to vector<2x128xf32>
    %276 = arith.addf %274, %275 : vector<2x128xf32>
    %cst_86 = arith.constant dense<0.000000e+00> : vector<2x128xf32>
    %277 = tpu.matmul %271, %272, %cst_86 {dimension_numbers = #tpu.dot_dimension_numbers<[1], [0], [0], [1], [0, 0, 1, 1], [], []>, precision = #tpu.contract_precision<fp32>} : vector<2x32xf32>, vector<32x128xf32>, vector<2x128xf32> -> vector<2x128xf32>
    %278 = arith.addf %276, %277 : vector<2x128xf32>
    %279 = arith.negf %278 : vector<2x128xf32>
    %280 = math.exp %279 : vector<2x128xf32>
    %cst_87 = arith.constant 1.000000e+00 : f32
    %281 = vector.broadcast %cst_87 : f32 to vector<2x128xf32>
    %282 = arith.addf %281, %280 : vector<2x128xf32>
    %283 = arith.divf %281, %282 : vector<2x128xf32>
    %284 = math.tanh %278 : vector<2x128xf32>
    %285 = vector.extract_strided_slice %283 {offsets = [0, 0], sizes = [2, 32], strides = [1, 1]} : vector<2x128xf32> to vector<2x32xf32>
    %286 = vector.extract_strided_slice %283 {offsets = [0, 32], sizes = [2, 32], strides = [1, 1]} : vector<2x128xf32> to vector<2x32xf32>
    %287 = vector.extract_strided_slice %284 {offsets = [0, 64], sizes = [2, 32], strides = [1, 1]} : vector<2x128xf32> to vector<2x32xf32>
    %288 = vector.extract_strided_slice %283 {offsets = [0, 96], sizes = [2, 32], strides = [1, 1]} : vector<2x128xf32> to vector<2x32xf32>
    %289 = arith.mulf %286, %244 : vector<2x32xf32>
    %290 = arith.mulf %285, %287 : vector<2x32xf32>
    %291 = arith.addf %289, %290 : vector<2x32xf32>
    %292 = math.tanh %291 : vector<2x32xf32>
    %293 = arith.mulf %288, %292 : vector<2x32xf32>
    %294 = vector.extract_strided_slice %293 {offsets = [0, 0], sizes = [1, 32], strides = [1, 1]} : vector<2x32xf32> to vector<1x32xf32>
    %c5 = arith.constant 5 : index
    %c0_88 = arith.constant 0 : index
    %295 = vector.load %arg6[%c5, %c0_88] : memref<16x32xf32, #tpu.memory_space<vmem>>, vector<1x32xf32>
    tpu.vector_store %arg6[%c5, %c0_88], %294 {strides = array<i32>} : memref<16x32xf32, #tpu.memory_space<vmem>>, vector<1x32xf32>,
    %296 = vector.extract_strided_slice %293 {offsets = [1, 0], sizes = [1, 32], strides = [1, 1]} : vector<2x32xf32> to vector<1x32xf32>
    %c13 = arith.constant 13 : index
    %c0_89 = arith.constant 0 : index
    %297 = vector.load %arg6[%c13, %c0_89] : memref<16x32xf32, #tpu.memory_space<vmem>>, vector<1x32xf32>
    tpu.vector_store %arg6[%c13, %c0_89], %296 {strides = array<i32>} : memref<16x32xf32, #tpu.memory_space<vmem>>, vector<1x32xf32>,
    %298 = tpu.concatenate %271, %293 in 1 : vector<2x32xf32>, vector<2x32xf32> -> vector<2x64xf32>
    %c0_90 = arith.constant 0 : index
    %c0_91 = arith.constant 0 : index
    %299 = vector.load %arg2[%c0_90, %c0_91] : memref<64x256xf32, #tpu.memory_space<vmem>>, vector<64x256xf32>
    %cst_92 = arith.constant dense<0.000000e+00> : vector<2x256xf32>
    %300 = tpu.matmul %298, %299, %cst_92 {dimension_numbers = #tpu.dot_dimension_numbers<[1], [0], [0], [1], [0, 0, 1, 1], [], []>, precision = #tpu.contract_precision<fp32>} : vector<2x64xf32>, vector<64x256xf32>, vector<2x256xf32> -> vector<2x256xf32>
    %301 = vector.extract_strided_slice %7 {offsets = [12, 0], sizes = [2, 128], strides = [1, 1]} : vector<16x128xf32> to vector<2x128xf32>
    %302 = vector.extract_strided_slice %300 {offsets = [0, 0], sizes = [2, 128], strides = [1, 1]} : vector<2x256xf32> to vector<2x128xf32>
    %303 = arith.addf %301, %302 : vector<2x128xf32>
    %304 = arith.negf %303 : vector<2x128xf32>
    %305 = math.exp %304 : vector<2x128xf32>
    %cst_93 = arith.constant 1.000000e+00 : f32
    %306 = vector.broadcast %cst_93 : f32 to vector<2x128xf32>
    %307 = arith.addf %306, %305 : vector<2x128xf32>
    %308 = arith.divf %306, %307 : vector<2x128xf32>
    %309 = math.tanh %303 : vector<2x128xf32>
    %310 = vector.extract_strided_slice %308 {offsets = [0, 0], sizes = [2, 32], strides = [1, 1]} : vector<2x128xf32> to vector<2x32xf32>
    %311 = vector.extract_strided_slice %308 {offsets = [0, 32], sizes = [2, 32], strides = [1, 1]} : vector<2x128xf32> to vector<2x32xf32>
    %312 = vector.extract_strided_slice %309 {offsets = [0, 64], sizes = [2, 32], strides = [1, 1]} : vector<2x128xf32> to vector<2x32xf32>
    %313 = vector.extract_strided_slice %308 {offsets = [0, 96], sizes = [2, 32], strides = [1, 1]} : vector<2x128xf32> to vector<2x32xf32>
    %314 = arith.mulf %311, %269 : vector<2x32xf32>
    %315 = arith.mulf %310, %312 : vector<2x32xf32>
    %316 = arith.addf %314, %315 : vector<2x32xf32>
    %317 = math.tanh %316 : vector<2x32xf32>
    %318 = arith.mulf %313, %317 : vector<2x32xf32>
    %c64_94 = arith.constant 64 : index
    %c0_95 = arith.constant 0 : index
    %319 = vector.load %arg1[%c64_94, %c0_95] : memref<144x128xf32, #tpu.memory_space<vmem>>, vector<32x128xf32>
    %c128_96 = arith.constant 128 : index
    %c0_97 = arith.constant 0 : index
    %320 = vector.load %arg1[%c128_96, %c0_97] : memref<144x128xf32, #tpu.memory_space<vmem>>, vector<1x128xf32>
    %321 = vector.extract_strided_slice %300 {offsets = [0, 128], sizes = [2, 128], strides = [1, 1]} : vector<2x256xf32> to vector<2x128xf32>
    %322 = vector.broadcast %320 : vector<1x128xf32> to vector<2x128xf32>
    %323 = arith.addf %321, %322 : vector<2x128xf32>
    %cst_98 = arith.constant dense<0.000000e+00> : vector<2x128xf32>
    %324 = tpu.matmul %318, %319, %cst_98 {dimension_numbers = #tpu.dot_dimension_numbers<[1], [0], [0], [1], [0, 0, 1, 1], [], []>, precision = #tpu.contract_precision<fp32>} : vector<2x32xf32>, vector<32x128xf32>, vector<2x128xf32> -> vector<2x128xf32>
    %325 = arith.addf %323, %324 : vector<2x128xf32>
    %326 = arith.negf %325 : vector<2x128xf32>
    %327 = math.exp %326 : vector<2x128xf32>
    %cst_99 = arith.constant 1.000000e+00 : f32
    %328 = vector.broadcast %cst_99 : f32 to vector<2x128xf32>
    %329 = arith.addf %328, %327 : vector<2x128xf32>
    %330 = arith.divf %328, %329 : vector<2x128xf32>
    %331 = math.tanh %325 : vector<2x128xf32>
    %332 = vector.extract_strided_slice %330 {offsets = [0, 0], sizes = [2, 32], strides = [1, 1]} : vector<2x128xf32> to vector<2x32xf32>
    %333 = vector.extract_strided_slice %330 {offsets = [0, 32], sizes = [2, 32], strides = [1, 1]} : vector<2x128xf32> to vector<2x32xf32>
    %334 = vector.extract_strided_slice %331 {offsets = [0, 64], sizes = [2, 32], strides = [1, 1]} : vector<2x128xf32> to vector<2x32xf32>
    %335 = vector.extract_strided_slice %330 {offsets = [0, 96], sizes = [2, 32], strides = [1, 1]} : vector<2x128xf32> to vector<2x32xf32>
    %336 = arith.mulf %333, %291 : vector<2x32xf32>
    %337 = arith.mulf %332, %334 : vector<2x32xf32>
    %338 = arith.addf %336, %337 : vector<2x32xf32>
    %339 = math.tanh %338 : vector<2x32xf32>
    %340 = arith.mulf %335, %339 : vector<2x32xf32>
    %341 = vector.extract_strided_slice %340 {offsets = [0, 0], sizes = [1, 32], strides = [1, 1]} : vector<2x32xf32> to vector<1x32xf32>
    %c6 = arith.constant 6 : index
    %c0_100 = arith.constant 0 : index
    %342 = vector.load %arg6[%c6, %c0_100] : memref<16x32xf32, #tpu.memory_space<vmem>>, vector<1x32xf32>
    tpu.vector_store %arg6[%c6, %c0_100], %341 {strides = array<i32>} : memref<16x32xf32, #tpu.memory_space<vmem>>, vector<1x32xf32>,
    %343 = vector.extract_strided_slice %340 {offsets = [1, 0], sizes = [1, 32], strides = [1, 1]} : vector<2x32xf32> to vector<1x32xf32>
    %c14 = arith.constant 14 : index
    %c0_101 = arith.constant 0 : index
    %344 = vector.load %arg6[%c14, %c0_101] : memref<16x32xf32, #tpu.memory_space<vmem>>, vector<1x32xf32>
    tpu.vector_store %arg6[%c14, %c0_101], %343 {strides = array<i32>} : memref<16x32xf32, #tpu.memory_space<vmem>>, vector<1x32xf32>,
    %345 = tpu.concatenate %318, %340 in 1 : vector<2x32xf32>, vector<2x32xf32> -> vector<2x64xf32>
    %c0_102 = arith.constant 0 : index
    %c0_103 = arith.constant 0 : index
    %346 = vector.load %arg2[%c0_102, %c0_103] : memref<64x256xf32, #tpu.memory_space<vmem>>, vector<64x256xf32>
    %cst_104 = arith.constant dense<0.000000e+00> : vector<2x256xf32>
    %347 = tpu.matmul %345, %346, %cst_104 {dimension_numbers = #tpu.dot_dimension_numbers<[1], [0], [0], [1], [0, 0, 1, 1], [], []>, precision = #tpu.contract_precision<fp32>} : vector<2x64xf32>, vector<64x256xf32>, vector<2x256xf32> -> vector<2x256xf32>
    %348 = vector.extract_strided_slice %7 {offsets = [14, 0], sizes = [2, 128], strides = [1, 1]} : vector<16x128xf32> to vector<2x128xf32>
    %349 = vector.extract_strided_slice %347 {offsets = [0, 0], sizes = [2, 128], strides = [1, 1]} : vector<2x256xf32> to vector<2x128xf32>
    %350 = arith.addf %348, %349 : vector<2x128xf32>
    %351 = arith.negf %350 : vector<2x128xf32>
    %352 = math.exp %351 : vector<2x128xf32>
    %cst_105 = arith.constant 1.000000e+00 : f32
    %353 = vector.broadcast %cst_105 : f32 to vector<2x128xf32>
    %354 = arith.addf %353, %352 : vector<2x128xf32>
    %355 = arith.divf %353, %354 : vector<2x128xf32>
    %356 = math.tanh %350 : vector<2x128xf32>
    %357 = vector.extract_strided_slice %355 {offsets = [0, 0], sizes = [2, 32], strides = [1, 1]} : vector<2x128xf32> to vector<2x32xf32>
    %358 = vector.extract_strided_slice %355 {offsets = [0, 32], sizes = [2, 32], strides = [1, 1]} : vector<2x128xf32> to vector<2x32xf32>
    %359 = vector.extract_strided_slice %356 {offsets = [0, 64], sizes = [2, 32], strides = [1, 1]} : vector<2x128xf32> to vector<2x32xf32>
    %360 = vector.extract_strided_slice %355 {offsets = [0, 96], sizes = [2, 32], strides = [1, 1]} : vector<2x128xf32> to vector<2x32xf32>
    %361 = arith.mulf %358, %316 : vector<2x32xf32>
    %362 = arith.mulf %357, %359 : vector<2x32xf32>
    %363 = arith.addf %361, %362 : vector<2x32xf32>
    %364 = math.tanh %363 : vector<2x32xf32>
    %365 = arith.mulf %360, %364 : vector<2x32xf32>
    %c64_106 = arith.constant 64 : index
    %c0_107 = arith.constant 0 : index
    %366 = vector.load %arg1[%c64_106, %c0_107] : memref<144x128xf32, #tpu.memory_space<vmem>>, vector<32x128xf32>
    %c128_108 = arith.constant 128 : index
    %c0_109 = arith.constant 0 : index
    %367 = vector.load %arg1[%c128_108, %c0_109] : memref<144x128xf32, #tpu.memory_space<vmem>>, vector<1x128xf32>
    %368 = vector.extract_strided_slice %347 {offsets = [0, 128], sizes = [2, 128], strides = [1, 1]} : vector<2x256xf32> to vector<2x128xf32>
    %369 = vector.broadcast %367 : vector<1x128xf32> to vector<2x128xf32>
    %370 = arith.addf %368, %369 : vector<2x128xf32>
    %cst_110 = arith.constant dense<0.000000e+00> : vector<2x128xf32>
    %371 = tpu.matmul %365, %366, %cst_110 {dimension_numbers = #tpu.dot_dimension_numbers<[1], [0], [0], [1], [0, 0, 1, 1], [], []>, precision = #tpu.contract_precision<fp32>} : vector<2x32xf32>, vector<32x128xf32>, vector<2x128xf32> -> vector<2x128xf32>
    %372 = arith.addf %370, %371 : vector<2x128xf32>
    %373 = arith.negf %372 : vector<2x128xf32>
    %374 = math.exp %373 : vector<2x128xf32>
    %cst_111 = arith.constant 1.000000e+00 : f32
    %375 = vector.broadcast %cst_111 : f32 to vector<2x128xf32>
    %376 = arith.addf %375, %374 : vector<2x128xf32>
    %377 = arith.divf %375, %376 : vector<2x128xf32>
    %378 = math.tanh %372 : vector<2x128xf32>
    %379 = vector.extract_strided_slice %377 {offsets = [0, 0], sizes = [2, 32], strides = [1, 1]} : vector<2x128xf32> to vector<2x32xf32>
    %380 = vector.extract_strided_slice %377 {offsets = [0, 32], sizes = [2, 32], strides = [1, 1]} : vector<2x128xf32> to vector<2x32xf32>
    %381 = vector.extract_strided_slice %378 {offsets = [0, 64], sizes = [2, 32], strides = [1, 1]} : vector<2x128xf32> to vector<2x32xf32>
    %382 = vector.extract_strided_slice %377 {offsets = [0, 96], sizes = [2, 32], strides = [1, 1]} : vector<2x128xf32> to vector<2x32xf32>
    %383 = arith.mulf %380, %338 : vector<2x32xf32>
    %384 = arith.mulf %379, %381 : vector<2x32xf32>
    %385 = arith.addf %383, %384 : vector<2x32xf32>
    %386 = math.tanh %385 : vector<2x32xf32>
    %387 = arith.mulf %382, %386 : vector<2x32xf32>
    %388 = vector.extract_strided_slice %387 {offsets = [0, 0], sizes = [1, 32], strides = [1, 1]} : vector<2x32xf32> to vector<1x32xf32>
    %c7 = arith.constant 7 : index
    %c0_112 = arith.constant 0 : index
    %389 = vector.load %arg6[%c7, %c0_112] : memref<16x32xf32, #tpu.memory_space<vmem>>, vector<1x32xf32>
    tpu.vector_store %arg6[%c7, %c0_112], %388 {strides = array<i32>} : memref<16x32xf32, #tpu.memory_space<vmem>>, vector<1x32xf32>,
    %390 = vector.extract_strided_slice %387 {offsets = [1, 0], sizes = [1, 32], strides = [1, 1]} : vector<2x32xf32> to vector<1x32xf32>
    %c15 = arith.constant 15 : index
    %c0_113 = arith.constant 0 : index
    %391 = vector.load %arg6[%c15, %c0_113] : memref<16x32xf32, #tpu.memory_space<vmem>>, vector<1x32xf32>
    tpu.vector_store %arg6[%c15, %c0_113], %390 {strides = array<i32>} : memref<16x32xf32, #tpu.memory_space<vmem>>, vector<1x32xf32>,
    %c96 = arith.constant 96 : index
    %c0_114 = arith.constant 0 : index
    %392 = vector.load %arg1[%c96, %c0_114] : memref<144x128xf32, #tpu.memory_space<vmem>>, vector<32x128xf32>
    %c136 = arith.constant 136 : index
    %c0_115 = arith.constant 0 : index
    %393 = vector.load %arg1[%c136, %c0_115] : memref<144x128xf32, #tpu.memory_space<vmem>>, vector<1x128xf32>
    %c0_116 = arith.constant 0 : index
    %c0_117 = arith.constant 0 : index
    %394 = vector.load %arg6[%c0_116, %c0_117] : memref<16x32xf32, #tpu.memory_space<vmem>>, vector<16x32xf32>
    %cst_118 = arith.constant dense<0.000000e+00> : vector<16x128xf32>
    %395 = tpu.matmul %394, %392, %cst_118 {dimension_numbers = #tpu.dot_dimension_numbers<[1], [0], [0], [1], [0, 0, 1, 1], [], []>, precision = #tpu.contract_precision<fp32>} : vector<16x32xf32>, vector<32x128xf32>, vector<16x128xf32> -> vector<16x128xf32>
    %396 = vector.broadcast %393 : vector<1x128xf32> to vector<16x128xf32>
    %397 = arith.addf %395, %396 : vector<16x128xf32>
    %c0_119 = arith.constant 0 : index
    %c0_120 = arith.constant 0 : index
    %398 = vector.load %arg4[%c0_119, %c0_120] : memref<16x128xf32, #tpu.memory_space<vmem>>, vector<16x128xf32>
    tpu.vector_store %arg4[%c0_119, %c0_120], %397 {strides = array<i32>} : memref<16x128xf32, #tpu.memory_space<vmem>>, vector<16x128xf32>,
    %c0_121 = arith.constant 0 : index
    %c0_122 = arith.constant 0 : index
    %c0_123 = arith.constant 0 : index
    %c0_124 = arith.constant 0 : index
    %399 = vector.load %arg5[%c0_121, %c0_122, %c0_123, %c0_124] : memref<2x2x2x32xf32, #tpu.memory_space<vmem>>, vector<1x1x2x32xf32>
    %400 = vector.shape_cast %399 : vector<1x1x2x32xf32> to vector<2x32xf32>
    %401 = vector.shape_cast %365 : vector<2x32xf32> to vector<1x1x2x32xf32>
    tpu.vector_store %arg5[%c0_121, %c0_122, %c0_123, %c0_124], %401 {strides = array<i32>} : memref<2x2x2x32xf32, #tpu.memory_space<vmem>>, vector<1x1x2x32xf32>,
    %c1_125 = arith.constant 1 : index
    %c0_126 = arith.constant 0 : index
    %c0_127 = arith.constant 0 : index
    %c0_128 = arith.constant 0 : index
    %402 = vector.load %arg5[%c1_125, %c0_126, %c0_127, %c0_128] : memref<2x2x2x32xf32, #tpu.memory_space<vmem>>, vector<1x1x2x32xf32>
    %403 = vector.shape_cast %402 : vector<1x1x2x32xf32> to vector<2x32xf32>
    %404 = vector.shape_cast %363 : vector<2x32xf32> to vector<1x1x2x32xf32>
    tpu.vector_store %arg5[%c1_125, %c0_126, %c0_127, %c0_128], %404 {strides = array<i32>} : memref<2x2x2x32xf32, #tpu.memory_space<vmem>>, vector<1x1x2x32xf32>,
    %c0_129 = arith.constant 0 : index
    %c1_130 = arith.constant 1 : index
    %c0_131 = arith.constant 0 : index
    %c0_132 = arith.constant 0 : index
    %405 = vector.load %arg5[%c0_129, %c1_130, %c0_131, %c0_132] : memref<2x2x2x32xf32, #tpu.memory_space<vmem>>, vector<1x1x2x32xf32>
    %406 = vector.shape_cast %405 : vector<1x1x2x32xf32> to vector<2x32xf32>
    %407 = vector.shape_cast %387 : vector<2x32xf32> to vector<1x1x2x32xf32>
    tpu.vector_store %arg5[%c0_129, %c1_130, %c0_131, %c0_132], %407 {strides = array<i32>} : memref<2x2x2x32xf32, #tpu.memory_space<vmem>>, vector<1x1x2x32xf32>,
    %c1_133 = arith.constant 1 : index
    %c1_134 = arith.constant 1 : index
    %c0_135 = arith.constant 0 : index
    %c0_136 = arith.constant 0 : index
    %408 = vector.load %arg5[%c1_133, %c1_134, %c0_135, %c0_136] : memref<2x2x2x32xf32, #tpu.memory_space<vmem>>, vector<1x1x2x32xf32>
    %409 = vector.shape_cast %408 : vector<1x1x2x32xf32> to vector<2x32xf32>
    %410 = vector.shape_cast %385 : vector<2x32xf32> to vector<1x1x2x32xf32>
    tpu.vector_store %arg5[%c1_133, %c1_134, %c0_135, %c0_136], %410 {strides = array<i32>} : memref<2x2x2x32xf32, #tpu.memory_space<vmem>>, vector<1x1x2x32xf32>,
    return
  }
}

</mosaic_0001>

<llo_original>
// kernel: tpu_custom_call.1
$region0: #{tpu_custom_call.1}
  #allocation0 [shape = 'u32[]', space=smem, size = 0x4, offset = 0x4, fixed_abs, tag = 'smem constant byte address 0x4 - core index']
  #allocation1 [shape = 'u32[144,128]{1,0:T(1,128)}', space=vmem, size = 0x12000, scoped, tag = 'internal scratch']
  #allocation2 [shape = 'f32[16,32]{1,0:T(8,128)}', space=vmem, size = 0x2000, scoped, tag = 'scratch operand']
  %s0 = inlined_call_operand.vmem [shape: s32[16,1], index: 0, kind: input, shape index: {}]
  %s1 = inlined_call_operand.hbm [shape: f32[144,128], index: 1, kind: input, shape index: {}]
  %s2 = inlined_call_operand.hbm [shape: f32[64,256], index: 2, kind: input, shape index: {}]
  %s3 = inlined_call_operand.vmem [shape: f32[2,2,2,32], index: 3, kind: input, shape index: {}]
  %s4 = inlined_call_operand.hbm [shape: f32[16,128], index: 4, kind: output, shape index: {0}]
  %s5 = inlined_call_operand.hbm [shape: f32[2,2,2,32], index: 5, kind: output, shape index: {1}]
  %6 = xla_tuple %s4, %s5
  %s7 = sld [smem:[#allocation0]]
  $region42: #{tpu_custom_call.1} parent=0
    _
  %s9 = ssub.s32 1, %s7
  %s10 = scalar_select 0, %s9, %s7
  $region1: #{tpu_custom_call.1} parent=0
    #allocation3 [shape = 'u8[73728]{0}', space=vmem, size = 0x12000, scoped, tag = 'input window, operand 1, single buffered']
    #allocation4 [shape = 's32[1]{0}', space=sflag, size = 0x4, scoped, tag = 'scoped memory for tpu_custom_call.1']
    #allocation5 [shape = 's32[1]{0}', space=sflag, size = 0x4, scoped, tag = 'scoped memory for tpu_custom_call.1']
    #allocation6 [shape = 'u8[65536]{0}', space=vmem, size = 0x10000, scoped, tag = 'input window, operand 2, single buffered']
    #allocation7 [shape = 's32[1]{0}', space=sflag, size = 0x4, scoped, tag = 'scoped memory for tpu_custom_call.1']
    #allocation8 [shape = 'u8[8192]{0}', space=vmem, size = 0x2000, scoped, tag = 'output window, operand 0, single buffered']
    #allocation9 [shape = 'u8[4096]{0}', space=vmem, size = 0x1000, scoped, tag = 'output window, operand 1, single buffered']
    #allocation10 [shape = 's32[1]{0}', space=sflag, size = 0x4, scoped, tag = 'scoped memory for tpu_custom_call.1']
    %11 = vsyncpa [#allocation4], 0
    %12 = vsyncpa [#allocation7], 0
    %13 = vsyncpa [#allocation5], 0
    %14 = vsyncpa [#allocation10], 0
    // Predicated region
    $region2: #{tpu_custom_call.1} parent=1 // pred_check
      _
    $region3: #{tpu_custom_call.1} parent=1 // pred_check_branch
      %16 = sbr.rel (0) target = $region5
    $region4: #{tpu_custom_call.1} parent=1 // pred_region
      _
    $region5: #{tpu_custom_call.1} parent=1 // pred_fallthru
      _
    // Predicated region
    $region6: #{tpu_custom_call.1} parent=1 // pred_check
      _
    $region7: #{tpu_custom_call.1} parent=1 // pred_check_branch
      %18 = sbr.rel (0) target = $region9
    $region8: #{tpu_custom_call.1} parent=1 // pred_region
      %s20 = ssub.s32 2304, 2304
      %21 = vsyncadd [#allocation4], %s20
      %s22 = sshll.u32 [#allocation3], 4
      %s23 = int_to_ptr.vmem [resolvable:$true] %s22
      %28 = dma.hbm_to_vmem [thread:$0]  %s1, 2304, %s23, [#allocation4], 128, 128, 8
    $region9: #{tpu_custom_call.1} parent=1 // pred_fallthru
      _
    // Predicated region
    $region10: #{tpu_custom_call.1} parent=1 // pred_check
      _
    $region11: #{tpu_custom_call.1} parent=1 // pred_check_branch
      %30 = sbr.rel (0) target = $region13
    $region12: #{tpu_custom_call.1} parent=1 // pred_region
      %s32 = ssub.s32 2048, 2048
      %33 = vsyncadd [#allocation7], %s32
      %s34 = sshll.u32 [#allocation6], 4
      %s35 = int_to_ptr.vmem [resolvable:$true] %s34
      %40 = dma.hbm_to_vmem [thread:$0]  %s2, 2048, %s35, [#allocation7], 256, 256, 16
    $region13: #{tpu_custom_call.1} parent=1 // pred_fallthru
      _
    // Predicated region
    $region14: #{tpu_custom_call.1} parent=1 // pred_check
      _
    $region15: #{tpu_custom_call.1} parent=1 // pred_check_branch
      %42 = sbr.rel (0) target = $region17
    $region16: #{tpu_custom_call.1} parent=1 // pred_region
      _
    $region17: #{tpu_custom_call.1} parent=1 // pred_fallthru
      _
    // Predicated region
    $region18: #{tpu_custom_call.1} parent=1 // pred_check
      _
    $region19: #{tpu_custom_call.1} parent=1 // pred_check_branch
      %44 = sbr.rel (0) target = $region21
    $region20: #{tpu_custom_call.1} parent=1 // pred_region
      %45 = dma.done [#allocation4], 2304
    $region21: #{tpu_custom_call.1} parent=1 // pred_fallthru
      _
    // Predicated region
    $region22: #{tpu_custom_call.1} parent=1 // pred_check
      _
    $region23: #{tpu_custom_call.1} parent=1 // pred_check_branch
      %47 = sbr.rel (0) target = $region25
    $region24: #{tpu_custom_call.1} parent=1 // pred_region
      %48 = dma.done [#allocation7], 2048
    $region25: #{tpu_custom_call.1} parent=1 // pred_fallthru
      _
    %v49 = vld [vmem:[%s0] sm:$0xff]
    %v50 = vld [vmem:[%s0 + $0x8] sm:$0xff]
    %v51 = vlaneseq
    %v52 = vand.u32 %v51, 127
    %53 = vset.pattern.permute.xlu0 0
    %54 = vperm.xlu0 %53, %v49
    %v55 = vpop.permute.xlu0 %54
    %56 = vset.pattern.permute.xlu0 0
    %57 = vperm.xlu0 %56, %v50
    %v58 = vpop.permute.xlu0 %57
    %vm59 = vcmp.eq.s32.totalorder %v52, %v55
    %vm60 = vcmp.eq.s32.totalorder %v52, %v58
    %v61 = vsel %vm59, 1, 0
    %v62 = vsel %vm60, 1, 0
    %v63 = vcvt.s32.f32 %v61
    %v64 = vcvt.s32.f32 %v62
    %v65 = vld [vmem:[#allocation3] sm:$0xff]
    %v66 = vld [vmem:[#allocation3 + $0x8] sm:$0xff]
    %v67 = vld [vmem:[#allocation3 + $0x10] sm:$0xff]
    %v68 = vld [vmem:[#allocation3 + $0x18] sm:$0xff]
    %v69 = vld [vmem:[#allocation3 + $0x20] sm:$0xff]
    %v70 = vld [vmem:[#allocation3 + $0x28] sm:$0xff]
    %v71 = vld [vmem:[#allocation3 + $0x30] sm:$0xff]
    %v72 = vld [vmem:[#allocation3 + $0x38] sm:$0xff]
    %vm73 = vcmask 523264
    %v75 = vsel %vm73, %v63, 0
    %v78 = vsel %vm73, %v64, 0
    %80 = vmatprep.subr.mxu0 0.0
    %v81 = vand.u32 %v65, 4294901760
    %82 = vmatpush1.msra.mxu0 %v81
    %83 = vmatprep.subr.mxu0 0.0
    %v84 = vand.u32 %v66, 4294901760
    %85 = vmatpush1.msra.mxu0 %v84
    %86 = vmatprep.subr.mxu0 0.0
    %v87 = vand.u32 %v67, 4294901760
    %88 = vmatpush1.msra.mxu0 %v87
    %89 = vmatprep.subr.mxu0 0.0
    %v90 = vand.u32 %v68, 4294901760
    %91 = vmatpush1.msra.mxu0 %v90
    %92 = vmatprep.subr.mxu0 0.0
    %v93 = vand.u32 %v69, 4294901760
    %94 = vmatpush1.msra.mxu0 %v93
    %95 = vmatprep.subr.mxu0 0.0
    %v96 = vand.u32 %v70, 4294901760
    %97 = vmatpush1.msra.mxu0 %v96
    %98 = vmatprep.subr.mxu0 0.0
    %v99 = vand.u32 %v71, 4294901760
    %100 = vmatpush1.msra.mxu0 %v99
    %101 = vmatprep.subr.mxu0 0.0
    %v102 = vand.u32 %v72, 4294901760
    %103 = vmatpush1.msra.mxu0 %v102
    %104 = vmatprep.subr.mxu0 0.0
    %105 = vmatpush1.msra.mxu0 0.0
    %106 = vmatprep.subr.mxu0 0.0
    %107 = vmatpush1.msra.mxu0 0.0
    %108 = vmatprep.subr.mxu0 0.0
    %109 = vmatpush1.msra.mxu0 0.0
    %110 = vmatprep.subr.mxu0 0.0
    %111 = vmatpush1.msra.mxu0 0.0
    %112 = vmatprep.subr.mxu0 0.0
    %113 = vmatpush1.msra.mxu0 0.0
    %114 = vmatprep.subr.mxu0 0.0
    %115 = vmatpush1.msra.mxu0 0.0
    %116 = vmatprep.subr.mxu0 0.0
    %117 = vmatpush1.msra.mxu0 0.0
    %118 = vmatprep.subr.mxu0 0.0
    %119 = vmatpush1.msra.mxu0 0.0
    %120 = vmatprep.subr.mxu0 0.0
    %121 = vmatpush1.msra.mxu0 0.0
    %122 = vmatprep.subr.mxu0 0.0
    %123 = vmatpush1.msra.mxu0 0.0
    %124 = vmatprep.subr.mxu0 0.0
    %125 = vmatpush1.msra.mxu0 0.0
    %126 = vmatprep.subr.mxu0 0.0
    %127 = vmatpush1.msra.mxu0 0.0
    %128 = vmatprep.subr.mxu0 0.0
    %129 = vmatpush1.msra.mxu0 0.0
    %130 = vmatprep.subr.mxu0 0.0
    %131 = vmatpush1.msra.mxu0 0.0
    %132 = vmatprep.subr.mxu0 0.0
    %133 = vmatpush1.msra.mxu0 0.0
    %134 = vmatprep.subr.mxu0 0.0
    %135 = vmatpush1.msra.mxu0 0.0
    %136 = vmatprep.subr.mxu0 0.0
    %137 = vmatpush1.msra.mxu0 0.0
    %138 = vmatprep.subr.mxu0 0.0
    %139 = vmatpush1.msra.mxu0 0.0
    %140 = vmatprep.subr.mxu0 0.0
    %141 = vmatpush1.msra.mxu0 0.0
    %142 = vmatprep.subr.mxu0 0.0
    %143 = vmatpush1.msra.mxu0 0.0
    %144 = vmatprep.subr.mxu0 0.0
    %145 = vmatpush1.msra.mxu0 0.0
    %146 = vmatprep.subr.mxu0 0.0
    %147 = vmatpush1.msra.mxu0 0.0
    %148 = vmatprep.subr.mxu0 0.0
    %149 = vmatpush1.msra.mxu0 0.0
    %150 = vmatprep.subr.mxu0 0.0
    %151 = vmatpush1.msra.mxu0 0.0
    %152 = vmatprep.mubr.f32.mxu0 0.0
    %v153 = vand.u32 %v75, 4294901760
    %v154 = vsub.f32 %v75, %v153
    %v155 = vand.u32 %v154, 4294901760
    %v156 = vsub.f32 %v154, %v155
    %v157 = vand.u32 %v156, 4294901760
    %158 = vmatmul.mubr.f32.gmra.mrb[0].mxu0 %v157
    %v159 = vpop.f32.mrb[0].mxu0
    %v160 = vadd.f32 0.0, %v159
    %v161 = vpop.f32.mrb[0].mxu0
    %162 = vmatprep.mubr.f32.mxu0 0.0
    %v163 = vand.u32 %v78, 4294901760
    %v164 = vsub.f32 %v78, %v163
    %v165 = vand.u32 %v164, 4294901760
    %v166 = vsub.f32 %v164, %v165
    %v167 = vand.u32 %v166, 4294901760
    %168 = vmatmul.mubr.f32.gmra.mrb[0].mxu0 %v167
    %v169 = vpop.f32.mrb[0].mxu0
    %v170 = vadd.f32 0.0, %v169
    %v171 = vpop.f32.mrb[0].mxu0
    %172 = vdwg.mxu0
    %173 = vmatprep.subr.mxu0 0.0
    %v174 = vand.u32 %v65, 4294901760
    %v175 = vsub.f32 %v65, %v174
    %v176 = vand.u32 %v175, 4294901760
    %v177 = vsub.f32 %v175, %v176
    %v178 = vand.u32 %v177, 4294901760
    %179 = vmatpush1.msra.mxu0 %v178
    %180 = vmatprep.subr.mxu0 0.0
    %v181 = vand.u32 %v66, 4294901760
    %v182 = vsub.f32 %v66, %v181
    %v183 = vand.u32 %v182, 4294901760
    %v184 = vsub.f32 %v182, %v183
    %v185 = vand.u32 %v184, 4294901760
    %186 = vmatpush1.msra.mxu0 %v185
    %187 = vmatprep.subr.mxu0 0.0
    %v188 = vand.u32 %v67, 4294901760
    %v189 = vsub.f32 %v67, %v188
    %v190 = vand.u32 %v189, 4294901760
    %v191 = vsub.f32 %v189, %v190
    %v192 = vand.u32 %v191, 4294901760
    %193 = vmatpush1.msra.mxu0 %v192
    %194 = vmatprep.subr.mxu0 0.0
    %v195 = vand.u32 %v68, 4294901760
    %v196 = vsub.f32 %v68, %v195
    %v197 = vand.u32 %v196, 4294901760
    %v198 = vsub.f32 %v196, %v197
    %v199 = vand.u32 %v198, 4294901760
    %200 = vmatpush1.msra.mxu0 %v199
    %201 = vmatprep.subr.mxu0 0.0
    %v202 = vand.u32 %v69, 4294901760
    %v203 = vsub.f32 %v69, %v202
    %v204 = vand.u32 %v203, 4294901760
    %v205 = vsub.f32 %v203, %v204
    %v206 = vand.u32 %v205, 4294901760
    %207 = vmatpush1.msra.mxu0 %v206
    %208 = vmatprep.subr.mxu0 0.0
    %v209 = vand.u32 %v70, 4294901760
    %v210 = vsub.f32 %v70, %v209
    %v211 = vand.u32 %v210, 4294901760
    %v212 = vsub.f32 %v210, %v211
    %v213 = vand.u32 %v212, 4294901760
    %214 = vmatpush1.msra.mxu0 %v213
    %215 = vmatprep.subr.mxu0 0.0
    %v216 = vand.u32 %v71, 4294901760
    %v217 = vsub.f32 %v71, %v216
    %v218 = vand.u32 %v217, 4294901760
    %v219 = vsub.f32 %v217, %v218
    %v220 = vand.u32 %v219, 4294901760
    %221 = vmatpush1.msra.mxu0 %v220
    %222 = vmatprep.subr.mxu0 0.0
    %v223 = vand.u32 %v72, 4294901760
    %v224 = vsub.f32 %v72, %v223
    %v225 = vand.u32 %v224, 4294901760
    %v226 = vsub.f32 %v224, %v225
    %v227 = vand.u32 %v226, 4294901760
    %228 = vmatpush1.msra.mxu0 %v227
    %229 = vmatprep.subr.mxu0 0.0
    %230 = vmatpush1.msra.mxu0 0.0
    %231 = vmatprep.subr.mxu0 0.0
    %232 = vmatpush1.msra.mxu0 0.0
    %233 = vmatprep.subr.mxu0 0.0
    %234 = vmatpush1.msra.mxu0 0.0
    %235 = vmatprep.subr.mxu0 0.0
    %236 = vmatpush1.msra.mxu0 0.0
    %237 = vmatprep.subr.mxu0 0.0
    %238 = vmatpush1.msra.mxu0 0.0
    %239 = vmatprep.subr.mxu0 0.0
    %240 = vmatpush1.msra.mxu0 0.0
    %241 = vmatprep.subr.mxu0 0.0
    %242 = vmatpush1.msra.mxu0 0.0
    %243 = vmatprep.subr.mxu0 0.0
    %244 = vmatpush1.msra.mxu0 0.0
    %245 = vmatprep.subr.mxu0 0.0
    %246 = vmatpush1.msra.mxu0 0.0
    %247 = vmatprep.subr.mxu0 0.0
    %248 = vmatpush1.msra.mxu0 0.0
    %249 = vmatprep.subr.mxu0 0.0
    %250 = vmatpush1.msra.mxu0 0.0
    %251 = vmatprep.subr.mxu0 0.0
    %252 = vmatpush1.msra.mxu0 0.0
    %253 = vmatprep.subr.mxu0 0.0
    %254 = vmatpush1.msra.mxu0 0.0
    %255 = vmatprep.subr.mxu0 0.0
    %256 = vmatpush1.msra.mxu0 0.0
    %257 = vmatprep.subr.mxu0 0.0
    %258 = vmatpush1.msra.mxu0 0.0
    %259 = vmatprep.subr.mxu0 0.0
    %260 = vmatpush1.msra.mxu0 0.0
    %261 = vmatprep.subr.mxu0 0.0
    %262 = vmatpush1.msra.mxu0 0.0
    %263 = vmatprep.subr.mxu0 0.0
    %264 = vmatpush1.msra.mxu0 0.0
    %265 = vmatprep.subr.mxu0 0.0
    %266 = vmatpush1.msra.mxu0 0.0
    %267 = vmatprep.subr.mxu0 0.0
    %268 = vmatpush1.msra.mxu0 0.0
    %269 = vmatprep.subr.mxu0 0.0
    %270 = vmatpush1.msra.mxu0 0.0
    %271 = vmatprep.subr.mxu0 0.0
    %272 = vmatpush1.msra.mxu0 0.0
    %273 = vmatprep.subr.mxu0 0.0
    %274 = vmatpush1.msra.mxu0 0.0
    %275 = vmatprep.subr.mxu0 0.0
    %276 = vmatpush1.msra.mxu0 0.0
    %277 = vmatprep.mubr.f32.mxu0 0.0
    %v278 = vand.u32 %v75, 4294901760
    %279 = vmatmul.mubr.f32.gmra.mrb[0].mxu0 %v278
    %v280 = vpop.f32.mrb[0].mxu0
    %v281 = vadd.f32 %v160, %v280
    %v282 = vpop.f32.mrb[0].mxu0
    %283 = vmatprep.mubr.f32.mxu0 0.0
    %v284 = vand.u32 %v78, 4294901760
    %285 = vmatmul.mubr.f32.gmra.mrb[0].mxu0 %v284
    %v286 = vpop.f32.mrb[0].mxu0
    %v287 = vadd.f32 %v170, %v286
    %v288 = vpop.f32.mrb[0].mxu0
    %289 = vdwg.mxu0
    %290 = vmatprep.subr.mxu0 0.0
    %v291 = vand.u32 %v65, 4294901760
    %v292 = vsub.f32 %v65, %v291
    %293 = vmatpush1.msra.mxu0 %v292
    %294 = vmatprep.subr.mxu0 0.0
    %v295 = vand.u32 %v66, 4294901760
    %v296 = vsub.f32 %v66, %v295
    %297 = vmatpush1.msra.mxu0 %v296
    %298 = vmatprep.subr.mxu0 0.0
    %v299 = vand.u32 %v67, 4294901760
    %v300 = vsub.f32 %v67, %v299
    %301 = vmatpush1.msra.mxu0 %v300
    %302 = vmatprep.subr.mxu0 0.0
    %v303 = vand.u32 %v68, 4294901760
    %v304 = vsub.f32 %v68, %v303
    %305 = vmatpush1.msra.mxu0 %v304
    %306 = vmatprep.subr.mxu0 0.0
    %v307 = vand.u32 %v69, 4294901760
    %v308 = vsub.f32 %v69, %v307
    %309 = vmatpush1.msra.mxu0 %v308
    %310 = vmatprep.subr.mxu0 0.0
    %v311 = vand.u32 %v70, 4294901760
    %v312 = vsub.f32 %v70, %v311
    %313 = vmatpush1.msra.mxu0 %v312
    %314 = vmatprep.subr.mxu0 0.0
    %v315 = vand.u32 %v71, 4294901760
    %v316 = vsub.f32 %v71, %v315
    %317 = vmatpush1.msra.mxu0 %v316
    %318 = vmatprep.subr.mxu0 0.0
    %v319 = vand.u32 %v72, 4294901760
    %v320 = vsub.f32 %v72, %v319
    %321 = vmatpush1.msra.mxu0 %v320
    %322 = vmatprep.subr.mxu0 0.0
    %323 = vmatpush1.msra.mxu0 0.0
    %324 = vmatprep.subr.mxu0 0.0
    %325 = vmatpush1.msra.mxu0 0.0
    %326 = vmatprep.subr.mxu0 0.0
    %327 = vmatpush1.msra.mxu0 0.0
    %328 = vmatprep.subr.mxu0 0.0
    %329 = vmatpush1.msra.mxu0 0.0
    %330 = vmatprep.subr.mxu0 0.0
    %331 = vmatpush1.msra.mxu0 0.0
    %332 = vmatprep.subr.mxu0 0.0
    %333 = vmatpush1.msra.mxu0 0.0
    %334 = vmatprep.subr.mxu0 0.0
    %335 = vmatpush1.msra.mxu0 0.0
    %336 = vmatprep.subr.mxu0 0.0
    %337 = vmatpush1.msra.mxu0 0.0
    %338 = vmatprep.subr.mxu0 0.0
    %339 = vmatpush1.msra.mxu0 0.0
    %340 = vmatprep.subr.mxu0 0.0
    %341 = vmatpush1.msra.mxu0 0.0
    %342 = vmatprep.subr.mxu0 0.0
    %343 = vmatpush1.msra.mxu0 0.0
    %344 = vmatprep.subr.mxu0 0.0
    %345 = vmatpush1.msra.mxu0 0.0
    %346 = vmatprep.subr.mxu0 0.0
    %347 = vmatpush1.msra.mxu0 0.0
    %348 = vmatprep.subr.mxu0 0.0
    %349 = vmatpush1.msra.mxu0 0.0
    %350 = vmatprep.subr.mxu0 0.0
    %351 = vmatpush1.msra.mxu0 0.0
    %352 = vmatprep.subr.mxu0 0.0
    %353 = vmatpush1.msra.mxu0 0.0
    %354 = vmatprep.subr.mxu0 0.0
    %355 = vmatpush1.msra.mxu0 0.0
    %356 = vmatprep.subr.mxu0 0.0
    %357 = vmatpush1.msra.mxu0 0.0
    %358 = vmatprep.subr.mxu0 0.0
    %359 = vmatpush1.msra.mxu0 0.0
    %360 = vmatprep.subr.mxu0 0.0
    %361 = vmatpush1.msra.mxu0 0.0
    %362 = vmatprep.subr.mxu0 0.0
    %363 = vmatpush1.msra.mxu0 0.0
    %364 = vmatprep.subr.mxu0 0.0
    %365 = vmatpush1.msra.mxu0 0.0
    %366 = vmatprep.subr.mxu0 0.0
    %367 = vmatpush1.msra.mxu0 0.0
    %368 = vmatprep.subr.mxu0 0.0
    %369 = vmatpush1.msra.mxu0 0.0
    %370 = vmatprep.mubr.f32.mxu0 0.0
    %v371 = vand.u32 %v75, 4294901760
    %v372 = vsub.f32 %v75, %v371
    %373 = vmatmul.mubr.f32.gmra.mrb[0].mxu0 %v372
    %v374 = vpop.f32.mrb[0].mxu0
    %v375 = vadd.f32 %v281, %v374
    %v376 = vpop.f32.mrb[0].mxu0
    %377 = vmatprep.mubr.f32.mxu0 0.0
    %v378 = vand.u32 %v78, 4294901760
    %v379 = vsub.f32 %v78, %v378
    %380 = vmatmul.mubr.f32.gmra.mrb[0].mxu0 %v379
    %v381 = vpop.f32.mrb[0].mxu0
    %v382 = vadd.f32 %v287, %v381
    %v383 = vpop.f32.mrb[0].mxu0
    %384 = vdwg.mxu0
    %385 = vmatprep.subr.mxu0 0.0
    %v386 = vand.u32 %v65, 4294901760
    %387 = vmatpush1.msra.mxu0 %v386
    %388 = vmatprep.subr.mxu0 0.0
    %v389 = vand.u32 %v66, 4294901760
    %390 = vmatpush1.msra.mxu0 %v389
    %391 = vmatprep.subr.mxu0 0.0
    %v392 = vand.u32 %v67, 4294901760
    %393 = vmatpush1.msra.mxu0 %v392
    %394 = vmatprep.subr.mxu0 0.0
    %v395 = vand.u32 %v68, 4294901760
    %396 = vmatpush1.msra.mxu0 %v395
    %397 = vmatprep.subr.mxu0 0.0
    %v398 = vand.u32 %v69, 4294901760
    %399 = vmatpush1.msra.mxu0 %v398
    %400 = vmatprep.subr.mxu0 0.0
    %v401 = vand.u32 %v70, 4294901760
    %402 = vmatpush1.msra.mxu0 %v401
    %403 = vmatprep.subr.mxu0 0.0
    %v404 = vand.u32 %v71, 4294901760
    %405 = vmatpush1.msra.mxu0 %v404
    %406 = vmatprep.subr.mxu0 0.0
    %v407 = vand.u32 %v72, 4294901760
    %408 = vmatpush1.msra.mxu0 %v407
    %409 = vmatprep.subr.mxu0 0.0
    %410 = vmatpush1.msra.mxu0 0.0
    %411 = vmatprep.subr.mxu0 0.0
    %412 = vmatpush1.msra.mxu0 0.0
    %413 = vmatprep.subr.mxu0 0.0
    %414 = vmatpush1.msra.mxu0 0.0
    %415 = vmatprep.subr.mxu0 0.0
    %416 = vmatpush1.msra.mxu0 0.0
    %417 = vmatprep.subr.mxu0 0.0
    %418 = vmatpush1.msra.mxu0 0.0
    %419 = vmatprep.subr.mxu0 0.0
    %420 = vmatpush1.msra.mxu0 0.0
    %421 = vmatprep.subr.mxu0 0.0
    %422 = vmatpush1.msra.mxu0 0.0
    %423 = vmatprep.subr.mxu0 0.0
    %424 = vmatpush1.msra.mxu0 0.0
    %425 = vmatprep.subr.mxu0 0.0
    %426 = vmatpush1.msra.mxu0 0.0
    %427 = vmatprep.subr.mxu0 0.0
    %428 = vmatpush1.msra.mxu0 0.0
    %429 = vmatprep.subr.mxu0 0.0
    %430 = vmatpush1.msra.mxu0 0.0
    %431 = vmatprep.subr.mxu0 0.0
    %432 = vmatpush1.msra.mxu0 0.0
    %433 = vmatprep.subr.mxu0 0.0
    %434 = vmatpush1.msra.mxu0 0.0
    %435 = vmatprep.subr.mxu0 0.0
    %436 = vmatpush1.msra.mxu0 0.0
    %437 = vmatprep.subr.mxu0 0.0
    %438 = vmatpush1.msra.mxu0 0.0
    %439 = vmatprep.subr.mxu0 0.0
    %440 = vmatpush1.msra.mxu0 0.0
    %441 = vmatprep.subr.mxu0 0.0
    %442 = vmatpush1.msra.mxu0 0.0
    %443 = vmatprep.subr.mxu0 0.0
    %444 = vmatpush1.msra.mxu0 0.0
    %445 = vmatprep.subr.mxu0 0.0
    %446 = vmatpush1.msra.mxu0 0.0
    %447 = vmatprep.subr.mxu0 0.0
    %448 = vmatpush1.msra.mxu0 0.0
    %449 = vmatprep.subr.mxu0 0.0
    %450 = vmatpush1.msra.mxu0 0.0
    %451 = vmatprep.subr.mxu0 0.0
    %452 = vmatpush1.msra.mxu0 0.0
    %453 = vmatprep.subr.mxu0 0.0
    %454 = vmatpush1.msra.mxu0 0.0
    %455 = vmatprep.subr.mxu0 0.0
    %456 = vmatpush1.msra.mxu0 0.0
    %457 = vmatprep.mubr.f32.mxu0 0.0
    %v458 = vand.u32 %v75, 4294901760
    %v459 = vsub.f32 %v75, %v458
    %v460 = vand.u32 %v459, 4294901760
    %461 = vmatmul.mubr.f32.gmra.mrb[0].mxu0 %v460
    %v462 = vpop.f32.mrb[0].mxu0
    %v463 = vadd.f32 %v375, %v462
    %v464 = vpop.f32.mrb[0].mxu0
    %465 = vmatprep.mubr.f32.mxu0 0.0
    %v466 = vand.u32 %v78, 4294901760
    %v467 = vsub.f32 %v78, %v466
    %v468 = vand.u32 %v467, 4294901760
    %469 = vmatmul.mubr.f32.gmra.mrb[0].mxu0 %v468
    %v470 = vpop.f32.mrb[0].mxu0
    %v471 = vadd.f32 %v382, %v470
    %v472 = vpop.f32.mrb[0].mxu0
    %473 = vdwg.mxu0
    %474 = vmatprep.subr.mxu0 0.0
    %v475 = vand.u32 %v65, 4294901760
    %v476 = vsub.f32 %v65, %v475
    %v477 = vand.u32 %v476, 4294901760
    %478 = vmatpush1.msra.mxu0 %v477
    %479 = vmatprep.subr.mxu0 0.0
    %v480 = vand.u32 %v66, 4294901760
    %v481 = vsub.f32 %v66, %v480
    %v482 = vand.u32 %v481, 4294901760
    %483 = vmatpush1.msra.mxu0 %v482
    %484 = vmatprep.subr.mxu0 0.0
    %v485 = vand.u32 %v67, 4294901760
    %v486 = vsub.f32 %v67, %v485
    %v487 = vand.u32 %v486, 4294901760
    %488 = vmatpush1.msra.mxu0 %v487
    %489 = vmatprep.subr.mxu0 0.0
    %v490 = vand.u32 %v68, 4294901760
    %v491 = vsub.f32 %v68, %v490
    %v492 = vand.u32 %v491, 4294901760
    %493 = vmatpush1.msra.mxu0 %v492
    %494 = vmatprep.subr.mxu0 0.0
    %v495 = vand.u32 %v69, 4294901760
    %v496 = vsub.f32 %v69, %v495
    %v497 = vand.u32 %v496, 4294901760
    %498 = vmatpush1.msra.mxu0 %v497
    %499 = vmatprep.subr.mxu0 0.0
    %v500 = vand.u32 %v70, 4294901760
    %v501 = vsub.f32 %v70, %v500
    %v502 = vand.u32 %v501, 4294901760
    %503 = vmatpush1.msra.mxu0 %v502
    %504 = vmatprep.subr.mxu0 0.0
    %v505 = vand.u32 %v71, 4294901760
    %v506 = vsub.f32 %v71, %v505
    %v507 = vand.u32 %v506, 4294901760
    %508 = vmatpush1.msra.mxu0 %v507
    %509 = vmatprep.subr.mxu0 0.0
    %v510 = vand.u32 %v72, 4294901760
    %v511 = vsub.f32 %v72, %v510
    %v512 = vand.u32 %v511, 4294901760
    %513 = vmatpush1.msra.mxu0 %v512
    %514 = vmatprep.subr.mxu0 0.0
    %515 = vmatpush1.msra.mxu0 0.0
    %516 = vmatprep.subr.mxu0 0.0
    %517 = vmatpush1.msra.mxu0 0.0
    %518 = vmatprep.subr.mxu0 0.0
    %519 = vmatpush1.msra.mxu0 0.0
    %520 = vmatprep.subr.mxu0 0.0
    %521 = vmatpush1.msra.mxu0 0.0
    %522 = vmatprep.subr.mxu0 0.0
    %523 = vmatpush1.msra.mxu0 0.0
    %524 = vmatprep.subr.mxu0 0.0
    %525 = vmatpush1.msra.mxu0 0.0
    %526 = vmatprep.subr.mxu0 0.0
    %527 = vmatpush1.msra.mxu0 0.0
    %528 = vmatprep.subr.mxu0 0.0
    %529 = vmatpush1.msra.mxu0 0.0
    %530 = vmatprep.subr.mxu0 0.0
    %531 = vmatpush1.msra.mxu0 0.0
    %532 = vmatprep.subr.mxu0 0.0
    %533 = vmatpush1.msra.mxu0 0.0
    %534 = vmatprep.subr.mxu0 0.0
    %535 = vmatpush1.msra.mxu0 0.0
    %536 = vmatprep.subr.mxu0 0.0
    %537 = vmatpush1.msra.mxu0 0.0
    %538 = vmatprep.subr.mxu0 0.0
    %539 = vmatpush1.msra.mxu0 0.0
    %540 = vmatprep.subr.mxu0 0.0
    %541 = vmatpush1.msra.mxu0 0.0
    %542 = vmatprep.subr.mxu0 0.0
    %543 = vmatpush1.msra.mxu0 0.0
    %544 = vmatprep.subr.mxu0 0.0
    %545 = vmatpush1.msra.mxu0 0.0
    %546 = vmatprep.subr.mxu0 0.0
    %547 = vmatpush1.msra.mxu0 0.0
    %548 = vmatprep.subr.mxu0 0.0
    %549 = vmatpush1.msra.mxu0 0.0
    %550 = vmatprep.subr.mxu0 0.0
    %551 = vmatpush1.msra.mxu0 0.0
    %552 = vmatprep.subr.mxu0 0.0
    %553 = vmatpush1.msra.mxu0 0.0
    %554 = vmatprep.subr.mxu0 0.0
    %555 = vmatpush1.msra.mxu0 0.0
    %556 = vmatprep.subr.mxu0 0.0
    %557 = vmatpush1.msra.mxu0 0.0
    %558 = vmatprep.subr.mxu0 0.0
    %559 = vmatpush1.msra.mxu0 0.0
    %560 = vmatprep.subr.mxu0 0.0
    %561 = vmatpush1.msra.mxu0 0.0
    %562 = vmatprep.mubr.f32.mxu0 0.0
    %v563 = vand.u32 %v75, 4294901760
    %564 = vmatmul.mubr.f32.gmra.mrb[0].mxu0 %v563
    %v565 = vpop.f32.mrb[0].mxu0
    %v566 = vadd.f32 %v463, %v565
    %v567 = vpop.f32.mrb[0].mxu0
    %568 = vmatprep.mubr.f32.mxu0 0.0
    %v569 = vand.u32 %v78, 4294901760
    %570 = vmatmul.mubr.f32.gmra.mrb[0].mxu0 %v569
    %v571 = vpop.f32.mrb[0].mxu0
    %v572 = vadd.f32 %v471, %v571
    %v573 = vpop.f32.mrb[0].mxu0
    %574 = vdwg.mxu0
    %575 = vmatprep.subr.mxu0 0.0
    %v576 = vand.u32 %v65, 4294901760
    %577 = vmatpush1.msra.mxu0 %v576
    %578 = vmatprep.subr.mxu0 0.0
    %v579 = vand.u32 %v66, 4294901760
    %580 = vmatpush1.msra.mxu0 %v579
    %581 = vmatprep.subr.mxu0 0.0
    %v582 = vand.u32 %v67, 4294901760
    %583 = vmatpush1.msra.mxu0 %v582
    %584 = vmatprep.subr.mxu0 0.0
    %v585 = vand.u32 %v68, 4294901760
    %586 = vmatpush1.msra.mxu0 %v585
    %587 = vmatprep.subr.mxu0 0.0
    %v588 = vand.u32 %v69, 4294901760
    %589 = vmatpush1.msra.mxu0 %v588
    %590 = vmatprep.subr.mxu0 0.0
    %v591 = vand.u32 %v70, 4294901760
    %592 = vmatpush1.msra.mxu0 %v591
    %593 = vmatprep.subr.mxu0 0.0
    %v594 = vand.u32 %v71, 4294901760
    %595 = vmatpush1.msra.mxu0 %v594
    %596 = vmatprep.subr.mxu0 0.0
    %v597 = vand.u32 %v72, 4294901760
    %598 = vmatpush1.msra.mxu0 %v597
    %599 = vmatprep.subr.mxu0 0.0
    %600 = vmatpush1.msra.mxu0 0.0
    %601 = vmatprep.subr.mxu0 0.0
    %602 = vmatpush1.msra.mxu0 0.0
    %603 = vmatprep.subr.mxu0 0.0
    %604 = vmatpush1.msra.mxu0 0.0
    %605 = vmatprep.subr.mxu0 0.0
    %606 = vmatpush1.msra.mxu0 0.0
    %607 = vmatprep.subr.mxu0 0.0
    %608 = vmatpush1.msra.mxu0 0.0
    %609 = vmatprep.subr.mxu0 0.0
    %610 = vmatpush1.msra.mxu0 0.0
    %611 = vmatprep.subr.mxu0 0.0
    %612 = vmatpush1.msra.mxu0 0.0
    %613 = vmatprep.subr.mxu0 0.0
    %614 = vmatpush1.msra.mxu0 0.0
    %615 = vmatprep.subr.mxu0 0.0
    %616 = vmatpush1.msra.mxu0 0.0
    %617 = vmatprep.subr.mxu0 0.0
    %618 = vmatpush1.msra.mxu0 0.0
    %619 = vmatprep.subr.mxu0 0.0
    %620 = vmatpush1.msra.mxu0 0.0
    %621 = vmatprep.subr.mxu0 0.0
    %622 = vmatpush1.msra.mxu0 0.0
    %623 = vmatprep.subr.mxu0 0.0
    %624 = vmatpush1.msra.mxu0 0.0
    %625 = vmatprep.subr.mxu0 0.0
    %626 = vmatpush1.msra.mxu0 0.0
    %627 = vmatprep.subr.mxu0 0.0
    %628 = vmatpush1.msra.mxu0 0.0
    %629 = vmatprep.subr.mxu0 0.0
    %630 = vmatpush1.msra.mxu0 0.0
    %631 = vmatprep.subr.mxu0 0.0
    %632 = vmatpush1.msra.mxu0 0.0
    %633 = vmatprep.subr.mxu0 0.0
    %634 = vmatpush1.msra.mxu0 0.0
    %635 = vmatprep.subr.mxu0 0.0
    %636 = vmatpush1.msra.mxu0 0.0
    %637 = vmatprep.subr.mxu0 0.0
    %638 = vmatpush1.msra.mxu0 0.0
    %639 = vmatprep.subr.mxu0 0.0
    %640 = vmatpush1.msra.mxu0 0.0
    %641 = vmatprep.subr.mxu0 0.0
    %642 = vmatpush1.msra.mxu0 0.0
    %643 = vmatprep.subr.mxu0 0.0
    %644 = vmatpush1.msra.mxu0 0.0
    %645 = vmatprep.subr.mxu0 0.0
    %646 = vmatpush1.msra.mxu0 0.0
    %647 = vmatprep.mubr.f32.mxu0 0.0
    %v648 = vand.u32 %v75, 4294901760
    %649 = vmatmul.mubr.f32.gmra.mrb[0].mxu0 %v648
    %v650 = vpop.f32.mrb[0].mxu0
    %v651 = vadd.f32 %v566, %v650
    %v652 = vpop.f32.mrb[0].mxu0
    %653 = vmatprep.mubr.f32.mxu0 0.0
    %v654 = vand.u32 %v78, 4294901760
    %655 = vmatmul.mubr.f32.gmra.mrb[0].mxu0 %v654
    %v656 = vpop.f32.mrb[0].mxu0
    %v657 = vadd.f32 %v572, %v656
    %v658 = vpop.f32.mrb[0].mxu0
    %659 = vdwg.mxu0
    %v660 = vld [vmem:[%s3] sm:$0x3]
    %s661 = scalar_lea.vmem %s3, 2
    %v662 = vld [vmem:[%s661] sm:$0x3]
    %s663 = scalar_lea.vmem %s3, 4
    %v664 = vld [vmem:[%s663] sm:$0x3]
    %s665 = scalar_lea.vmem %s3, 6
    %v666 = vld [vmem:[%s665] sm:$0x3]
    %668 = vrot.lane.b32.xlu0 %v662, 32
    %v669 = vpop.permute.xlu0 %668
    %vm671 = vcmask 261120
    %v672 = vsel %vm671, %v660, %v669
    %v673 = vld [vmem:[#allocation6] sm:$0xff]
    %v674 = vld [vmem:[#allocation6 + $0x8] sm:$0xff]
    %v675 = vld [vmem:[#allocation6 + $0x10] sm:$0xff]
    %v676 = vld [vmem:[#allocation6 + $0x18] sm:$0xff]
    %v677 = vld [vmem:[#allocation6 + $0x20] sm:$0xff]
    %v678 = vld [vmem:[#allocation6 + $0x28] sm:$0xff]
    %v679 = vld [vmem:[#allocation6 + $0x30] sm:$0xff]
    %v680 = vld [vmem:[#allocation6 + $0x38] sm:$0xff]
    %v681 = vld [vmem:[#allocation6 + $0x40] sm:$0xff]
    %v682 = vld [vmem:[#allocation6 + $0x48] sm:$0xff]
    %v683 = vld [vmem:[#allocation6 + $0x50] sm:$0xff]
    %v684 = vld [vmem:[#allocation6 + $0x58] sm:$0xff]
    %v685 = vld [vmem:[#allocation6 + $0x60] sm:$0xff]
    %v686 = vld [vmem:[#allocation6 + $0x68] sm:$0xff]
    %v687 = vld [vmem:[#allocation6 + $0x70] sm:$0xff]
    %v688 = vld [vmem:[#allocation6 + $0x78] sm:$0xff]
    %v690 = vsel %vm73, %v672, 0
    %v692 = vand.u32 %v674, 4294901760
    %693 = vmatprep.subr.mxu0 %v692
    %v694 = vand.u32 %v673, 4294901760
    %695 = vmatpush1.msra.mxu0 %v694
    %v696 = vand.u32 %v676, 4294901760
    %697 = vmatprep.subr.mxu0 %v696
    %v698 = vand.u32 %v675, 4294901760
    %699 = vmatpush1.msra.mxu0 %v698
    %v700 = vand.u32 %v678, 4294901760
    %701 = vmatprep.subr.mxu0 %v700
    %v702 = vand.u32 %v677, 4294901760
    %703 = vmatpush1.msra.mxu0 %v702
    %v704 = vand.u32 %v680, 4294901760
    %705 = vmatprep.subr.mxu0 %v704
    %v706 = vand.u32 %v679, 4294901760
    %707 = vmatpush1.msra.mxu0 %v706
    %v708 = vand.u32 %v682, 4294901760
    %709 = vmatprep.subr.mxu0 %v708
    %v710 = vand.u32 %v681, 4294901760
    %711 = vmatpush1.msra.mxu0 %v710
    %v712 = vand.u32 %v684, 4294901760
    %713 = vmatprep.subr.mxu0 %v712
    %v714 = vand.u32 %v683, 4294901760
    %715 = vmatpush1.msra.mxu0 %v714
    %v716 = vand.u32 %v686, 4294901760
    %717 = vmatprep.subr.mxu0 %v716
    %v718 = vand.u32 %v685, 4294901760
    %719 = vmatpush1.msra.mxu0 %v718
    %v720 = vand.u32 %v688, 4294901760
    %721 = vmatprep.subr.mxu0 %v720
    %v722 = vand.u32 %v687, 4294901760
    %723 = vmatpush1.msra.mxu0 %v722
    %724 = vmatprep.subr.mxu0 0.0
    %725 = vmatpush1.msra.mxu0 0.0
    %726 = vmatprep.subr.mxu0 0.0
    %727 = vmatpush1.msra.mxu0 0.0
    %728 = vmatprep.subr.mxu0 0.0
    %729 = vmatpush1.msra.mxu0 0.0
    %730 = vmatprep.subr.mxu0 0.0
    %731 = vmatpush1.msra.mxu0 0.0
    %732 = vmatprep.subr.mxu0 0.0
    %733 = vmatpush1.msra.mxu0 0.0
    %734 = vmatprep.subr.mxu0 0.0
    %735 = vmatpush1.msra.mxu0 0.0
    %736 = vmatprep.subr.mxu0 0.0
    %737 = vmatpush1.msra.mxu0 0.0
    %738 = vmatprep.subr.mxu0 0.0
    %739 = vmatpush1.msra.mxu0 0.0
    %740 = vmatprep.subr.mxu0 0.0
    %741 = vmatpush1.msra.mxu0 0.0
    %742 = vmatprep.subr.mxu0 0.0
    %743 = vmatpush1.msra.mxu0 0.0
    %744 = vmatprep.subr.mxu0 0.0
    %745 = vmatpush1.msra.mxu0 0.0
    %746 = vmatprep.subr.mxu0 0.0
    %747 = vmatpush1.msra.mxu0 0.0
    %748 = vmatprep.subr.mxu0 0.0
    %749 = vmatpush1.msra.mxu0 0.0
    %750 = vmatprep.subr.mxu0 0.0
    %751 = vmatpush1.msra.mxu0 0.0
    %752 = vmatprep.subr.mxu0 0.0
    %753 = vmatpush1.msra.mxu0 0.0
    %754 = vmatprep.subr.mxu0 0.0
    %755 = vmatpush1.msra.mxu0 0.0
    %756 = vmatprep.subr.mxu0 0.0
    %757 = vmatpush1.msra.mxu0 0.0
    %758 = vmatprep.subr.mxu0 0.0
    %759 = vmatpush1.msra.mxu0 0.0
    %760 = vmatprep.subr.mxu0 0.0
    %761 = vmatpush1.msra.mxu0 0.0
    %762 = vmatprep.subr.mxu0 0.0
    %763 = vmatpush1.msra.mxu0 0.0
    %764 = vmatprep.subr.mxu0 0.0
    %765 = vmatpush1.msra.mxu0 0.0
    %766 = vmatprep.subr.mxu0 0.0
    %767 = vmatpush1.msra.mxu0 0.0
    %768 = vmatprep.subr.mxu0 0.0
    %769 = vmatpush1.msra.mxu0 0.0
    %770 = vmatprep.subr.mxu0 0.0
    %771 = vmatpush1.msra.mxu0 0.0
    %772 = vmatprep.mubr.f32.mxu0 0.0
    %v773 = vand.u32 %v690, 4294901760
    %v774 = vsub.f32 %v690, %v773
    %v775 = vand.u32 %v774, 4294901760
    %v776 = vsub.f32 %v774, %v775
    %v777 = vand.u32 %v776, 4294901760
    %778 = vmatmul.mubr.f32.gmra.mrb[0].mxu0 %v777
    %v779 = vpop.f32.mrb[0].mxu0
    %v780 = vadd.f32 0.0, %v779
    %v781 = vpop.f32.mrb[0].mxu0
    %v782 = vadd.f32 0.0, %v781
    %783 = vdwg.mxu0
    %v784 = vand.u32 %v674, 4294901760
    %v785 = vsub.f32 %v674, %v784
    %v786 = vand.u32 %v785, 4294901760
    %v787 = vsub.f32 %v785, %v786
    %v788 = vand.u32 %v787, 4294901760
    %789 = vmatprep.subr.mxu0 %v788
    %v790 = vand.u32 %v673, 4294901760
    %v791 = vsub.f32 %v673, %v790
    %v792 = vand.u32 %v791, 4294901760
    %v793 = vsub.f32 %v791, %v792
    %v794 = vand.u32 %v793, 4294901760
    %795 = vmatpush1.msra.mxu0 %v794
    %v796 = vand.u32 %v676, 4294901760
    %v797 = vsub.f32 %v676, %v796
    %v798 = vand.u32 %v797, 4294901760
    %v799 = vsub.f32 %v797, %v798
    %v800 = vand.u32 %v799, 4294901760
    %801 = vmatprep.subr.mxu0 %v800
    %v802 = vand.u32 %v675, 4294901760
    %v803 = vsub.f32 %v675, %v802
    %v804 = vand.u32 %v803, 4294901760
    %v805 = vsub.f32 %v803, %v804
    %v806 = vand.u32 %v805, 4294901760
    %807 = vmatpush1.msra.mxu0 %v806
    %v808 = vand.u32 %v678, 4294901760
    %v809 = vsub.f32 %v678, %v808
    %v810 = vand.u32 %v809, 4294901760
    %v811 = vsub.f32 %v809, %v810
    %v812 = vand.u32 %v811, 4294901760
    %813 = vmatprep.subr.mxu0 %v812
    %v814 = vand.u32 %v677, 4294901760
    %v815 = vsub.f32 %v677, %v814
    %v816 = vand.u32 %v815, 4294901760
    %v817 = vsub.f32 %v815, %v816
    %v818 = vand.u32 %v817, 4294901760
    %819 = vmatpush1.msra.mxu0 %v818
    %v820 = vand.u32 %v680, 4294901760
    %v821 = vsub.f32 %v680, %v820
    %v822 = vand.u32 %v821, 4294901760
    %v823 = vsub.f32 %v821, %v822
    %v824 = vand.u32 %v823, 4294901760
    %825 = vmatprep.subr.mxu0 %v824
    %v826 = vand.u32 %v679, 4294901760
    %v827 = vsub.f32 %v679, %v826
    %v828 = vand.u32 %v827, 4294901760
    %v829 = vsub.f32 %v827, %v828
    %v830 = vand.u32 %v829, 4294901760
    %831 = vmatpush1.msra.mxu0 %v830
    %v832 = vand.u32 %v682, 4294901760
    %v833 = vsub.f32 %v682, %v832
    %v834 = vand.u32 %v833, 4294901760
    %v835 = vsub.f32 %v833, %v834
    %v836 = vand.u32 %v835, 4294901760
    %837 = vmatprep.subr.mxu0 %v836
    %v838 = vand.u32 %v681, 4294901760
    %v839 = vsub.f32 %v681, %v838
    %v840 = vand.u32 %v839, 4294901760
    %v841 = vsub.f32 %v839, %v840
    %v842 = vand.u32 %v841, 4294901760
    %843 = vmatpush1.msra.mxu0 %v842
    %v844 = vand.u32 %v684, 4294901760
    %v845 = vsub.f32 %v684, %v844
    %v846 = vand.u32 %v845, 4294901760
    %v847 = vsub.f32 %v845, %v846
    %v848 = vand.u32 %v847, 4294901760
    %849 = vmatprep.subr.mxu0 %v848
    %v850 = vand.u32 %v683, 4294901760
    %v851 = vsub.f32 %v683, %v850
    %v852 = vand.u32 %v851, 4294901760
    %v853 = vsub.f32 %v851, %v852
    %v854 = vand.u32 %v853, 4294901760
    %855 = vmatpush1.msra.mxu0 %v854
    %v856 = vand.u32 %v686, 4294901760
    %v857 = vsub.f32 %v686, %v856
    %v858 = vand.u32 %v857, 4294901760
    %v859 = vsub.f32 %v857, %v858
    %v860 = vand.u32 %v859, 4294901760
    %861 = vmatprep.subr.mxu0 %v860
    %v862 = vand.u32 %v685, 4294901760
    %v863 = vsub.f32 %v685, %v862
    %v864 = vand.u32 %v863, 4294901760
    %v865 = vsub.f32 %v863, %v864
    %v866 = vand.u32 %v865, 4294901760
    %867 = vmatpush1.msra.mxu0 %v866
    %v868 = vand.u32 %v688, 4294901760
    %v869 = vsub.f32 %v688, %v868
    %v870 = vand.u32 %v869, 4294901760
    %v871 = vsub.f32 %v869, %v870
    %v872 = vand.u32 %v871, 4294901760
    %873 = vmatprep.subr.mxu0 %v872
    %v874 = vand.u32 %v687, 4294901760
    %v875 = vsub.f32 %v687, %v874
    %v876 = vand.u32 %v875, 4294901760
    %v877 = vsub.f32 %v875, %v876
    %v878 = vand.u32 %v877, 4294901760
    %879 = vmatpush1.msra.mxu0 %v878
    %880 = vmatprep.subr.mxu0 0.0
    %881 = vmatpush1.msra.mxu0 0.0
    %882 = vmatprep.subr.mxu0 0.0
    %883 = vmatpush1.msra.mxu0 0.0
    %884 = vmatprep.subr.mxu0 0.0
    %885 = vmatpush1.msra.mxu0 0.0
    %886 = vmatprep.subr.mxu0 0.0
    %887 = vmatpush1.msra.mxu0 0.0
    %888 = vmatprep.subr.mxu0 0.0
    %889 = vmatpush1.msra.mxu0 0.0
    %890 = vmatprep.subr.mxu0 0.0
    %891 = vmatpush1.msra.mxu0 0.0
    %892 = vmatprep.subr.mxu0 0.0
    %893 = vmatpush1.msra.mxu0 0.0
    %894 = vmatprep.subr.mxu0 0.0
    %895 = vmatpush1.msra.mxu0 0.0
    %896 = vmatprep.subr.mxu0 0.0
    %897 = vmatpush1.msra.mxu0 0.0
    %898 = vmatprep.subr.mxu0 0.0
    %899 = vmatpush1.msra.mxu0 0.0
    %900 = vmatprep.subr.mxu0 0.0
    %901 = vmatpush1.msra.mxu0 0.0
    %902 = vmatprep.subr.mxu0 0.0
    %903 = vmatpush1.msra.mxu0 0.0
    %904 = vmatprep.subr.mxu0 0.0
    %905 = vmatpush1.msra.mxu0 0.0
    %906 = vmatprep.subr.mxu0 0.0
    %907 = vmatpush1.msra.mxu0 0.0
    %908 = vmatprep.subr.mxu0 0.0
    %909 = vmatpush1.msra.mxu0 0.0
    %910 = vmatprep.subr.mxu0 0.0
    %911 = vmatpush1.msra.mxu0 0.0
    %912 = vmatprep.subr.mxu0 0.0
    %913 = vmatpush1.msra.mxu0 0.0
    %914 = vmatprep.subr.mxu0 0.0
    %915 = vmatpush1.msra.mxu0 0.0
    %916 = vmatprep.subr.mxu0 0.0
    %917 = vmatpush1.msra.mxu0 0.0
    %918 = vmatprep.subr.mxu0 0.0
    %919 = vmatpush1.msra.mxu0 0.0
    %920 = vmatprep.subr.mxu0 0.0
    %921 = vmatpush1.msra.mxu0 0.0
    %922 = vmatprep.subr.mxu0 0.0
    %923 = vmatpush1.msra.mxu0 0.0
    %924 = vmatprep.subr.mxu0 0.0
    %925 = vmatpush1.msra.mxu0 0.0
    %926 = vmatprep.subr.mxu0 0.0
    %927 = vmatpush1.msra.mxu0 0.0
    %928 = vmatprep.mubr.f32.mxu0 0.0
    %v929 = vand.u32 %v690, 4294901760
    %930 = vmatmul.mubr.f32.gmra.mrb[0].mxu0 %v929
    %v931 = vpop.f32.mrb[0].mxu0
    %v932 = vadd.f32 %v780, %v931
    %v933 = vpop.f32.mrb[0].mxu0
    %v934 = vadd.f32 %v782, %v933
    %935 = vdwg.mxu0
    %v936 = vand.u32 %v674, 4294901760
    %v937 = vsub.f32 %v674, %v936
    %938 = vmatprep.subr.mxu0 %v937
    %v939 = vand.u32 %v673, 4294901760
    %v940 = vsub.f32 %v673, %v939
    %941 = vmatpush1.msra.mxu0 %v940
    %v942 = vand.u32 %v676, 4294901760
    %v943 = vsub.f32 %v676, %v942
    %944 = vmatprep.subr.mxu0 %v943
    %v945 = vand.u32 %v675, 4294901760
    %v946 = vsub.f32 %v675, %v945
    %947 = vmatpush1.msra.mxu0 %v946
    %v948 = vand.u32 %v678, 4294901760
    %v949 = vsub.f32 %v678, %v948
    %950 = vmatprep.subr.mxu0 %v949
    %v951 = vand.u32 %v677, 4294901760
    %v952 = vsub.f32 %v677, %v951
    %953 = vmatpush1.msra.mxu0 %v952
    %v954 = vand.u32 %v680, 4294901760
    %v955 = vsub.f32 %v680, %v954
    %956 = vmatprep.subr.mxu0 %v955
    %v957 = vand.u32 %v679, 4294901760
    %v958 = vsub.f32 %v679, %v957
    %959 = vmatpush1.msra.mxu0 %v958
    %v960 = vand.u32 %v682, 4294901760
    %v961 = vsub.f32 %v682, %v960
    %962 = vmatprep.subr.mxu0 %v961
    %v963 = vand.u32 %v681, 4294901760
    %v964 = vsub.f32 %v681, %v963
    %965 = vmatpush1.msra.mxu0 %v964
    %v966 = vand.u32 %v684, 4294901760
    %v967 = vsub.f32 %v684, %v966
    %968 = vmatprep.subr.mxu0 %v967
    %v969 = vand.u32 %v683, 4294901760
    %v970 = vsub.f32 %v683, %v969
    %971 = vmatpush1.msra.mxu0 %v970
    %v972 = vand.u32 %v686, 4294901760
    %v973 = vsub.f32 %v686, %v972
    %974 = vmatprep.subr.mxu0 %v973
    %v975 = vand.u32 %v685, 4294901760
    %v976 = vsub.f32 %v685, %v975
    %977 = vmatpush1.msra.mxu0 %v976
    %v978 = vand.u32 %v688, 4294901760
    %v979 = vsub.f32 %v688, %v978
    %980 = vmatprep.subr.mxu0 %v979
    %v981 = vand.u32 %v687, 4294901760
    %v982 = vsub.f32 %v687, %v981
    %983 = vmatpush1.msra.mxu0 %v982
    %984 = vmatprep.subr.mxu0 0.0
    %985 = vmatpush1.msra.mxu0 0.0
    %986 = vmatprep.subr.mxu0 0.0
    %987 = vmatpush1.msra.mxu0 0.0
    %988 = vmatprep.subr.mxu0 0.0
    %989 = vmatpush1.msra.mxu0 0.0
    %990 = vmatprep.subr.mxu0 0.0
    %991 = vmatpush1.msra.mxu0 0.0
    %992 = vmatprep.subr.mxu0 0.0
    %993 = vmatpush1.msra.mxu0 0.0
    %994 = vmatprep.subr.mxu0 0.0
    %995 = vmatpush1.msra.mxu0 0.0
    %996 = vmatprep.subr.mxu0 0.0
    %997 = vmatpush1.msra.mxu0 0.0
    %998 = vmatprep.subr.mxu0 0.0
    %999 = vmatpush1.msra.mxu0 0.0
    %1000 = vmatprep.subr.mxu0 0.0
    %1001 = vmatpush1.msra.mxu0 0.0
    %1002 = vmatprep.subr.mxu0 0.0
    %1003 = vmatpush1.msra.mxu0 0.0
    %1004 = vmatprep.subr.mxu0 0.0
    %1005 = vmatpush1.msra.mxu0 0.0
    %1006 = vmatprep.subr.mxu0 0.0
    %1007 = vmatpush1.msra.mxu0 0.0
    %1008 = vmatprep.subr.mxu0 0.0
    %1009 = vmatpush1.msra.mxu0 0.0
    %1010 = vmatprep.subr.mxu0 0.0
    %1011 = vmatpush1.msra.mxu0 0.0
    %1012 = vmatprep.subr.mxu0 0.0
    %1013 = vmatpush1.msra.mxu0 0.0
    %1014 = vmatprep.subr.mxu0 0.0
    %1015 = vmatpush1.msra.mxu0 0.0
    %1016 = vmatprep.subr.mxu0 0.0
    %1017 = vmatpush1.msra.mxu0 0.0
    %1018 = vmatprep.subr.mxu0 0.0
    %1019 = vmatpush1.msra.mxu0 0.0
    %1020 = vmatprep.subr.mxu0 0.0
    %1021 = vmatpush1.msra.mxu0 0.0
    %1022 = vmatprep.subr.mxu0 0.0
    %1023 = vmatpush1.msra.mxu0 0.0
    %1024 = vmatprep.subr.mxu0 0.0
    %1025 = vmatpush1.msra.mxu0 0.0
    %1026 = vmatprep.subr.mxu0 0.0
    %1027 = vmatpush1.msra.mxu0 0.0
    %1028 = vmatprep.subr.mxu0 0.0
    %1029 = vmatpush1.msra.mxu0 0.0
    %1030 = vmatprep.subr.mxu0 0.0
    %1031 = vmatpush1.msra.mxu0 0.0
    %1032 = vmatprep.mubr.f32.mxu0 0.0
    %v1033 = vand.u32 %v690, 4294901760
    %v1034 = vsub.f32 %v690, %v1033
    %1035 = vmatmul.mubr.f32.gmra.mrb[0].mxu0 %v1034
    %v1036 = vpop.f32.mrb[0].mxu0
    %v1037 = vadd.f32 %v932, %v1036
    %v1038 = vpop.f32.mrb[0].mxu0
    %v1039 = vadd.f32 %v934, %v1038
    %1040 = vdwg.mxu0
    %v1041 = vand.u32 %v674, 4294901760
    %1042 = vmatprep.subr.mxu0 %v1041
    %v1043 = vand.u32 %v673, 4294901760
    %1044 = vmatpush1.msra.mxu0 %v1043
    %v1045 = vand.u32 %v676, 4294901760
    %1046 = vmatprep.subr.mxu0 %v1045
    %v1047 = vand.u32 %v675, 4294901760
    %1048 = vmatpush1.msra.mxu0 %v1047
    %v1049 = vand.u32 %v678, 4294901760
    %1050 = vmatprep.subr.mxu0 %v1049
    %v1051 = vand.u32 %v677, 4294901760
    %1052 = vmatpush1.msra.mxu0 %v1051
    %v1053 = vand.u32 %v680, 4294901760
    %1054 = vmatprep.subr.mxu0 %v1053
    %v1055 = vand.u32 %v679, 4294901760
    %1056 = vmatpush1.msra.mxu0 %v1055
    %v1057 = vand.u32 %v682, 4294901760
    %1058 = vmatprep.subr.mxu0 %v1057
    %v1059 = vand.u32 %v681, 4294901760
    %1060 = vmatpush1.msra.mxu0 %v1059
    %v1061 = vand.u32 %v684, 4294901760
    %1062 = vmatprep.subr.mxu0 %v1061
    %v1063 = vand.u32 %v683, 4294901760
    %1064 = vmatpush1.msra.mxu0 %v1063
    %v1065 = vand.u32 %v686, 4294901760
    %1066 = vmatprep.subr.mxu0 %v1065
    %v1067 = vand.u32 %v685, 4294901760
    %1068 = vmatpush1.msra.mxu0 %v1067
    %v1069 = vand.u32 %v688, 4294901760
    %1070 = vmatprep.subr.mxu0 %v1069
    %v1071 = vand.u32 %v687, 4294901760
    %1072 = vmatpush1.msra.mxu0 %v1071
    %1073 = vmatprep.subr.mxu0 0.0
    %1074 = vmatpush1.msra.mxu0 0.0
    %1075 = vmatprep.subr.mxu0 0.0
    %1076 = vmatpush1.msra.mxu0 0.0
    %1077 = vmatprep.subr.mxu0 0.0
    %1078 = vmatpush1.msra.mxu0 0.0
    %1079 = vmatprep.subr.mxu0 0.0
    %1080 = vmatpush1.msra.mxu0 0.0
    %1081 = vmatprep.subr.mxu0 0.0
    %1082 = vmatpush1.msra.mxu0 0.0
    %1083 = vmatprep.subr.mxu0 0.0
    %1084 = vmatpush1.msra.mxu0 0.0
    %1085 = vmatprep.subr.mxu0 0.0
    %1086 = vmatpush1.msra.mxu0 0.0
    %1087 = vmatprep.subr.mxu0 0.0
    %1088 = vmatpush1.msra.mxu0 0.0
    %1089 = vmatprep.subr.mxu0 0.0
    %1090 = vmatpush1.msra.mxu0 0.0
    %1091 = vmatprep.subr.mxu0 0.0
    %1092 = vmatpush1.msra.mxu0 0.0
    %1093 = vmatprep.subr.mxu0 0.0
    %1094 = vmatpush1.msra.mxu0 0.0
    %1095 = vmatprep.subr.mxu0 0.0
    %1096 = vmatpush1.msra.mxu0 0.0
    %1097 = vmatprep.subr.mxu0 0.0
    %1098 = vmatpush1.msra.mxu0 0.0
    %1099 = vmatprep.subr.mxu0 0.0
    %1100 = vmatpush1.msra.mxu0 0.0
    %1101 = vmatprep.subr.mxu0 0.0
    %1102 = vmatpush1.msra.mxu0 0.0
    %1103 = vmatprep.subr.mxu0 0.0
    %1104 = vmatpush1.msra.mxu0 0.0
    %1105 = vmatprep.subr.mxu0 0.0
    %1106 = vmatpush1.msra.mxu0 0.0
    %1107 = vmatprep.subr.mxu0 0.0
    %1108 = vmatpush1.msra.mxu0 0.0
    %1109 = vmatprep.subr.mxu0 0.0
    %1110 = vmatpush1.msra.mxu0 0.0
    %1111 = vmatprep.subr.mxu0 0.0
    %1112 = vmatpush1.msra.mxu0 0.0
    %1113 = vmatprep.subr.mxu0 0.0
    %1114 = vmatpush1.msra.mxu0 0.0
    %1115 = vmatprep.subr.mxu0 0.0
    %1116 = vmatpush1.msra.mxu0 0.0
    %1117 = vmatprep.subr.mxu0 0.0
    %1118 = vmatpush1.msra.mxu0 0.0
    %1119 = vmatprep.subr.mxu0 0.0
    %1120 = vmatpush1.msra.mxu0 0.0
    %1121 = vmatprep.mubr.f32.mxu0 0.0
    %v1122 = vand.u32 %v690, 4294901760
    %v1123 = vsub.f32 %v690, %v1122
    %v1124 = vand.u32 %v1123, 4294901760
    %1125 = vmatmul.mubr.f32.gmra.mrb[0].mxu0 %v1124
    %v1126 = vpop.f32.mrb[0].mxu0
    %v1127 = vadd.f32 %v1037, %v1126
    %v1128 = vpop.f32.mrb[0].mxu0
    %v1129 = vadd.f32 %v1039, %v1128
    %1130 = vdwg.mxu0
    %v1131 = vand.u32 %v674, 4294901760
    %v1132 = vsub.f32 %v674, %v1131
    %v1133 = vand.u32 %v1132, 4294901760
    %1134 = vmatprep.subr.mxu0 %v1133
    %v1135 = vand.u32 %v673, 4294901760
    %v1136 = vsub.f32 %v673, %v1135
    %v1137 = vand.u32 %v1136, 4294901760
    %1138 = vmatpush1.msra.mxu0 %v1137
    %v1139 = vand.u32 %v676, 4294901760
    %v1140 = vsub.f32 %v676, %v1139
    %v1141 = vand.u32 %v1140, 4294901760
    %1142 = vmatprep.subr.mxu0 %v1141
    %v1143 = vand.u32 %v675, 4294901760
    %v1144 = vsub.f32 %v675, %v1143
    %v1145 = vand.u32 %v1144, 4294901760
    %1146 = vmatpush1.msra.mxu0 %v1145
    %v1147 = vand.u32 %v678, 4294901760
    %v1148 = vsub.f32 %v678, %v1147
    %v1149 = vand.u32 %v1148, 4294901760
    %1150 = vmatprep.subr.mxu0 %v1149
    %v1151 = vand.u32 %v677, 4294901760
    %v1152 = vsub.f32 %v677, %v1151
    %v1153 = vand.u32 %v1152, 4294901760
    %1154 = vmatpush1.msra.mxu0 %v1153
    %v1155 = vand.u32 %v680, 4294901760
    %v1156 = vsub.f32 %v680, %v1155
    %v1157 = vand.u32 %v1156, 4294901760
    %1158 = vmatprep.subr.mxu0 %v1157
    %v1159 = vand.u32 %v679, 4294901760
    %v1160 = vsub.f32 %v679, %v1159
    %v1161 = vand.u32 %v1160, 4294901760
    %1162 = vmatpush1.msra.mxu0 %v1161
    %v1163 = vand.u32 %v682, 4294901760
    %v1164 = vsub.f32 %v682, %v1163
    %v1165 = vand.u32 %v1164, 4294901760
    %1166 = vmatprep.subr.mxu0 %v1165
    %v1167 = vand.u32 %v681, 4294901760
    %v1168 = vsub.f32 %v681, %v1167
    %v1169 = vand.u32 %v1168, 4294901760
    %1170 = vmatpush1.msra.mxu0 %v1169
    %v1171 = vand.u32 %v684, 4294901760
    %v1172 = vsub.f32 %v684, %v1171
    %v1173 = vand.u32 %v1172, 4294901760
    %1174 = vmatprep.subr.mxu0 %v1173
    %v1175 = vand.u32 %v683, 4294901760
    %v1176 = vsub.f32 %v683, %v1175
    %v1177 = vand.u32 %v1176, 4294901760
    %1178 = vmatpush1.msra.mxu0 %v1177
    %v1179 = vand.u32 %v686, 4294901760
    %v1180 = vsub.f32 %v686, %v1179
    %v1181 = vand.u32 %v1180, 4294901760
    %1182 = vmatprep.subr.mxu0 %v1181
    %v1183 = vand.u32 %v685, 4294901760
    %v1184 = vsub.f32 %v685, %v1183
    %v1185 = vand.u32 %v1184, 4294901760
    %1186 = vmatpush1.msra.mxu0 %v1185
    %v1187 = vand.u32 %v688, 4294901760
    %v1188 = vsub.f32 %v688, %v1187
    %v1189 = vand.u32 %v1188, 4294901760
    %1190 = vmatprep.subr.mxu0 %v1189
    %v1191 = vand.u32 %v687, 4294901760
    %v1192 = vsub.f32 %v687, %v1191
    %v1193 = vand.u32 %v1192, 4294901760
    %1194 = vmatpush1.msra.mxu0 %v1193
    %1195 = vmatprep.subr.mxu0 0.0
    %1196 = vmatpush1.msra.mxu0 0.0
    %1197 = vmatprep.subr.mxu0 0.0
    %1198 = vmatpush1.msra.mxu0 0.0
    %1199 = vmatprep.subr.mxu0 0.0
    %1200 = vmatpush1.msra.mxu0 0.0
    %1201 = vmatprep.subr.mxu0 0.0
    %1202 = vmatpush1.msra.mxu0 0.0
    %1203 = vmatprep.subr.mxu0 0.0
    %1204 = vmatpush1.msra.mxu0 0.0
    %1205 = vmatprep.subr.mxu0 0.0
    %1206 = vmatpush1.msra.mxu0 0.0
    %1207 = vmatprep.subr.mxu0 0.0
    %1208 = vmatpush1.msra.mxu0 0.0
    %1209 = vmatprep.subr.mxu0 0.0
    %1210 = vmatpush1.msra.mxu0 0.0
    %1211 = vmatprep.subr.mxu0 0.0
    %1212 = vmatpush1.msra.mxu0 0.0
    %1213 = vmatprep.subr.mxu0 0.0
    %1214 = vmatpush1.msra.mxu0 0.0
    %1215 = vmatprep.subr.mxu0 0.0
    %1216 = vmatpush1.msra.mxu0 0.0
    %1217 = vmatprep.subr.mxu0 0.0
    %1218 = vmatpush1.msra.mxu0 0.0
    %1219 = vmatprep.subr.mxu0 0.0
    %1220 = vmatpush1.msra.mxu0 0.0
    %1221 = vmatprep.subr.mxu0 0.0
    %1222 = vmatpush1.msra.mxu0 0.0
    %1223 = vmatprep.subr.mxu0 0.0
    %1224 = vmatpush1.msra.mxu0 0.0
    %1225 = vmatprep.subr.mxu0 0.0
    %1226 = vmatpush1.msra.mxu0 0.0
    %1227 = vmatprep.subr.mxu0 0.0
    %1228 = vmatpush1.msra.mxu0 0.0
    %1229 = vmatprep.subr.mxu0 0.0
    %1230 = vmatpush1.msra.mxu0 0.0
    %1231 = vmatprep.subr.mxu0 0.0
    %1232 = vmatpush1.msra.mxu0 0.0
    %1233 = vmatprep.subr.mxu0 0.0
    %1234 = vmatpush1.msra.mxu0 0.0
    %1235 = vmatprep.subr.mxu0 0.0
    %1236 = vmatpush1.msra.mxu0 0.0
    %1237 = vmatprep.subr.mxu0 0.0
    %1238 = vmatpush1.msra.mxu0 0.0
    %1239 = vmatprep.subr.mxu0 0.0
    %1240 = vmatpush1.msra.mxu0 0.0
    %1241 = vmatprep.subr.mxu0 0.0
    %1242 = vmatpush1.msra.mxu0 0.0
    %1243 = vmatprep.mubr.f32.mxu0 0.0
    %v1244 = vand.u32 %v690, 4294901760
    %1245 = vmatmul.mubr.f32.gmra.mrb[0].mxu0 %v1244
    %v1246 = vpop.f32.mrb[0].mxu0
    %v1247 = vadd.f32 %v1127, %v1246
    %v1248 = vpop.f32.mrb[0].mxu0
    %v1249 = vadd.f32 %v1129, %v1248
    %1250 = vdwg.mxu0
    %v1251 = vand.u32 %v674, 4294901760
    %1252 = vmatprep.subr.mxu0 %v1251
    %v1253 = vand.u32 %v673, 4294901760
    %1254 = vmatpush1.msra.mxu0 %v1253
    %v1255 = vand.u32 %v676, 4294901760
    %1256 = vmatprep.subr.mxu0 %v1255
    %v1257 = vand.u32 %v675, 4294901760
    %1258 = vmatpush1.msra.mxu0 %v1257
    %v1259 = vand.u32 %v678, 4294901760
    %1260 = vmatprep.subr.mxu0 %v1259
    %v1261 = vand.u32 %v677, 4294901760
    %1262 = vmatpush1.msra.mxu0 %v1261
    %v1263 = vand.u32 %v680, 4294901760
    %1264 = vmatprep.subr.mxu0 %v1263
    %v1265 = vand.u32 %v679, 4294901760
    %1266 = vmatpush1.msra.mxu0 %v1265
    %v1267 = vand.u32 %v682, 4294901760
    %1268 = vmatprep.subr.mxu0 %v1267
    %v1269 = vand.u32 %v681, 4294901760
    %1270 = vmatpush1.msra.mxu0 %v1269
    %v1271 = vand.u32 %v684, 4294901760
    %1272 = vmatprep.subr.mxu0 %v1271
    %v1273 = vand.u32 %v683, 4294901760
    %1274 = vmatpush1.msra.mxu0 %v1273
    %v1275 = vand.u32 %v686, 4294901760
    %1276 = vmatprep.subr.mxu0 %v1275
    %v1277 = vand.u32 %v685, 4294901760
    %1278 = vmatpush1.msra.mxu0 %v1277
    %v1279 = vand.u32 %v688, 4294901760
    %1280 = vmatprep.subr.mxu0 %v1279
    %v1281 = vand.u32 %v687, 4294901760
    %1282 = vmatpush1.msra.mxu0 %v1281
    %1283 = vmatprep.subr.mxu0 0.0
    %1284 = vmatpush1.msra.mxu0 0.0
    %1285 = vmatprep.subr.mxu0 0.0
    %1286 = vmatpush1.msra.mxu0 0.0
    %1287 = vmatprep.subr.mxu0 0.0
    %1288 = vmatpush1.msra.mxu0 0.0
    %1289 = vmatprep.subr.mxu0 0.0
    %1290 = vmatpush1.msra.mxu0 0.0
    %1291 = vmatprep.subr.mxu0 0.0
    %1292 = vmatpush1.msra.mxu0 0.0
    %1293 = vmatprep.subr.mxu0 0.0
    %1294 = vmatpush1.msra.mxu0 0.0
    %1295 = vmatprep.subr.mxu0 0.0
    %1296 = vmatpush1.msra.mxu0 0.0
    %1297 = vmatprep.subr.mxu0 0.0
    %1298 = vmatpush1.msra.mxu0 0.0
    %1299 = vmatprep.subr.mxu0 0.0
    %1300 = vmatpush1.msra.mxu0 0.0
    %1301 = vmatprep.subr.mxu0 0.0
    %1302 = vmatpush1.msra.mxu0 0.0
    %1303 = vmatprep.subr.mxu0 0.0
    %1304 = vmatpush1.msra.mxu0 0.0
    %1305 = vmatprep.subr.mxu0 0.0
    %1306 = vmatpush1.msra.mxu0 0.0
    %1307 = vmatprep.subr.mxu0 0.0
    %1308 = vmatpush1.msra.mxu0 0.0
    %1309 = vmatprep.subr.mxu0 0.0
    %1310 = vmatpush1.msra.mxu0 0.0
    %1311 = vmatprep.subr.mxu0 0.0
    %1312 = vmatpush1.msra.mxu0 0.0
    %1313 = vmatprep.subr.mxu0 0.0
    %1314 = vmatpush1.msra.mxu0 0.0
    %1315 = vmatprep.subr.mxu0 0.0
    %1316 = vmatpush1.msra.mxu0 0.0
    %1317 = vmatprep.subr.mxu0 0.0
    %1318 = vmatpush1.msra.mxu0 0.0
    %1319 = vmatprep.subr.mxu0 0.0
    %1320 = vmatpush1.msra.mxu0 0.0
    %1321 = vmatprep.subr.mxu0 0.0
    %1322 = vmatpush1.msra.mxu0 0.0
    %1323 = vmatprep.subr.mxu0 0.0
    %1324 = vmatpush1.msra.mxu0 0.0
    %1325 = vmatprep.subr.mxu0 0.0
    %1326 = vmatpush1.msra.mxu0 0.0
    %1327 = vmatprep.subr.mxu0 0.0
    %1328 = vmatpush1.msra.mxu0 0.0
    %1329 = vmatprep.subr.mxu0 0.0
    %1330 = vmatpush1.msra.mxu0 0.0
    %1331 = vmatprep.mubr.f32.mxu0 0.0
    %v1332 = vand.u32 %v690, 4294901760
    %1333 = vmatmul.mubr.f32.gmra.mrb[0].mxu0 %v1332
    %v1334 = vpop.f32.mrb[0].mxu0
    %v1335 = vadd.f32 %v1247, %v1334
    %v1336 = vpop.f32.mrb[0].mxu0
    %v1337 = vadd.f32 %v1249, %v1336
    %1338 = vdwg.mxu0
    %v1339 = vadd.f32 %v651, %v1335
    %v1340 = vxor.u32 %v1339, 2147483648
    %v1341 = vmul.f32 %v1340, 1.442695
    %v1342 = vpow.pop %v1341
    %v1343 = vadd.f32 %v1342, 1.0
    %v1344 = vrcp.pop %v1343
    %v1345 = vmul.f32 1.0, %v1344
    %v1346 = vtanh.pop %v1339
    %1348 = vrot.lane.b32.xlu0 %v664, 32
    %v1349 = vpop.permute.xlu0 %1348
    %v1351 = vmul.f32 %v1345, %v1349
    %1353 = vrot.lane.b32.xlu0 %v1346, 64
    %v1354 = vpop.permute.xlu0 %1353
    %v1356 = vmul.f32 %v1345, %v1354
    %1358 = vrot.lane.b32.xlu0 %v1356, 32
    %v1359 = vpop.permute.xlu0 %1358
    %v1361 = vadd.f32 %v1351, %v1359
    %v1362 = vtanh.pop %v1361
    %1364 = vrot.lane.b32.xlu0 %v1362, 64
    %v1365 = vpop.permute.xlu0 %1364
    %v1367 = vmul.f32 %v1345, %v1365
    %v1368 = vld [vmem:[#allocation3 + $0x40] sm:$0xff]
    %v1369 = vld [vmem:[#allocation3 + $0x48] sm:$0xff]
    %v1370 = vld [vmem:[#allocation3 + $0x50] sm:$0xff]
    %v1371 = vld [vmem:[#allocation3 + $0x58] sm:$0xff]
    %v1372 = vld [vmem:[#allocation3 + $0x80] sm:$0x1]
    %v1373 = vlaneseq
    %v1374 = vshrl.u32 %v1373, 7
    %v1375 = vsub.s32 0, %v1374
    %v1376 = vrot.slane %v1372, %v1375
    %v1377 = vadd.f32 %v1337, %v1376
    %1379 = vrot.lane.b32.xlu0 %v1367, 32
    %v1380 = vpop.permute.xlu0 %1379
    %v1381 = vsel %vm671, %v1380, 0
    %1383 = vmatprep.subr.mxu0 0.0
    %v1384 = vand.u32 %v1368, 4294901760
    %1385 = vmatpush1.msra.mxu0 %v1384
    %1386 = vmatprep.subr.mxu0 0.0
    %v1387 = vand.u32 %v1369, 4294901760
    %1388 = vmatpush1.msra.mxu0 %v1387
    %1389 = vmatprep.subr.mxu0 0.0
    %v1390 = vand.u32 %v1370, 4294901760
    %1391 = vmatpush1.msra.mxu0 %v1390
    %1392 = vmatprep.subr.mxu0 0.0
    %v1393 = vand.u32 %v1371, 4294901760
    %1394 = vmatpush1.msra.mxu0 %v1393
    %1395 = vmatprep.subr.mxu0 0.0
    %1396 = vmatpush1.msra.mxu0 0.0
    %1397 = vmatprep.subr.mxu0 0.0
    %1398 = vmatpush1.msra.mxu0 0.0
    %1399 = vmatprep.subr.mxu0 0.0
    %1400 = vmatpush1.msra.mxu0 0.0
    %1401 = vmatprep.subr.mxu0 0.0
    %1402 = vmatpush1.msra.mxu0 0.0
    %1403 = vmatprep.subr.mxu0 0.0
    %1404 = vmatpush1.msra.mxu0 0.0
    %1405 = vmatprep.subr.mxu0 0.0
    %1406 = vmatpush1.msra.mxu0 0.0
    %1407 = vmatprep.subr.mxu0 0.0
    %1408 = vmatpush1.msra.mxu0 0.0
    %1409 = vmatprep.subr.mxu0 0.0
    %1410 = vmatpush1.msra.mxu0 0.0
    %1411 = vmatprep.subr.mxu0 0.0
    %1412 = vmatpush1.msra.mxu0 0.0
    %1413 = vmatprep.subr.mxu0 0.0
    %1414 = vmatpush1.msra.mxu0 0.0
    %1415 = vmatprep.subr.mxu0 0.0
    %1416 = vmatpush1.msra.mxu0 0.0
    %1417 = vmatprep.subr.mxu0 0.0
    %1418 = vmatpush1.msra.mxu0 0.0
    %1419 = vmatprep.subr.mxu0 0.0
    %1420 = vmatpush1.msra.mxu0 0.0
    %1421 = vmatprep.subr.mxu0 0.0
    %1422 = vmatpush1.msra.mxu0 0.0
    %1423 = vmatprep.subr.mxu0 0.0
    %1424 = vmatpush1.msra.mxu0 0.0
    %1425 = vmatprep.subr.mxu0 0.0
    %1426 = vmatpush1.msra.mxu0 0.0
    %1427 = vmatprep.subr.mxu0 0.0
    %1428 = vmatpush1.msra.mxu0 0.0
    %1429 = vmatprep.subr.mxu0 0.0
    %1430 = vmatpush1.msra.mxu0 0.0
    %1431 = vmatprep.subr.mxu0 0.0
    %1432 = vmatpush1.msra.mxu0 0.0
    %1433 = vmatprep.subr.mxu0 0.0
    %1434 = vmatpush1.msra.mxu0 0.0
    %1435 = vmatprep.subr.mxu0 0.0
    %1436 = vmatpush1.msra.mxu0 0.0
    %1437 = vmatprep.subr.mxu0 0.0
    %1438 = vmatpush1.msra.mxu0 0.0
    %1439 = vmatprep.subr.mxu0 0.0
    %1440 = vmatpush1.msra.mxu0 0.0
    %1441 = vmatprep.subr.mxu0 0.0
    %1442 = vmatpush1.msra.mxu0 0.0
    %1443 = vmatprep.subr.mxu0 0.0
    %1444 = vmatpush1.msra.mxu0 0.0
    %1445 = vmatprep.subr.mxu0 0.0
    %1446 = vmatpush1.msra.mxu0 0.0
    %1447 = vmatprep.subr.mxu0 0.0
    %1448 = vmatpush1.msra.mxu0 0.0
    %1449 = vmatprep.subr.mxu0 0.0
    %1450 = vmatpush1.msra.mxu0 0.0
    %1451 = vmatprep.mubr.f32.mxu0 0.0
    %v1452 = vand.u32 %v1381, 4294901760
    %v1453 = vsub.f32 %v1381, %v1452
    %v1454 = vand.u32 %v1453, 4294901760
    %v1455 = vsub.f32 %v1453, %v1454
    %v1456 = vand.u32 %v1455, 4294901760
    %1457 = vmatmul.mubr.f32.gmra.mrb[0].mxu0 %v1456
    %v1458 = vpop.f32.mrb[0].mxu0
    %v1459 = vadd.f32 0.0, %v1458
    %v1460 = vpop.f32.mrb[0].mxu0
    %1461 = vdwg.mxu0
    %1462 = vmatprep.subr.mxu0 0.0
    %v1463 = vand.u32 %v1368, 4294901760
    %v1464 = vsub.f32 %v1368, %v1463
    %v1465 = vand.u32 %v1464, 4294901760
    %v1466 = vsub.f32 %v1464, %v1465
    %v1467 = vand.u32 %v1466, 4294901760
    %1468 = vmatpush1.msra.mxu0 %v1467
    %1469 = vmatprep.subr.mxu0 0.0
    %v1470 = vand.u32 %v1369, 4294901760
    %v1471 = vsub.f32 %v1369, %v1470
    %v1472 = vand.u32 %v1471, 4294901760
    %v1473 = vsub.f32 %v1471, %v1472
    %v1474 = vand.u32 %v1473, 4294901760
    %1475 = vmatpush1.msra.mxu0 %v1474
    %1476 = vmatprep.subr.mxu0 0.0
    %v1477 = vand.u32 %v1370, 4294901760
    %v1478 = vsub.f32 %v1370, %v1477
    %v1479 = vand.u32 %v1478, 4294901760
    %v1480 = vsub.f32 %v1478, %v1479
    %v1481 = vand.u32 %v1480, 4294901760
    %1482 = vmatpush1.msra.mxu0 %v1481
    %1483 = vmatprep.subr.mxu0 0.0
    %v1484 = vand.u32 %v1371, 4294901760
    %v1485 = vsub.f32 %v1371, %v1484
    %v1486 = vand.u32 %v1485, 4294901760
    %v1487 = vsub.f32 %v1485, %v1486
    %v1488 = vand.u32 %v1487, 4294901760
    %1489 = vmatpush1.msra.mxu0 %v1488
    %1490 = vmatprep.subr.mxu0 0.0
    %1491 = vmatpush1.msra.mxu0 0.0
    %1492 = vmatprep.subr.mxu0 0.0
    %1493 = vmatpush1.msra.mxu0 0.0
    %1494 = vmatprep.subr.mxu0 0.0
    %1495 = vmatpush1.msra.mxu0 0.0
    %1496 = vmatprep.subr.mxu0 0.0
    %1497 = vmatpush1.msra.mxu0 0.0
    %1498 = vmatprep.subr.mxu0 0.0
    %1499 = vmatpush1.msra.mxu0 0.0
    %1500 = vmatprep.subr.mxu0 0.0
    %1501 = vmatpush1.msra.mxu0 0.0
    %1502 = vmatprep.subr.mxu0 0.0
    %1503 = vmatpush1.msra.mxu0 0.0
    %1504 = vmatprep.subr.mxu0 0.0
    %1505 = vmatpush1.msra.mxu0 0.0
    %1506 = vmatprep.subr.mxu0 0.0
    %1507 = vmatpush1.msra.mxu0 0.0
    %1508 = vmatprep.subr.mxu0 0.0
    %1509 = vmatpush1.msra.mxu0 0.0
    %1510 = vmatprep.subr.mxu0 0.0
    %1511 = vmatpush1.msra.mxu0 0.0
    %1512 = vmatprep.subr.mxu0 0.0
    %1513 = vmatpush1.msra.mxu0 0.0
    %1514 = vmatprep.subr.mxu0 0.0
    %1515 = vmatpush1.msra.mxu0 0.0
    %1516 = vmatprep.subr.mxu0 0.0
    %1517 = vmatpush1.msra.mxu0 0.0
    %1518 = vmatprep.subr.mxu0 0.0
    %1519 = vmatpush1.msra.mxu0 0.0
    %1520 = vmatprep.subr.mxu0 0.0
    %1521 = vmatpush1.msra.mxu0 0.0
    %1522 = vmatprep.subr.mxu0 0.0
    %1523 = vmatpush1.msra.mxu0 0.0
    %1524 = vmatprep.subr.mxu0 0.0
    %1525 = vmatpush1.msra.mxu0 0.0
    %1526 = vmatprep.subr.mxu0 0.0
    %1527 = vmatpush1.msra.mxu0 0.0
    %1528 = vmatprep.subr.mxu0 0.0
    %1529 = vmatpush1.msra.mxu0 0.0
    %1530 = vmatprep.subr.mxu0 0.0
    %1531 = vmatpush1.msra.mxu0 0.0
    %1532 = vmatprep.subr.mxu0 0.0
    %1533 = vmatpush1.msra.mxu0 0.0
    %1534 = vmatprep.subr.mxu0 0.0
    %1535 = vmatpush1.msra.mxu0 0.0
    %1536 = vmatprep.subr.mxu0 0.0
    %1537 = vmatpush1.msra.mxu0 0.0
    %1538 = vmatprep.subr.mxu0 0.0
    %1539 = vmatpush1.msra.mxu0 0.0
    %1540 = vmatprep.subr.mxu0 0.0
    %1541 = vmatpush1.msra.mxu0 0.0
    %1542 = vmatprep.subr.mxu0 0.0
    %1543 = vmatpush1.msra.mxu0 0.0
    %1544 = vmatprep.subr.mxu0 0.0
    %1545 = vmatpush1.msra.mxu0 0.0
    %1546 = vmatprep.mubr.f32.mxu0 0.0
    %v1547 = vand.u32 %v1381, 4294901760
    %1548 = vmatmul.mubr.f32.gmra.mrb[0].mxu0 %v1547
    %v1549 = vpop.f32.mrb[0].mxu0
    %v1550 = vadd.f32 %v1459, %v1549
    %v1551 = vpop.f32.mrb[0].mxu0
    %1552 = vdwg.mxu0
    %1553 = vmatprep.subr.mxu0 0.0
    %v1554 = vand.u32 %v1368, 4294901760
    %v1555 = vsub.f32 %v1368, %v1554
    %1556 = vmatpush1.msra.mxu0 %v1555
    %1557 = vmatprep.subr.mxu0 0.0
    %v1558 = vand.u32 %v1369, 4294901760
    %v1559 = vsub.f32 %v1369, %v1558
    %1560 = vmatpush1.msra.mxu0 %v1559
    %1561 = vmatprep.subr.mxu0 0.0
    %v1562 = vand.u32 %v1370, 4294901760
    %v1563 = vsub.f32 %v1370, %v1562
    %1564 = vmatpush1.msra.mxu0 %v1563
    %1565 = vmatprep.subr.mxu0 0.0
    %v1566 = vand.u32 %v1371, 4294901760
    %v1567 = vsub.f32 %v1371, %v1566
    %1568 = vmatpush1.msra.mxu0 %v1567
    %1569 = vmatprep.subr.mxu0 0.0
    %1570 = vmatpush1.msra.mxu0 0.0
    %1571 = vmatprep.subr.mxu0 0.0
    %1572 = vmatpush1.msra.mxu0 0.0
    %1573 = vmatprep.subr.mxu0 0.0
    %1574 = vmatpush1.msra.mxu0 0.0
    %1575 = vmatprep.subr.mxu0 0.0
    %1576 = vmatpush1.msra.mxu0 0.0
    %1577 = vmatprep.subr.mxu0 0.0
    %1578 = vmatpush1.msra.mxu0 0.0
    %1579 = vmatprep.subr.mxu0 0.0
    %1580 = vmatpush1.msra.mxu0 0.0
    %1581 = vmatprep.subr.mxu0 0.0
    %1582 = vmatpush1.msra.mxu0 0.0
    %1583 = vmatprep.subr.mxu0 0.0
    %1584 = vmatpush1.msra.mxu0 0.0
    %1585 = vmatprep.subr.mxu0 0.0
    %1586 = vmatpush1.msra.mxu0 0.0
    %1587 = vmatprep.subr.mxu0 0.0
    %1588 = vmatpush1.msra.mxu0 0.0
    %1589 = vmatprep.subr.mxu0 0.0
    %1590 = vmatpush1.msra.mxu0 0.0
    %1591 = vmatprep.subr.mxu0 0.0
    %1592 = vmatpush1.msra.mxu0 0.0
    %1593 = vmatprep.subr.mxu0 0.0
    %1594 = vmatpush1.msra.mxu0 0.0
    %1595 = vmatprep.subr.mxu0 0.0
    %1596 = vmatpush1.msra.mxu0 0.0
    %1597 = vmatprep.subr.mxu0 0.0
    %1598 = vmatpush1.msra.mxu0 0.0
    %1599 = vmatprep.subr.mxu0 0.0
    %1600 = vmatpush1.msra.mxu0 0.0
    %1601 = vmatprep.subr.mxu0 0.0
    %1602 = vmatpush1.msra.mxu0 0.0
    %1603 = vmatprep.subr.mxu0 0.0
    %1604 = vmatpush1.msra.mxu0 0.0
    %1605 = vmatprep.subr.mxu0 0.0
    %1606 = vmatpush1.msra.mxu0 0.0
    %1607 = vmatprep.subr.mxu0 0.0
    %1608 = vmatpush1.msra.mxu0 0.0
    %1609 = vmatprep.subr.mxu0 0.0
    %1610 = vmatpush1.msra.mxu0 0.0
    %1611 = vmatprep.subr.mxu0 0.0
    %1612 = vmatpush1.msra.mxu0 0.0
    %1613 = vmatprep.subr.mxu0 0.0
    %1614 = vmatpush1.msra.mxu0 0.0
    %1615 = vmatprep.subr.mxu0 0.0
    %1616 = vmatpush1.msra.mxu0 0.0
    %1617 = vmatprep.subr.mxu0 0.0
    %1618 = vmatpush1.msra.mxu0 0.0
    %1619 = vmatprep.subr.mxu0 0.0
    %1620 = vmatpush1.msra.mxu0 0.0
    %1621 = vmatprep.subr.mxu0 0.0
    %1622 = vmatpush1.msra.mxu0 0.0
    %1623 = vmatprep.subr.mxu0 0.0
    %1624 = vmatpush1.msra.mxu0 0.0
    %1625 = vmatprep.mubr.f32.mxu0 0.0
    %v1626 = vand.u32 %v1381, 4294901760
    %v1627 = vsub.f32 %v1381, %v1626
    %1628 = vmatmul.mubr.f32.gmra.mrb[0].mxu0 %v1627
    %v1629 = vpop.f32.mrb[0].mxu0
    %v1630 = vadd.f32 %v1550, %v1629
    %v1631 = vpop.f32.mrb[0].mxu0
    %1632 = vdwg.mxu0
    %1633 = vmatprep.subr.mxu0 0.0
    %v1634 = vand.u32 %v1368, 4294901760
    %1635 = vmatpush1.msra.mxu0 %v1634
    %1636 = vmatprep.subr.mxu0 0.0
    %v1637 = vand.u32 %v1369, 4294901760
    %1638 = vmatpush1.msra.mxu0 %v1637
    %1639 = vmatprep.subr.mxu0 0.0
    %v1640 = vand.u32 %v1370, 4294901760
    %1641 = vmatpush1.msra.mxu0 %v1640
    %1642 = vmatprep.subr.mxu0 0.0
    %v1643 = vand.u32 %v1371, 4294901760
    %1644 = vmatpush1.msra.mxu0 %v1643
    %1645 = vmatprep.subr.mxu0 0.0
    %1646 = vmatpush1.msra.mxu0 0.0
    %1647 = vmatprep.subr.mxu0 0.0
    %1648 = vmatpush1.msra.mxu0 0.0
    %1649 = vmatprep.subr.mxu0 0.0
    %1650 = vmatpush1.msra.mxu0 0.0
    %1651 = vmatprep.subr.mxu0 0.0
    %1652 = vmatpush1.msra.mxu0 0.0
    %1653 = vmatprep.subr.mxu0 0.0
    %1654 = vmatpush1.msra.mxu0 0.0
    %1655 = vmatprep.subr.mxu0 0.0
    %1656 = vmatpush1.msra.mxu0 0.0
    %1657 = vmatprep.subr.mxu0 0.0
    %1658 = vmatpush1.msra.mxu0 0.0
    %1659 = vmatprep.subr.mxu0 0.0
    %1660 = vmatpush1.msra.mxu0 0.0
    %1661 = vmatprep.subr.mxu0 0.0
    %1662 = vmatpush1.msra.mxu0 0.0
    %1663 = vmatprep.subr.mxu0 0.0
    %1664 = vmatpush1.msra.mxu0 0.0
    %1665 = vmatprep.subr.mxu0 0.0
    %1666 = vmatpush1.msra.mxu0 0.0
    %1667 = vmatprep.subr.mxu0 0.0
    %1668 = vmatpush1.msra.mxu0 0.0
    %1669 = vmatprep.subr.mxu0 0.0
    %1670 = vmatpush1.msra.mxu0 0.0
    %1671 = vmatprep.subr.mxu0 0.0
    %1672 = vmatpush1.msra.mxu0 0.0
    %1673 = vmatprep.subr.mxu0 0.0
    %1674 = vmatpush1.msra.mxu0 0.0
    %1675 = vmatprep.subr.mxu0 0.0
    %1676 = vmatpush1.msra.mxu0 0.0
    %1677 = vmatprep.subr.mxu0 0.0
    %1678 = vmatpush1.msra.mxu0 0.0
    %1679 = vmatprep.subr.mxu0 0.0
    %1680 = vmatpush1.msra.mxu0 0.0
    %1681 = vmatprep.subr.mxu0 0.0
    %1682 = vmatpush1.msra.mxu0 0.0
    %1683 = vmatprep.subr.mxu0 0.0
    %1684 = vmatpush1.msra.mxu0 0.0
    %1685 = vmatprep.subr.mxu0 0.0
    %1686 = vmatpush1.msra.mxu0 0.0
    %1687 = vmatprep.subr.mxu0 0.0
    %1688 = vmatpush1.msra.mxu0 0.0
    %1689 = vmatprep.subr.mxu0 0.0
    %1690 = vmatpush1.msra.mxu0 0.0
    %1691 = vmatprep.subr.mxu0 0.0
    %1692 = vmatpush1.msra.mxu0 0.0
    %1693 = vmatprep.subr.mxu0 0.0
    %1694 = vmatpush1.msra.mxu0 0.0
    %1695 = vmatprep.subr.mxu0 0.0
    %1696 = vmatpush1.msra.mxu0 0.0
    %1697 = vmatprep.subr.mxu0 0.0
    %1698 = vmatpush1.msra.mxu0 0.0
    %1699 = vmatprep.subr.mxu0 0.0
    %1700 = vmatpush1.msra.mxu0 0.0
    %1701 = vmatprep.mubr.f32.mxu0 0.0
    %v1702 = vand.u32 %v1381, 4294901760
    %v1703 = vsub.f32 %v1381, %v1702
    %v1704 = vand.u32 %v1703, 4294901760
    %1705 = vmatmul.mubr.f32.gmra.mrb[0].mxu0 %v1704
    %v1706 = vpop.f32.mrb[0].mxu0
    %v1707 = vadd.f32 %v1630, %v1706
    %v1708 = vpop.f32.mrb[0].mxu0
    %1709 = vdwg.mxu0
    %1710 = vmatprep.subr.mxu0 0.0
    %v1711 = vand.u32 %v1368, 4294901760
    %v1712 = vsub.f32 %v1368, %v1711
    %v1713 = vand.u32 %v1712, 4294901760
    %1714 = vmatpush1.msra.mxu0 %v1713
    %1715 = vmatprep.subr.mxu0 0.0
    %v1716 = vand.u32 %v1369, 4294901760
    %v1717 = vsub.f32 %v1369, %v1716
    %v1718 = vand.u32 %v1717, 4294901760
    %1719 = vmatpush1.msra.mxu0 %v1718
    %1720 = vmatprep.subr.mxu0 0.0
    %v1721 = vand.u32 %v1370, 4294901760
    %v1722 = vsub.f32 %v1370, %v1721
    %v1723 = vand.u32 %v1722, 4294901760
    %1724 = vmatpush1.msra.mxu0 %v1723
    %1725 = vmatprep.subr.mxu0 0.0
    %v1726 = vand.u32 %v1371, 4294901760
    %v1727 = vsub.f32 %v1371, %v1726
    %v1728 = vand.u32 %v1727, 4294901760
    %1729 = vmatpush1.msra.mxu0 %v1728
    %1730 = vmatprep.subr.mxu0 0.0
    %1731 = vmatpush1.msra.mxu0 0.0
    %1732 = vmatprep.subr.mxu0 0.0
    %1733 = vmatpush1.msra.mxu0 0.0
    %1734 = vmatprep.subr.mxu0 0.0
    %1735 = vmatpush1.msra.mxu0 0.0
    %1736 = vmatprep.subr.mxu0 0.0
    %1737 = vmatpush1.msra.mxu0 0.0
    %1738 = vmatprep.subr.mxu0 0.0
    %1739 = vmatpush1.msra.mxu0 0.0
    %1740 = vmatprep.subr.mxu0 0.0
    %1741 = vmatpush1.msra.mxu0 0.0
    %1742 = vmatprep.subr.mxu0 0.0
    %1743 = vmatpush1.msra.mxu0 0.0
    %1744 = vmatprep.subr.mxu0 0.0
    %1745 = vmatpush1.msra.mxu0 0.0
    %1746 = vmatprep.subr.mxu0 0.0
    %1747 = vmatpush1.msra.mxu0 0.0
    %1748 = vmatprep.subr.mxu0 0.0
    %1749 = vmatpush1.msra.mxu0 0.0
    %1750 = vmatprep.subr.mxu0 0.0
    %1751 = vmatpush1.msra.mxu0 0.0
    %1752 = vmatprep.subr.mxu0 0.0
    %1753 = vmatpush1.msra.mxu0 0.0
    %1754 = vmatprep.subr.mxu0 0.0
    %1755 = vmatpush1.msra.mxu0 0.0
    %1756 = vmatprep.subr.mxu0 0.0
    %1757 = vmatpush1.msra.mxu0 0.0
    %1758 = vmatprep.subr.mxu0 0.0
    %1759 = vmatpush1.msra.mxu0 0.0
    %1760 = vmatprep.subr.mxu0 0.0
    %1761 = vmatpush1.msra.mxu0 0.0
    %1762 = vmatprep.subr.mxu0 0.0
    %1763 = vmatpush1.msra.mxu0 0.0
    %1764 = vmatprep.subr.mxu0 0.0
    %1765 = vmatpush1.msra.mxu0 0.0
    %1766 = vmatprep.subr.mxu0 0.0
    %1767 = vmatpush1.msra.mxu0 0.0
    %1768 = vmatprep.subr.mxu0 0.0
    %1769 = vmatpush1.msra.mxu0 0.0
    %1770 = vmatprep.subr.mxu0 0.0
    %1771 = vmatpush1.msra.mxu0 0.0
    %1772 = vmatprep.subr.mxu0 0.0
    %1773 = vmatpush1.msra.mxu0 0.0
    %1774 = vmatprep.subr.mxu0 0.0
    %1775 = vmatpush1.msra.mxu0 0.0
    %1776 = vmatprep.subr.mxu0 0.0
    %1777 = vmatpush1.msra.mxu0 0.0
    %1778 = vmatprep.subr.mxu0 0.0
    %1779 = vmatpush1.msra.mxu0 0.0
    %1780 = vmatprep.subr.mxu0 0.0
    %1781 = vmatpush1.msra.mxu0 0.0
    %1782 = vmatprep.subr.mxu0 0.0
    %1783 = vmatpush1.msra.mxu0 0.0
    %1784 = vmatprep.subr.mxu0 0.0
    %1785 = vmatpush1.msra.mxu0 0.0
    %1786 = vmatprep.mubr.f32.mxu0 0.0
    %v1787 = vand.u32 %v1381, 4294901760
    %1788 = vmatmul.mubr.f32.gmra.mrb[0].mxu0 %v1787
    %v1789 = vpop.f32.mrb[0].mxu0
    %v1790 = vadd.f32 %v1707, %v1789
    %v1791 = vpop.f32.mrb[0].mxu0
    %1792 = vdwg.mxu0
    %1793 = vmatprep.subr.mxu0 0.0
    %v1794 = vand.u32 %v1368, 4294901760
    %1795 = vmatpush1.msra.mxu0 %v1794
    %1796 = vmatprep.subr.mxu0 0.0
    %v1797 = vand.u32 %v1369, 4294901760
    %1798 = vmatpush1.msra.mxu0 %v1797
    %1799 = vmatprep.subr.mxu0 0.0
    %v1800 = vand.u32 %v1370, 4294901760
    %1801 = vmatpush1.msra.mxu0 %v1800
    %1802 = vmatprep.subr.mxu0 0.0
    %v1803 = vand.u32 %v1371, 4294901760
    %1804 = vmatpush1.msra.mxu0 %v1803
    %1805 = vmatprep.subr.mxu0 0.0
    %1806 = vmatpush1.msra.mxu0 0.0
    %1807 = vmatprep.subr.mxu0 0.0
    %1808 = vmatpush1.msra.mxu0 0.0
    %1809 = vmatprep.subr.mxu0 0.0
    %1810 = vmatpush1.msra.mxu0 0.0
    %1811 = vmatprep.subr.mxu0 0.0
    %1812 = vmatpush1.msra.mxu0 0.0
    %1813 = vmatprep.subr.mxu0 0.0
    %1814 = vmatpush1.msra.mxu0 0.0
    %1815 = vmatprep.subr.mxu0 0.0
    %1816 = vmatpush1.msra.mxu0 0.0
    %1817 = vmatprep.subr.mxu0 0.0
    %1818 = vmatpush1.msra.mxu0 0.0
    %1819 = vmatprep.subr.mxu0 0.0
    %1820 = vmatpush1.msra.mxu0 0.0
    %1821 = vmatprep.subr.mxu0 0.0
    %1822 = vmatpush1.msra.mxu0 0.0
    %1823 = vmatprep.subr.mxu0 0.0
    %1824 = vmatpush1.msra.mxu0 0.0
    %1825 = vmatprep.subr.mxu0 0.0
    %1826 = vmatpush1.msra.mxu0 0.0
    %1827 = vmatprep.subr.mxu0 0.0
    %1828 = vmatpush1.msra.mxu0 0.0
    %1829 = vmatprep.subr.mxu0 0.0
    %1830 = vmatpush1.msra.mxu0 0.0
    %1831 = vmatprep.subr.mxu0 0.0
    %1832 = vmatpush1.msra.mxu0 0.0
    %1833 = vmatprep.subr.mxu0 0.0
    %1834 = vmatpush1.msra.mxu0 0.0
    %1835 = vmatprep.subr.mxu0 0.0
    %1836 = vmatpush1.msra.mxu0 0.0
    %1837 = vmatprep.subr.mxu0 0.0
    %1838 = vmatpush1.msra.mxu0 0.0
    %1839 = vmatprep.subr.mxu0 0.0
    %1840 = vmatpush1.msra.mxu0 0.0
    %1841 = vmatprep.subr.mxu0 0.0
    %1842 = vmatpush1.msra.mxu0 0.0
    %1843 = vmatprep.subr.mxu0 0.0
    %1844 = vmatpush1.msra.mxu0 0.0
    %1845 = vmatprep.subr.mxu0 0.0
    %1846 = vmatpush1.msra.mxu0 0.0
    %1847 = vmatprep.subr.mxu0 0.0
    %1848 = vmatpush1.msra.mxu0 0.0
    %1849 = vmatprep.subr.mxu0 0.0
    %1850 = vmatpush1.msra.mxu0 0.0
    %1851 = vmatprep.subr.mxu0 0.0
    %1852 = vmatpush1.msra.mxu0 0.0
    %1853 = vmatprep.subr.mxu0 0.0
    %1854 = vmatpush1.msra.mxu0 0.0
    %1855 = vmatprep.subr.mxu0 0.0
    %1856 = vmatpush1.msra.mxu0 0.0
    %1857 = vmatprep.subr.mxu0 0.0
    %1858 = vmatpush1.msra.mxu0 0.0
    %1859 = vmatprep.subr.mxu0 0.0
    %1860 = vmatpush1.msra.mxu0 0.0
    %1861 = vmatprep.mubr.f32.mxu0 0.0
    %v1862 = vand.u32 %v1381, 4294901760
    %1863 = vmatmul.mubr.f32.gmra.mrb[0].mxu0 %v1862
    %v1864 = vpop.f32.mrb[0].mxu0
    %v1865 = vadd.f32 %v1790, %v1864
    %v1866 = vpop.f32.mrb[0].mxu0
    %1867 = vdwg.mxu0
    %v1868 = vadd.f32 %v1377, %v1865
    %v1869 = vxor.u32 %v1868, 2147483648
    %v1870 = vmul.f32 %v1869, 1.442695
    %v1871 = vpow.pop %v1870
    %v1872 = vadd.f32 %v1871, 1.0
    %v1873 = vrcp.pop %v1872
    %v1874 = vmul.f32 1.0, %v1873
    %v1875 = vtanh.pop %v1868
    %1877 = vrot.lane.b32.xlu0 %v666, 32
    %v1878 = vpop.permute.xlu0 %1877
    %v1880 = vmul.f32 %v1874, %v1878
    %1882 = vrot.lane.b32.xlu0 %v1875, 64
    %v1883 = vpop.permute.xlu0 %1882
    %v1885 = vmul.f32 %v1874, %v1883
    %1887 = vrot.lane.b32.xlu0 %v1885, 32
    %v1888 = vpop.permute.xlu0 %1887
    %v1890 = vadd.f32 %v1880, %v1888
    %v1891 = vtanh.pop %v1890
    %1893 = vrot.lane.b32.xlu0 %v1891, 64
    %v1894 = vpop.permute.xlu0 %1893
    %v1896 = vmul.f32 %v1874, %v1894
    %1898 = vrot.lane.b32.xlu0 %v1896, 32
    %v1899 = vpop.permute.xlu0 %1898
    %vm1901 = vcmask 253952
    %1902 = vst.msk [vmem:[#allocation2] sm:$0x1] %vm1901, %v1899
    %vm1903 = vcmask 254977
    %1904 = vst.msk [vmem:[#allocation2 + $0x7] sm:$0x2] %vm1903, %v1899
    %1906 = vrot.lane.b32.xlu0 %v1896, 64
    %v1907 = vpop.permute.xlu0 %1906
    %v1909 = vsel %vm671, %v1380, %v1907
    %v1910 = vld [vmem:[#allocation6] sm:$0xff]
    %v1911 = vld [vmem:[#allocation6 + $0x8] sm:$0xff]
    %v1912 = vld [vmem:[#allocation6 + $0x10] sm:$0xff]
    %v1913 = vld [vmem:[#allocation6 + $0x18] sm:$0xff]
    %v1914 = vld [vmem:[#allocation6 + $0x20] sm:$0xff]
    %v1915 = vld [vmem:[#allocation6 + $0x28] sm:$0xff]
    %v1916 = vld [vmem:[#allocation6 + $0x30] sm:$0xff]
    %v1917 = vld [vmem:[#allocation6 + $0x38] sm:$0xff]
    %v1918 = vld [vmem:[#allocation6 + $0x40] sm:$0xff]
    %v1919 = vld [vmem:[#allocation6 + $0x48] sm:$0xff]
    %v1920 = vld [vmem:[#allocation6 + $0x50] sm:$0xff]
    %v1921 = vld [vmem:[#allocation6 + $0x58] sm:$0xff]
    %v1922 = vld [vmem:[#allocation6 + $0x60] sm:$0xff]
    %v1923 = vld [vmem:[#allocation6 + $0x68] sm:$0xff]
    %v1924 = vld [vmem:[#allocation6 + $0x70] sm:$0xff]
    %v1925 = vld [vmem:[#allocation6 + $0x78] sm:$0xff]
    %v1927 = vsel %vm73, %v1909, 0
    %v1929 = vand.u32 %v1911, 4294901760
    %1930 = vmatprep.subr.mxu0 %v1929
    %v1931 = vand.u32 %v1910, 4294901760
    %1932 = vmatpush1.msra.mxu0 %v1931
    %v1933 = vand.u32 %v1913, 4294901760
    %1934 = vmatprep.subr.mxu0 %v1933
    %v1935 = vand.u32 %v1912, 4294901760
    %1936 = vmatpush1.msra.mxu0 %v1935
    %v1937 = vand.u32 %v1915, 4294901760
    %1938 = vmatprep.subr.mxu0 %v1937
    %v1939 = vand.u32 %v1914, 4294901760
    %1940 = vmatpush1.msra.mxu0 %v1939
    %v1941 = vand.u32 %v1917, 4294901760
    %1942 = vmatprep.subr.mxu0 %v1941
    %v1943 = vand.u32 %v1916, 4294901760
    %1944 = vmatpush1.msra.mxu0 %v1943
    %v1945 = vand.u32 %v1919, 4294901760
    %1946 = vmatprep.subr.mxu0 %v1945
    %v1947 = vand.u32 %v1918, 4294901760
    %1948 = vmatpush1.msra.mxu0 %v1947
    %v1949 = vand.u32 %v1921, 4294901760
    %1950 = vmatprep.subr.mxu0 %v1949
    %v1951 = vand.u32 %v1920, 4294901760
    %1952 = vmatpush1.msra.mxu0 %v1951
    %v1953 = vand.u32 %v1923, 4294901760
    %1954 = vmatprep.subr.mxu0 %v1953
    %v1955 = vand.u32 %v1922, 4294901760
    %1956 = vmatpush1.msra.mxu0 %v1955
    %v1957 = vand.u32 %v1925, 4294901760
    %1958 = vmatprep.subr.mxu0 %v1957
    %v1959 = vand.u32 %v1924, 4294901760
    %1960 = vmatpush1.msra.mxu0 %v1959
    %1961 = vmatprep.subr.mxu0 0.0
    %1962 = vmatpush1.msra.mxu0 0.0
    %1963 = vmatprep.subr.mxu0 0.0
    %1964 = vmatpush1.msra.mxu0 0.0
    %1965 = vmatprep.subr.mxu0 0.0
    %1966 = vmatpush1.msra.mxu0 0.0
    %1967 = vmatprep.subr.mxu0 0.0
    %1968 = vmatpush1.msra.mxu0 0.0
    %1969 = vmatprep.subr.mxu0 0.0
    %1970 = vmatpush1.msra.mxu0 0.0
    %1971 = vmatprep.subr.mxu0 0.0
    %1972 = vmatpush1.msra.mxu0 0.0
    %1973 = vmatprep.subr.mxu0 0.0
    %1974 = vmatpush1.msra.mxu0 0.0
    %1975 = vmatprep.subr.mxu0 0.0
    %1976 = vmatpush1.msra.mxu0 0.0
    %1977 = vmatprep.subr.mxu0 0.0
    %1978 = vmatpush1.msra.mxu0 0.0
    %1979 = vmatprep.subr.mxu0 0.0
    %1980 = vmatpush1.msra.mxu0 0.0
    %1981 = vmatprep.subr.mxu0 0.0
    %1982 = vmatpush1.msra.mxu0 0.0
    %1983 = vmatprep.subr.mxu0 0.0
    %1984 = vmatpush1.msra.mxu0 0.0
    %1985 = vmatprep.subr.mxu0 0.0
    %1986 = vmatpush1.msra.mxu0 0.0
    %1987 = vmatprep.subr.mxu0 0.0
    %1988 = vmatpush1.msra.mxu0 0.0
    %1989 = vmatprep.subr.mxu0 0.0
    %1990 = vmatpush1.msra.mxu0 0.0
    %1991 = vmatprep.subr.mxu0 0.0
    %1992 = vmatpush1.msra.mxu0 0.0
    %1993 = vmatprep.subr.mxu0 0.0
    %1994 = vmatpush1.msra.mxu0 0.0
    %1995 = vmatprep.subr.mxu0 0.0
    %1996 = vmatpush1.msra.mxu0 0.0
    %1997 = vmatprep.subr.mxu0 0.0
    %1998 = vmatpush1.msra.mxu0 0.0
    %1999 = vmatprep.subr.mxu0 0.0
    %2000 = vmatpush1.msra.mxu0 0.0
    %2001 = vmatprep.subr.mxu0 0.0
    %2002 = vmatpush1.msra.mxu0 0.0
    %2003 = vmatprep.subr.mxu0 0.0
    %2004 = vmatpush1.msra.mxu0 0.0
    %2005 = vmatprep.subr.mxu0 0.0
    %2006 = vmatpush1.msra.mxu0 0.0
    %2007 = vmatprep.subr.mxu0 0.0
    %2008 = vmatpush1.msra.mxu0 0.0
    %2009 = vmatprep.mubr.f32.mxu0 0.0
    %v2010 = vand.u32 %v1927, 4294901760
    %v2011 = vsub.f32 %v1927, %v2010
    %v2012 = vand.u32 %v2011, 4294901760
    %v2013 = vsub.f32 %v2011, %v2012
    %v2014 = vand.u32 %v2013, 4294901760
    %2015 = vmatmul.mubr.f32.gmra.mrb[0].mxu0 %v2014
    %v2016 = vpop.f32.mrb[0].mxu0
    %v2017 = vadd.f32 0.0, %v2016
    %v2018 = vpop.f32.mrb[0].mxu0
    %v2019 = vadd.f32 0.0, %v2018
    %2020 = vdwg.mxu0
    %v2021 = vand.u32 %v1911, 4294901760
    %v2022 = vsub.f32 %v1911, %v2021
    %v2023 = vand.u32 %v2022, 4294901760
    %v2024 = vsub.f32 %v2022, %v2023
    %v2025 = vand.u32 %v2024, 4294901760
    %2026 = vmatprep.subr.mxu0 %v2025
    %v2027 = vand.u32 %v1910, 4294901760
    %v2028 = vsub.f32 %v1910, %v2027
    %v2029 = vand.u32 %v2028, 4294901760
    %v2030 = vsub.f32 %v2028, %v2029
    %v2031 = vand.u32 %v2030, 4294901760
    %2032 = vmatpush1.msra.mxu0 %v2031
    %v2033 = vand.u32 %v1913, 4294901760
    %v2034 = vsub.f32 %v1913, %v2033
    %v2035 = vand.u32 %v2034, 4294901760
    %v2036 = vsub.f32 %v2034, %v2035
    %v2037 = vand.u32 %v2036, 4294901760
    %2038 = vmatprep.subr.mxu0 %v2037
    %v2039 = vand.u32 %v1912, 4294901760
    %v2040 = vsub.f32 %v1912, %v2039
    %v2041 = vand.u32 %v2040, 4294901760
    %v2042 = vsub.f32 %v2040, %v2041
    %v2043 = vand.u32 %v2042, 4294901760
    %2044 = vmatpush1.msra.mxu0 %v2043
    %v2045 = vand.u32 %v1915, 4294901760
    %v2046 = vsub.f32 %v1915, %v2045
    %v2047 = vand.u32 %v2046, 4294901760
    %v2048 = vsub.f32 %v2046, %v2047
    %v2049 = vand.u32 %v2048, 4294901760
    %2050 = vmatprep.subr.mxu0 %v2049
    %v2051 = vand.u32 %v1914, 4294901760
    %v2052 = vsub.f32 %v1914, %v2051
    %v2053 = vand.u32 %v2052, 4294901760
    %v2054 = vsub.f32 %v2052, %v2053
    %v2055 = vand.u32 %v2054, 4294901760
    %2056 = vmatpush1.msra.mxu0 %v2055
    %v2057 = vand.u32 %v1917, 4294901760
    %v2058 = vsub.f32 %v1917, %v2057
    %v2059 = vand.u32 %v2058, 4294901760
    %v2060 = vsub.f32 %v2058, %v2059
    %v2061 = vand.u32 %v2060, 4294901760
    %2062 = vmatprep.subr.mxu0 %v2061
    %v2063 = vand.u32 %v1916, 4294901760
    %v2064 = vsub.f32 %v1916, %v2063
    %v2065 = vand.u32 %v2064, 4294901760
    %v2066 = vsub.f32 %v2064, %v2065
    %v2067 = vand.u32 %v2066, 4294901760
    %2068 = vmatpush1.msra.mxu0 %v2067
    %v2069 = vand.u32 %v1919, 4294901760
    %v2070 = vsub.f32 %v1919, %v2069
    %v2071 = vand.u32 %v2070, 4294901760
    %v2072 = vsub.f32 %v2070, %v2071
    %v2073 = vand.u32 %v2072, 4294901760
    %2074 = vmatprep.subr.mxu0 %v2073
    %v2075 = vand.u32 %v1918, 4294901760
    %v2076 = vsub.f32 %v1918, %v2075
    %v2077 = vand.u32 %v2076, 4294901760
    %v2078 = vsub.f32 %v2076, %v2077
    %v2079 = vand.u32 %v2078, 4294901760
    %2080 = vmatpush1.msra.mxu0 %v2079
    %v2081 = vand.u32 %v1921, 4294901760
    %v2082 = vsub.f32 %v1921, %v2081
    %v2083 = vand.u32 %v2082, 4294901760
    %v2084 = vsub.f32 %v2082, %v2083
    %v2085 = vand.u32 %v2084, 4294901760
    %2086 = vmatprep.subr.mxu0 %v2085
    %v2087 = vand.u32 %v1920, 4294901760
    %v2088 = vsub.f32 %v1920, %v2087
    %v2089 = vand.u32 %v2088, 4294901760
    %v2090 = vsub.f32 %v2088, %v2089
    %v2091 = vand.u32 %v2090, 4294901760
    %2092 = vmatpush1.msra.mxu0 %v2091
    %v2093 = vand.u32 %v1923, 4294901760
    %v2094 = vsub.f32 %v1923, %v2093
    %v2095 = vand.u32 %v2094, 4294901760
    %v2096 = vsub.f32 %v2094, %v2095
    %v2097 = vand.u32 %v2096, 4294901760
    %2098 = vmatprep.subr.mxu0 %v2097
    %v2099 = vand.u32 %v1922, 4294901760
    %v2100 = vsub.f32 %v1922, %v2099
    %v2101 = vand.u32 %v2100, 4294901760
    %v2102 = vsub.f32 %v2100, %v2101
    %v2103 = vand.u32 %v2102, 4294901760
    %2104 = vmatpush1.msra.mxu0 %v2103
    %v2105 = vand.u32 %v1925, 4294901760
    %v2106 = vsub.f32 %v1925, %v2105
    %v2107 = vand.u32 %v2106, 4294901760
    %v2108 = vsub.f32 %v2106, %v2107
    %v2109 = vand.u32 %v2108, 4294901760
    %2110 = vmatprep.subr.mxu0 %v2109
    %v2111 = vand.u32 %v1924, 4294901760
    %v2112 = vsub.f32 %v1924, %v2111
    %v2113 = vand.u32 %v2112, 4294901760
    %v2114 = vsub.f32 %v2112, %v2113
    %v2115 = vand.u32 %v2114, 4294901760
    %2116 = vmatpush1.msra.mxu0 %v2115
    %2117 = vmatprep.subr.mxu0 0.0
    %2118 = vmatpush1.msra.mxu0 0.0
    %2119 = vmatprep.subr.mxu0 0.0
    %2120 = vmatpush1.msra.mxu0 0.0
    %2121 = vmatprep.subr.mxu0 0.0
    %2122 = vmatpush1.msra.mxu0 0.0
    %2123 = vmatprep.subr.mxu0 0.0
    %2124 = vmatpush1.msra.mxu0 0.0
    %2125 = vmatprep.subr.mxu0 0.0
    %2126 = vmatpush1.msra.mxu0 0.0
    %2127 = vmatprep.subr.mxu0 0.0
    %2128 = vmatpush1.msra.mxu0 0.0
    %2129 = vmatprep.subr.mxu0 0.0
    %2130 = vmatpush1.msra.mxu0 0.0
    %2131 = vmatprep.subr.mxu0 0.0
    %2132 = vmatpush1.msra.mxu0 0.0
    %2133 = vmatprep.subr.mxu0 0.0
    %2134 = vmatpush1.msra.mxu0 0.0
    %2135 = vmatprep.subr.mxu0 0.0
    %2136 = vmatpush1.msra.mxu0 0.0
    %2137 = vmatprep.subr.mxu0 0.0
    %2138 = vmatpush1.msra.mxu0 0.0
    %2139 = vmatprep.subr.mxu0 0.0
    %2140 = vmatpush1.msra.mxu0 0.0
    %2141 = vmatprep.subr.mxu0 0.0
    %2142 = vmatpush1.msra.mxu0 0.0
    %2143 = vmatprep.subr.mxu0 0.0
    %2144 = vmatpush1.msra.mxu0 0.0
    %2145 = vmatprep.subr.mxu0 0.0
    %2146 = vmatpush1.msra.mxu0 0.0
    %2147 = vmatprep.subr.mxu0 0.0
    %2148 = vmatpush1.msra.mxu0 0.0
    %2149 = vmatprep.subr.mxu0 0.0
    %2150 = vmatpush1.msra.mxu0 0.0
    %2151 = vmatprep.subr.mxu0 0.0
    %2152 = vmatpush1.msra.mxu0 0.0
    %2153 = vmatprep.subr.mxu0 0.0
    %2154 = vmatpush1.msra.mxu0 0.0
    %2155 = vmatprep.subr.mxu0 0.0
    %2156 = vmatpush1.msra.mxu0 0.0
    %2157 = vmatprep.subr.mxu0 0.0
    %2158 = vmatpush1.msra.mxu0 0.0
    %2159 = vmatprep.subr.mxu0 0.0
    %2160 = vmatpush1.msra.mxu0 0.0
    %2161 = vmatprep.subr.mxu0 0.0
    %2162 = vmatpush1.msra.mxu0 0.0
    %2163 = vmatprep.subr.mxu0 0.0
    %2164 = vmatpush1.msra.mxu0 0.0
    %2165 = vmatprep.mubr.f32.mxu0 0.0
    %v2166 = vand.u32 %v1927, 4294901760
    %2167 = vmatmul.mubr.f32.gmra.mrb[0].mxu0 %v2166
    %v2168 = vpop.f32.mrb[0].mxu0
    %v2169 = vadd.f32 %v2017, %v2168
    %v2170 = vpop.f32.mrb[0].mxu0
    %v2171 = vadd.f32 %v2019, %v2170
    %2172 = vdwg.mxu0
    %v2173 = vand.u32 %v1911, 4294901760
    %v2174 = vsub.f32 %v1911, %v2173
    %2175 = vmatprep.subr.mxu0 %v2174
    %v2176 = vand.u32 %v1910, 4294901760
    %v2177 = vsub.f32 %v1910, %v2176
    %2178 = vmatpush1.msra.mxu0 %v2177
    %v2179 = vand.u32 %v1913, 4294901760
    %v2180 = vsub.f32 %v1913, %v2179
    %2181 = vmatprep.subr.mxu0 %v2180
    %v2182 = vand.u32 %v1912, 4294901760
    %v2183 = vsub.f32 %v1912, %v2182
    %2184 = vmatpush1.msra.mxu0 %v2183
    %v2185 = vand.u32 %v1915, 4294901760
    %v2186 = vsub.f32 %v1915, %v2185
    %2187 = vmatprep.subr.mxu0 %v2186
    %v2188 = vand.u32 %v1914, 4294901760
    %v2189 = vsub.f32 %v1914, %v2188
    %2190 = vmatpush1.msra.mxu0 %v2189
    %v2191 = vand.u32 %v1917, 4294901760
    %v2192 = vsub.f32 %v1917, %v2191
    %2193 = vmatprep.subr.mxu0 %v2192
    %v2194 = vand.u32 %v1916, 4294901760
    %v2195 = vsub.f32 %v1916, %v2194
    %2196 = vmatpush1.msra.mxu0 %v2195
    %v2197 = vand.u32 %v1919, 4294901760
    %v2198 = vsub.f32 %v1919, %v2197
    %2199 = vmatprep.subr.mxu0 %v2198
    %v2200 = vand.u32 %v1918, 4294901760
    %v2201 = vsub.f32 %v1918, %v2200
    %2202 = vmatpush1.msra.mxu0 %v2201
    %v2203 = vand.u32 %v1921, 4294901760
    %v2204 = vsub.f32 %v1921, %v2203
    %2205 = vmatprep.subr.mxu0 %v2204
    %v2206 = vand.u32 %v1920, 4294901760
    %v2207 = vsub.f32 %v1920, %v2206
    %2208 = vmatpush1.msra.mxu0 %v2207
    %v2209 = vand.u32 %v1923, 4294901760
    %v2210 = vsub.f32 %v1923, %v2209
    %2211 = vmatprep.subr.mxu0 %v2210
    %v2212 = vand.u32 %v1922, 4294901760
    %v2213 = vsub.f32 %v1922, %v2212
    %2214 = vmatpush1.msra.mxu0 %v2213
    %v2215 = vand.u32 %v1925, 4294901760
    %v2216 = vsub.f32 %v1925, %v2215
    %2217 = vmatprep.subr.mxu0 %v2216
    %v2218 = vand.u32 %v1924, 4294901760
    %v2219 = vsub.f32 %v1924, %v2218
    %2220 = vmatpush1.msra.mxu0 %v2219
    %2221 = vmatprep.subr.mxu0 0.0
    %2222 = vmatpush1.msra.mxu0 0.0
    %2223 = vmatprep.subr.mxu0 0.0
    %2224 = vmatpush1.msra.mxu0 0.0
    %2225 = vmatprep.subr.mxu0 0.0
    %2226 = vmatpush1.msra.mxu0 0.0
    %2227 = vmatprep.subr.mxu0 0.0
    %2228 = vmatpush1.msra.mxu0 0.0
    %2229 = vmatprep.subr.mxu0 0.0
    %2230 = vmatpush1.msra.mxu0 0.0
    %2231 = vmatprep.subr.mxu0 0.0
    %2232 = vmatpush1.msra.mxu0 0.0
    %2233 = vmatprep.subr.mxu0 0.0
    %2234 = vmatpush1.msra.mxu0 0.0
    %2235 = vmatprep.subr.mxu0 0.0
    %2236 = vmatpush1.msra.mxu0 0.0
    %2237 = vmatprep.subr.mxu0 0.0
    %2238 = vmatpush1.msra.mxu0 0.0
    %2239 = vmatprep.subr.mxu0 0.0
    %2240 = vmatpush1.msra.mxu0 0.0
    %2241 = vmatprep.subr.mxu0 0.0
    %2242 = vmatpush1.msra.mxu0 0.0
    %2243 = vmatprep.subr.mxu0 0.0
    %2244 = vmatpush1.msra.mxu0 0.0
    %2245 = vmatprep.subr.mxu0 0.0
    %2246 = vmatpush1.msra.mxu0 0.0
    %2247 = vmatprep.subr.mxu0 0.0
    %2248 = vmatpush1.msra.mxu0 0.0
    %2249 = vmatprep.subr.mxu0 0.0
    %2250 = vmatpush1.msra.mxu0 0.0
    %2251 = vmatprep.subr.mxu0 0.0
    %2252 = vmatpush1.msra.mxu0 0.0
    %2253 = vmatprep.subr.mxu0 0.0
    %2254 = vmatpush1.msra.mxu0 0.0
    %2255 = vmatprep.subr.mxu0 0.0
    %2256 = vmatpush1.msra.mxu0 0.0
    %2257 = vmatprep.subr.mxu0 0.0
    %2258 = vmatpush1.msra.mxu0 0.0
    %2259 = vmatprep.subr.mxu0 0.0
    %2260 = vmatpush1.msra.mxu0 0.0
    %2261 = vmatprep.subr.mxu0 0.0
    %2262 = vmatpush1.msra.mxu0 0.0
    %2263 = vmatprep.subr.mxu0 0.0
    %2264 = vmatpush1.msra.mxu0 0.0
    %2265 = vmatprep.subr.mxu0 0.0
    %2266 = vmatpush1.msra.mxu0 0.0
    %2267 = vmatprep.subr.mxu0 0.0
    %2268 = vmatpush1.msra.mxu0 0.0
    %2269 = vmatprep.mubr.f32.mxu0 0.0
    %v2270 = vand.u32 %v1927, 4294901760
    %v2271 = vsub.f32 %v1927, %v2270
    %2272 = vmatmul.mubr.f32.gmra.mrb[0].mxu0 %v2271
    %v2273 = vpop.f32.mrb[0].mxu0
    %v2274 = vadd.f32 %v2169, %v2273
    %v2275 = vpop.f32.mrb[0].mxu0
    %v2276 = vadd.f32 %v2171, %v2275
    %2277 = vdwg.mxu0
    %v2278 = vand.u32 %v1911, 4294901760
    %2279 = vmatprep.subr.mxu0 %v2278
    %v2280 = vand.u32 %v1910, 4294901760
    %2281 = vmatpush1.msra.mxu0 %v2280
    %v2282 = vand.u32 %v1913, 4294901760
    %2283 = vmatprep.subr.mxu0 %v2282
    %v2284 = vand.u32 %v1912, 4294901760
    %2285 = vmatpush1.msra.mxu0 %v2284
    %v2286 = vand.u32 %v1915, 4294901760
    %2287 = vmatprep.subr.mxu0 %v2286
    %v2288 = vand.u32 %v1914, 4294901760
    %2289 = vmatpush1.msra.mxu0 %v2288
    %v2290 = vand.u32 %v1917, 4294901760
    %2291 = vmatprep.subr.mxu0 %v2290
    %v2292 = vand.u32 %v1916, 4294901760
    %2293 = vmatpush1.msra.mxu0 %v2292
    %v2294 = vand.u32 %v1919, 4294901760
    %2295 = vmatprep.subr.mxu0 %v2294
    %v2296 = vand.u32 %v1918, 4294901760
    %2297 = vmatpush1.msra.mxu0 %v2296
    %v2298 = vand.u32 %v1921, 4294901760
    %2299 = vmatprep.subr.mxu0 %v2298
    %v2300 = vand.u32 %v1920, 4294901760
    %2301 = vmatpush1.msra.mxu0 %v2300
    %v2302 = vand.u32 %v1923, 4294901760
    %2303 = vmatprep.subr.mxu0 %v2302
    %v2304 = vand.u32 %v1922, 4294901760
    %2305 = vmatpush1.msra.mxu0 %v2304
    %v2306 = vand.u32 %v1925, 4294901760
    %2307 = vmatprep.subr.mxu0 %v2306
    %v2308 = vand.u32 %v1924, 4294901760
    %2309 = vmatpush1.msra.mxu0 %v2308
    %2310 = vmatprep.subr.mxu0 0.0
    %2311 = vmatpush1.msra.mxu0 0.0
    %2312 = vmatprep.subr.mxu0 0.0
    %2313 = vmatpush1.msra.mxu0 0.0
    %2314 = vmatprep.subr.mxu0 0.0
    %2315 = vmatpush1.msra.mxu0 0.0
    %2316 = vmatprep.subr.mxu0 0.0
    %2317 = vmatpush1.msra.mxu0 0.0
    %2318 = vmatprep.subr.mxu0 0.0
    %2319 = vmatpush1.msra.mxu0 0.0
    %2320 = vmatprep.subr.mxu0 0.0
    %2321 = vmatpush1.msra.mxu0 0.0
    %2322 = vmatprep.subr.mxu0 0.0
    %2323 = vmatpush1.msra.mxu0 0.0
    %2324 = vmatprep.subr.mxu0 0.0
    %2325 = vmatpush1.msra.mxu0 0.0
    %2326 = vmatprep.subr.mxu0 0.0
    %2327 = vmatpush1.msra.mxu0 0.0
    %2328 = vmatprep.subr.mxu0 0.0
    %2329 = vmatpush1.msra.mxu0 0.0
    %2330 = vmatprep.subr.mxu0 0.0
    %2331 = vmatpush1.msra.mxu0 0.0
    %2332 = vmatprep.subr.mxu0 0.0
    %2333 = vmatpush1.msra.mxu0 0.0
    %2334 = vmatprep.subr.mxu0 0.0
    %2335 = vmatpush1.msra.mxu0 0.0
    %2336 = vmatprep.subr.mxu0 0.0
    %2337 = vmatpush1.msra.mxu0 0.0
    %2338 = vmatprep.subr.mxu0 0.0
    %2339 = vmatpush1.msra.mxu0 0.0
    %2340 = vmatprep.subr.mxu0 0.0
    %2341 = vmatpush1.msra.mxu0 0.0
    %2342 = vmatprep.subr.mxu0 0.0
    %2343 = vmatpush1.msra.mxu0 0.0
    %2344 = vmatprep.subr.mxu0 0.0
    %2345 = vmatpush1.msra.mxu0 0.0
    %2346 = vmatprep.subr.mxu0 0.0
    %2347 = vmatpush1.msra.mxu0 0.0
    %2348 = vmatprep.subr.mxu0 0.0
    %2349 = vmatpush1.msra.mxu0 0.0
    %2350 = vmatprep.subr.mxu0 0.0
    %2351 = vmatpush1.msra.mxu0 0.0
    %2352 = vmatprep.subr.mxu0 0.0
    %2353 = vmatpush1.msra.mxu0 0.0
    %2354 = vmatprep.subr.mxu0 0.0
    %2355 = vmatpush1.msra.mxu0 0.0
    %2356 = vmatprep.subr.mxu0 0.0
    %2357 = vmatpush1.msra.mxu0 0.0
    %2358 = vmatprep.mubr.f32.mxu0 0.0
    %v2359 = vand.u32 %v1927, 4294901760
    %v2360 = vsub.f32 %v1927, %v2359
    %v2361 = vand.u32 %v2360, 4294901760
    %2362 = vmatmul.mubr.f32.gmra.mrb[0].mxu0 %v2361
    %v2363 = vpop.f32.mrb[0].mxu0
    %v2364 = vadd.f32 %v2274, %v2363
    %v2365 = vpop.f32.mrb[0].mxu0
    %v2366 = vadd.f32 %v2276, %v2365
    %2367 = vdwg.mxu0
    %v2368 = vand.u32 %v1911, 4294901760
    %v2369 = vsub.f32 %v1911, %v2368
    %v2370 = vand.u32 %v2369, 4294901760
    %2371 = vmatprep.subr.mxu0 %v2370
    %v2372 = vand.u32 %v1910, 4294901760
    %v2373 = vsub.f32 %v1910, %v2372
    %v2374 = vand.u32 %v2373, 4294901760
    %2375 = vmatpush1.msra.mxu0 %v2374
    %v2376 = vand.u32 %v1913, 4294901760
    %v2377 = vsub.f32 %v1913, %v2376
    %v2378 = vand.u32 %v2377, 4294901760
    %2379 = vmatprep.subr.mxu0 %v2378
    %v2380 = vand.u32 %v1912, 4294901760
    %v2381 = vsub.f32 %v1912, %v2380
    %v2382 = vand.u32 %v2381, 4294901760
    %2383 = vmatpush1.msra.mxu0 %v2382
    %v2384 = vand.u32 %v1915, 4294901760
    %v2385 = vsub.f32 %v1915, %v2384
    %v2386 = vand.u32 %v2385, 4294901760
    %2387 = vmatprep.subr.mxu0 %v2386
    %v2388 = vand.u32 %v1914, 4294901760
    %v2389 = vsub.f32 %v1914, %v2388
    %v2390 = vand.u32 %v2389, 4294901760
    %2391 = vmatpush1.msra.mxu0 %v2390
    %v2392 = vand.u32 %v1917, 4294901760
    %v2393 = vsub.f32 %v1917, %v2392
    %v2394 = vand.u32 %v2393, 4294901760
    %2395 = vmatprep.subr.mxu0 %v2394
    %v2396 = vand.u32 %v1916, 4294901760
    %v2397 = vsub.f32 %v1916, %v2396
    %v2398 = vand.u32 %v2397, 4294901760
    %2399 = vmatpush1.msra.mxu0 %v2398
    %v2400 = vand.u32 %v1919, 4294901760
    %v2401 = vsub.f32 %v1919, %v2400
    %v2402 = vand.u32 %v2401, 4294901760
    %2403 = vmatprep.subr.mxu0 %v2402
    %v2404 = vand.u32 %v1918, 4294901760
    %v2405 = vsub.f32 %v1918, %v2404
    %v2406 = vand.u32 %v2405, 4294901760
    %2407 = vmatpush1.msra.mxu0 %v2406
    %v2408 = vand.u32 %v1921, 4294901760
    %v2409 = vsub.f32 %v1921, %v2408
    %v2410 = vand.u32 %v2409, 4294901760
    %2411 = vmatprep.subr.mxu0 %v2410
    %v2412 = vand.u32 %v1920, 4294901760
    %v2413 = vsub.f32 %v1920, %v2412
    %v2414 = vand.u32 %v2413, 4294901760
    %2415 = vmatpush1.msra.mxu0 %v2414
    %v2416 = vand.u32 %v1923, 4294901760
    %v2417 = vsub.f32 %v1923, %v2416
    %v2418 = vand.u32 %v2417, 4294901760
    %2419 = vmatprep.subr.mxu0 %v2418
    %v2420 = vand.u32 %v1922, 4294901760
    %v2421 = vsub.f32 %v1922, %v2420
    %v2422 = vand.u32 %v2421, 4294901760
    %2423 = vmatpush1.msra.mxu0 %v2422
    %v2424 = vand.u32 %v1925, 4294901760
    %v2425 = vsub.f32 %v1925, %v2424
    %v2426 = vand.u32 %v2425, 4294901760
    %2427 = vmatprep.subr.mxu0 %v2426
    %v2428 = vand.u32 %v1924, 4294901760
    %v2429 = vsub.f32 %v1924, %v2428
    %v2430 = vand.u32 %v2429, 4294901760
    %2431 = vmatpush1.msra.mxu0 %v2430
    %2432 = vmatprep.subr.mxu0 0.0
    %2433 = vmatpush1.msra.mxu0 0.0
    %2434 = vmatprep.subr.mxu0 0.0
    %2435 = vmatpush1.msra.mxu0 0.0
    %2436 = vmatprep.subr.mxu0 0.0
    %2437 = vmatpush1.msra.mxu0 0.0
    %2438 = vmatprep.subr.mxu0 0.0
    %2439 = vmatpush1.msra.mxu0 0.0
    %2440 = vmatprep.subr.mxu0 0.0
    %2441 = vmatpush1.msra.mxu0 0.0
    %2442 = vmatprep.subr.mxu0 0.0
    %2443 = vmatpush1.msra.mxu0 0.0
    %2444 = vmatprep.subr.mxu0 0.0
    %2445 = vmatpush1.msra.mxu0 0.0
    %2446 = vmatprep.subr.mxu0 0.0
    %2447 = vmatpush1.msra.mxu0 0.0
    %2448 = vmatprep.subr.mxu0 0.0
    %2449 = vmatpush1.msra.mxu0 0.0
    %2450 = vmatprep.subr.mxu0 0.0
    %2451 = vmatpush1.msra.mxu0 0.0
    %2452 = vmatprep.subr.mxu0 0.0
    %2453 = vmatpush1.msra.mxu0 0.0
    %2454 = vmatprep.subr.mxu0 0.0
    %2455 = vmatpush1.msra.mxu0 0.0
    %2456 = vmatprep.subr.mxu0 0.0
    %2457 = vmatpush1.msra.mxu0 0.0
    %2458 = vmatprep.subr.mxu0 0.0
    %2459 = vmatpush1.msra.mxu0 0.0
    %2460 = vmatprep.subr.mxu0 0.0
    %2461 = vmatpush1.msra.mxu0 0.0
    %2462 = vmatprep.subr.mxu0 0.0
    %2463 = vmatpush1.msra.mxu0 0.0
    %2464 = vmatprep.subr.mxu0 0.0
    %2465 = vmatpush1.msra.mxu0 0.0
    %2466 = vmatprep.subr.mxu0 0.0
    %2467 = vmatpush1.msra.mxu0 0.0
    %2468 = vmatprep.subr.mxu0 0.0
    %2469 = vmatpush1.msra.mxu0 0.0
    %2470 = vmatprep.subr.mxu0 0.0
    %2471 = vmatpush1.msra.mxu0 0.0
    %2472 = vmatprep.subr.mxu0 0.0
    %2473 = vmatpush1.msra.mxu0 0.0
    %2474 = vmatprep.subr.mxu0 0.0
    %2475 = vmatpush1.msra.mxu0 0.0
    %2476 = vmatprep.subr.mxu0 0.0
    %2477 = vmatpush1.msra.mxu0 0.0
    %2478 = vmatprep.subr.mxu0 0.0
    %2479 = vmatpush1.msra.mxu0 0.0
    %2480 = vmatprep.mubr.f32.mxu0 0.0
    %v2481 = vand.u32 %v1927, 4294901760
    %2482 = vmatmul.mubr.f32.gmra.mrb[0].mxu0 %v2481
    %v2483 = vpop.f32.mrb[0].mxu0
    %v2484 = vadd.f32 %v2364, %v2483
    %v2485 = vpop.f32.mrb[0].mxu0
    %v2486 = vadd.f32 %v2366, %v2485
    %2487 = vdwg.mxu0
    %v2488 = vand.u32 %v1911, 4294901760
    %2489 = vmatprep.subr.mxu0 %v2488
    %v2490 = vand.u32 %v1910, 4294901760
    %2491 = vmatpush1.msra.mxu0 %v2490
    %v2492 = vand.u32 %v1913, 4294901760
    %2493 = vmatprep.subr.mxu0 %v2492
    %v2494 = vand.u32 %v1912, 4294901760
    %2495 = vmatpush1.msra.mxu0 %v2494
    %v2496 = vand.u32 %v1915, 4294901760
    %2497 = vmatprep.subr.mxu0 %v2496
    %v2498 = vand.u32 %v1914, 4294901760
    %2499 = vmatpush1.msra.mxu0 %v2498
    %v2500 = vand.u32 %v1917, 4294901760
    %2501 = vmatprep.subr.mxu0 %v2500
    %v2502 = vand.u32 %v1916, 4294901760
    %2503 = vmatpush1.msra.mxu0 %v2502
    %v2504 = vand.u32 %v1919, 4294901760
    %2505 = vmatprep.subr.mxu0 %v2504
    %v2506 = vand.u32 %v1918, 4294901760
    %2507 = vmatpush1.msra.mxu0 %v2506
    %v2508 = vand.u32 %v1921, 4294901760
    %2509 = vmatprep.subr.mxu0 %v2508
    %v2510 = vand.u32 %v1920, 4294901760
    %2511 = vmatpush1.msra.mxu0 %v2510
    %v2512 = vand.u32 %v1923, 4294901760
    %2513 = vmatprep.subr.mxu0 %v2512
    %v2514 = vand.u32 %v1922, 4294901760
    %2515 = vmatpush1.msra.mxu0 %v2514
    %v2516 = vand.u32 %v1925, 4294901760
    %2517 = vmatprep.subr.mxu0 %v2516
    %v2518 = vand.u32 %v1924, 4294901760
    %2519 = vmatpush1.msra.mxu0 %v2518
    %2520 = vmatprep.subr.mxu0 0.0
    %2521 = vmatpush1.msra.mxu0 0.0
    %2522 = vmatprep.subr.mxu0 0.0
    %2523 = vmatpush1.msra.mxu0 0.0
    %2524 = vmatprep.subr.mxu0 0.0
    %2525 = vmatpush1.msra.mxu0 0.0
    %2526 = vmatprep.subr.mxu0 0.0
    %2527 = vmatpush1.msra.mxu0 0.0
    %2528 = vmatprep.subr.mxu0 0.0
    %2529 = vmatpush1.msra.mxu0 0.0
    %2530 = vmatprep.subr.mxu0 0.0
    %2531 = vmatpush1.msra.mxu0 0.0
    %2532 = vmatprep.subr.mxu0 0.0
    %2533 = vmatpush1.msra.mxu0 0.0
    %2534 = vmatprep.subr.mxu0 0.0
    %2535 = vmatpush1.msra.mxu0 0.0
    %2536 = vmatprep.subr.mxu0 0.0
    %2537 = vmatpush1.msra.mxu0 0.0
    %2538 = vmatprep.subr.mxu0 0.0
    %2539 = vmatpush1.msra.mxu0 0.0
    %2540 = vmatprep.subr.mxu0 0.0
    %2541 = vmatpush1.msra.mxu0 0.0
    %2542 = vmatprep.subr.mxu0 0.0
    %2543 = vmatpush1.msra.mxu0 0.0
    %2544 = vmatprep.subr.mxu0 0.0
    %2545 = vmatpush1.msra.mxu0 0.0
    %2546 = vmatprep.subr.mxu0 0.0
    %2547 = vmatpush1.msra.mxu0 0.0
    %2548 = vmatprep.subr.mxu0 0.0
    %2549 = vmatpush1.msra.mxu0 0.0
    %2550 = vmatprep.subr.mxu0 0.0
    %2551 = vmatpush1.msra.mxu0 0.0
    %2552 = vmatprep.subr.mxu0 0.0
    %2553 = vmatpush1.msra.mxu0 0.0
    %2554 = vmatprep.subr.mxu0 0.0
    %2555 = vmatpush1.msra.mxu0 0.0
    %2556 = vmatprep.subr.mxu0 0.0
    %2557 = vmatpush1.msra.mxu0 0.0
    %2558 = vmatprep.subr.mxu0 0.0
    %2559 = vmatpush1.msra.mxu0 0.0
    %2560 = vmatprep.subr.mxu0 0.0
    %2561 = vmatpush1.msra.mxu0 0.0
    %2562 = vmatprep.subr.mxu0 0.0
    %2563 = vmatpush1.msra.mxu0 0.0
    %2564 = vmatprep.subr.mxu0 0.0
    %2565 = vmatpush1.msra.mxu0 0.0
    %2566 = vmatprep.subr.mxu0 0.0
    %2567 = vmatpush1.msra.mxu0 0.0
    %2568 = vmatprep.mubr.f32.mxu0 0.0
    %v2569 = vand.u32 %v1927, 4294901760
    %2570 = vmatmul.mubr.f32.gmra.mrb[0].mxu0 %v2569
    %v2571 = vpop.f32.mrb[0].mxu0
    %v2572 = vadd.f32 %v2484, %v2571
    %v2573 = vpop.f32.mrb[0].mxu0
    %v2574 = vadd.f32 %v2486, %v2573
    %2575 = vdwg.mxu0
    %v2577 = vrot.slane %v2572, 6
    %v2579 = vadd.f32 %v651, %v2577
    %v2580 = vxor.u32 %v2579, 2147483648
    %v2581 = vmul.f32 %v2580, 1.442695
    %v2582 = vpow.pop %v2581
    %v2583 = vadd.f32 %v2582, 1.0
    %v2584 = vrcp.pop %v2583
    %v2585 = vmul.f32 1.0, %v2584
    %v2586 = vtanh.pop %v2579
    %v2588 = vrot.slane %v1361, 6
    %v2590 = vmul.f32 %v2585, %v2588
    %2592 = vrot.lane.b32.xlu0 %v2586, 64
    %v2593 = vpop.permute.xlu0 %2592
    %v2595 = vmul.f32 %v2585, %v2593
    %2597 = vrot.lane.b32.xlu0 %v2595, 32
    %v2598 = vpop.permute.xlu0 %2597
    %v2600 = vadd.f32 %v2590, %v2598
    %v2601 = vtanh.pop %v2600
    %2603 = vrot.lane.b32.xlu0 %v2601, 64
    %v2604 = vpop.permute.xlu0 %2603
    %v2606 = vmul.f32 %v2585, %v2604
    %v2607 = vld [vmem:[#allocation3 + $0x40] sm:$0xff]
    %v2608 = vld [vmem:[#allocation3 + $0x48] sm:$0xff]
    %v2609 = vld [vmem:[#allocation3 + $0x50] sm:$0xff]
    %v2610 = vld [vmem:[#allocation3 + $0x58] sm:$0xff]
    %v2611 = vld [vmem:[#allocation3 + $0x80] sm:$0x1]
    %v2612 = vlaneseq
    %v2613 = vshrl.u32 %v2612, 7
    %v2614 = vsub.s32 0, %v2613
    %v2615 = vrot.slane %v2611, %v2614
    %v2616 = vadd.f32 %v2574, %v2615
    %v2618 = vrot.slane %v2606, 2
    %2619 = vrot.lane.b32.xlu0 %v2618, 32
    %v2620 = vpop.permute.xlu0 %2619
    %v2621 = vsel %vm671, %v2620, 0
    %2623 = vmatprep.subr.mxu0 0.0
    %v2624 = vand.u32 %v2607, 4294901760
    %2625 = vmatpush1.msra.mxu0 %v2624
    %2626 = vmatprep.subr.mxu0 0.0
    %v2627 = vand.u32 %v2608, 4294901760
    %2628 = vmatpush1.msra.mxu0 %v2627
    %2629 = vmatprep.subr.mxu0 0.0
    %v2630 = vand.u32 %v2609, 4294901760
    %2631 = vmatpush1.msra.mxu0 %v2630
    %2632 = vmatprep.subr.mxu0 0.0
    %v2633 = vand.u32 %v2610, 4294901760
    %2634 = vmatpush1.msra.mxu0 %v2633
    %2635 = vmatprep.subr.mxu0 0.0
    %2636 = vmatpush1.msra.mxu0 0.0
    %2637 = vmatprep.subr.mxu0 0.0
    %2638 = vmatpush1.msra.mxu0 0.0
    %2639 = vmatprep.subr.mxu0 0.0
    %2640 = vmatpush1.msra.mxu0 0.0
    %2641 = vmatprep.subr.mxu0 0.0
    %2642 = vmatpush1.msra.mxu0 0.0
    %2643 = vmatprep.subr.mxu0 0.0
    %2644 = vmatpush1.msra.mxu0 0.0
    %2645 = vmatprep.subr.mxu0 0.0
    %2646 = vmatpush1.msra.mxu0 0.0
    %2647 = vmatprep.subr.mxu0 0.0
    %2648 = vmatpush1.msra.mxu0 0.0
    %2649 = vmatprep.subr.mxu0 0.0
    %2650 = vmatpush1.msra.mxu0 0.0
    %2651 = vmatprep.subr.mxu0 0.0
    %2652 = vmatpush1.msra.mxu0 0.0
    %2653 = vmatprep.subr.mxu0 0.0
    %2654 = vmatpush1.msra.mxu0 0.0
    %2655 = vmatprep.subr.mxu0 0.0
    %2656 = vmatpush1.msra.mxu0 0.0
    %2657 = vmatprep.subr.mxu0 0.0
    %2658 = vmatpush1.msra.mxu0 0.0
    %2659 = vmatprep.subr.mxu0 0.0
    %2660 = vmatpush1.msra.mxu0 0.0
    %2661 = vmatprep.subr.mxu0 0.0
    %2662 = vmatpush1.msra.mxu0 0.0
    %2663 = vmatprep.subr.mxu0 0.0
    %2664 = vmatpush1.msra.mxu0 0.0
    %2665 = vmatprep.subr.mxu0 0.0
    %2666 = vmatpush1.msra.mxu0 0.0
    %2667 = vmatprep.subr.mxu0 0.0
    %2668 = vmatpush1.msra.mxu0 0.0
    %2669 = vmatprep.subr.mxu0 0.0
    %2670 = vmatpush1.msra.mxu0 0.0
    %2671 = vmatprep.subr.mxu0 0.0
    %2672 = vmatpush1.msra.mxu0 0.0
    %2673 = vmatprep.subr.mxu0 0.0
    %2674 = vmatpush1.msra.mxu0 0.0
    %2675 = vmatprep.subr.mxu0 0.0
    %2676 = vmatpush1.msra.mxu0 0.0
    %2677 = vmatprep.subr.mxu0 0.0
    %2678 = vmatpush1.msra.mxu0 0.0
    %2679 = vmatprep.subr.mxu0 0.0
    %2680 = vmatpush1.msra.mxu0 0.0
    %2681 = vmatprep.subr.mxu0 0.0
    %2682 = vmatpush1.msra.mxu0 0.0
    %2683 = vmatprep.subr.mxu0 0.0
    %2684 = vmatpush1.msra.mxu0 0.0
    %2685 = vmatprep.subr.mxu0 0.0
    %2686 = vmatpush1.msra.mxu0 0.0
    %2687 = vmatprep.subr.mxu0 0.0
    %2688 = vmatpush1.msra.mxu0 0.0
    %2689 = vmatprep.subr.mxu0 0.0
    %2690 = vmatpush1.msra.mxu0 0.0
    %2691 = vmatprep.mubr.f32.mxu0 0.0
    %v2692 = vand.u32 %v2621, 4294901760
    %v2693 = vsub.f32 %v2621, %v2692
    %v2694 = vand.u32 %v2693, 4294901760
    %v2695 = vsub.f32 %v2693, %v2694
    %v2696 = vand.u32 %v2695, 4294901760
    %2697 = vmatmul.mubr.f32.gmra.mrb[0].mxu0 %v2696
    %v2698 = vpop.f32.mrb[0].mxu0
    %v2699 = vadd.f32 0.0, %v2698
    %v2700 = vpop.f32.mrb[0].mxu0
    %2701 = vdwg.mxu0
    %2702 = vmatprep.subr.mxu0 0.0
    %v2703 = vand.u32 %v2607, 4294901760
    %v2704 = vsub.f32 %v2607, %v2703
    %v2705 = vand.u32 %v2704, 4294901760
    %v2706 = vsub.f32 %v2704, %v2705
    %v2707 = vand.u32 %v2706, 4294901760
    %2708 = vmatpush1.msra.mxu0 %v2707
    %2709 = vmatprep.subr.mxu0 0.0
    %v2710 = vand.u32 %v2608, 4294901760
    %v2711 = vsub.f32 %v2608, %v2710
    %v2712 = vand.u32 %v2711, 4294901760
    %v2713 = vsub.f32 %v2711, %v2712
    %v2714 = vand.u32 %v2713, 4294901760
    %2715 = vmatpush1.msra.mxu0 %v2714
    %2716 = vmatprep.subr.mxu0 0.0
    %v2717 = vand.u32 %v2609, 4294901760
    %v2718 = vsub.f32 %v2609, %v2717
    %v2719 = vand.u32 %v2718, 4294901760
    %v2720 = vsub.f32 %v2718, %v2719
    %v2721 = vand.u32 %v2720, 4294901760
    %2722 = vmatpush1.msra.mxu0 %v2721
    %2723 = vmatprep.subr.mxu0 0.0
    %v2724 = vand.u32 %v2610, 4294901760
    %v2725 = vsub.f32 %v2610, %v2724
    %v2726 = vand.u32 %v2725, 4294901760
    %v2727 = vsub.f32 %v2725, %v2726
    %v2728 = vand.u32 %v2727, 4294901760
    %2729 = vmatpush1.msra.mxu0 %v2728
    %2730 = vmatprep.subr.mxu0 0.0
    %2731 = vmatpush1.msra.mxu0 0.0
    %2732 = vmatprep.subr.mxu0 0.0
    %2733 = vmatpush1.msra.mxu0 0.0
    %2734 = vmatprep.subr.mxu0 0.0
    %2735 = vmatpush1.msra.mxu0 0.0
    %2736 = vmatprep.subr.mxu0 0.0
    %2737 = vmatpush1.msra.mxu0 0.0
    %2738 = vmatprep.subr.mxu0 0.0
    %2739 = vmatpush1.msra.mxu0 0.0
    %2740 = vmatprep.subr.mxu0 0.0
    %2741 = vmatpush1.msra.mxu0 0.0
    %2742 = vmatprep.subr.mxu0 0.0
    %2743 = vmatpush1.msra.mxu0 0.0
    %2744 = vmatprep.subr.mxu0 0.0
    %2745 = vmatpush1.msra.mxu0 0.0
    %2746 = vmatprep.subr.mxu0 0.0
    %2747 = vmatpush1.msra.mxu0 0.0
    %2748 = vmatprep.subr.mxu0 0.0
    %2749 = vmatpush1.msra.mxu0 0.0
    %2750 = vmatprep.subr.mxu0 0.0
    %2751 = vmatpush1.msra.mxu0 0.0
    %2752 = vmatprep.subr.mxu0 0.0
    %2753 = vmatpush1.msra.mxu0 0.0
    %2754 = vmatprep.subr.mxu0 0.0
    %2755 = vmatpush1.msra.mxu0 0.0
    %2756 = vmatprep.subr.mxu0 0.0
    %2757 = vmatpush1.msra.mxu0 0.0
    %2758 = vmatprep.subr.mxu0 0.0
    %2759 = vmatpush1.msra.mxu0 0.0
    %2760 = vmatprep.subr.mxu0 0.0
    %2761 = vmatpush1.msra.mxu0 0.0
    %2762 = vmatprep.subr.mxu0 0.0
    %2763 = vmatpush1.msra.mxu0 0.0
    %2764 = vmatprep.subr.mxu0 0.0
    %2765 = vmatpush1.msra.mxu0 0.0
    %2766 = vmatprep.subr.mxu0 0.0
    %2767 = vmatpush1.msra.mxu0 0.0
    %2768 = vmatprep.subr.mxu0 0.0
    %2769 = vmatpush1.msra.mxu0 0.0
    %2770 = vmatprep.subr.mxu0 0.0
    %2771 = vmatpush1.msra.mxu0 0.0
    %2772 = vmatprep.subr.mxu0 0.0
    %2773 = vmatpush1.msra.mxu0 0.0
    %2774 = vmatprep.subr.mxu0 0.0
    %2775 = vmatpush1.msra.mxu0 0.0
    %2776 = vmatprep.subr.mxu0 0.0
    %2777 = vmatpush1.msra.mxu0 0.0
    %2778 = vmatprep.subr.mxu0 0.0
    %2779 = vmatpush1.msra.mxu0 0.0
    %2780 = vmatprep.subr.mxu0 0.0
    %2781 = vmatpush1.msra.mxu0 0.0
    %2782 = vmatprep.subr.mxu0 0.0
    %2783 = vmatpush1.msra.mxu0 0.0
    %2784 = vmatprep.subr.mxu0 0.0
    %2785 = vmatpush1.msra.mxu0 0.0
    %2786 = vmatprep.mubr.f32.mxu0 0.0
    %v2787 = vand.u32 %v2621, 4294901760
    %2788 = vmatmul.mubr.f32.gmra.mrb[0].mxu0 %v2787
    %v2789 = vpop.f32.mrb[0].mxu0
    %v2790 = vadd.f32 %v2699, %v2789
    %v2791 = vpop.f32.mrb[0].mxu0
    %2792 = vdwg.mxu0
    %2793 = vmatprep.subr.mxu0 0.0
    %v2794 = vand.u32 %v2607, 4294901760
    %v2795 = vsub.f32 %v2607, %v2794
    %2796 = vmatpush1.msra.mxu0 %v2795
    %2797 = vmatprep.subr.mxu0 0.0
    %v2798 = vand.u32 %v2608, 4294901760
    %v2799 = vsub.f32 %v2608, %v2798
    %2800 = vmatpush1.msra.mxu0 %v2799
    %2801 = vmatprep.subr.mxu0 0.0
    %v2802 = vand.u32 %v2609, 4294901760
    %v2803 = vsub.f32 %v2609, %v2802
    %2804 = vmatpush1.msra.mxu0 %v2803
    %2805 = vmatprep.subr.mxu0 0.0
    %v2806 = vand.u32 %v2610, 4294901760
    %v2807 = vsub.f32 %v2610, %v2806
    %2808 = vmatpush1.msra.mxu0 %v2807
    %2809 = vmatprep.subr.mxu0 0.0
    %2810 = vmatpush1.msra.mxu0 0.0
    %2811 = vmatprep.subr.mxu0 0.0
    %2812 = vmatpush1.msra.mxu0 0.0
    %2813 = vmatprep.subr.mxu0 0.0
    %2814 = vmatpush1.msra.mxu0 0.0
    %2815 = vmatprep.subr.mxu0 0.0
    %2816 = vmatpush1.msra.mxu0 0.0
    %2817 = vmatprep.subr.mxu0 0.0
    %2818 = vmatpush1.msra.mxu0 0.0
    %2819 = vmatprep.subr.mxu0 0.0
    %2820 = vmatpush1.msra.mxu0 0.0
    %2821 = vmatprep.subr.mxu0 0.0
    %2822 = vmatpush1.msra.mxu0 0.0
    %2823 = vmatprep.subr.mxu0 0.0
    %2824 = vmatpush1.msra.mxu0 0.0
    %2825 = vmatprep.subr.mxu0 0.0
    %2826 = vmatpush1.msra.mxu0 0.0
    %2827 = vmatprep.subr.mxu0 0.0
    %2828 = vmatpush1.msra.mxu0 0.0
    %2829 = vmatprep.subr.mxu0 0.0
    %2830 = vmatpush1.msra.mxu0 0.0
    %2831 = vmatprep.subr.mxu0 0.0
    %2832 = vmatpush1.msra.mxu0 0.0
    %2833 = vmatprep.subr.mxu0 0.0
    %2834 = vmatpush1.msra.mxu0 0.0
    %2835 = vmatprep.subr.mxu0 0.0
    %2836 = vmatpush1.msra.mxu0 0.0
    %2837 = vmatprep.subr.mxu0 0.0
    %2838 = vmatpush1.msra.mxu0 0.0
    %2839 = vmatprep.subr.mxu0 0.0
    %2840 = vmatpush1.msra.mxu0 0.0
    %2841 = vmatprep.subr.mxu0 0.0
    %2842 = vmatpush1.msra.mxu0 0.0
    %2843 = vmatprep.subr.mxu0 0.0
    %2844 = vmatpush1.msra.mxu0 0.0
    %2845 = vmatprep.subr.mxu0 0.0
    %2846 = vmatpush1.msra.mxu0 0.0
    %2847 = vmatprep.subr.mxu0 0.0
    %2848 = vmatpush1.msra.mxu0 0.0
    %2849 = vmatprep.subr.mxu0 0.0
    %2850 = vmatpush1.msra.mxu0 0.0
    %2851 = vmatprep.subr.mxu0 0.0
    %2852 = vmatpush1.msra.mxu0 0.0
    %2853 = vmatprep.subr.mxu0 0.0
    %2854 = vmatpush1.msra.mxu0 0.0
    %2855 = vmatprep.subr.mxu0 0.0
    %2856 = vmatpush1.msra.mxu0 0.0
    %2857 = vmatprep.subr.mxu0 0.0
    %2858 = vmatpush1.msra.mxu0 0.0
    %2859 = vmatprep.subr.mxu0 0.0
    %2860 = vmatpush1.msra.mxu0 0.0
    %2861 = vmatprep.subr.mxu0 0.0
    %2862 = vmatpush1.msra.mxu0 0.0
    %2863 = vmatprep.subr.mxu0 0.0
    %2864 = vmatpush1.msra.mxu0 0.0
    %2865 = vmatprep.mubr.f32.mxu0 0.0
    %v2866 = vand.u32 %v2621, 4294901760
    %v2867 = vsub.f32 %v2621, %v2866
    %2868 = vmatmul.mubr.f32.gmra.mrb[0].mxu0 %v2867
    %v2869 = vpop.f32.mrb[0].mxu0
    %v2870 = vadd.f32 %v2790, %v2869
    %v2871 = vpop.f32.mrb[0].mxu0
    %2872 = vdwg.mxu0
    %2873 = vmatprep.subr.mxu0 0.0
    %v2874 = vand.u32 %v2607, 4294901760
    %2875 = vmatpush1.msra.mxu0 %v2874
    %2876 = vmatprep.subr.mxu0 0.0
    %v2877 = vand.u32 %v2608, 4294901760
    %2878 = vmatpush1.msra.mxu0 %v2877
    %2879 = vmatprep.subr.mxu0 0.0
    %v2880 = vand.u32 %v2609, 4294901760
    %2881 = vmatpush1.msra.mxu0 %v2880
    %2882 = vmatprep.subr.mxu0 0.0
    %v2883 = vand.u32 %v2610, 4294901760
    %2884 = vmatpush1.msra.mxu0 %v2883
    %2885 = vmatprep.subr.mxu0 0.0
    %2886 = vmatpush1.msra.mxu0 0.0
    %2887 = vmatprep.subr.mxu0 0.0
    %2888 = vmatpush1.msra.mxu0 0.0
    %2889 = vmatprep.subr.mxu0 0.0
    %2890 = vmatpush1.msra.mxu0 0.0
    %2891 = vmatprep.subr.mxu0 0.0
    %2892 = vmatpush1.msra.mxu0 0.0
    %2893 = vmatprep.subr.mxu0 0.0
    %2894 = vmatpush1.msra.mxu0 0.0
    %2895 = vmatprep.subr.mxu0 0.0
    %2896 = vmatpush1.msra.mxu0 0.0
    %2897 = vmatprep.subr.mxu0 0.0
    %2898 = vmatpush1.msra.mxu0 0.0
    %2899 = vmatprep.subr.mxu0 0.0
    %2900 = vmatpush1.msra.mxu0 0.0
    %2901 = vmatprep.subr.mxu0 0.0
    %2902 = vmatpush1.msra.mxu0 0.0
    %2903 = vmatprep.subr.mxu0 0.0
    %2904 = vmatpush1.msra.mxu0 0.0
    %2905 = vmatprep.subr.mxu0 0.0
    %2906 = vmatpush1.msra.mxu0 0.0
    %2907 = vmatprep.subr.mxu0 0.0
    %2908 = vmatpush1.msra.mxu0 0.0
    %2909 = vmatprep.subr.mxu0 0.0
    %2910 = vmatpush1.msra.mxu0 0.0
    %2911 = vmatprep.subr.mxu0 0.0
    %2912 = vmatpush1.msra.mxu0 0.0
    %2913 = vmatprep.subr.mxu0 0.0
    %2914 = vmatpush1.msra.mxu0 0.0
    %2915 = vmatprep.subr.mxu0 0.0
    %2916 = vmatpush1.msra.mxu0 0.0
    %2917 = vmatprep.subr.mxu0 0.0
    %2918 = vmatpush1.msra.mxu0 0.0
    %2919 = vmatprep.subr.mxu0 0.0
    %2920 = vmatpush1.msra.mxu0 0.0
    %2921 = vmatprep.subr.mxu0 0.0
    %2922 = vmatpush1.msra.mxu0 0.0
    %2923 = vmatprep.subr.mxu0 0.0
    %2924 = vmatpush1.msra.mxu0 0.0
    %2925 = vmatprep.subr.mxu0 0.0
    %2926 = vmatpush1.msra.mxu0 0.0
    %2927 = vmatprep.subr.mxu0 0.0
    %2928 = vmatpush1.msra.mxu0 0.0
    %2929 = vmatprep.subr.mxu0 0.0
    %2930 = vmatpush1.msra.mxu0 0.0
    %2931 = vmatprep.subr.mxu0 0.0
    %2932 = vmatpush1.msra.mxu0 0.0
    %2933 = vmatprep.subr.mxu0 0.0
    %2934 = vmatpush1.msra.mxu0 0.0
    %2935 = vmatprep.subr.mxu0 0.0
    %2936 = vmatpush1.msra.mxu0 0.0
    %2937 = vmatprep.subr.mxu0 0.0
    %2938 = vmatpush1.msra.mxu0 0.0
    %2939 = vmatprep.subr.mxu0 0.0
    %2940 = vmatpush1.msra.mxu0 0.0
    %2941 = vmatprep.mubr.f32.mxu0 0.0
    %v2942 = vand.u32 %v2621, 4294901760
    %v2943 = vsub.f32 %v2621, %v2942
    %v2944 = vand.u32 %v2943, 4294901760
    %2945 = vmatmul.mubr.f32.gmra.mrb[0].mxu0 %v2944
    %v2946 = vpop.f32.mrb[0].mxu0
    %v2947 = vadd.f32 %v2870, %v2946
    %v2948 = vpop.f32.mrb[0].mxu0
    %2949 = vdwg.mxu0
    %2950 = vmatprep.subr.mxu0 0.0
    %v2951 = vand.u32 %v2607, 4294901760
    %v2952 = vsub.f32 %v2607, %v2951
    %v2953 = vand.u32 %v2952, 4294901760
    %2954 = vmatpush1.msra.mxu0 %v2953
    %2955 = vmatprep.subr.mxu0 0.0
    %v2956 = vand.u32 %v2608, 4294901760
    %v2957 = vsub.f32 %v2608, %v2956
    %v2958 = vand.u32 %v2957, 4294901760
    %2959 = vmatpush1.msra.mxu0 %v2958
    %2960 = vmatprep.subr.mxu0 0.0
    %v2961 = vand.u32 %v2609, 4294901760
    %v2962 = vsub.f32 %v2609, %v2961
    %v2963 = vand.u32 %v2962, 4294901760
    %2964 = vmatpush1.msra.mxu0 %v2963
    %2965 = vmatprep.subr.mxu0 0.0
    %v2966 = vand.u32 %v2610, 4294901760
    %v2967 = vsub.f32 %v2610, %v2966
    %v2968 = vand.u32 %v2967, 4294901760
    %2969 = vmatpush1.msra.mxu0 %v2968
    %2970 = vmatprep.subr.mxu0 0.0
    %2971 = vmatpush1.msra.mxu0 0.0
    %2972 = vmatprep.subr.mxu0 0.0
    %2973 = vmatpush1.msra.mxu0 0.0
    %2974 = vmatprep.subr.mxu0 0.0
    %2975 = vmatpush1.msra.mxu0 0.0
    %2976 = vmatprep.subr.mxu0 0.0
    %2977 = vmatpush1.msra.mxu0 0.0
    %2978 = vmatprep.subr.mxu0 0.0
    %2979 = vmatpush1.msra.mxu0 0.0
    %2980 = vmatprep.subr.mxu0 0.0
    %2981 = vmatpush1.msra.mxu0 0.0
    %2982 = vmatprep.subr.mxu0 0.0
    %2983 = vmatpush1.msra.mxu0 0.0
    %2984 = vmatprep.subr.mxu0 0.0
    %2985 = vmatpush1.msra.mxu0 0.0
    %2986 = vmatprep.subr.mxu0 0.0
    %2987 = vmatpush1.msra.mxu0 0.0
    %2988 = vmatprep.subr.mxu0 0.0
    %2989 = vmatpush1.msra.mxu0 0.0
    %2990 = vmatprep.subr.mxu0 0.0
    %2991 = vmatpush1.msra.mxu0 0.0
    %2992 = vmatprep.subr.mxu0 0.0
    %2993 = vmatpush1.msra.mxu0 0.0
    %2994 = vmatprep.subr.mxu0 0.0
    %2995 = vmatpush1.msra.mxu0 0.0
    %2996 = vmatprep.subr.mxu0 0.0
    %2997 = vmatpush1.msra.mxu0 0.0
    %2998 = vmatprep.subr.mxu0 0.0
    %2999 = vmatpush1.msra.mxu0 0.0
    %3000 = vmatprep.subr.mxu0 0.0
    %3001 = vmatpush1.msra.mxu0 0.0
    %3002 = vmatprep.subr.mxu0 0.0
    %3003 = vmatpush1.msra.mxu0 0.0
    %3004 = vmatprep.subr.mxu0 0.0
    %3005 = vmatpush1.msra.mxu0 0.0
    %3006 = vmatprep.subr.mxu0 0.0
    %3007 = vmatpush1.msra.mxu0 0.0
    %3008 = vmatprep.subr.mxu0 0.0
    %3009 = vmatpush1.msra.mxu0 0.0
    %3010 = vmatprep.subr.mxu0 0.0
    %3011 = vmatpush1.msra.mxu0 0.0
    %3012 = vmatprep.subr.mxu0 0.0
    %3013 = vmatpush1.msra.mxu0 0.0
    %3014 = vmatprep.subr.mxu0 0.0
    %3015 = vmatpush1.msra.mxu0 0.0
    %3016 = vmatprep.subr.mxu0 0.0
    %3017 = vmatpush1.msra.mxu0 0.0
    %3018 = vmatprep.subr.mxu0 0.0
    %3019 = vmatpush1.msra.mxu0 0.0
    %3020 = vmatprep.subr.mxu0 0.0
    %3021 = vmatpush1.msra.mxu0 0.0
    %3022 = vmatprep.subr.mxu0 0.0
    %3023 = vmatpush1.msra.mxu0 0.0
    %3024 = vmatprep.subr.mxu0 0.0
    %3025 = vmatpush1.msra.mxu0 0.0
    %3026 = vmatprep.mubr.f32.mxu0 0.0
    %v3027 = vand.u32 %v2621, 4294901760
    %3028 = vmatmul.mubr.f32.gmra.mrb[0].mxu0 %v3027
    %v3029 = vpop.f32.mrb[0].mxu0
    %v3030 = vadd.f32 %v2947, %v3029
    %v3031 = vpop.f32.mrb[0].mxu0
    %3032 = vdwg.mxu0
    %3033 = vmatprep.subr.mxu0 0.0
    %v3034 = vand.u32 %v2607, 4294901760
    %3035 = vmatpush1.msra.mxu0 %v3034
    %3036 = vmatprep.subr.mxu0 0.0
    %v3037 = vand.u32 %v2608, 4294901760
    %3038 = vmatpush1.msra.mxu0 %v3037
    %3039 = vmatprep.subr.mxu0 0.0
    %v3040 = vand.u32 %v2609, 4294901760
    %3041 = vmatpush1.msra.mxu0 %v3040
    %3042 = vmatprep.subr.mxu0 0.0
    %v3043 = vand.u32 %v2610, 4294901760
    %3044 = vmatpush1.msra.mxu0 %v3043
    %3045 = vmatprep.subr.mxu0 0.0
    %3046 = vmatpush1.msra.mxu0 0.0
    %3047 = vmatprep.subr.mxu0 0.0
    %3048 = vmatpush1.msra.mxu0 0.0
    %3049 = vmatprep.subr.mxu0 0.0
    %3050 = vmatpush1.msra.mxu0 0.0
    %3051 = vmatprep.subr.mxu0 0.0
    %3052 = vmatpush1.msra.mxu0 0.0
    %3053 = vmatprep.subr.mxu0 0.0
    %3054 = vmatpush1.msra.mxu0 0.0
    %3055 = vmatprep.subr.mxu0 0.0
    %3056 = vmatpush1.msra.mxu0 0.0
    %3057 = vmatprep.subr.mxu0 0.0
    %3058 = vmatpush1.msra.mxu0 0.0
    %3059 = vmatprep.subr.mxu0 0.0
    %3060 = vmatpush1.msra.mxu0 0.0
    %3061 = vmatprep.subr.mxu0 0.0
    %3062 = vmatpush1.msra.mxu0 0.0
    %3063 = vmatprep.subr.mxu0 0.0
    %3064 = vmatpush1.msra.mxu0 0.0
    %3065 = vmatprep.subr.mxu0 0.0
    %3066 = vmatpush1.msra.mxu0 0.0
    %3067 = vmatprep.subr.mxu0 0.0
    %3068 = vmatpush1.msra.mxu0 0.0
    %3069 = vmatprep.subr.mxu0 0.0
    %3070 = vmatpush1.msra.mxu0 0.0
    %3071 = vmatprep.subr.mxu0 0.0
    %3072 = vmatpush1.msra.mxu0 0.0
    %3073 = vmatprep.subr.mxu0 0.0
    %3074 = vmatpush1.msra.mxu0 0.0
    %3075 = vmatprep.subr.mxu0 0.0
    %3076 = vmatpush1.msra.mxu0 0.0
    %3077 = vmatprep.subr.mxu0 0.0
    %3078 = vmatpush1.msra.mxu0 0.0
    %3079 = vmatprep.subr.mxu0 0.0
    %3080 = vmatpush1.msra.mxu0 0.0
    %3081 = vmatprep.subr.mxu0 0.0
    %3082 = vmatpush1.msra.mxu0 0.0
    %3083 = vmatprep.subr.mxu0 0.0
    %3084 = vmatpush1.msra.mxu0 0.0
    %3085 = vmatprep.subr.mxu0 0.0
    %3086 = vmatpush1.msra.mxu0 0.0
    %3087 = vmatprep.subr.mxu0 0.0
    %3088 = vmatpush1.msra.mxu0 0.0
    %3089 = vmatprep.subr.mxu0 0.0
    %3090 = vmatpush1.msra.mxu0 0.0
    %3091 = vmatprep.subr.mxu0 0.0
    %3092 = vmatpush1.msra.mxu0 0.0
    %3093 = vmatprep.subr.mxu0 0.0
    %3094 = vmatpush1.msra.mxu0 0.0
    %3095 = vmatprep.subr.mxu0 0.0
    %3096 = vmatpush1.msra.mxu0 0.0
    %3097 = vmatprep.subr.mxu0 0.0
    %3098 = vmatpush1.msra.mxu0 0.0
    %3099 = vmatprep.subr.mxu0 0.0
    %3100 = vmatpush1.msra.mxu0 0.0
    %3101 = vmatprep.mubr.f32.mxu0 0.0
    %v3102 = vand.u32 %v2621, 4294901760
    %3103 = vmatmul.mubr.f32.gmra.mrb[0].mxu0 %v3102
    %v3104 = vpop.f32.mrb[0].mxu0
    %v3105 = vadd.f32 %v3030, %v3104
    %v3106 = vpop.f32.mrb[0].mxu0
    %3107 = vdwg.mxu0
    %v3108 = vadd.f32 %v2616, %v3105
    %v3109 = vxor.u32 %v3108, 2147483648
    %v3110 = vmul.f32 %v3109, 1.442695
    %v3111 = vpow.pop %v3110
    %v3112 = vadd.f32 %v3111, 1.0
    %v3113 = vrcp.pop %v3112
    %v3114 = vmul.f32 1.0, %v3113
    %v3115 = vtanh.pop %v3108
    %v3116 = vmul.f32 %v3114, %v1890
    %3118 = vrot.lane.b32.xlu0 %v3115, 64
    %v3119 = vpop.permute.xlu0 %3118
    %v3121 = vmul.f32 %v3114, %v3119
    %3123 = vrot.lane.b32.xlu0 %v3121, 32
    %v3124 = vpop.permute.xlu0 %3123
    %v3126 = vadd.f32 %v3116, %v3124
    %v3127 = vtanh.pop %v3126
    %3129 = vrot.lane.b32.xlu0 %v3127, 64
    %v3130 = vpop.permute.xlu0 %3129
    %v3132 = vmul.f32 %v3114, %v3130
    %3134 = vrot.lane.b32.xlu0 %v3132, 32
    %v3135 = vpop.permute.xlu0 %3134
    %3137 = vst.msk [vmem:[#allocation2 + $0x1] sm:$0x1] %vm1901, %v3135
    %3138 = vst.msk [vmem:[#allocation2 + $0x8] sm:$0x2] %vm1903, %v3135
    %3139 = vrot.lane.b32.xlu0 %v2606, 32
    %v3140 = vpop.permute.xlu0 %3139
    %v3142 = vrot.slane %v3132, 6
    %3143 = vrot.lane.b32.xlu0 %v3142, 64
    %v3144 = vpop.permute.xlu0 %3143
    %v3146 = vsel %vm671, %v3140, %v3144
    %v3147 = vld [vmem:[#allocation6] sm:$0xff]
    %v3148 = vld [vmem:[#allocation6 + $0x8] sm:$0xff]
    %v3149 = vld [vmem:[#allocation6 + $0x10] sm:$0xff]
    %v3150 = vld [vmem:[#allocation6 + $0x18] sm:$0xff]
    %v3151 = vld [vmem:[#allocation6 + $0x20] sm:$0xff]
    %v3152 = vld [vmem:[#allocation6 + $0x28] sm:$0xff]
    %v3153 = vld [vmem:[#allocation6 + $0x30] sm:$0xff]
    %v3154 = vld [vmem:[#allocation6 + $0x38] sm:$0xff]
    %v3155 = vld [vmem:[#allocation6 + $0x40] sm:$0xff]
    %v3156 = vld [vmem:[#allocation6 + $0x48] sm:$0xff]
    %v3157 = vld [vmem:[#allocation6 + $0x50] sm:$0xff]
    %v3158 = vld [vmem:[#allocation6 + $0x58] sm:$0xff]
    %v3159 = vld [vmem:[#allocation6 + $0x60] sm:$0xff]
    %v3160 = vld [vmem:[#allocation6 + $0x68] sm:$0xff]
    %v3161 = vld [vmem:[#allocation6 + $0x70] sm:$0xff]
    %v3162 = vld [vmem:[#allocation6 + $0x78] sm:$0xff]
    %v3164 = vrot.slane %v3146, 2
    %v3165 = vsel %vm73, %v3164, 0
    %v3167 = vand.u32 %v3148, 4294901760
    %3168 = vmatprep.subr.mxu0 %v3167
    %v3169 = vand.u32 %v3147, 4294901760
    %3170 = vmatpush1.msra.mxu0 %v3169
    %v3171 = vand.u32 %v3150, 4294901760
    %3172 = vmatprep.subr.mxu0 %v3171
    %v3173 = vand.u32 %v3149, 4294901760
    %3174 = vmatpush1.msra.mxu0 %v3173
    %v3175 = vand.u32 %v3152, 4294901760
    %3176 = vmatprep.subr.mxu0 %v3175
    %v3177 = vand.u32 %v3151, 4294901760
    %3178 = vmatpush1.msra.mxu0 %v3177
    %v3179 = vand.u32 %v3154, 4294901760
    %3180 = vmatprep.subr.mxu0 %v3179
    %v3181 = vand.u32 %v3153, 4294901760
    %3182 = vmatpush1.msra.mxu0 %v3181
    %v3183 = vand.u32 %v3156, 4294901760
    %3184 = vmatprep.subr.mxu0 %v3183
    %v3185 = vand.u32 %v3155, 4294901760
    %3186 = vmatpush1.msra.mxu0 %v3185
    %v3187 = vand.u32 %v3158, 4294901760
    %3188 = vmatprep.subr.mxu0 %v3187
    %v3189 = vand.u32 %v3157, 4294901760
    %3190 = vmatpush1.msra.mxu0 %v3189
    %v3191 = vand.u32 %v3160, 4294901760
    %3192 = vmatprep.subr.mxu0 %v3191
    %v3193 = vand.u32 %v3159, 4294901760
    %3194 = vmatpush1.msra.mxu0 %v3193
    %v3195 = vand.u32 %v3162, 4294901760
    %3196 = vmatprep.subr.mxu0 %v3195
    %v3197 = vand.u32 %v3161, 4294901760
    %3198 = vmatpush1.msra.mxu0 %v3197
    %3199 = vmatprep.subr.mxu0 0.0
    %3200 = vmatpush1.msra.mxu0 0.0
    %3201 = vmatprep.subr.mxu0 0.0
    %3202 = vmatpush1.msra.mxu0 0.0
    %3203 = vmatprep.subr.mxu0 0.0
    %3204 = vmatpush1.msra.mxu0 0.0
    %3205 = vmatprep.subr.mxu0 0.0
    %3206 = vmatpush1.msra.mxu0 0.0
    %3207 = vmatprep.subr.mxu0 0.0
    %3208 = vmatpush1.msra.mxu0 0.0
    %3209 = vmatprep.subr.mxu0 0.0
    %3210 = vmatpush1.msra.mxu0 0.0
    %3211 = vmatprep.subr.mxu0 0.0
    %3212 = vmatpush1.msra.mxu0 0.0
    %3213 = vmatprep.subr.mxu0 0.0
    %3214 = vmatpush1.msra.mxu0 0.0
    %3215 = vmatprep.subr.mxu0 0.0
    %3216 = vmatpush1.msra.mxu0 0.0
    %3217 = vmatprep.subr.mxu0 0.0
    %3218 = vmatpush1.msra.mxu0 0.0
    %3219 = vmatprep.subr.mxu0 0.0
    %3220 = vmatpush1.msra.mxu0 0.0
    %3221 = vmatprep.subr.mxu0 0.0
    %3222 = vmatpush1.msra.mxu0 0.0
    %3223 = vmatprep.subr.mxu0 0.0
    %3224 = vmatpush1.msra.mxu0 0.0
    %3225 = vmatprep.subr.mxu0 0.0
    %3226 = vmatpush1.msra.mxu0 0.0
    %3227 = vmatprep.subr.mxu0 0.0
    %3228 = vmatpush1.msra.mxu0 0.0
    %3229 = vmatprep.subr.mxu0 0.0
    %3230 = vmatpush1.msra.mxu0 0.0
    %3231 = vmatprep.subr.mxu0 0.0
    %3232 = vmatpush1.msra.mxu0 0.0
    %3233 = vmatprep.subr.mxu0 0.0
    %3234 = vmatpush1.msra.mxu0 0.0
    %3235 = vmatprep.subr.mxu0 0.0
    %3236 = vmatpush1.msra.mxu0 0.0
    %3237 = vmatprep.subr.mxu0 0.0
    %3238 = vmatpush1.msra.mxu0 0.0
    %3239 = vmatprep.subr.mxu0 0.0
    %3240 = vmatpush1.msra.mxu0 0.0
    %3241 = vmatprep.subr.mxu0 0.0
    %3242 = vmatpush1.msra.mxu0 0.0
    %3243 = vmatprep.subr.mxu0 0.0
    %3244 = vmatpush1.msra.mxu0 0.0
    %3245 = vmatprep.subr.mxu0 0.0
    %3246 = vmatpush1.msra.mxu0 0.0
    %3247 = vmatprep.mubr.f32.mxu0 0.0
    %v3248 = vand.u32 %v3165, 4294901760
    %v3249 = vsub.f32 %v3165, %v3248
    %v3250 = vand.u32 %v3249, 4294901760
    %v3251 = vsub.f32 %v3249, %v3250
    %v3252 = vand.u32 %v3251, 4294901760
    %3253 = vmatmul.mubr.f32.gmra.mrb[0].mxu0 %v3252
    %v3254 = vpop.f32.mrb[0].mxu0
    %v3255 = vadd.f32 0.0, %v3254
    %v3256 = vpop.f32.mrb[0].mxu0
    %v3257 = vadd.f32 0.0, %v3256
    %3258 = vdwg.mxu0
    %v3259 = vand.u32 %v3148, 4294901760
    %v3260 = vsub.f32 %v3148, %v3259
    %v3261 = vand.u32 %v3260, 4294901760
    %v3262 = vsub.f32 %v3260, %v3261
    %v3263 = vand.u32 %v3262, 4294901760
    %3264 = vmatprep.subr.mxu0 %v3263
    %v3265 = vand.u32 %v3147, 4294901760
    %v3266 = vsub.f32 %v3147, %v3265
    %v3267 = vand.u32 %v3266, 4294901760
    %v3268 = vsub.f32 %v3266, %v3267
    %v3269 = vand.u32 %v3268, 4294901760
    %3270 = vmatpush1.msra.mxu0 %v3269
    %v3271 = vand.u32 %v3150, 4294901760
    %v3272 = vsub.f32 %v3150, %v3271
    %v3273 = vand.u32 %v3272, 4294901760
    %v3274 = vsub.f32 %v3272, %v3273
    %v3275 = vand.u32 %v3274, 4294901760
    %3276 = vmatprep.subr.mxu0 %v3275
    %v3277 = vand.u32 %v3149, 4294901760
    %v3278 = vsub.f32 %v3149, %v3277
    %v3279 = vand.u32 %v3278, 4294901760
    %v3280 = vsub.f32 %v3278, %v3279
    %v3281 = vand.u32 %v3280, 4294901760
    %3282 = vmatpush1.msra.mxu0 %v3281
    %v3283 = vand.u32 %v3152, 4294901760
    %v3284 = vsub.f32 %v3152, %v3283
    %v3285 = vand.u32 %v3284, 4294901760
    %v3286 = vsub.f32 %v3284, %v3285
    %v3287 = vand.u32 %v3286, 4294901760
    %3288 = vmatprep.subr.mxu0 %v3287
    %v3289 = vand.u32 %v3151, 4294901760
    %v3290 = vsub.f32 %v3151, %v3289
    %v3291 = vand.u32 %v3290, 4294901760
    %v3292 = vsub.f32 %v3290, %v3291
    %v3293 = vand.u32 %v3292, 4294901760
    %3294 = vmatpush1.msra.mxu0 %v3293
    %v3295 = vand.u32 %v3154, 4294901760
    %v3296 = vsub.f32 %v3154, %v3295
    %v3297 = vand.u32 %v3296, 4294901760
    %v3298 = vsub.f32 %v3296, %v3297
    %v3299 = vand.u32 %v3298, 4294901760
    %3300 = vmatprep.subr.mxu0 %v3299
    %v3301 = vand.u32 %v3153, 4294901760
    %v3302 = vsub.f32 %v3153, %v3301
    %v3303 = vand.u32 %v3302, 4294901760
    %v3304 = vsub.f32 %v3302, %v3303
    %v3305 = vand.u32 %v3304, 4294901760
    %3306 = vmatpush1.msra.mxu0 %v3305
    %v3307 = vand.u32 %v3156, 4294901760
    %v3308 = vsub.f32 %v3156, %v3307
    %v3309 = vand.u32 %v3308, 4294901760
    %v3310 = vsub.f32 %v3308, %v3309
    %v3311 = vand.u32 %v3310, 4294901760
    %3312 = vmatprep.subr.mxu0 %v3311
    %v3313 = vand.u32 %v3155, 4294901760
    %v3314 = vsub.f32 %v3155, %v3313
    %v3315 = vand.u32 %v3314, 4294901760
    %v3316 = vsub.f32 %v3314, %v3315
    %v3317 = vand.u32 %v3316, 4294901760
    %3318 = vmatpush1.msra.mxu0 %v3317
    %v3319 = vand.u32 %v3158, 4294901760
    %v3320 = vsub.f32 %v3158, %v3319
    %v3321 = vand.u32 %v3320, 4294901760
    %v3322 = vsub.f32 %v3320, %v3321
    %v3323 = vand.u32 %v3322, 4294901760
    %3324 = vmatprep.subr.mxu0 %v3323
    %v3325 = vand.u32 %v3157, 4294901760
    %v3326 = vsub.f32 %v3157, %v3325
    %v3327 = vand.u32 %v3326, 4294901760
    %v3328 = vsub.f32 %v3326, %v3327
    %v3329 = vand.u32 %v3328, 4294901760
    %3330 = vmatpush1.msra.mxu0 %v3329
    %v3331 = vand.u32 %v3160, 4294901760
    %v3332 = vsub.f32 %v3160, %v3331
    %v3333 = vand.u32 %v3332, 4294901760
    %v3334 = vsub.f32 %v3332, %v3333
    %v3335 = vand.u32 %v3334, 4294901760
    %3336 = vmatprep.subr.mxu0 %v3335
    %v3337 = vand.u32 %v3159, 4294901760
    %v3338 = vsub.f32 %v3159, %v3337
    %v3339 = vand.u32 %v3338, 4294901760
    %v3340 = vsub.f32 %v3338, %v3339
    %v3341 = vand.u32 %v3340, 4294901760
    %3342 = vmatpush1.msra.mxu0 %v3341
    %v3343 = vand.u32 %v3162, 4294901760
    %v3344 = vsub.f32 %v3162, %v3343
    %v3345 = vand.u32 %v3344, 4294901760
    %v3346 = vsub.f32 %v3344, %v3345
    %v3347 = vand.u32 %v3346, 4294901760
    %3348 = vmatprep.subr.mxu0 %v3347
    %v3349 = vand.u32 %v3161, 4294901760
    %v3350 = vsub.f32 %v3161, %v3349
    %v3351 = vand.u32 %v3350, 4294901760
    %v3352 = vsub.f32 %v3350, %v3351
    %v3353 = vand.u32 %v3352, 4294901760
    %3354 = vmatpush1.msra.mxu0 %v3353
    %3355 = vmatprep.subr.mxu0 0.0
    %3356 = vmatpush1.msra.mxu0 0.0
    %3357 = vmatprep.subr.mxu0 0.0
    %3358 = vmatpush1.msra.mxu0 0.0
    %3359 = vmatprep.subr.mxu0 0.0
    %3360 = vmatpush1.msra.mxu0 0.0
    %3361 = vmatprep.subr.mxu0 0.0
    %3362 = vmatpush1.msra.mxu0 0.0
    %3363 = vmatprep.subr.mxu0 0.0
    %3364 = vmatpush1.msra.mxu0 0.0
    %3365 = vmatprep.subr.mxu0 0.0
    %3366 = vmatpush1.msra.mxu0 0.0
    %3367 = vmatprep.subr.mxu0 0.0
    %3368 = vmatpush1.msra.mxu0 0.0
    %3369 = vmatprep.subr.mxu0 0.0
    %3370 = vmatpush1.msra.mxu0 0.0
    %3371 = vmatprep.subr.mxu0 0.0
    %3372 = vmatpush1.msra.mxu0 0.0
    %3373 = vmatprep.subr.mxu0 0.0
    %3374 = vmatpush1.msra.mxu0 0.0
    %3375 = vmatprep.subr.mxu0 0.0
    %3376 = vmatpush1.msra.mxu0 0.0
    %3377 = vmatprep.subr.mxu0 0.0
    %3378 = vmatpush1.msra.mxu0 0.0
    %3379 = vmatprep.subr.mxu0 0.0
    %3380 = vmatpush1.msra.mxu0 0.0
    %3381 = vmatprep.subr.mxu0 0.0
    %3382 = vmatpush1.msra.mxu0 0.0
    %3383 = vmatprep.subr.mxu0 0.0
    %3384 = vmatpush1.msra.mxu0 0.0
    %3385 = vmatprep.subr.mxu0 0.0
    %3386 = vmatpush1.msra.mxu0 0.0
    %3387 = vmatprep.subr.mxu0 0.0
    %3388 = vmatpush1.msra.mxu0 0.0
    %3389 = vmatprep.subr.mxu0 0.0
    %3390 = vmatpush1.msra.mxu0 0.0
    %3391 = vmatprep.subr.mxu0 0.0
    %3392 = vmatpush1.msra.mxu0 0.0
    %3393 = vmatprep.subr.mxu0 0.0
    %3394 = vmatpush1.msra.mxu0 0.0
    %3395 = vmatprep.subr.mxu0 0.0
    %3396 = vmatpush1.msra.mxu0 0.0
    %3397 = vmatprep.subr.mxu0 0.0
    %3398 = vmatpush1.msra.mxu0 0.0
    %3399 = vmatprep.subr.mxu0 0.0
    %3400 = vmatpush1.msra.mxu0 0.0
    %3401 = vmatprep.subr.mxu0 0.0
    %3402 = vmatpush1.msra.mxu0 0.0
    %3403 = vmatprep.mubr.f32.mxu0 0.0
    %v3404 = vand.u32 %v3165, 4294901760
    %3405 = vmatmul.mubr.f32.gmra.mrb[0].mxu0 %v3404
    %v3406 = vpop.f32.mrb[0].mxu0
    %v3407 = vadd.f32 %v3255, %v3406
    %v3408 = vpop.f32.mrb[0].mxu0
    %v3409 = vadd.f32 %v3257, %v3408
    %3410 = vdwg.mxu0
    %v3411 = vand.u32 %v3148, 4294901760
    %v3412 = vsub.f32 %v3148, %v3411
    %3413 = vmatprep.subr.mxu0 %v3412
    %v3414 = vand.u32 %v3147, 4294901760
    %v3415 = vsub.f32 %v3147, %v3414
    %3416 = vmatpush1.msra.mxu0 %v3415
    %v3417 = vand.u32 %v3150, 4294901760
    %v3418 = vsub.f32 %v3150, %v3417
    %3419 = vmatprep.subr.mxu0 %v3418
    %v3420 = vand.u32 %v3149, 4294901760
    %v3421 = vsub.f32 %v3149, %v3420
    %3422 = vmatpush1.msra.mxu0 %v3421
    %v3423 = vand.u32 %v3152, 4294901760
    %v3424 = vsub.f32 %v3152, %v3423
    %3425 = vmatprep.subr.mxu0 %v3424
    %v3426 = vand.u32 %v3151, 4294901760
    %v3427 = vsub.f32 %v3151, %v3426
    %3428 = vmatpush1.msra.mxu0 %v3427
    %v3429 = vand.u32 %v3154, 4294901760
    %v3430 = vsub.f32 %v3154, %v3429
    %3431 = vmatprep.subr.mxu0 %v3430
    %v3432 = vand.u32 %v3153, 4294901760
    %v3433 = vsub.f32 %v3153, %v3432
    %3434 = vmatpush1.msra.mxu0 %v3433
    %v3435 = vand.u32 %v3156, 4294901760
    %v3436 = vsub.f32 %v3156, %v3435
    %3437 = vmatprep.subr.mxu0 %v3436
    %v3438 = vand.u32 %v3155, 4294901760
    %v3439 = vsub.f32 %v3155, %v3438
    %3440 = vmatpush1.msra.mxu0 %v3439
    %v3441 = vand.u32 %v3158, 4294901760
    %v3442 = vsub.f32 %v3158, %v3441
    %3443 = vmatprep.subr.mxu0 %v3442
    %v3444 = vand.u32 %v3157, 4294901760
    %v3445 = vsub.f32 %v3157, %v3444
    %3446 = vmatpush1.msra.mxu0 %v3445
    %v3447 = vand.u32 %v3160, 4294901760
    %v3448 = vsub.f32 %v3160, %v3447
    %3449 = vmatprep.subr.mxu0 %v3448
    %v3450 = vand.u32 %v3159, 4294901760
    %v3451 = vsub.f32 %v3159, %v3450
    %3452 = vmatpush1.msra.mxu0 %v3451
    %v3453 = vand.u32 %v3162, 4294901760
    %v3454 = vsub.f32 %v3162, %v3453
    %3455 = vmatprep.subr.mxu0 %v3454
    %v3456 = vand.u32 %v3161, 4294901760
    %v3457 = vsub.f32 %v3161, %v3456
    %3458 = vmatpush1.msra.mxu0 %v3457
    %3459 = vmatprep.subr.mxu0 0.0
    %3460 = vmatpush1.msra.mxu0 0.0
    %3461 = vmatprep.subr.mxu0 0.0
    %3462 = vmatpush1.msra.mxu0 0.0
    %3463 = vmatprep.subr.mxu0 0.0
    %3464 = vmatpush1.msra.mxu0 0.0
    %3465 = vmatprep.subr.mxu0 0.0
    %3466 = vmatpush1.msra.mxu0 0.0
    %3467 = vmatprep.subr.mxu0 0.0
    %3468 = vmatpush1.msra.mxu0 0.0
    %3469 = vmatprep.subr.mxu0 0.0
    %3470 = vmatpush1.msra.mxu0 0.0
    %3471 = vmatprep.subr.mxu0 0.0
    %3472 = vmatpush1.msra.mxu0 0.0
    %3473 = vmatprep.subr.mxu0 0.0
    %3474 = vmatpush1.msra.mxu0 0.0
    %3475 = vmatprep.subr.mxu0 0.0
    %3476 = vmatpush1.msra.mxu0 0.0
    %3477 = vmatprep.subr.mxu0 0.0
    %3478 = vmatpush1.msra.mxu0 0.0
    %3479 = vmatprep.subr.mxu0 0.0
    %3480 = vmatpush1.msra.mxu0 0.0
    %3481 = vmatprep.subr.mxu0 0.0
    %3482 = vmatpush1.msra.mxu0 0.0
    %3483 = vmatprep.subr.mxu0 0.0
    %3484 = vmatpush1.msra.mxu0 0.0
    %3485 = vmatprep.subr.mxu0 0.0
    %3486 = vmatpush1.msra.mxu0 0.0
    %3487 = vmatprep.subr.mxu0 0.0
    %3488 = vmatpush1.msra.mxu0 0.0
    %3489 = vmatprep.subr.mxu0 0.0
    %3490 = vmatpush1.msra.mxu0 0.0
    %3491 = vmatprep.subr.mxu0 0.0
    %3492 = vmatpush1.msra.mxu0 0.0
    %3493 = vmatprep.subr.mxu0 0.0
    %3494 = vmatpush1.msra.mxu0 0.0
    %3495 = vmatprep.subr.mxu0 0.0
    %3496 = vmatpush1.msra.mxu0 0.0
    %3497 = vmatprep.subr.mxu0 0.0
    %3498 = vmatpush1.msra.mxu0 0.0
    %3499 = vmatprep.subr.mxu0 0.0
    %3500 = vmatpush1.msra.mxu0 0.0
    %3501 = vmatprep.subr.mxu0 0.0
    %3502 = vmatpush1.msra.mxu0 0.0
    %3503 = vmatprep.subr.mxu0 0.0
    %3504 = vmatpush1.msra.mxu0 0.0
    %3505 = vmatprep.subr.mxu0 0.0
    %3506 = vmatpush1.msra.mxu0 0.0
    %3507 = vmatprep.mubr.f32.mxu0 0.0
    %v3508 = vand.u32 %v3165, 4294901760
    %v3509 = vsub.f32 %v3165, %v3508
    %3510 = vmatmul.mubr.f32.gmra.mrb[0].mxu0 %v3509
    %v3511 = vpop.f32.mrb[0].mxu0
    %v3512 = vadd.f32 %v3407, %v3511
    %v3513 = vpop.f32.mrb[0].mxu0
    %v3514 = vadd.f32 %v3409, %v3513
    %3515 = vdwg.mxu0
    %v3516 = vand.u32 %v3148, 4294901760
    %3517 = vmatprep.subr.mxu0 %v3516
    %v3518 = vand.u32 %v3147, 4294901760
    %3519 = vmatpush1.msra.mxu0 %v3518
    %v3520 = vand.u32 %v3150, 4294901760
    %3521 = vmatprep.subr.mxu0 %v3520
    %v3522 = vand.u32 %v3149, 4294901760
    %3523 = vmatpush1.msra.mxu0 %v3522
    %v3524 = vand.u32 %v3152, 4294901760
    %3525 = vmatprep.subr.mxu0 %v3524
    %v3526 = vand.u32 %v3151, 4294901760
    %3527 = vmatpush1.msra.mxu0 %v3526
    %v3528 = vand.u32 %v3154, 4294901760
    %3529 = vmatprep.subr.mxu0 %v3528
    %v3530 = vand.u32 %v3153, 4294901760
    %3531 = vmatpush1.msra.mxu0 %v3530
    %v3532 = vand.u32 %v3156, 4294901760
    %3533 = vmatprep.subr.mxu0 %v3532
    %v3534 = vand.u32 %v3155, 4294901760
    %3535 = vmatpush1.msra.mxu0 %v3534
    %v3536 = vand.u32 %v3158, 4294901760
    %3537 = vmatprep.subr.mxu0 %v3536
    %v3538 = vand.u32 %v3157, 4294901760
    %3539 = vmatpush1.msra.mxu0 %v3538
    %v3540 = vand.u32 %v3160, 4294901760
    %3541 = vmatprep.subr.mxu0 %v3540
    %v3542 = vand.u32 %v3159, 4294901760
    %3543 = vmatpush1.msra.mxu0 %v3542
    %v3544 = vand.u32 %v3162, 4294901760
    %3545 = vmatprep.subr.mxu0 %v3544
    %v3546 = vand.u32 %v3161, 4294901760
    %3547 = vmatpush1.msra.mxu0 %v3546
    %3548 = vmatprep.subr.mxu0 0.0
    %3549 = vmatpush1.msra.mxu0 0.0
    %3550 = vmatprep.subr.mxu0 0.0
    %3551 = vmatpush1.msra.mxu0 0.0
    %3552 = vmatprep.subr.mxu0 0.0
    %3553 = vmatpush1.msra.mxu0 0.0
    %3554 = vmatprep.subr.mxu0 0.0
    %3555 = vmatpush1.msra.mxu0 0.0
    %3556 = vmatprep.subr.mxu0 0.0
    %3557 = vmatpush1.msra.mxu0 0.0
    %3558 = vmatprep.subr.mxu0 0.0
    %3559 = vmatpush1.msra.mxu0 0.0
    %3560 = vmatprep.subr.mxu0 0.0
    %3561 = vmatpush1.msra.mxu0 0.0
    %3562 = vmatprep.subr.mxu0 0.0
    %3563 = vmatpush1.msra.mxu0 0.0
    %3564 = vmatprep.subr.mxu0 0.0
    %3565 = vmatpush1.msra.mxu0 0.0
    %3566 = vmatprep.subr.mxu0 0.0
    %3567 = vmatpush1.msra.mxu0 0.0
    %3568 = vmatprep.subr.mxu0 0.0
    %3569 = vmatpush1.msra.mxu0 0.0
    %3570 = vmatprep.subr.mxu0 0.0
    %3571 = vmatpush1.msra.mxu0 0.0
    %3572 = vmatprep.subr.mxu0 0.0
    %3573 = vmatpush1.msra.mxu0 0.0
    %3574 = vmatprep.subr.mxu0 0.0
    %3575 = vmatpush1.msra.mxu0 0.0
    %3576 = vmatprep.subr.mxu0 0.0
    %3577 = vmatpush1.msra.mxu0 0.0
    %3578 = vmatprep.subr.mxu0 0.0
    %3579 = vmatpush1.msra.mxu0 0.0
    %3580 = vmatprep.subr.mxu0 0.0
    %3581 = vmatpush1.msra.mxu0 0.0
    %3582 = vmatprep.subr.mxu0 0.0
    %3583 = vmatpush1.msra.mxu0 0.0
    %3584 = vmatprep.subr.mxu0 0.0
    %3585 = vmatpush1.msra.mxu0 0.0
    %3586 = vmatprep.subr.mxu0 0.0
    %3587 = vmatpush1.msra.mxu0 0.0
    %3588 = vmatprep.subr.mxu0 0.0
    %3589 = vmatpush1.msra.mxu0 0.0
    %3590 = vmatprep.subr.mxu0 0.0
    %3591 = vmatpush1.msra.mxu0 0.0
    %3592 = vmatprep.subr.mxu0 0.0
    %3593 = vmatpush1.msra.mxu0 0.0
    %3594 = vmatprep.subr.mxu0 0.0
    %3595 = vmatpush1.msra.mxu0 0.0
    %3596 = vmatprep.mubr.f32.mxu0 0.0
    %v3597 = vand.u32 %v3165, 4294901760
    %v3598 = vsub.f32 %v3165, %v3597
    %v3599 = vand.u32 %v3598, 4294901760
    %3600 = vmatmul.mubr.f32.gmra.mrb[0].mxu0 %v3599
    %v3601 = vpop.f32.mrb[0].mxu0
    %v3602 = vadd.f32 %v3512, %v3601
    %v3603 = vpop.f32.mrb[0].mxu0
    %v3604 = vadd.f32 %v3514, %v3603
    %3605 = vdwg.mxu0
    %v3606 = vand.u32 %v3148, 4294901760
    %v3607 = vsub.f32 %v3148, %v3606
    %v3608 = vand.u32 %v3607, 4294901760
    %3609 = vmatprep.subr.mxu0 %v3608
    %v3610 = vand.u32 %v3147, 4294901760
    %v3611 = vsub.f32 %v3147, %v3610
    %v3612 = vand.u32 %v3611, 4294901760
    %3613 = vmatpush1.msra.mxu0 %v3612
    %v3614 = vand.u32 %v3150, 4294901760
    %v3615 = vsub.f32 %v3150, %v3614
    %v3616 = vand.u32 %v3615, 4294901760
    %3617 = vmatprep.subr.mxu0 %v3616
    %v3618 = vand.u32 %v3149, 4294901760
    %v3619 = vsub.f32 %v3149, %v3618
    %v3620 = vand.u32 %v3619, 4294901760
    %3621 = vmatpush1.msra.mxu0 %v3620
    %v3622 = vand.u32 %v3152, 4294901760
    %v3623 = vsub.f32 %v3152, %v3622
    %v3624 = vand.u32 %v3623, 4294901760
    %3625 = vmatprep.subr.mxu0 %v3624
    %v3626 = vand.u32 %v3151, 4294901760
    %v3627 = vsub.f32 %v3151, %v3626
    %v3628 = vand.u32 %v3627, 4294901760
    %3629 = vmatpush1.msra.mxu0 %v3628
    %v3630 = vand.u32 %v3154, 4294901760
    %v3631 = vsub.f32 %v3154, %v3630
    %v3632 = vand.u32 %v3631, 4294901760
    %3633 = vmatprep.subr.mxu0 %v3632
    %v3634 = vand.u32 %v3153, 4294901760
    %v3635 = vsub.f32 %v3153, %v3634
    %v3636 = vand.u32 %v3635, 4294901760
    %3637 = vmatpush1.msra.mxu0 %v3636
    %v3638 = vand.u32 %v3156, 4294901760
    %v3639 = vsub.f32 %v3156, %v3638
    %v3640 = vand.u32 %v3639, 4294901760
    %3641 = vmatprep.subr.mxu0 %v3640
    %v3642 = vand.u32 %v3155, 4294901760
    %v3643 = vsub.f32 %v3155, %v3642
    %v3644 = vand.u32 %v3643, 4294901760
    %3645 = vmatpush1.msra.mxu0 %v3644
    %v3646 = vand.u32 %v3158, 4294901760
    %v3647 = vsub.f32 %v3158, %v3646
    %v3648 = vand.u32 %v3647, 4294901760
    %3649 = vmatprep.subr.mxu0 %v3648
    %v3650 = vand.u32 %v3157, 4294901760
    %v3651 = vsub.f32 %v3157, %v3650
    %v3652 = vand.u32 %v3651, 4294901760
    %3653 = vmatpush1.msra.mxu0 %v3652
    %v3654 = vand.u32 %v3160, 4294901760
    %v3655 = vsub.f32 %v3160, %v3654
    %v3656 = vand.u32 %v3655, 4294901760
    %3657 = vmatprep.subr.mxu0 %v3656
    %v3658 = vand.u32 %v3159, 4294901760
    %v3659 = vsub.f32 %v3159, %v3658
    %v3660 = vand.u32 %v3659, 4294901760
    %3661 = vmatpush1.msra.mxu0 %v3660
    %v3662 = vand.u32 %v3162, 4294901760
    %v3663 = vsub.f32 %v3162, %v3662
    %v3664 = vand.u32 %v3663, 4294901760
    %3665 = vmatprep.subr.mxu0 %v3664
    %v3666 = vand.u32 %v3161, 4294901760
    %v3667 = vsub.f32 %v3161, %v3666
    %v3668 = vand.u32 %v3667, 4294901760
    %3669 = vmatpush1.msra.mxu0 %v3668
    %3670 = vmatprep.subr.mxu0 0.0
    %3671 = vmatpush1.msra.mxu0 0.0
    %3672 = vmatprep.subr.mxu0 0.0
    %3673 = vmatpush1.msra.mxu0 0.0
    %3674 = vmatprep.subr.mxu0 0.0
    %3675 = vmatpush1.msra.mxu0 0.0
    %3676 = vmatprep.subr.mxu0 0.0
    %3677 = vmatpush1.msra.mxu0 0.0
    %3678 = vmatprep.subr.mxu0 0.0
    %3679 = vmatpush1.msra.mxu0 0.0
    %3680 = vmatprep.subr.mxu0 0.0
    %3681 = vmatpush1.msra.mxu0 0.0
    %3682 = vmatprep.subr.mxu0 0.0
    %3683 = vmatpush1.msra.mxu0 0.0
    %3684 = vmatprep.subr.mxu0 0.0
    %3685 = vmatpush1.msra.mxu0 0.0
    %3686 = vmatprep.subr.mxu0 0.0
    %3687 = vmatpush1.msra.mxu0 0.0
    %3688 = vmatprep.subr.mxu0 0.0
    %3689 = vmatpush1.msra.mxu0 0.0
    %3690 = vmatprep.subr.mxu0 0.0
    %3691 = vmatpush1.msra.mxu0 0.0
    %3692 = vmatprep.subr.mxu0 0.0
    %3693 = vmatpush1.msra.mxu0 0.0
    %3694 = vmatprep.subr.mxu0 0.0
    %3695 = vmatpush1.msra.mxu0 0.0
    %3696 = vmatprep.subr.mxu0 0.0
    %3697 = vmatpush1.msra.mxu0 0.0
    %3698 = vmatprep.subr.mxu0 0.0
    %3699 = vmatpush1.msra.mxu0 0.0
    %3700 = vmatprep.subr.mxu0 0.0
    %3701 = vmatpush1.msra.mxu0 0.0
    %3702 = vmatprep.subr.mxu0 0.0
    %3703 = vmatpush1.msra.mxu0 0.0
    %3704 = vmatprep.subr.mxu0 0.0
    %3705 = vmatpush1.msra.mxu0 0.0
    %3706 = vmatprep.subr.mxu0 0.0
    %3707 = vmatpush1.msra.mxu0 0.0
    %3708 = vmatprep.subr.mxu0 0.0
    %3709 = vmatpush1.msra.mxu0 0.0
    %3710 = vmatprep.subr.mxu0 0.0
    %3711 = vmatpush1.msra.mxu0 0.0
    %3712 = vmatprep.subr.mxu0 0.0
    %3713 = vmatpush1.msra.mxu0 0.0
    %3714 = vmatprep.subr.mxu0 0.0
    %3715 = vmatpush1.msra.mxu0 0.0
    %3716 = vmatprep.subr.mxu0 0.0
    %3717 = vmatpush1.msra.mxu0 0.0
    %3718 = vmatprep.mubr.f32.mxu0 0.0
    %v3719 = vand.u32 %v3165, 4294901760
    %3720 = vmatmul.mubr.f32.gmra.mrb[0].mxu0 %v3719
    %v3721 = vpop.f32.mrb[0].mxu0
    %v3722 = vadd.f32 %v3602, %v3721
    %v3723 = vpop.f32.mrb[0].mxu0
    %v3724 = vadd.f32 %v3604, %v3723
    %3725 = vdwg.mxu0
    %v3726 = vand.u32 %v3148, 4294901760
    %3727 = vmatprep.subr.mxu0 %v3726
    %v3728 = vand.u32 %v3147, 4294901760
    %3729 = vmatpush1.msra.mxu0 %v3728
    %v3730 = vand.u32 %v3150, 4294901760
    %3731 = vmatprep.subr.mxu0 %v3730
    %v3732 = vand.u32 %v3149, 4294901760
    %3733 = vmatpush1.msra.mxu0 %v3732
    %v3734 = vand.u32 %v3152, 4294901760
    %3735 = vmatprep.subr.mxu0 %v3734
    %v3736 = vand.u32 %v3151, 4294901760
    %3737 = vmatpush1.msra.mxu0 %v3736
    %v3738 = vand.u32 %v3154, 4294901760
    %3739 = vmatprep.subr.mxu0 %v3738
    %v3740 = vand.u32 %v3153, 4294901760
    %3741 = vmatpush1.msra.mxu0 %v3740
    %v3742 = vand.u32 %v3156, 4294901760
    %3743 = vmatprep.subr.mxu0 %v3742
    %v3744 = vand.u32 %v3155, 4294901760
    %3745 = vmatpush1.msra.mxu0 %v3744
    %v3746 = vand.u32 %v3158, 4294901760
    %3747 = vmatprep.subr.mxu0 %v3746
    %v3748 = vand.u32 %v3157, 4294901760
    %3749 = vmatpush1.msra.mxu0 %v3748
    %v3750 = vand.u32 %v3160, 4294901760
    %3751 = vmatprep.subr.mxu0 %v3750
    %v3752 = vand.u32 %v3159, 4294901760
    %3753 = vmatpush1.msra.mxu0 %v3752
    %v3754 = vand.u32 %v3162, 4294901760
    %3755 = vmatprep.subr.mxu0 %v3754
    %v3756 = vand.u32 %v3161, 4294901760
    %3757 = vmatpush1.msra.mxu0 %v3756
    %3758 = vmatprep.subr.mxu0 0.0
    %3759 = vmatpush1.msra.mxu0 0.0
    %3760 = vmatprep.subr.mxu0 0.0
    %3761 = vmatpush1.msra.mxu0 0.0
    %3762 = vmatprep.subr.mxu0 0.0
    %3763 = vmatpush1.msra.mxu0 0.0
    %3764 = vmatprep.subr.mxu0 0.0
    %3765 = vmatpush1.msra.mxu0 0.0
    %3766 = vmatprep.subr.mxu0 0.0
    %3767 = vmatpush1.msra.mxu0 0.0
    %3768 = vmatprep.subr.mxu0 0.0
    %3769 = vmatpush1.msra.mxu0 0.0
    %3770 = vmatprep.subr.mxu0 0.0
    %3771 = vmatpush1.msra.mxu0 0.0
    %3772 = vmatprep.subr.mxu0 0.0
    %3773 = vmatpush1.msra.mxu0 0.0
    %3774 = vmatprep.subr.mxu0 0.0
    %3775 = vmatpush1.msra.mxu0 0.0
    %3776 = vmatprep.subr.mxu0 0.0
    %3777 = vmatpush1.msra.mxu0 0.0
    %3778 = vmatprep.subr.mxu0 0.0
    %3779 = vmatpush1.msra.mxu0 0.0
    %3780 = vmatprep.subr.mxu0 0.0
    %3781 = vmatpush1.msra.mxu0 0.0
    %3782 = vmatprep.subr.mxu0 0.0
    %3783 = vmatpush1.msra.mxu0 0.0
    %3784 = vmatprep.subr.mxu0 0.0
    %3785 = vmatpush1.msra.mxu0 0.0
    %3786 = vmatprep.subr.mxu0 0.0
    %3787 = vmatpush1.msra.mxu0 0.0
    %3788 = vmatprep.subr.mxu0 0.0
    %3789 = vmatpush1.msra.mxu0 0.0
    %3790 = vmatprep.subr.mxu0 0.0
    %3791 = vmatpush1.msra.mxu0 0.0
    %3792 = vmatprep.subr.mxu0 0.0
    %3793 = vmatpush1.msra.mxu0 0.0
    %3794 = vmatprep.subr.mxu0 0.0
    %3795 = vmatpush1.msra.mxu0 0.0
    %3796 = vmatprep.subr.mxu0 0.0
    %3797 = vmatpush1.msra.mxu0 0.0
    %3798 = vmatprep.subr.mxu0 0.0
    %3799 = vmatpush1.msra.mxu0 0.0
    %3800 = vmatprep.subr.mxu0 0.0
    %3801 = vmatpush1.msra.mxu0 0.0
    %3802 = vmatprep.subr.mxu0 0.0
    %3803 = vmatpush1.msra.mxu0 0.0
    %3804 = vmatprep.subr.mxu0 0.0
    %3805 = vmatpush1.msra.mxu0 0.0
    %3806 = vmatprep.mubr.f32.mxu0 0.0
    %v3807 = vand.u32 %v3165, 4294901760
    %3808 = vmatmul.mubr.f32.gmra.mrb[0].mxu0 %v3807
    %v3809 = vpop.f32.mrb[0].mxu0
    %v3810 = vadd.f32 %v3722, %v3809
    %v3811 = vpop.f32.mrb[0].mxu0
    %v3812 = vadd.f32 %v3724, %v3811
    %3813 = vdwg.mxu0
    %v3815 = vrot.slane %v3810, 4
    %v3817 = vadd.f32 %v651, %v3815
    %v3818 = vxor.u32 %v3817, 2147483648
    %v3819 = vmul.f32 %v3818, 1.442695
    %v3820 = vpow.pop %v3819
    %v3821 = vadd.f32 %v3820, 1.0
    %v3822 = vrcp.pop %v3821
    %v3823 = vmul.f32 1.0, %v3822
    %v3824 = vtanh.pop %v3817
    %v3826 = vrot.slane %v2600, 6
    %v3828 = vmul.f32 %v3823, %v3826
    %3830 = vrot.lane.b32.xlu0 %v3824, 64
    %v3831 = vpop.permute.xlu0 %3830
    %v3833 = vmul.f32 %v3823, %v3831
    %3835 = vrot.lane.b32.xlu0 %v3833, 32
    %v3836 = vpop.permute.xlu0 %3835
    %v3838 = vadd.f32 %v3828, %v3836
    %v3839 = vtanh.pop %v3838
    %3841 = vrot.lane.b32.xlu0 %v3839, 64
    %v3842 = vpop.permute.xlu0 %3841
    %v3844 = vmul.f32 %v3823, %v3842
    %v3845 = vld [vmem:[#allocation3 + $0x40] sm:$0xff]
    %v3846 = vld [vmem:[#allocation3 + $0x48] sm:$0xff]
    %v3847 = vld [vmem:[#allocation3 + $0x50] sm:$0xff]
    %v3848 = vld [vmem:[#allocation3 + $0x58] sm:$0xff]
    %v3849 = vld [vmem:[#allocation3 + $0x80] sm:$0x1]
    %v3850 = vlaneseq
    %v3851 = vshrl.u32 %v3850, 7
    %v3852 = vsub.s32 0, %v3851
    %v3853 = vrot.slane %v3849, %v3852
    %v3854 = vadd.f32 %v3812, %v3853
    %v3856 = vrot.slane %v3844, 4
    %3857 = vrot.lane.b32.xlu0 %v3856, 32
    %v3858 = vpop.permute.xlu0 %3857
    %v3859 = vsel %vm671, %v3858, 0
    %3861 = vmatprep.subr.mxu0 0.0
    %v3862 = vand.u32 %v3845, 4294901760
    %3863 = vmatpush1.msra.mxu0 %v3862
    %3864 = vmatprep.subr.mxu0 0.0
    %v3865 = vand.u32 %v3846, 4294901760
    %3866 = vmatpush1.msra.mxu0 %v3865
    %3867 = vmatprep.subr.mxu0 0.0
    %v3868 = vand.u32 %v3847, 4294901760
    %3869 = vmatpush1.msra.mxu0 %v3868
    %3870 = vmatprep.subr.mxu0 0.0
    %v3871 = vand.u32 %v3848, 4294901760
    %3872 = vmatpush1.msra.mxu0 %v3871
    %3873 = vmatprep.subr.mxu0 0.0
    %3874 = vmatpush1.msra.mxu0 0.0
    %3875 = vmatprep.subr.mxu0 0.0
    %3876 = vmatpush1.msra.mxu0 0.0
    %3877 = vmatprep.subr.mxu0 0.0
    %3878 = vmatpush1.msra.mxu0 0.0
    %3879 = vmatprep.subr.mxu0 0.0
    %3880 = vmatpush1.msra.mxu0 0.0
    %3881 = vmatprep.subr.mxu0 0.0
    %3882 = vmatpush1.msra.mxu0 0.0
    %3883 = vmatprep.subr.mxu0 0.0
    %3884 = vmatpush1.msra.mxu0 0.0
    %3885 = vmatprep.subr.mxu0 0.0
    %3886 = vmatpush1.msra.mxu0 0.0
    %3887 = vmatprep.subr.mxu0 0.0
    %3888 = vmatpush1.msra.mxu0 0.0
    %3889 = vmatprep.subr.mxu0 0.0
    %3890 = vmatpush1.msra.mxu0 0.0
    %3891 = vmatprep.subr.mxu0 0.0
    %3892 = vmatpush1.msra.mxu0 0.0
    %3893 = vmatprep.subr.mxu0 0.0
    %3894 = vmatpush1.msra.mxu0 0.0
    %3895 = vmatprep.subr.mxu0 0.0
    %3896 = vmatpush1.msra.mxu0 0.0
    %3897 = vmatprep.subr.mxu0 0.0
    %3898 = vmatpush1.msra.mxu0 0.0
    %3899 = vmatprep.subr.mxu0 0.0
    %3900 = vmatpush1.msra.mxu0 0.0
    %3901 = vmatprep.subr.mxu0 0.0
    %3902 = vmatpush1.msra.mxu0 0.0
    %3903 = vmatprep.subr.mxu0 0.0
    %3904 = vmatpush1.msra.mxu0 0.0
    %3905 = vmatprep.subr.mxu0 0.0
    %3906 = vmatpush1.msra.mxu0 0.0
    %3907 = vmatprep.subr.mxu0 0.0
    %3908 = vmatpush1.msra.mxu0 0.0
    %3909 = vmatprep.subr.mxu0 0.0
    %3910 = vmatpush1.msra.mxu0 0.0
    %3911 = vmatprep.subr.mxu0 0.0
    %3912 = vmatpush1.msra.mxu0 0.0
    %3913 = vmatprep.subr.mxu0 0.0
    %3914 = vmatpush1.msra.mxu0 0.0
    %3915 = vmatprep.subr.mxu0 0.0
    %3916 = vmatpush1.msra.mxu0 0.0
    %3917 = vmatprep.subr.mxu0 0.0
    %3918 = vmatpush1.msra.mxu0 0.0
    %3919 = vmatprep.subr.mxu0 0.0
    %3920 = vmatpush1.msra.mxu0 0.0
    %3921 = vmatprep.subr.mxu0 0.0
    %3922 = vmatpush1.msra.mxu0 0.0
    %3923 = vmatprep.subr.mxu0 0.0
    %3924 = vmatpush1.msra.mxu0 0.0
    %3925 = vmatprep.subr.mxu0 0.0
    %3926 = vmatpush1.msra.mxu0 0.0
    %3927 = vmatprep.subr.mxu0 0.0
    %3928 = vmatpush1.msra.mxu0 0.0
    %3929 = vmatprep.mubr.f32.mxu0 0.0
    %v3930 = vand.u32 %v3859, 4294901760
    %v3931 = vsub.f32 %v3859, %v3930
    %v3932 = vand.u32 %v3931, 4294901760
    %v3933 = vsub.f32 %v3931, %v3932
    %v3934 = vand.u32 %v3933, 4294901760
    %3935 = vmatmul.mubr.f32.gmra.mrb[0].mxu0 %v3934
    %v3936 = vpop.f32.mrb[0].mxu0
    %v3937 = vadd.f32 0.0, %v3936
    %v3938 = vpop.f32.mrb[0].mxu0
    %3939 = vdwg.mxu0
    %3940 = vmatprep.subr.mxu0 0.0
    %v3941 = vand.u32 %v3845, 4294901760
    %v3942 = vsub.f32 %v3845, %v3941
    %v3943 = vand.u32 %v3942, 4294901760
    %v3944 = vsub.f32 %v3942, %v3943
    %v3945 = vand.u32 %v3944, 4294901760
    %3946 = vmatpush1.msra.mxu0 %v3945
    %3947 = vmatprep.subr.mxu0 0.0
    %v3948 = vand.u32 %v3846, 4294901760
    %v3949 = vsub.f32 %v3846, %v3948
    %v3950 = vand.u32 %v3949, 4294901760
    %v3951 = vsub.f32 %v3949, %v3950
    %v3952 = vand.u32 %v3951, 4294901760
    %3953 = vmatpush1.msra.mxu0 %v3952
    %3954 = vmatprep.subr.mxu0 0.0
    %v3955 = vand.u32 %v3847, 4294901760
    %v3956 = vsub.f32 %v3847, %v3955
    %v3957 = vand.u32 %v3956, 4294901760
    %v3958 = vsub.f32 %v3956, %v3957
    %v3959 = vand.u32 %v3958, 4294901760
    %3960 = vmatpush1.msra.mxu0 %v3959
    %3961 = vmatprep.subr.mxu0 0.0
    %v3962 = vand.u32 %v3848, 4294901760
    %v3963 = vsub.f32 %v3848, %v3962
    %v3964 = vand.u32 %v3963, 4294901760
    %v3965 = vsub.f32 %v3963, %v3964
    %v3966 = vand.u32 %v3965, 4294901760
    %3967 = vmatpush1.msra.mxu0 %v3966
    %3968 = vmatprep.subr.mxu0 0.0
    %3969 = vmatpush1.msra.mxu0 0.0
    %3970 = vmatprep.subr.mxu0 0.0
    %3971 = vmatpush1.msra.mxu0 0.0
    %3972 = vmatprep.subr.mxu0 0.0
    %3973 = vmatpush1.msra.mxu0 0.0
    %3974 = vmatprep.subr.mxu0 0.0
    %3975 = vmatpush1.msra.mxu0 0.0
    %3976 = vmatprep.subr.mxu0 0.0
    %3977 = vmatpush1.msra.mxu0 0.0
    %3978 = vmatprep.subr.mxu0 0.0
    %3979 = vmatpush1.msra.mxu0 0.0
    %3980 = vmatprep.subr.mxu0 0.0
    %3981 = vmatpush1.msra.mxu0 0.0
    %3982 = vmatprep.subr.mxu0 0.0
    %3983 = vmatpush1.msra.mxu0 0.0
    %3984 = vmatprep.subr.mxu0 0.0
    %3985 = vmatpush1.msra.mxu0 0.0
    %3986 = vmatprep.subr.mxu0 0.0
    %3987 = vmatpush1.msra.mxu0 0.0
    %3988 = vmatprep.subr.mxu0 0.0
    %3989 = vmatpush1.msra.mxu0 0.0
    %3990 = vmatprep.subr.mxu0 0.0
    %3991 = vmatpush1.msra.mxu0 0.0
    %3992 = vmatprep.subr.mxu0 0.0
    %3993 = vmatpush1.msra.mxu0 0.0
    %3994 = vmatprep.subr.mxu0 0.0
    %3995 = vmatpush1.msra.mxu0 0.0
    %3996 = vmatprep.subr.mxu0 0.0
    %3997 = vmatpush1.msra.mxu0 0.0
    %3998 = vmatprep.subr.mxu0 0.0
    %3999 = vmatpush1.msra.mxu0 0.0
    %4000 = vmatprep.subr.mxu0 0.0
    %4001 = vmatpush1.msra.mxu0 0.0
    %4002 = vmatprep.subr.mxu0 0.0
    %4003 = vmatpush1.msra.mxu0 0.0
    %4004 = vmatprep.subr.mxu0 0.0
    %4005 = vmatpush1.msra.mxu0 0.0
    %4006 = vmatprep.subr.mxu0 0.0
    %4007 = vmatpush1.msra.mxu0 0.0
    %4008 = vmatprep.subr.mxu0 0.0
    %4009 = vmatpush1.msra.mxu0 0.0
    %4010 = vmatprep.subr.mxu0 0.0
    %4011 = vmatpush1.msra.mxu0 0.0
    %4012 = vmatprep.subr.mxu0 0.0
    %4013 = vmatpush1.msra.mxu0 0.0
    %4014 = vmatprep.subr.mxu0 0.0
    %4015 = vmatpush1.msra.mxu0 0.0
    %4016 = vmatprep.subr.mxu0 0.0
    %4017 = vmatpush1.msra.mxu0 0.0
    %4018 = vmatprep.subr.mxu0 0.0
    %4019 = vmatpush1.msra.mxu0 0.0
    %4020 = vmatprep.subr.mxu0 0.0
    %4021 = vmatpush1.msra.mxu0 0.0
    %4022 = vmatprep.subr.mxu0 0.0
    %4023 = vmatpush1.msra.mxu0 0.0
    %4024 = vmatprep.mubr.f32.mxu0 0.0
    %v4025 = vand.u32 %v3859, 4294901760
    %4026 = vmatmul.mubr.f32.gmra.mrb[0].mxu0 %v4025
    %v4027 = vpop.f32.mrb[0].mxu0
    %v4028 = vadd.f32 %v3937, %v4027
    %v4029 = vpop.f32.mrb[0].mxu0
    %4030 = vdwg.mxu0
    %4031 = vmatprep.subr.mxu0 0.0
    %v4032 = vand.u32 %v3845, 4294901760
    %v4033 = vsub.f32 %v3845, %v4032
    %4034 = vmatpush1.msra.mxu0 %v4033
    %4035 = vmatprep.subr.mxu0 0.0
    %v4036 = vand.u32 %v3846, 4294901760
    %v4037 = vsub.f32 %v3846, %v4036
    %4038 = vmatpush1.msra.mxu0 %v4037
    %4039 = vmatprep.subr.mxu0 0.0
    %v4040 = vand.u32 %v3847, 4294901760
    %v4041 = vsub.f32 %v3847, %v4040
    %4042 = vmatpush1.msra.mxu0 %v4041
    %4043 = vmatprep.subr.mxu0 0.0
    %v4044 = vand.u32 %v3848, 4294901760
    %v4045 = vsub.f32 %v3848, %v4044
    %4046 = vmatpush1.msra.mxu0 %v4045
    %4047 = vmatprep.subr.mxu0 0.0
    %4048 = vmatpush1.msra.mxu0 0.0
    %4049 = vmatprep.subr.mxu0 0.0
    %4050 = vmatpush1.msra.mxu0 0.0
    %4051 = vmatprep.subr.mxu0 0.0
    %4052 = vmatpush1.msra.mxu0 0.0
    %4053 = vmatprep.subr.mxu0 0.0
    %4054 = vmatpush1.msra.mxu0 0.0
    %4055 = vmatprep.subr.mxu0 0.0
    %4056 = vmatpush1.msra.mxu0 0.0
    %4057 = vmatprep.subr.mxu0 0.0
    %4058 = vmatpush1.msra.mxu0 0.0
    %4059 = vmatprep.subr.mxu0 0.0
    %4060 = vmatpush1.msra.mxu0 0.0
    %4061 = vmatprep.subr.mxu0 0.0
    %4062 = vmatpush1.msra.mxu0 0.0
    %4063 = vmatprep.subr.mxu0 0.0
    %4064 = vmatpush1.msra.mxu0 0.0
    %4065 = vmatprep.subr.mxu0 0.0
    %4066 = vmatpush1.msra.mxu0 0.0
    %4067 = vmatprep.subr.mxu0 0.0
    %4068 = vmatpush1.msra.mxu0 0.0
    %4069 = vmatprep.subr.mxu0 0.0
    %4070 = vmatpush1.msra.mxu0 0.0
    %4071 = vmatprep.subr.mxu0 0.0
    %4072 = vmatpush1.msra.mxu0 0.0
    %4073 = vmatprep.subr.mxu0 0.0
    %4074 = vmatpush1.msra.mxu0 0.0
    %4075 = vmatprep.subr.mxu0 0.0
    %4076 = vmatpush1.msra.mxu0 0.0
    %4077 = vmatprep.subr.mxu0 0.0
    %4078 = vmatpush1.msra.mxu0 0.0
    %4079 = vmatprep.subr.mxu0 0.0
    %4080 = vmatpush1.msra.mxu0 0.0
    %4081 = vmatprep.subr.mxu0 0.0
    %4082 = vmatpush1.msra.mxu0 0.0
    %4083 = vmatprep.subr.mxu0 0.0
    %4084 = vmatpush1.msra.mxu0 0.0
    %4085 = vmatprep.subr.mxu0 0.0
    %4086 = vmatpush1.msra.mxu0 0.0
    %4087 = vmatprep.subr.mxu0 0.0
    %4088 = vmatpush1.msra.mxu0 0.0
    %4089 = vmatprep.subr.mxu0 0.0
    %4090 = vmatpush1.msra.mxu0 0.0
    %4091 = vmatprep.subr.mxu0 0.0
    %4092 = vmatpush1.msra.mxu0 0.0
    %4093 = vmatprep.subr.mxu0 0.0
    %4094 = vmatpush1.msra.mxu0 0.0
    %4095 = vmatprep.subr.mxu0 0.0
    %4096 = vmatpush1.msra.mxu0 0.0
    %4097 = vmatprep.subr.mxu0 0.0
    %4098 = vmatpush1.msra.mxu0 0.0
    %4099 = vmatprep.subr.mxu0 0.0
    %4100 = vmatpush1.msra.mxu0 0.0
    %4101 = vmatprep.subr.mxu0 0.0
    %4102 = vmatpush1.msra.mxu0 0.0
    %4103 = vmatprep.mubr.f32.mxu0 0.0
    %v4104 = vand.u32 %v3859, 4294901760
    %v4105 = vsub.f32 %v3859, %v4104
    %4106 = vmatmul.mubr.f32.gmra.mrb[0].mxu0 %v4105
    %v4107 = vpop.f32.mrb[0].mxu0
    %v4108 = vadd.f32 %v4028, %v4107
    %v4109 = vpop.f32.mrb[0].mxu0
    %4110 = vdwg.mxu0
    %4111 = vmatprep.subr.mxu0 0.0
    %v4112 = vand.u32 %v3845, 4294901760
    %4113 = vmatpush1.msra.mxu0 %v4112
    %4114 = vmatprep.subr.mxu0 0.0
    %v4115 = vand.u32 %v3846, 4294901760
    %4116 = vmatpush1.msra.mxu0 %v4115
    %4117 = vmatprep.subr.mxu0 0.0
    %v4118 = vand.u32 %v3847, 4294901760
    %4119 = vmatpush1.msra.mxu0 %v4118
    %4120 = vmatprep.subr.mxu0 0.0
    %v4121 = vand.u32 %v3848, 4294901760
    %4122 = vmatpush1.msra.mxu0 %v4121
    %4123 = vmatprep.subr.mxu0 0.0
    %4124 = vmatpush1.msra.mxu0 0.0
    %4125 = vmatprep.subr.mxu0 0.0
    %4126 = vmatpush1.msra.mxu0 0.0
    %4127 = vmatprep.subr.mxu0 0.0
    %4128 = vmatpush1.msra.mxu0 0.0
    %4129 = vmatprep.subr.mxu0 0.0
    %4130 = vmatpush1.msra.mxu0 0.0
    %4131 = vmatprep.subr.mxu0 0.0
    %4132 = vmatpush1.msra.mxu0 0.0
    %4133 = vmatprep.subr.mxu0 0.0
    %4134 = vmatpush1.msra.mxu0 0.0
    %4135 = vmatprep.subr.mxu0 0.0
    %4136 = vmatpush1.msra.mxu0 0.0
    %4137 = vmatprep.subr.mxu0 0.0
    %4138 = vmatpush1.msra.mxu0 0.0
    %4139 = vmatprep.subr.mxu0 0.0
    %4140 = vmatpush1.msra.mxu0 0.0
    %4141 = vmatprep.subr.mxu0 0.0
    %4142 = vmatpush1.msra.mxu0 0.0
    %4143 = vmatprep.subr.mxu0 0.0
    %4144 = vmatpush1.msra.mxu0 0.0
    %4145 = vmatprep.subr.mxu0 0.0
    %4146 = vmatpush1.msra.mxu0 0.0
    %4147 = vmatprep.subr.mxu0 0.0
    %4148 = vmatpush1.msra.mxu0 0.0
    %4149 = vmatprep.subr.mxu0 0.0
    %4150 = vmatpush1.msra.mxu0 0.0
    %4151 = vmatprep.subr.mxu0 0.0
    %4152 = vmatpush1.msra.mxu0 0.0
    %4153 = vmatprep.subr.mxu0 0.0
    %4154 = vmatpush1.msra.mxu0 0.0
    %4155 = vmatprep.subr.mxu0 0.0
    %4156 = vmatpush1.msra.mxu0 0.0
    %4157 = vmatprep.subr.mxu0 0.0
    %4158 = vmatpush1.msra.mxu0 0.0
    %4159 = vmatprep.subr.mxu0 0.0
    %4160 = vmatpush1.msra.mxu0 0.0
    %4161 = vmatprep.subr.mxu0 0.0
    %4162 = vmatpush1.msra.mxu0 0.0
    %4163 = vmatprep.subr.mxu0 0.0
    %4164 = vmatpush1.msra.mxu0 0.0
    %4165 = vmatprep.subr.mxu0 0.0
    %4166 = vmatpush1.msra.mxu0 0.0
    %4167 = vmatprep.subr.mxu0 0.0
    %4168 = vmatpush1.msra.mxu0 0.0
    %4169 = vmatprep.subr.mxu0 0.0
    %4170 = vmatpush1.msra.mxu0 0.0
    %4171 = vmatprep.subr.mxu0 0.0
    %4172 = vmatpush1.msra.mxu0 0.0
    %4173 = vmatprep.subr.mxu0 0.0
    %4174 = vmatpush1.msra.mxu0 0.0
    %4175 = vmatprep.subr.mxu0 0.0
    %4176 = vmatpush1.msra.mxu0 0.0
    %4177 = vmatprep.subr.mxu0 0.0
    %4178 = vmatpush1.msra.mxu0 0.0
    %4179 = vmatprep.mubr.f32.mxu0 0.0
    %v4180 = vand.u32 %v3859, 4294901760
    %v4181 = vsub.f32 %v3859, %v4180
    %v4182 = vand.u32 %v4181, 4294901760
    %4183 = vmatmul.mubr.f32.gmra.mrb[0].mxu0 %v4182
    %v4184 = vpop.f32.mrb[0].mxu0
    %v4185 = vadd.f32 %v4108, %v4184
    %v4186 = vpop.f32.mrb[0].mxu0
    %4187 = vdwg.mxu0
    %4188 = vmatprep.subr.mxu0 0.0
    %v4189 = vand.u32 %v3845, 4294901760
    %v4190 = vsub.f32 %v3845, %v4189
    %v4191 = vand.u32 %v4190, 4294901760
    %4192 = vmatpush1.msra.mxu0 %v4191
    %4193 = vmatprep.subr.mxu0 0.0
    %v4194 = vand.u32 %v3846, 4294901760
    %v4195 = vsub.f32 %v3846, %v4194
    %v4196 = vand.u32 %v4195, 4294901760
    %4197 = vmatpush1.msra.mxu0 %v4196
    %4198 = vmatprep.subr.mxu0 0.0
    %v4199 = vand.u32 %v3847, 4294901760
    %v4200 = vsub.f32 %v3847, %v4199
    %v4201 = vand.u32 %v4200, 4294901760
    %4202 = vmatpush1.msra.mxu0 %v4201
    %4203 = vmatprep.subr.mxu0 0.0
    %v4204 = vand.u32 %v3848, 4294901760
    %v4205 = vsub.f32 %v3848, %v4204
    %v4206 = vand.u32 %v4205, 4294901760
    %4207 = vmatpush1.msra.mxu0 %v4206
    %4208 = vmatprep.subr.mxu0 0.0
    %4209 = vmatpush1.msra.mxu0 0.0
    %4210 = vmatprep.subr.mxu0 0.0
    %4211 = vmatpush1.msra.mxu0 0.0
    %4212 = vmatprep.subr.mxu0 0.0
    %4213 = vmatpush1.msra.mxu0 0.0
    %4214 = vmatprep.subr.mxu0 0.0
    %4215 = vmatpush1.msra.mxu0 0.0
    %4216 = vmatprep.subr.mxu0 0.0
    %4217 = vmatpush1.msra.mxu0 0.0
    %4218 = vmatprep.subr.mxu0 0.0
    %4219 = vmatpush1.msra.mxu0 0.0
    %4220 = vmatprep.subr.mxu0 0.0
    %4221 = vmatpush1.msra.mxu0 0.0
    %4222 = vmatprep.subr.mxu0 0.0
    %4223 = vmatpush1.msra.mxu0 0.0
    %4224 = vmatprep.subr.mxu0 0.0
    %4225 = vmatpush1.msra.mxu0 0.0
    %4226 = vmatprep.subr.mxu0 0.0
    %4227 = vmatpush1.msra.mxu0 0.0
    %4228 = vmatprep.subr.mxu0 0.0
    %4229 = vmatpush1.msra.mxu0 0.0
    %4230 = vmatprep.subr.mxu0 0.0
    %4231 = vmatpush1.msra.mxu0 0.0
    %4232 = vmatprep.subr.mxu0 0.0
    %4233 = vmatpush1.msra.mxu0 0.0
    %4234 = vmatprep.subr.mxu0 0.0
    %4235 = vmatpush1.msra.mxu0 0.0
    %4236 = vmatprep.subr.mxu0 0.0
    %4237 = vmatpush1.msra.mxu0 0.0
    %4238 = vmatprep.subr.mxu0 0.0
    %4239 = vmatpush1.msra.mxu0 0.0
    %4240 = vmatprep.subr.mxu0 0.0
    %4241 = vmatpush1.msra.mxu0 0.0
    %4242 = vmatprep.subr.mxu0 0.0
    %4243 = vmatpush1.msra.mxu0 0.0
    %4244 = vmatprep.subr.mxu0 0.0
    %4245 = vmatpush1.msra.mxu0 0.0
    %4246 = vmatprep.subr.mxu0 0.0
    %4247 = vmatpush1.msra.mxu0 0.0
    %4248 = vmatprep.subr.mxu0 0.0
    %4249 = vmatpush1.msra.mxu0 0.0
    %4250 = vmatprep.subr.mxu0 0.0
    %4251 = vmatpush1.msra.mxu0 0.0
    %4252 = vmatprep.subr.mxu0 0.0
    %4253 = vmatpush1.msra.mxu0 0.0
    %4254 = vmatprep.subr.mxu0 0.0
    %4255 = vmatpush1.msra.mxu0 0.0
    %4256 = vmatprep.subr.mxu0 0.0
    %4257 = vmatpush1.msra.mxu0 0.0
    %4258 = vmatprep.subr.mxu0 0.0
    %4259 = vmatpush1.msra.mxu0 0.0
    %4260 = vmatprep.subr.mxu0 0.0
    %4261 = vmatpush1.msra.mxu0 0.0
    %4262 = vmatprep.subr.mxu0 0.0
    %4263 = vmatpush1.msra.mxu0 0.0
    %4264 = vmatprep.mubr.f32.mxu0 0.0
    %v4265 = vand.u32 %v3859, 4294901760
    %4266 = vmatmul.mubr.f32.gmra.mrb[0].mxu0 %v4265
    %v4267 = vpop.f32.mrb[0].mxu0
    %v4268 = vadd.f32 %v4185, %v4267
    %v4269 = vpop.f32.mrb[0].mxu0
    %4270 = vdwg.mxu0
    %4271 = vmatprep.subr.mxu0 0.0
    %v4272 = vand.u32 %v3845, 4294901760
    %4273 = vmatpush1.msra.mxu0 %v4272
    %4274 = vmatprep.subr.mxu0 0.0
    %v4275 = vand.u32 %v3846, 4294901760
    %4276 = vmatpush1.msra.mxu0 %v4275
    %4277 = vmatprep.subr.mxu0 0.0
    %v4278 = vand.u32 %v3847, 4294901760
    %4279 = vmatpush1.msra.mxu0 %v4278
    %4280 = vmatprep.subr.mxu0 0.0
    %v4281 = vand.u32 %v3848, 4294901760
    %4282 = vmatpush1.msra.mxu0 %v4281
    %4283 = vmatprep.subr.mxu0 0.0
    %4284 = vmatpush1.msra.mxu0 0.0
    %4285 = vmatprep.subr.mxu0 0.0
    %4286 = vmatpush1.msra.mxu0 0.0
    %4287 = vmatprep.subr.mxu0 0.0
    %4288 = vmatpush1.msra.mxu0 0.0
    %4289 = vmatprep.subr.mxu0 0.0
    %4290 = vmatpush1.msra.mxu0 0.0
    %4291 = vmatprep.subr.mxu0 0.0
    %4292 = vmatpush1.msra.mxu0 0.0
    %4293 = vmatprep.subr.mxu0 0.0
    %4294 = vmatpush1.msra.mxu0 0.0
    %4295 = vmatprep.subr.mxu0 0.0
    %4296 = vmatpush1.msra.mxu0 0.0
    %4297 = vmatprep.subr.mxu0 0.0
    %4298 = vmatpush1.msra.mxu0 0.0
    %4299 = vmatprep.subr.mxu0 0.0
    %4300 = vmatpush1.msra.mxu0 0.0
    %4301 = vmatprep.subr.mxu0 0.0
    %4302 = vmatpush1.msra.mxu0 0.0
    %4303 = vmatprep.subr.mxu0 0.0
    %4304 = vmatpush1.msra.mxu0 0.0
    %4305 = vmatprep.subr.mxu0 0.0
    %4306 = vmatpush1.msra.mxu0 0.0
    %4307 = vmatprep.subr.mxu0 0.0
    %4308 = vmatpush1.msra.mxu0 0.0
    %4309 = vmatprep.subr.mxu0 0.0
    %4310 = vmatpush1.msra.mxu0 0.0
    %4311 = vmatprep.subr.mxu0 0.0
    %4312 = vmatpush1.msra.mxu0 0.0
    %4313 = vmatprep.subr.mxu0 0.0
    %4314 = vmatpush1.msra.mxu0 0.0
    %4315 = vmatprep.subr.mxu0 0.0
    %4316 = vmatpush1.msra.mxu0 0.0
    %4317 = vmatprep.subr.mxu0 0.0
    %4318 = vmatpush1.msra.mxu0 0.0
    %4319 = vmatprep.subr.mxu0 0.0
    %4320 = vmatpush1.msra.mxu0 0.0
    %4321 = vmatprep.subr.mxu0 0.0
    %4322 = vmatpush1.msra.mxu0 0.0
    %4323 = vmatprep.subr.mxu0 0.0
    %4324 = vmatpush1.msra.mxu0 0.0
    %4325 = vmatprep.subr.mxu0 0.0
    %4326 = vmatpush1.msra.mxu0 0.0
    %4327 = vmatprep.subr.mxu0 0.0
    %4328 = vmatpush1.msra.mxu0 0.0
    %4329 = vmatprep.subr.mxu0 0.0
    %4330 = vmatpush1.msra.mxu0 0.0
    %4331 = vmatprep.subr.mxu0 0.0
    %4332 = vmatpush1.msra.mxu0 0.0
    %4333 = vmatprep.subr.mxu0 0.0
    %4334 = vmatpush1.msra.mxu0 0.0
    %4335 = vmatprep.subr.mxu0 0.0
    %4336 = vmatpush1.msra.mxu0 0.0
    %4337 = vmatprep.subr.mxu0 0.0
    %4338 = vmatpush1.msra.mxu0 0.0
    %4339 = vmatprep.mubr.f32.mxu0 0.0
    %v4340 = vand.u32 %v3859, 4294901760
    %4341 = vmatmul.mubr.f32.gmra.mrb[0].mxu0 %v4340
    %v4342 = vpop.f32.mrb[0].mxu0
    %v4343 = vadd.f32 %v4268, %v4342
    %v4344 = vpop.f32.mrb[0].mxu0
    %4345 = vdwg.mxu0
    %v4346 = vadd.f32 %v3854, %v4343
    %v4347 = vxor.u32 %v4346, 2147483648
    %v4348 = vmul.f32 %v4347, 1.442695
    %v4349 = vpow.pop %v4348
    %v4350 = vadd.f32 %v4349, 1.0
    %v4351 = vrcp.pop %v4350
    %v4352 = vmul.f32 1.0, %v4351
    %v4353 = vtanh.pop %v4346
    %v4354 = vmul.f32 %v4352, %v3126
    %4356 = vrot.lane.b32.xlu0 %v4353, 64
    %v4357 = vpop.permute.xlu0 %4356
    %v4359 = vmul.f32 %v4352, %v4357
    %4361 = vrot.lane.b32.xlu0 %v4359, 32
    %v4362 = vpop.permute.xlu0 %4361
    %v4364 = vadd.f32 %v4354, %v4362
    %v4365 = vtanh.pop %v4364
    %4367 = vrot.lane.b32.xlu0 %v4365, 64
    %v4368 = vpop.permute.xlu0 %4367
    %v4370 = vmul.f32 %v4352, %v4368
    %4372 = vrot.lane.b32.xlu0 %v4370, 32
    %v4373 = vpop.permute.xlu0 %4372
    %4375 = vst.msk [vmem:[#allocation2 + $0x2] sm:$0x1] %vm1901, %v4373
    %4376 = vst.msk [vmem:[#allocation2 + $0x9] sm:$0x2] %vm1903, %v4373
    %4377 = vrot.lane.b32.xlu0 %v3844, 32
    %v4378 = vpop.permute.xlu0 %4377
    %v4380 = vrot.slane %v4370, 4
    %4381 = vrot.lane.b32.xlu0 %v4380, 64
    %v4382 = vpop.permute.xlu0 %4381
    %v4384 = vsel %vm671, %v4378, %v4382
    %v4385 = vld [vmem:[#allocation6] sm:$0xff]
    %v4386 = vld [vmem:[#allocation6 + $0x8] sm:$0xff]
    %v4387 = vld [vmem:[#allocation6 + $0x10] sm:$0xff]
    %v4388 = vld [vmem:[#allocation6 + $0x18] sm:$0xff]
    %v4389 = vld [vmem:[#allocation6 + $0x20] sm:$0xff]
    %v4390 = vld [vmem:[#allocation6 + $0x28] sm:$0xff]
    %v4391 = vld [vmem:[#allocation6 + $0x30] sm:$0xff]
    %v4392 = vld [vmem:[#allocation6 + $0x38] sm:$0xff]
    %v4393 = vld [vmem:[#allocation6 + $0x40] sm:$0xff]
    %v4394 = vld [vmem:[#allocation6 + $0x48] sm:$0xff]
    %v4395 = vld [vmem:[#allocation6 + $0x50] sm:$0xff]
    %v4396 = vld [vmem:[#allocation6 + $0x58] sm:$0xff]
    %v4397 = vld [vmem:[#allocation6 + $0x60] sm:$0xff]
    %v4398 = vld [vmem:[#allocation6 + $0x68] sm:$0xff]
    %v4399 = vld [vmem:[#allocation6 + $0x70] sm:$0xff]
    %v4400 = vld [vmem:[#allocation6 + $0x78] sm:$0xff]
    %v4402 = vrot.slane %v4384, 4
    %v4403 = vsel %vm73, %v4402, 0
    %v4405 = vand.u32 %v4386, 4294901760
    %4406 = vmatprep.subr.mxu0 %v4405
    %v4407 = vand.u32 %v4385, 4294901760
    %4408 = vmatpush1.msra.mxu0 %v4407
    %v4409 = vand.u32 %v4388, 4294901760
    %4410 = vmatprep.subr.mxu0 %v4409
    %v4411 = vand.u32 %v4387, 4294901760
    %4412 = vmatpush1.msra.mxu0 %v4411
    %v4413 = vand.u32 %v4390, 4294901760
    %4414 = vmatprep.subr.mxu0 %v4413
    %v4415 = vand.u32 %v4389, 4294901760
    %4416 = vmatpush1.msra.mxu0 %v4415
    %v4417 = vand.u32 %v4392, 4294901760
    %4418 = vmatprep.subr.mxu0 %v4417
    %v4419 = vand.u32 %v4391, 4294901760
    %4420 = vmatpush1.msra.mxu0 %v4419
    %v4421 = vand.u32 %v4394, 4294901760
    %4422 = vmatprep.subr.mxu0 %v4421
    %v4423 = vand.u32 %v4393, 4294901760
    %4424 = vmatpush1.msra.mxu0 %v4423
    %v4425 = vand.u32 %v4396, 4294901760
    %4426 = vmatprep.subr.mxu0 %v4425
    %v4427 = vand.u32 %v4395, 4294901760
    %4428 = vmatpush1.msra.mxu0 %v4427
    %v4429 = vand.u32 %v4398, 4294901760
    %4430 = vmatprep.subr.mxu0 %v4429
    %v4431 = vand.u32 %v4397, 4294901760
    %4432 = vmatpush1.msra.mxu0 %v4431
    %v4433 = vand.u32 %v4400, 4294901760
    %4434 = vmatprep.subr.mxu0 %v4433
    %v4435 = vand.u32 %v4399, 4294901760
    %4436 = vmatpush1.msra.mxu0 %v4435
    %4437 = vmatprep.subr.mxu0 0.0
    %4438 = vmatpush1.msra.mxu0 0.0
    %4439 = vmatprep.subr.mxu0 0.0
    %4440 = vmatpush1.msra.mxu0 0.0
    %4441 = vmatprep.subr.mxu0 0.0
    %4442 = vmatpush1.msra.mxu0 0.0
    %4443 = vmatprep.subr.mxu0 0.0
    %4444 = vmatpush1.msra.mxu0 0.0
    %4445 = vmatprep.subr.mxu0 0.0
    %4446 = vmatpush1.msra.mxu0 0.0
    %4447 = vmatprep.subr.mxu0 0.0
    %4448 = vmatpush1.msra.mxu0 0.0
    %4449 = vmatprep.subr.mxu0 0.0
    %4450 = vmatpush1.msra.mxu0 0.0
    %4451 = vmatprep.subr.mxu0 0.0
    %4452 = vmatpush1.msra.mxu0 0.0
    %4453 = vmatprep.subr.mxu0 0.0
    %4454 = vmatpush1.msra.mxu0 0.0
    %4455 = vmatprep.subr.mxu0 0.0
    %4456 = vmatpush1.msra.mxu0 0.0
    %4457 = vmatprep.subr.mxu0 0.0
    %4458 = vmatpush1.msra.mxu0 0.0
    %4459 = vmatprep.subr.mxu0 0.0
    %4460 = vmatpush1.msra.mxu0 0.0
    %4461 = vmatprep.subr.mxu0 0.0
    %4462 = vmatpush1.msra.mxu0 0.0
    %4463 = vmatprep.subr.mxu0 0.0
    %4464 = vmatpush1.msra.mxu0 0.0
    %4465 = vmatprep.subr.mxu0 0.0
    %4466 = vmatpush1.msra.mxu0 0.0
    %4467 = vmatprep.subr.mxu0 0.0
    %4468 = vmatpush1.msra.mxu0 0.0
    %4469 = vmatprep.subr.mxu0 0.0
    %4470 = vmatpush1.msra.mxu0 0.0
    %4471 = vmatprep.subr.mxu0 0.0
    %4472 = vmatpush1.msra.mxu0 0.0
    %4473 = vmatprep.subr.mxu0 0.0
    %4474 = vmatpush1.msra.mxu0 0.0
    %4475 = vmatprep.subr.mxu0 0.0
    %4476 = vmatpush1.msra.mxu0 0.0
    %4477 = vmatprep.subr.mxu0 0.0
    %4478 = vmatpush1.msra.mxu0 0.0
    %4479 = vmatprep.subr.mxu0 0.0
    %4480 = vmatpush1.msra.mxu0 0.0
    %4481 = vmatprep.subr.mxu0 0.0
    %4482 = vmatpush1.msra.mxu0 0.0
    %4483 = vmatprep.subr.mxu0 0.0
    %4484 = vmatpush1.msra.mxu0 0.0
    %4485 = vmatprep.mubr.f32.mxu0 0.0
    %v4486 = vand.u32 %v4403, 4294901760
    %v4487 = vsub.f32 %v4403, %v4486
    %v4488 = vand.u32 %v4487, 4294901760
    %v4489 = vsub.f32 %v4487, %v4488
    %v4490 = vand.u32 %v4489, 4294901760
    %4491 = vmatmul.mubr.f32.gmra.mrb[0].mxu0 %v4490
    %v4492 = vpop.f32.mrb[0].mxu0
    %v4493 = vadd.f32 0.0, %v4492
    %v4494 = vpop.f32.mrb[0].mxu0
    %v4495 = vadd.f32 0.0, %v4494
    %4496 = vdwg.mxu0
    %v4497 = vand.u32 %v4386, 4294901760
    %v4498 = vsub.f32 %v4386, %v4497
    %v4499 = vand.u32 %v4498, 4294901760
    %v4500 = vsub.f32 %v4498, %v4499
    %v4501 = vand.u32 %v4500, 4294901760
    %4502 = vmatprep.subr.mxu0 %v4501
    %v4503 = vand.u32 %v4385, 4294901760
    %v4504 = vsub.f32 %v4385, %v4503
    %v4505 = vand.u32 %v4504, 4294901760
    %v4506 = vsub.f32 %v4504, %v4505
    %v4507 = vand.u32 %v4506, 4294901760
    %4508 = vmatpush1.msra.mxu0 %v4507
    %v4509 = vand.u32 %v4388, 4294901760
    %v4510 = vsub.f32 %v4388, %v4509
    %v4511 = vand.u32 %v4510, 4294901760
    %v4512 = vsub.f32 %v4510, %v4511
    %v4513 = vand.u32 %v4512, 4294901760
    %4514 = vmatprep.subr.mxu0 %v4513
    %v4515 = vand.u32 %v4387, 4294901760
    %v4516 = vsub.f32 %v4387, %v4515
    %v4517 = vand.u32 %v4516, 4294901760
    %v4518 = vsub.f32 %v4516, %v4517
    %v4519 = vand.u32 %v4518, 4294901760
    %4520 = vmatpush1.msra.mxu0 %v4519
    %v4521 = vand.u32 %v4390, 4294901760
    %v4522 = vsub.f32 %v4390, %v4521
    %v4523 = vand.u32 %v4522, 4294901760
    %v4524 = vsub.f32 %v4522, %v4523
    %v4525 = vand.u32 %v4524, 4294901760
    %4526 = vmatprep.subr.mxu0 %v4525
    %v4527 = vand.u32 %v4389, 4294901760
    %v4528 = vsub.f32 %v4389, %v4527
    %v4529 = vand.u32 %v4528, 4294901760
    %v4530 = vsub.f32 %v4528, %v4529
    %v4531 = vand.u32 %v4530, 4294901760
    %4532 = vmatpush1.msra.mxu0 %v4531
    %v4533 = vand.u32 %v4392, 4294901760
    %v4534 = vsub.f32 %v4392, %v4533
    %v4535 = vand.u32 %v4534, 4294901760
    %v4536 = vsub.f32 %v4534, %v4535
    %v4537 = vand.u32 %v4536, 4294901760
    %4538 = vmatprep.subr.mxu0 %v4537
    %v4539 = vand.u32 %v4391, 4294901760
    %v4540 = vsub.f32 %v4391, %v4539
    %v4541 = vand.u32 %v4540, 4294901760
    %v4542 = vsub.f32 %v4540, %v4541
    %v4543 = vand.u32 %v4542, 4294901760
    %4544 = vmatpush1.msra.mxu0 %v4543
    %v4545 = vand.u32 %v4394, 4294901760
    %v4546 = vsub.f32 %v4394, %v4545
    %v4547 = vand.u32 %v4546, 4294901760
    %v4548 = vsub.f32 %v4546, %v4547
    %v4549 = vand.u32 %v4548, 4294901760
    %4550 = vmatprep.subr.mxu0 %v4549
    %v4551 = vand.u32 %v4393, 4294901760
    %v4552 = vsub.f32 %v4393, %v4551
    %v4553 = vand.u32 %v4552, 4294901760
    %v4554 = vsub.f32 %v4552, %v4553
    %v4555 = vand.u32 %v4554, 4294901760
    %4556 = vmatpush1.msra.mxu0 %v4555
    %v4557 = vand.u32 %v4396, 4294901760
    %v4558 = vsub.f32 %v4396, %v4557
    %v4559 = vand.u32 %v4558, 4294901760
    %v4560 = vsub.f32 %v4558, %v4559
    %v4561 = vand.u32 %v4560, 4294901760
    %4562 = vmatprep.subr.mxu0 %v4561
    %v4563 = vand.u32 %v4395, 4294901760
    %v4564 = vsub.f32 %v4395, %v4563
    %v4565 = vand.u32 %v4564, 4294901760
    %v4566 = vsub.f32 %v4564, %v4565
    %v4567 = vand.u32 %v4566, 4294901760
    %4568 = vmatpush1.msra.mxu0 %v4567
    %v4569 = vand.u32 %v4398, 4294901760
    %v4570 = vsub.f32 %v4398, %v4569
    %v4571 = vand.u32 %v4570, 4294901760
    %v4572 = vsub.f32 %v4570, %v4571
    %v4573 = vand.u32 %v4572, 4294901760
    %4574 = vmatprep.subr.mxu0 %v4573
    %v4575 = vand.u32 %v4397, 4294901760
    %v4576 = vsub.f32 %v4397, %v4575
    %v4577 = vand.u32 %v4576, 4294901760
    %v4578 = vsub.f32 %v4576, %v4577
    %v4579 = vand.u32 %v4578, 4294901760
    %4580 = vmatpush1.msra.mxu0 %v4579
    %v4581 = vand.u32 %v4400, 4294901760
    %v4582 = vsub.f32 %v4400, %v4581
    %v4583 = vand.u32 %v4582, 4294901760
    %v4584 = vsub.f32 %v4582, %v4583
    %v4585 = vand.u32 %v4584, 4294901760
    %4586 = vmatprep.subr.mxu0 %v4585
    %v4587 = vand.u32 %v4399, 4294901760
    %v4588 = vsub.f32 %v4399, %v4587
    %v4589 = vand.u32 %v4588, 4294901760
    %v4590 = vsub.f32 %v4588, %v4589
    %v4591 = vand.u32 %v4590, 4294901760
    %4592 = vmatpush1.msra.mxu0 %v4591
    %4593 = vmatprep.subr.mxu0 0.0
    %4594 = vmatpush1.msra.mxu0 0.0
    %4595 = vmatprep.subr.mxu0 0.0
    %4596 = vmatpush1.msra.mxu0 0.0
    %4597 = vmatprep.subr.mxu0 0.0
    %4598 = vmatpush1.msra.mxu0 0.0
    %4599 = vmatprep.subr.mxu0 0.0
    %4600 = vmatpush1.msra.mxu0 0.0
    %4601 = vmatprep.subr.mxu0 0.0
    %4602 = vmatpush1.msra.mxu0 0.0
    %4603 = vmatprep.subr.mxu0 0.0
    %4604 = vmatpush1.msra.mxu0 0.0
    %4605 = vmatprep.subr.mxu0 0.0
    %4606 = vmatpush1.msra.mxu0 0.0
    %4607 = vmatprep.subr.mxu0 0.0
    %4608 = vmatpush1.msra.mxu0 0.0
    %4609 = vmatprep.subr.mxu0 0.0
    %4610 = vmatpush1.msra.mxu0 0.0
    %4611 = vmatprep.subr.mxu0 0.0
    %4612 = vmatpush1.msra.mxu0 0.0
    %4613 = vmatprep.subr.mxu0 0.0
    %4614 = vmatpush1.msra.mxu0 0.0
    %4615 = vmatprep.subr.mxu0 0.0
    %4616 = vmatpush1.msra.mxu0 0.0
    %4617 = vmatprep.subr.mxu0 0.0
    %4618 = vmatpush1.msra.mxu0 0.0
    %4619 = vmatprep.subr.mxu0 0.0
    %4620 = vmatpush1.msra.mxu0 0.0
    %4621 = vmatprep.subr.mxu0 0.0
    %4622 = vmatpush1.msra.mxu0 0.0
    %4623 = vmatprep.subr.mxu0 0.0
    %4624 = vmatpush1.msra.mxu0 0.0
    %4625 = vmatprep.subr.mxu0 0.0
    %4626 = vmatpush1.msra.mxu0 0.0
    %4627 = vmatprep.subr.mxu0 0.0
    %4628 = vmatpush1.msra.mxu0 0.0
    %4629 = vmatprep.subr.mxu0 0.0
    %4630 = vmatpush1.msra.mxu0 0.0
    %4631 = vmatprep.subr.mxu0 0.0
    %4632 = vmatpush1.msra.mxu0 0.0
    %4633 = vmatprep.subr.mxu0 0.0
    %4634 = vmatpush1.msra.mxu0 0.0
    %4635 = vmatprep.subr.mxu0 0.0
    %4636 = vmatpush1.msra.mxu0 0.0
    %4637 = vmatprep.subr.mxu0 0.0
    %4638 = vmatpush1.msra.mxu0 0.0
    %4639 = vmatprep.subr.mxu0 0.0
    %4640 = vmatpush1.msra.mxu0 0.0
    %4641 = vmatprep.mubr.f32.mxu0 0.0
    %v4642 = vand.u32 %v4403, 4294901760
    %4643 = vmatmul.mubr.f32.gmra.mrb[0].mxu0 %v4642
    %v4644 = vpop.f32.mrb[0].mxu0
    %v4645 = vadd.f32 %v4493, %v4644
    %v4646 = vpop.f32.mrb[0].mxu0
    %v4647 = vadd.f32 %v4495, %v4646
    %4648 = vdwg.mxu0
    %v4649 = vand.u32 %v4386, 4294901760
    %v4650 = vsub.f32 %v4386, %v4649
    %4651 = vmatprep.subr.mxu0 %v4650
    %v4652 = vand.u32 %v4385, 4294901760
    %v4653 = vsub.f32 %v4385, %v4652
    %4654 = vmatpush1.msra.mxu0 %v4653
    %v4655 = vand.u32 %v4388, 4294901760
    %v4656 = vsub.f32 %v4388, %v4655
    %4657 = vmatprep.subr.mxu0 %v4656
    %v4658 = vand.u32 %v4387, 4294901760
    %v4659 = vsub.f32 %v4387, %v4658
    %4660 = vmatpush1.msra.mxu0 %v4659
    %v4661 = vand.u32 %v4390, 4294901760
    %v4662 = vsub.f32 %v4390, %v4661
    %4663 = vmatprep.subr.mxu0 %v4662
    %v4664 = vand.u32 %v4389, 4294901760
    %v4665 = vsub.f32 %v4389, %v4664
    %4666 = vmatpush1.msra.mxu0 %v4665
    %v4667 = vand.u32 %v4392, 4294901760
    %v4668 = vsub.f32 %v4392, %v4667
    %4669 = vmatprep.subr.mxu0 %v4668
    %v4670 = vand.u32 %v4391, 4294901760
    %v4671 = vsub.f32 %v4391, %v4670
    %4672 = vmatpush1.msra.mxu0 %v4671
    %v4673 = vand.u32 %v4394, 4294901760
    %v4674 = vsub.f32 %v4394, %v4673
    %4675 = vmatprep.subr.mxu0 %v4674
    %v4676 = vand.u32 %v4393, 4294901760
    %v4677 = vsub.f32 %v4393, %v4676
    %4678 = vmatpush1.msra.mxu0 %v4677
    %v4679 = vand.u32 %v4396, 4294901760
    %v4680 = vsub.f32 %v4396, %v4679
    %4681 = vmatprep.subr.mxu0 %v4680
    %v4682 = vand.u32 %v4395, 4294901760
    %v4683 = vsub.f32 %v4395, %v4682
    %4684 = vmatpush1.msra.mxu0 %v4683
    %v4685 = vand.u32 %v4398, 4294901760
    %v4686 = vsub.f32 %v4398, %v4685
    %4687 = vmatprep.subr.mxu0 %v4686
    %v4688 = vand.u32 %v4397, 4294901760
    %v4689 = vsub.f32 %v4397, %v4688
    %4690 = vmatpush1.msra.mxu0 %v4689
    %v4691 = vand.u32 %v4400, 4294901760
    %v4692 = vsub.f32 %v4400, %v4691
    %4693 = vmatprep.subr.mxu0 %v4692
    %v4694 = vand.u32 %v4399, 4294901760
    %v4695 = vsub.f32 %v4399, %v4694
    %4696 = vmatpush1.msra.mxu0 %v4695
    %4697 = vmatprep.subr.mxu0 0.0
    %4698 = vmatpush1.msra.mxu0 0.0
    %4699 = vmatprep.subr.mxu0 0.0
    %4700 = vmatpush1.msra.mxu0 0.0
    %4701 = vmatprep.subr.mxu0 0.0
    %4702 = vmatpush1.msra.mxu0 0.0
    %4703 = vmatprep.subr.mxu0 0.0
    %4704 = vmatpush1.msra.mxu0 0.0
    %4705 = vmatprep.subr.mxu0 0.0
    %4706 = vmatpush1.msra.mxu0 0.0
    %4707 = vmatprep.subr.mxu0 0.0
    %4708 = vmatpush1.msra.mxu0 0.0
    %4709 = vmatprep.subr.mxu0 0.0
    %4710 = vmatpush1.msra.mxu0 0.0
    %4711 = vmatprep.subr.mxu0 0.0
    %4712 = vmatpush1.msra.mxu0 0.0
    %4713 = vmatprep.subr.mxu0 0.0
    %4714 = vmatpush1.msra.mxu0 0.0
    %4715 = vmatprep.subr.mxu0 0.0
    %4716 = vmatpush1.msra.mxu0 0.0
    %4717 = vmatprep.subr.mxu0 0.0
    %4718 = vmatpush1.msra.mxu0 0.0
    %4719 = vmatprep.subr.mxu0 0.0
    %4720 = vmatpush1.msra.mxu0 0.0
    %4721 = vmatprep.subr.mxu0 0.0
    %4722 = vmatpush1.msra.mxu0 0.0
    %4723 = vmatprep.subr.mxu0 0.0
    %4724 = vmatpush1.msra.mxu0 0.0
    %4725 = vmatprep.subr.mxu0 0.0
    %4726 = vmatpush1.msra.mxu0 0.0
    %4727 = vmatprep.subr.mxu0 0.0
    %4728 = vmatpush1.msra.mxu0 0.0
    %4729 = vmatprep.subr.mxu0 0.0
    %4730 = vmatpush1.msra.mxu0 0.0
    %4731 = vmatprep.subr.mxu0 0.0
    %4732 = vmatpush1.msra.mxu0 0.0
    %4733 = vmatprep.subr.mxu0 0.0
    %4734 = vmatpush1.msra.mxu0 0.0
    %4735 = vmatprep.subr.mxu0 0.0
    %4736 = vmatpush1.msra.mxu0 0.0
    %4737 = vmatprep.subr.mxu0 0.0
    %4738 = vmatpush1.msra.mxu0 0.0
    %4739 = vmatprep.subr.mxu0 0.0
    %4740 = vmatpush1.msra.mxu0 0.0
    %4741 = vmatprep.subr.mxu0 0.0
    %4742 = vmatpush1.msra.mxu0 0.0
    %4743 = vmatprep.subr.mxu0 0.0
    %4744 = vmatpush1.msra.mxu0 0.0
    %4745 = vmatprep.mubr.f32.mxu0 0.0
    %v4746 = vand.u32 %v4403, 4294901760
    %v4747 = vsub.f32 %v4403, %v4746
    %4748 = vmatmul.mubr.f32.gmra.mrb[0].mxu0 %v4747
    %v4749 = vpop.f32.mrb[0].mxu0
    %v4750 = vadd.f32 %v4645, %v4749
    %v4751 = vpop.f32.mrb[0].mxu0
    %v4752 = vadd.f32 %v4647, %v4751
    %4753 = vdwg.mxu0
    %v4754 = vand.u32 %v4386, 4294901760
    %4755 = vmatprep.subr.mxu0 %v4754
    %v4756 = vand.u32 %v4385, 4294901760
    %4757 = vmatpush1.msra.mxu0 %v4756
    %v4758 = vand.u32 %v4388, 4294901760
    %4759 = vmatprep.subr.mxu0 %v4758
    %v4760 = vand.u32 %v4387, 4294901760
    %4761 = vmatpush1.msra.mxu0 %v4760
    %v4762 = vand.u32 %v4390, 4294901760
    %4763 = vmatprep.subr.mxu0 %v4762
    %v4764 = vand.u32 %v4389, 4294901760
    %4765 = vmatpush1.msra.mxu0 %v4764
    %v4766 = vand.u32 %v4392, 4294901760
    %4767 = vmatprep.subr.mxu0 %v4766
    %v4768 = vand.u32 %v4391, 4294901760
    %4769 = vmatpush1.msra.mxu0 %v4768
    %v4770 = vand.u32 %v4394, 4294901760
    %4771 = vmatprep.subr.mxu0 %v4770
    %v4772 = vand.u32 %v4393, 4294901760
    %4773 = vmatpush1.msra.mxu0 %v4772
    %v4774 = vand.u32 %v4396, 4294901760
    %4775 = vmatprep.subr.mxu0 %v4774
    %v4776 = vand.u32 %v4395, 4294901760
    %4777 = vmatpush1.msra.mxu0 %v4776
    %v4778 = vand.u32 %v4398, 4294901760
    %4779 = vmatprep.subr.mxu0 %v4778
    %v4780 = vand.u32 %v4397, 4294901760
    %4781 = vmatpush1.msra.mxu0 %v4780
    %v4782 = vand.u32 %v4400, 4294901760
    %4783 = vmatprep.subr.mxu0 %v4782
    %v4784 = vand.u32 %v4399, 4294901760
    %4785 = vmatpush1.msra.mxu0 %v4784
    %4786 = vmatprep.subr.mxu0 0.0
    %4787 = vmatpush1.msra.mxu0 0.0
    %4788 = vmatprep.subr.mxu0 0.0
    %4789 = vmatpush1.msra.mxu0 0.0
    %4790 = vmatprep.subr.mxu0 0.0
    %4791 = vmatpush1.msra.mxu0 0.0
    %4792 = vmatprep.subr.mxu0 0.0
    %4793 = vmatpush1.msra.mxu0 0.0
    %4794 = vmatprep.subr.mxu0 0.0
    %4795 = vmatpush1.msra.mxu0 0.0
    %4796 = vmatprep.subr.mxu0 0.0
    %4797 = vmatpush1.msra.mxu0 0.0
    %4798 = vmatprep.subr.mxu0 0.0
    %4799 = vmatpush1.msra.mxu0 0.0
    %4800 = vmatprep.subr.mxu0 0.0
    %4801 = vmatpush1.msra.mxu0 0.0
    %4802 = vmatprep.subr.mxu0 0.0
    %4803 = vmatpush1.msra.mxu0 0.0
    %4804 = vmatprep.subr.mxu0 0.0
    %4805 = vmatpush1.msra.mxu0 0.0
    %4806 = vmatprep.subr.mxu0 0.0
    %4807 = vmatpush1.msra.mxu0 0.0
    %4808 = vmatprep.subr.mxu0 0.0
    %4809 = vmatpush1.msra.mxu0 0.0
    %4810 = vmatprep.subr.mxu0 0.0
    %4811 = vmatpush1.msra.mxu0 0.0
    %4812 = vmatprep.subr.mxu0 0.0
    %4813 = vmatpush1.msra.mxu0 0.0
    %4814 = vmatprep.subr.mxu0 0.0
    %4815 = vmatpush1.msra.mxu0 0.0
    %4816 = vmatprep.subr.mxu0 0.0
    %4817 = vmatpush1.msra.mxu0 0.0
    %4818 = vmatprep.subr.mxu0 0.0
    %4819 = vmatpush1.msra.mxu0 0.0
    %4820 = vmatprep.subr.mxu0 0.0
    %4821 = vmatpush1.msra.mxu0 0.0
    %4822 = vmatprep.subr.mxu0 0.0
    %4823 = vmatpush1.msra.mxu0 0.0
    %4824 = vmatprep.subr.mxu0 0.0
    %4825 = vmatpush1.msra.mxu0 0.0
    %4826 = vmatprep.subr.mxu0 0.0
    %4827 = vmatpush1.msra.mxu0 0.0
    %4828 = vmatprep.subr.mxu0 0.0
    %4829 = vmatpush1.msra.mxu0 0.0
    %4830 = vmatprep.subr.mxu0 0.0
    %4831 = vmatpush1.msra.mxu0 0.0
    %4832 = vmatprep.subr.mxu0 0.0
    %4833 = vmatpush1.msra.mxu0 0.0
    %4834 = vmatprep.mubr.f32.mxu0 0.0
    %v4835 = vand.u32 %v4403, 4294901760
    %v4836 = vsub.f32 %v4403, %v4835
    %v4837 = vand.u32 %v4836, 4294901760
    %4838 = vmatmul.mubr.f32.gmra.mrb[0].mxu0 %v4837
    %v4839 = vpop.f32.mrb[0].mxu0
    %v4840 = vadd.f32 %v4750, %v4839
    %v4841 = vpop.f32.mrb[0].mxu0
    %v4842 = vadd.f32 %v4752, %v4841
    %4843 = vdwg.mxu0
    %v4844 = vand.u32 %v4386, 4294901760
    %v4845 = vsub.f32 %v4386, %v4844
    %v4846 = vand.u32 %v4845, 4294901760
    %4847 = vmatprep.subr.mxu0 %v4846
    %v4848 = vand.u32 %v4385, 4294901760
    %v4849 = vsub.f32 %v4385, %v4848
    %v4850 = vand.u32 %v4849, 4294901760
    %4851 = vmatpush1.msra.mxu0 %v4850
    %v4852 = vand.u32 %v4388, 4294901760
    %v4853 = vsub.f32 %v4388, %v4852
    %v4854 = vand.u32 %v4853, 4294901760
    %4855 = vmatprep.subr.mxu0 %v4854
    %v4856 = vand.u32 %v4387, 4294901760
    %v4857 = vsub.f32 %v4387, %v4856
    %v4858 = vand.u32 %v4857, 4294901760
    %4859 = vmatpush1.msra.mxu0 %v4858
    %v4860 = vand.u32 %v4390, 4294901760
    %v4861 = vsub.f32 %v4390, %v4860
    %v4862 = vand.u32 %v4861, 4294901760
    %4863 = vmatprep.subr.mxu0 %v4862
    %v4864 = vand.u32 %v4389, 4294901760
    %v4865 = vsub.f32 %v4389, %v4864
    %v4866 = vand.u32 %v4865, 4294901760
    %4867 = vmatpush1.msra.mxu0 %v4866
    %v4868 = vand.u32 %v4392, 4294901760
    %v4869 = vsub.f32 %v4392, %v4868
    %v4870 = vand.u32 %v4869, 4294901760
    %4871 = vmatprep.subr.mxu0 %v4870
    %v4872 = vand.u32 %v4391, 4294901760
    %v4873 = vsub.f32 %v4391, %v4872
    %v4874 = vand.u32 %v4873, 4294901760
    %4875 = vmatpush1.msra.mxu0 %v4874
    %v4876 = vand.u32 %v4394, 4294901760
    %v4877 = vsub.f32 %v4394, %v4876
    %v4878 = vand.u32 %v4877, 4294901760
    %4879 = vmatprep.subr.mxu0 %v4878
    %v4880 = vand.u32 %v4393, 4294901760
    %v4881 = vsub.f32 %v4393, %v4880
    %v4882 = vand.u32 %v4881, 4294901760
    %4883 = vmatpush1.msra.mxu0 %v4882
    %v4884 = vand.u32 %v4396, 4294901760
    %v4885 = vsub.f32 %v4396, %v4884
    %v4886 = vand.u32 %v4885, 4294901760
    %4887 = vmatprep.subr.mxu0 %v4886
    %v4888 = vand.u32 %v4395, 4294901760
    %v4889 = vsub.f32 %v4395, %v4888
    %v4890 = vand.u32 %v4889, 4294901760
    %4891 = vmatpush1.msra.mxu0 %v4890
    %v4892 = vand.u32 %v4398, 4294901760
    %v4893 = vsub.f32 %v4398, %v4892
    %v4894 = vand.u32 %v4893, 4294901760
    %4895 = vmatprep.subr.mxu0 %v4894
    %v4896 = vand.u32 %v4397, 4294901760
    %v4897 = vsub.f32 %v4397, %v4896
    %v4898 = vand.u32 %v4897, 4294901760
    %4899 = vmatpush1.msra.mxu0 %v4898
    %v4900 = vand.u32 %v4400, 4294901760
    %v4901 = vsub.f32 %v4400, %v4900
    %v4902 = vand.u32 %v4901, 4294901760
    %4903 = vmatprep.subr.mxu0 %v4902
    %v4904 = vand.u32 %v4399, 4294901760
    %v4905 = vsub.f32 %v4399, %v4904
    %v4906 = vand.u32 %v4905, 4294901760
    %4907 = vmatpush1.msra.mxu0 %v4906
    %4908 = vmatprep.subr.mxu0 0.0
    %4909 = vmatpush1.msra.mxu0 0.0
    %4910 = vmatprep.subr.mxu0 0.0
    %4911 = vmatpush1.msra.mxu0 0.0
    %4912 = vmatprep.subr.mxu0 0.0
    %4913 = vmatpush1.msra.mxu0 0.0
    %4914 = vmatprep.subr.mxu0 0.0
    %4915 = vmatpush1.msra.mxu0 0.0
    %4916 = vmatprep.subr.mxu0 0.0
    %4917 = vmatpush1.msra.mxu0 0.0
    %4918 = vmatprep.subr.mxu0 0.0
    %4919 = vmatpush1.msra.mxu0 0.0
    %4920 = vmatprep.subr.mxu0 0.0
    %4921 = vmatpush1.msra.mxu0 0.0
    %4922 = vmatprep.subr.mxu0 0.0
    %4923 = vmatpush1.msra.mxu0 0.0
    %4924 = vmatprep.subr.mxu0 0.0
    %4925 = vmatpush1.msra.mxu0 0.0
    %4926 = vmatprep.subr.mxu0 0.0
    %4927 = vmatpush1.msra.mxu0 0.0
    %4928 = vmatprep.subr.mxu0 0.0
    %4929 = vmatpush1.msra.mxu0 0.0
    %4930 = vmatprep.subr.mxu0 0.0
    %4931 = vmatpush1.msra.mxu0 0.0
    %4932 = vmatprep.subr.mxu0 0.0
    %4933 = vmatpush1.msra.mxu0 0.0
    %4934 = vmatprep.subr.mxu0 0.0
    %4935 = vmatpush1.msra.mxu0 0.0
    %4936 = vmatprep.subr.mxu0 0.0
    %4937 = vmatpush1.msra.mxu0 0.0
    %4938 = vmatprep.subr.mxu0 0.0
    %4939 = vmatpush1.msra.mxu0 0.0
    %4940 = vmatprep.subr.mxu0 0.0
    %4941 = vmatpush1.msra.mxu0 0.0
    %4942 = vmatprep.subr.mxu0 0.0
    %4943 = vmatpush1.msra.mxu0 0.0
    %4944 = vmatprep.subr.mxu0 0.0
    %4945 = vmatpush1.msra.mxu0 0.0
    %4946 = vmatprep.subr.mxu0 0.0
    %4947 = vmatpush1.msra.mxu0 0.0
    %4948 = vmatprep.subr.mxu0 0.0
    %4949 = vmatpush1.msra.mxu0 0.0
    %4950 = vmatprep.subr.mxu0 0.0
    %4951 = vmatpush1.msra.mxu0 0.0
    %4952 = vmatprep.subr.mxu0 0.0
    %4953 = vmatpush1.msra.mxu0 0.0
    %4954 = vmatprep.subr.mxu0 0.0
    %4955 = vmatpush1.msra.mxu0 0.0
    %4956 = vmatprep.mubr.f32.mxu0 0.0
    %v4957 = vand.u32 %v4403, 4294901760
    %4958 = vmatmul.mubr.f32.gmra.mrb[0].mxu0 %v4957
    %v4959 = vpop.f32.mrb[0].mxu0
    %v4960 = vadd.f32 %v4840, %v4959
    %v4961 = vpop.f32.mrb[0].mxu0
    %v4962 = vadd.f32 %v4842, %v4961
    %4963 = vdwg.mxu0
    %v4964 = vand.u32 %v4386, 4294901760
    %4965 = vmatprep.subr.mxu0 %v4964
    %v4966 = vand.u32 %v4385, 4294901760
    %4967 = vmatpush1.msra.mxu0 %v4966
    %v4968 = vand.u32 %v4388, 4294901760
    %4969 = vmatprep.subr.mxu0 %v4968
    %v4970 = vand.u32 %v4387, 4294901760
    %4971 = vmatpush1.msra.mxu0 %v4970
    %v4972 = vand.u32 %v4390, 4294901760
    %4973 = vmatprep.subr.mxu0 %v4972
    %v4974 = vand.u32 %v4389, 4294901760
    %4975 = vmatpush1.msra.mxu0 %v4974
    %v4976 = vand.u32 %v4392, 4294901760
    %4977 = vmatprep.subr.mxu0 %v4976
    %v4978 = vand.u32 %v4391, 4294901760
    %4979 = vmatpush1.msra.mxu0 %v4978
    %v4980 = vand.u32 %v4394, 4294901760
    %4981 = vmatprep.subr.mxu0 %v4980
    %v4982 = vand.u32 %v4393, 4294901760
    %4983 = vmatpush1.msra.mxu0 %v4982
    %v4984 = vand.u32 %v4396, 4294901760
    %4985 = vmatprep.subr.mxu0 %v4984
    %v4986 = vand.u32 %v4395, 4294901760
    %4987 = vmatpush1.msra.mxu0 %v4986
    %v4988 = vand.u32 %v4398, 4294901760
    %4989 = vmatprep.subr.mxu0 %v4988
    %v4990 = vand.u32 %v4397, 4294901760
    %4991 = vmatpush1.msra.mxu0 %v4990
    %v4992 = vand.u32 %v4400, 4294901760
    %4993 = vmatprep.subr.mxu0 %v4992
    %v4994 = vand.u32 %v4399, 4294901760
    %4995 = vmatpush1.msra.mxu0 %v4994
    %4996 = vmatprep.subr.mxu0 0.0
    %4997 = vmatpush1.msra.mxu0 0.0
    %4998 = vmatprep.subr.mxu0 0.0
    %4999 = vmatpush1.msra.mxu0 0.0
    %5000 = vmatprep.subr.mxu0 0.0
    %5001 = vmatpush1.msra.mxu0 0.0
    %5002 = vmatprep.subr.mxu0 0.0
    %5003 = vmatpush1.msra.mxu0 0.0
    %5004 = vmatprep.subr.mxu0 0.0
    %5005 = vmatpush1.msra.mxu0 0.0
    %5006 = vmatprep.subr.mxu0 0.0
    %5007 = vmatpush1.msra.mxu0 0.0
    %5008 = vmatprep.subr.mxu0 0.0
    %5009 = vmatpush1.msra.mxu0 0.0
    %5010 = vmatprep.subr.mxu0 0.0
    %5011 = vmatpush1.msra.mxu0 0.0
    %5012 = vmatprep.subr.mxu0 0.0
    %5013 = vmatpush1.msra.mxu0 0.0
    %5014 = vmatprep.subr.mxu0 0.0
    %5015 = vmatpush1.msra.mxu0 0.0
    %5016 = vmatprep.subr.mxu0 0.0
    %5017 = vmatpush1.msra.mxu0 0.0
    %5018 = vmatprep.subr.mxu0 0.0
    %5019 = vmatpush1.msra.mxu0 0.0
    %5020 = vmatprep.subr.mxu0 0.0
    %5021 = vmatpush1.msra.mxu0 0.0
    %5022 = vmatprep.subr.mxu0 0.0
    %5023 = vmatpush1.msra.mxu0 0.0
    %5024 = vmatprep.subr.mxu0 0.0
    %5025 = vmatpush1.msra.mxu0 0.0
    %5026 = vmatprep.subr.mxu0 0.0
    %5027 = vmatpush1.msra.mxu0 0.0
    %5028 = vmatprep.subr.mxu0 0.0
    %5029 = vmatpush1.msra.mxu0 0.0
    %5030 = vmatprep.subr.mxu0 0.0
    %5031 = vmatpush1.msra.mxu0 0.0
    %5032 = vmatprep.subr.mxu0 0.0
    %5033 = vmatpush1.msra.mxu0 0.0
    %5034 = vmatprep.subr.mxu0 0.0
    %5035 = vmatpush1.msra.mxu0 0.0
    %5036 = vmatprep.subr.mxu0 0.0
    %5037 = vmatpush1.msra.mxu0 0.0
    %5038 = vmatprep.subr.mxu0 0.0
    %5039 = vmatpush1.msra.mxu0 0.0
    %5040 = vmatprep.subr.mxu0 0.0
    %5041 = vmatpush1.msra.mxu0 0.0
    %5042 = vmatprep.subr.mxu0 0.0
    %5043 = vmatpush1.msra.mxu0 0.0
    %5044 = vmatprep.mubr.f32.mxu0 0.0
    %v5045 = vand.u32 %v4403, 4294901760
    %5046 = vmatmul.mubr.f32.gmra.mrb[0].mxu0 %v5045
    %v5047 = vpop.f32.mrb[0].mxu0
    %v5048 = vadd.f32 %v4960, %v5047
    %v5049 = vpop.f32.mrb[0].mxu0
    %v5050 = vadd.f32 %v4962, %v5049
    %5051 = vdwg.mxu0
    %v5053 = vrot.slane %v5048, 2
    %v5055 = vadd.f32 %v651, %v5053
    %v5056 = vxor.u32 %v5055, 2147483648
    %v5057 = vmul.f32 %v5056, 1.442695
    %v5058 = vpow.pop %v5057
    %v5059 = vadd.f32 %v5058, 1.0
    %v5060 = vrcp.pop %v5059
    %v5061 = vmul.f32 1.0, %v5060
    %v5062 = vtanh.pop %v5055
    %v5064 = vrot.slane %v3838, 6
    %v5066 = vmul.f32 %v5061, %v5064
    %5068 = vrot.lane.b32.xlu0 %v5062, 64
    %v5069 = vpop.permute.xlu0 %5068
    %v5071 = vmul.f32 %v5061, %v5069
    %5073 = vrot.lane.b32.xlu0 %v5071, 32
    %v5074 = vpop.permute.xlu0 %5073
    %v5076 = vadd.f32 %v5066, %v5074
    %v5077 = vtanh.pop %v5076
    %5079 = vrot.lane.b32.xlu0 %v5077, 64
    %v5080 = vpop.permute.xlu0 %5079
    %v5082 = vmul.f32 %v5061, %v5080
    %v5083 = vld [vmem:[#allocation3 + $0x40] sm:$0xff]
    %v5084 = vld [vmem:[#allocation3 + $0x48] sm:$0xff]
    %v5085 = vld [vmem:[#allocation3 + $0x50] sm:$0xff]
    %v5086 = vld [vmem:[#allocation3 + $0x58] sm:$0xff]
    %v5087 = vld [vmem:[#allocation3 + $0x80] sm:$0x1]
    %v5088 = vlaneseq
    %v5089 = vshrl.u32 %v5088, 7
    %v5090 = vsub.s32 0, %v5089
    %v5091 = vrot.slane %v5087, %v5090
    %v5092 = vadd.f32 %v5050, %v5091
    %v5094 = vrot.slane %v5082, 6
    %5095 = vrot.lane.b32.xlu0 %v5094, 32
    %v5096 = vpop.permute.xlu0 %5095
    %v5097 = vsel %vm671, %v5096, 0
    %5099 = vmatprep.subr.mxu0 0.0
    %v5100 = vand.u32 %v5083, 4294901760
    %5101 = vmatpush1.msra.mxu0 %v5100
    %5102 = vmatprep.subr.mxu0 0.0
    %v5103 = vand.u32 %v5084, 4294901760
    %5104 = vmatpush1.msra.mxu0 %v5103
    %5105 = vmatprep.subr.mxu0 0.0
    %v5106 = vand.u32 %v5085, 4294901760
    %5107 = vmatpush1.msra.mxu0 %v5106
    %5108 = vmatprep.subr.mxu0 0.0
    %v5109 = vand.u32 %v5086, 4294901760
    %5110 = vmatpush1.msra.mxu0 %v5109
    %5111 = vmatprep.subr.mxu0 0.0
    %5112 = vmatpush1.msra.mxu0 0.0
    %5113 = vmatprep.subr.mxu0 0.0
    %5114 = vmatpush1.msra.mxu0 0.0
    %5115 = vmatprep.subr.mxu0 0.0
    %5116 = vmatpush1.msra.mxu0 0.0
    %5117 = vmatprep.subr.mxu0 0.0
    %5118 = vmatpush1.msra.mxu0 0.0
    %5119 = vmatprep.subr.mxu0 0.0
    %5120 = vmatpush1.msra.mxu0 0.0
    %5121 = vmatprep.subr.mxu0 0.0
    %5122 = vmatpush1.msra.mxu0 0.0
    %5123 = vmatprep.subr.mxu0 0.0
    %5124 = vmatpush1.msra.mxu0 0.0
    %5125 = vmatprep.subr.mxu0 0.0
    %5126 = vmatpush1.msra.mxu0 0.0
    %5127 = vmatprep.subr.mxu0 0.0
    %5128 = vmatpush1.msra.mxu0 0.0
    %5129 = vmatprep.subr.mxu0 0.0
    %5130 = vmatpush1.msra.mxu0 0.0
    %5131 = vmatprep.subr.mxu0 0.0
    %5132 = vmatpush1.msra.mxu0 0.0
    %5133 = vmatprep.subr.mxu0 0.0
    %5134 = vmatpush1.msra.mxu0 0.0
    %5135 = vmatprep.subr.mxu0 0.0
    %5136 = vmatpush1.msra.mxu0 0.0
    %5137 = vmatprep.subr.mxu0 0.0
    %5138 = vmatpush1.msra.mxu0 0.0
    %5139 = vmatprep.subr.mxu0 0.0
    %5140 = vmatpush1.msra.mxu0 0.0
    %5141 = vmatprep.subr.mxu0 0.0
    %5142 = vmatpush1.msra.mxu0 0.0
    %5143 = vmatprep.subr.mxu0 0.0
    %5144 = vmatpush1.msra.mxu0 0.0
    %5145 = vmatprep.subr.mxu0 0.0
    %5146 = vmatpush1.msra.mxu0 0.0
    %5147 = vmatprep.subr.mxu0 0.0
    %5148 = vmatpush1.msra.mxu0 0.0
    %5149 = vmatprep.subr.mxu0 0.0
    %5150 = vmatpush1.msra.mxu0 0.0
    %5151 = vmatprep.subr.mxu0 0.0
    %5152 = vmatpush1.msra.mxu0 0.0
    %5153 = vmatprep.subr.mxu0 0.0
    %5154 = vmatpush1.msra.mxu0 0.0
    %5155 = vmatprep.subr.mxu0 0.0
    %5156 = vmatpush1.msra.mxu0 0.0
    %5157 = vmatprep.subr.mxu0 0.0
    %5158 = vmatpush1.msra.mxu0 0.0
    %5159 = vmatprep.subr.mxu0 0.0
    %5160 = vmatpush1.msra.mxu0 0.0
    %5161 = vmatprep.subr.mxu0 0.0
    %5162 = vmatpush1.msra.mxu0 0.0
    %5163 = vmatprep.subr.mxu0 0.0
    %5164 = vmatpush1.msra.mxu0 0.0
    %5165 = vmatprep.subr.mxu0 0.0
    %5166 = vmatpush1.msra.mxu0 0.0
    %5167 = vmatprep.mubr.f32.mxu0 0.0
    %v5168 = vand.u32 %v5097, 4294901760
    %v5169 = vsub.f32 %v5097, %v5168
    %v5170 = vand.u32 %v5169, 4294901760
    %v5171 = vsub.f32 %v5169, %v5170
    %v5172 = vand.u32 %v5171, 4294901760
    %5173 = vmatmul.mubr.f32.gmra.mrb[0].mxu0 %v5172
    %v5174 = vpop.f32.mrb[0].mxu0
    %v5175 = vadd.f32 0.0, %v5174
    %v5176 = vpop.f32.mrb[0].mxu0
    %5177 = vdwg.mxu0
    %5178 = vmatprep.subr.mxu0 0.0
    %v5179 = vand.u32 %v5083, 4294901760
    %v5180 = vsub.f32 %v5083, %v5179
    %v5181 = vand.u32 %v5180, 4294901760
    %v5182 = vsub.f32 %v5180, %v5181
    %v5183 = vand.u32 %v5182, 4294901760
    %5184 = vmatpush1.msra.mxu0 %v5183
    %5185 = vmatprep.subr.mxu0 0.0
    %v5186 = vand.u32 %v5084, 4294901760
    %v5187 = vsub.f32 %v5084, %v5186
    %v5188 = vand.u32 %v5187, 4294901760
    %v5189 = vsub.f32 %v5187, %v5188
    %v5190 = vand.u32 %v5189, 4294901760
    %5191 = vmatpush1.msra.mxu0 %v5190
    %5192 = vmatprep.subr.mxu0 0.0
    %v5193 = vand.u32 %v5085, 4294901760
    %v5194 = vsub.f32 %v5085, %v5193
    %v5195 = vand.u32 %v5194, 4294901760
    %v5196 = vsub.f32 %v5194, %v5195
    %v5197 = vand.u32 %v5196, 4294901760
    %5198 = vmatpush1.msra.mxu0 %v5197
    %5199 = vmatprep.subr.mxu0 0.0
    %v5200 = vand.u32 %v5086, 4294901760
    %v5201 = vsub.f32 %v5086, %v5200
    %v5202 = vand.u32 %v5201, 4294901760
    %v5203 = vsub.f32 %v5201, %v5202
    %v5204 = vand.u32 %v5203, 4294901760
    %5205 = vmatpush1.msra.mxu0 %v5204
    %5206 = vmatprep.subr.mxu0 0.0
    %5207 = vmatpush1.msra.mxu0 0.0
    %5208 = vmatprep.subr.mxu0 0.0
    %5209 = vmatpush1.msra.mxu0 0.0
    %5210 = vmatprep.subr.mxu0 0.0
    %5211 = vmatpush1.msra.mxu0 0.0
    %5212 = vmatprep.subr.mxu0 0.0
    %5213 = vmatpush1.msra.mxu0 0.0
    %5214 = vmatprep.subr.mxu0 0.0
    %5215 = vmatpush1.msra.mxu0 0.0
    %5216 = vmatprep.subr.mxu0 0.0
    %5217 = vmatpush1.msra.mxu0 0.0
    %5218 = vmatprep.subr.mxu0 0.0
    %5219 = vmatpush1.msra.mxu0 0.0
    %5220 = vmatprep.subr.mxu0 0.0
    %5221 = vmatpush1.msra.mxu0 0.0
    %5222 = vmatprep.subr.mxu0 0.0
    %5223 = vmatpush1.msra.mxu0 0.0
    %5224 = vmatprep.subr.mxu0 0.0
    %5225 = vmatpush1.msra.mxu0 0.0
    %5226 = vmatprep.subr.mxu0 0.0
    %5227 = vmatpush1.msra.mxu0 0.0
    %5228 = vmatprep.subr.mxu0 0.0
    %5229 = vmatpush1.msra.mxu0 0.0
    %5230 = vmatprep.subr.mxu0 0.0
    %5231 = vmatpush1.msra.mxu0 0.0
    %5232 = vmatprep.subr.mxu0 0.0
    %5233 = vmatpush1.msra.mxu0 0.0
    %5234 = vmatprep.subr.mxu0 0.0
    %5235 = vmatpush1.msra.mxu0 0.0
    %5236 = vmatprep.subr.mxu0 0.0
    %5237 = vmatpush1.msra.mxu0 0.0
    %5238 = vmatprep.subr.mxu0 0.0
    %5239 = vmatpush1.msra.mxu0 0.0
    %5240 = vmatprep.subr.mxu0 0.0
    %5241 = vmatpush1.msra.mxu0 0.0
    %5242 = vmatprep.subr.mxu0 0.0
    %5243 = vmatpush1.msra.mxu0 0.0
    %5244 = vmatprep.subr.mxu0 0.0
    %5245 = vmatpush1.msra.mxu0 0.0
    %5246 = vmatprep.subr.mxu0 0.0
    %5247 = vmatpush1.msra.mxu0 0.0
    %5248 = vmatprep.subr.mxu0 0.0
    %5249 = vmatpush1.msra.mxu0 0.0
    %5250 = vmatprep.subr.mxu0 0.0
    %5251 = vmatpush1.msra.mxu0 0.0
    %5252 = vmatprep.subr.mxu0 0.0
    %5253 = vmatpush1.msra.mxu0 0.0
    %5254 = vmatprep.subr.mxu0 0.0
    %5255 = vmatpush1.msra.mxu0 0.0
    %5256 = vmatprep.subr.mxu0 0.0
    %5257 = vmatpush1.msra.mxu0 0.0
    %5258 = vmatprep.subr.mxu0 0.0
    %5259 = vmatpush1.msra.mxu0 0.0
    %5260 = vmatprep.subr.mxu0 0.0
    %5261 = vmatpush1.msra.mxu0 0.0
    %5262 = vmatprep.mubr.f32.mxu0 0.0
    %v5263 = vand.u32 %v5097, 4294901760
    %5264 = vmatmul.mubr.f32.gmra.mrb[0].mxu0 %v5263
    %v5265 = vpop.f32.mrb[0].mxu0
    %v5266 = vadd.f32 %v5175, %v5265
    %v5267 = vpop.f32.mrb[0].mxu0
    %5268 = vdwg.mxu0
    %5269 = vmatprep.subr.mxu0 0.0
    %v5270 = vand.u32 %v5083, 4294901760
    %v5271 = vsub.f32 %v5083, %v5270
    %5272 = vmatpush1.msra.mxu0 %v5271
    %5273 = vmatprep.subr.mxu0 0.0
    %v5274 = vand.u32 %v5084, 4294901760
    %v5275 = vsub.f32 %v5084, %v5274
    %5276 = vmatpush1.msra.mxu0 %v5275
    %5277 = vmatprep.subr.mxu0 0.0
    %v5278 = vand.u32 %v5085, 4294901760
    %v5279 = vsub.f32 %v5085, %v5278
    %5280 = vmatpush1.msra.mxu0 %v5279
    %5281 = vmatprep.subr.mxu0 0.0
    %v5282 = vand.u32 %v5086, 4294901760
    %v5283 = vsub.f32 %v5086, %v5282
    %5284 = vmatpush1.msra.mxu0 %v5283
    %5285 = vmatprep.subr.mxu0 0.0
    %5286 = vmatpush1.msra.mxu0 0.0
    %5287 = vmatprep.subr.mxu0 0.0
    %5288 = vmatpush1.msra.mxu0 0.0
    %5289 = vmatprep.subr.mxu0 0.0
    %5290 = vmatpush1.msra.mxu0 0.0
    %5291 = vmatprep.subr.mxu0 0.0
    %5292 = vmatpush1.msra.mxu0 0.0
    %5293 = vmatprep.subr.mxu0 0.0
    %5294 = vmatpush1.msra.mxu0 0.0
    %5295 = vmatprep.subr.mxu0 0.0
    %5296 = vmatpush1.msra.mxu0 0.0
    %5297 = vmatprep.subr.mxu0 0.0
    %5298 = vmatpush1.msra.mxu0 0.0
    %5299 = vmatprep.subr.mxu0 0.0
    %5300 = vmatpush1.msra.mxu0 0.0
    %5301 = vmatprep.subr.mxu0 0.0
    %5302 = vmatpush1.msra.mxu0 0.0
    %5303 = vmatprep.subr.mxu0 0.0
    %5304 = vmatpush1.msra.mxu0 0.0
    %5305 = vmatprep.subr.mxu0 0.0
    %5306 = vmatpush1.msra.mxu0 0.0
    %5307 = vmatprep.subr.mxu0 0.0
    %5308 = vmatpush1.msra.mxu0 0.0
    %5309 = vmatprep.subr.mxu0 0.0
    %5310 = vmatpush1.msra.mxu0 0.0
    %5311 = vmatprep.subr.mxu0 0.0
    %5312 = vmatpush1.msra.mxu0 0.0
    %5313 = vmatprep.subr.mxu0 0.0
    %5314 = vmatpush1.msra.mxu0 0.0
    %5315 = vmatprep.subr.mxu0 0.0
    %5316 = vmatpush1.msra.mxu0 0.0
    %5317 = vmatprep.subr.mxu0 0.0
    %5318 = vmatpush1.msra.mxu0 0.0
    %5319 = vmatprep.subr.mxu0 0.0
    %5320 = vmatpush1.msra.mxu0 0.0
    %5321 = vmatprep.subr.mxu0 0.0
    %5322 = vmatpush1.msra.mxu0 0.0
    %5323 = vmatprep.subr.mxu0 0.0
    %5324 = vmatpush1.msra.mxu0 0.0
    %5325 = vmatprep.subr.mxu0 0.0
    %5326 = vmatpush1.msra.mxu0 0.0
    %5327 = vmatprep.subr.mxu0 0.0
    %5328 = vmatpush1.msra.mxu0 0.0
    %5329 = vmatprep.subr.mxu0 0.0
    %5330 = vmatpush1.msra.mxu0 0.0
    %5331 = vmatprep.subr.mxu0 0.0
    %5332 = vmatpush1.msra.mxu0 0.0
    %5333 = vmatprep.subr.mxu0 0.0
    %5334 = vmatpush1.msra.mxu0 0.0
    %5335 = vmatprep.subr.mxu0 0.0
    %5336 = vmatpush1.msra.mxu0 0.0
    %5337 = vmatprep.subr.mxu0 0.0
    %5338 = vmatpush1.msra.mxu0 0.0
    %5339 = vmatprep.subr.mxu0 0.0
    %5340 = vmatpush1.msra.mxu0 0.0
    %5341 = vmatprep.mubr.f32.mxu0 0.0
    %v5342 = vand.u32 %v5097, 4294901760
    %v5343 = vsub.f32 %v5097, %v5342
    %5344 = vmatmul.mubr.f32.gmra.mrb[0].mxu0 %v5343
    %v5345 = vpop.f32.mrb[0].mxu0
    %v5346 = vadd.f32 %v5266, %v5345
    %v5347 = vpop.f32.mrb[0].mxu0
    %5348 = vdwg.mxu0
    %5349 = vmatprep.subr.mxu0 0.0
    %v5350 = vand.u32 %v5083, 4294901760
    %5351 = vmatpush1.msra.mxu0 %v5350
    %5352 = vmatprep.subr.mxu0 0.0
    %v5353 = vand.u32 %v5084, 4294901760
    %5354 = vmatpush1.msra.mxu0 %v5353
    %5355 = vmatprep.subr.mxu0 0.0
    %v5356 = vand.u32 %v5085, 4294901760
    %5357 = vmatpush1.msra.mxu0 %v5356
    %5358 = vmatprep.subr.mxu0 0.0
    %v5359 = vand.u32 %v5086, 4294901760
    %5360 = vmatpush1.msra.mxu0 %v5359
    %5361 = vmatprep.subr.mxu0 0.0
    %5362 = vmatpush1.msra.mxu0 0.0
    %5363 = vmatprep.subr.mxu0 0.0
    %5364 = vmatpush1.msra.mxu0 0.0
    %5365 = vmatprep.subr.mxu0 0.0
    %5366 = vmatpush1.msra.mxu0 0.0
    %5367 = vmatprep.subr.mxu0 0.0
    %5368 = vmatpush1.msra.mxu0 0.0
    %5369 = vmatprep.subr.mxu0 0.0
    %5370 = vmatpush1.msra.mxu0 0.0
    %5371 = vmatprep.subr.mxu0 0.0
    %5372 = vmatpush1.msra.mxu0 0.0
    %5373 = vmatprep.subr.mxu0 0.0
    %5374 = vmatpush1.msra.mxu0 0.0
    %5375 = vmatprep.subr.mxu0 0.0
    %5376 = vmatpush1.msra.mxu0 0.0
    %5377 = vmatprep.subr.mxu0 0.0
    %5378 = vmatpush1.msra.mxu0 0.0
    %5379 = vmatprep.subr.mxu0 0.0
    %5380 = vmatpush1.msra.mxu0 0.0
    %5381 = vmatprep.subr.mxu0 0.0
    %5382 = vmatpush1.msra.mxu0 0.0
    %5383 = vmatprep.subr.mxu0 0.0
    %5384 = vmatpush1.msra.mxu0 0.0
    %5385 = vmatprep.subr.mxu0 0.0
    %5386 = vmatpush1.msra.mxu0 0.0
    %5387 = vmatprep.subr.mxu0 0.0
    %5388 = vmatpush1.msra.mxu0 0.0
    %5389 = vmatprep.subr.mxu0 0.0
    %5390 = vmatpush1.msra.mxu0 0.0
    %5391 = vmatprep.subr.mxu0 0.0
    %5392 = vmatpush1.msra.mxu0 0.0
    %5393 = vmatprep.subr.mxu0 0.0
    %5394 = vmatpush1.msra.mxu0 0.0
    %5395 = vmatprep.subr.mxu0 0.0
    %5396 = vmatpush1.msra.mxu0 0.0
    %5397 = vmatprep.subr.mxu0 0.0
    %5398 = vmatpush1.msra.mxu0 0.0
    %5399 = vmatprep.subr.mxu0 0.0
    %5400 = vmatpush1.msra.mxu0 0.0
    %5401 = vmatprep.subr.mxu0 0.0
    %5402 = vmatpush1.msra.mxu0 0.0
    %5403 = vmatprep.subr.mxu0 0.0
    %5404 = vmatpush1.msra.mxu0 0.0
    %5405 = vmatprep.subr.mxu0 0.0
    %5406 = vmatpush1.msra.mxu0 0.0
    %5407 = vmatprep.subr.mxu0 0.0
    %5408 = vmatpush1.msra.mxu0 0.0
    %5409 = vmatprep.subr.mxu0 0.0
    %5410 = vmatpush1.msra.mxu0 0.0
    %5411 = vmatprep.subr.mxu0 0.0
    %5412 = vmatpush1.msra.mxu0 0.0
    %5413 = vmatprep.subr.mxu0 0.0
    %5414 = vmatpush1.msra.mxu0 0.0
    %5415 = vmatprep.subr.mxu0 0.0
    %5416 = vmatpush1.msra.mxu0 0.0
    %5417 = vmatprep.mubr.f32.mxu0 0.0
    %v5418 = vand.u32 %v5097, 4294901760
    %v5419 = vsub.f32 %v5097, %v5418
    %v5420 = vand.u32 %v5419, 4294901760
    %5421 = vmatmul.mubr.f32.gmra.mrb[0].mxu0 %v5420
    %v5422 = vpop.f32.mrb[0].mxu0
    %v5423 = vadd.f32 %v5346, %v5422
    %v5424 = vpop.f32.mrb[0].mxu0
    %5425 = vdwg.mxu0
    %5426 = vmatprep.subr.mxu0 0.0
    %v5427 = vand.u32 %v5083, 4294901760
    %v5428 = vsub.f32 %v5083, %v5427
    %v5429 = vand.u32 %v5428, 4294901760
    %5430 = vmatpush1.msra.mxu0 %v5429
    %5431 = vmatprep.subr.mxu0 0.0
    %v5432 = vand.u32 %v5084, 4294901760
    %v5433 = vsub.f32 %v5084, %v5432
    %v5434 = vand.u32 %v5433, 4294901760
    %5435 = vmatpush1.msra.mxu0 %v5434
    %5436 = vmatprep.subr.mxu0 0.0
    %v5437 = vand.u32 %v5085, 4294901760
    %v5438 = vsub.f32 %v5085, %v5437
    %v5439 = vand.u32 %v5438, 4294901760
    %5440 = vmatpush1.msra.mxu0 %v5439
    %5441 = vmatprep.subr.mxu0 0.0
    %v5442 = vand.u32 %v5086, 4294901760
    %v5443 = vsub.f32 %v5086, %v5442
    %v5444 = vand.u32 %v5443, 4294901760
    %5445 = vmatpush1.msra.mxu0 %v5444
    %5446 = vmatprep.subr.mxu0 0.0
    %5447 = vmatpush1.msra.mxu0 0.0
    %5448 = vmatprep.subr.mxu0 0.0
    %5449 = vmatpush1.msra.mxu0 0.0
    %5450 = vmatprep.subr.mxu0 0.0
    %5451 = vmatpush1.msra.mxu0 0.0
    %5452 = vmatprep.subr.mxu0 0.0
    %5453 = vmatpush1.msra.mxu0 0.0
    %5454 = vmatprep.subr.mxu0 0.0
    %5455 = vmatpush1.msra.mxu0 0.0
    %5456 = vmatprep.subr.mxu0 0.0
    %5457 = vmatpush1.msra.mxu0 0.0
    %5458 = vmatprep.subr.mxu0 0.0
    %5459 = vmatpush1.msra.mxu0 0.0
    %5460 = vmatprep.subr.mxu0 0.0
    %5461 = vmatpush1.msra.mxu0 0.0
    %5462 = vmatprep.subr.mxu0 0.0
    %5463 = vmatpush1.msra.mxu0 0.0
    %5464 = vmatprep.subr.mxu0 0.0
    %5465 = vmatpush1.msra.mxu0 0.0
    %5466 = vmatprep.subr.mxu0 0.0
    %5467 = vmatpush1.msra.mxu0 0.0
    %5468 = vmatprep.subr.mxu0 0.0
    %5469 = vmatpush1.msra.mxu0 0.0
    %5470 = vmatprep.subr.mxu0 0.0
    %5471 = vmatpush1.msra.mxu0 0.0
    %5472 = vmatprep.subr.mxu0 0.0
    %5473 = vmatpush1.msra.mxu0 0.0
    %5474 = vmatprep.subr.mxu0 0.0
    %5475 = vmatpush1.msra.mxu0 0.0
    %5476 = vmatprep.subr.mxu0 0.0
    %5477 = vmatpush1.msra.mxu0 0.0
    %5478 = vmatprep.subr.mxu0 0.0
    %5479 = vmatpush1.msra.mxu0 0.0
    %5480 = vmatprep.subr.mxu0 0.0
    %5481 = vmatpush1.msra.mxu0 0.0
    %5482 = vmatprep.subr.mxu0 0.0
    %5483 = vmatpush1.msra.mxu0 0.0
    %5484 = vmatprep.subr.mxu0 0.0
    %5485 = vmatpush1.msra.mxu0 0.0
    %5486 = vmatprep.subr.mxu0 0.0
    %5487 = vmatpush1.msra.mxu0 0.0
    %5488 = vmatprep.subr.mxu0 0.0
    %5489 = vmatpush1.msra.mxu0 0.0
    %5490 = vmatprep.subr.mxu0 0.0
    %5491 = vmatpush1.msra.mxu0 0.0
    %5492 = vmatprep.subr.mxu0 0.0
    %5493 = vmatpush1.msra.mxu0 0.0
    %5494 = vmatprep.subr.mxu0 0.0
    %5495 = vmatpush1.msra.mxu0 0.0
    %5496 = vmatprep.subr.mxu0 0.0
    %5497 = vmatpush1.msra.mxu0 0.0
    %5498 = vmatprep.subr.mxu0 0.0
    %5499 = vmatpush1.msra.mxu0 0.0
    %5500 = vmatprep.subr.mxu0 0.0
    %5501 = vmatpush1.msra.mxu0 0.0
    %5502 = vmatprep.mubr.f32.mxu0 0.0
    %v5503 = vand.u32 %v5097, 4294901760
    %5504 = vmatmul.mubr.f32.gmra.mrb[0].mxu0 %v5503
    %v5505 = vpop.f32.mrb[0].mxu0
    %v5506 = vadd.f32 %v5423, %v5505
    %v5507 = vpop.f32.mrb[0].mxu0
    %5508 = vdwg.mxu0
    %5509 = vmatprep.subr.mxu0 0.0
    %v5510 = vand.u32 %v5083, 4294901760
    %5511 = vmatpush1.msra.mxu0 %v5510
    %5512 = vmatprep.subr.mxu0 0.0
    %v5513 = vand.u32 %v5084, 4294901760
    %5514 = vmatpush1.msra.mxu0 %v5513
    %5515 = vmatprep.subr.mxu0 0.0
    %v5516 = vand.u32 %v5085, 4294901760
    %5517 = vmatpush1.msra.mxu0 %v5516
    %5518 = vmatprep.subr.mxu0 0.0
    %v5519 = vand.u32 %v5086, 4294901760
    %5520 = vmatpush1.msra.mxu0 %v5519
    %5521 = vmatprep.subr.mxu0 0.0
    %5522 = vmatpush1.msra.mxu0 0.0
    %5523 = vmatprep.subr.mxu0 0.0
    %5524 = vmatpush1.msra.mxu0 0.0
    %5525 = vmatprep.subr.mxu0 0.0
    %5526 = vmatpush1.msra.mxu0 0.0
    %5527 = vmatprep.subr.mxu0 0.0
    %5528 = vmatpush1.msra.mxu0 0.0
    %5529 = vmatprep.subr.mxu0 0.0
    %5530 = vmatpush1.msra.mxu0 0.0
    %5531 = vmatprep.subr.mxu0 0.0
    %5532 = vmatpush1.msra.mxu0 0.0
    %5533 = vmatprep.subr.mxu0 0.0
    %5534 = vmatpush1.msra.mxu0 0.0
    %5535 = vmatprep.subr.mxu0 0.0
    %5536 = vmatpush1.msra.mxu0 0.0
    %5537 = vmatprep.subr.mxu0 0.0
    %5538 = vmatpush1.msra.mxu0 0.0
    %5539 = vmatprep.subr.mxu0 0.0
    %5540 = vmatpush1.msra.mxu0 0.0
    %5541 = vmatprep.subr.mxu0 0.0
    %5542 = vmatpush1.msra.mxu0 0.0
    %5543 = vmatprep.subr.mxu0 0.0
    %5544 = vmatpush1.msra.mxu0 0.0
    %5545 = vmatprep.subr.mxu0 0.0
    %5546 = vmatpush1.msra.mxu0 0.0
    %5547 = vmatprep.subr.mxu0 0.0
    %5548 = vmatpush1.msra.mxu0 0.0
    %5549 = vmatprep.subr.mxu0 0.0
    %5550 = vmatpush1.msra.mxu0 0.0
    %5551 = vmatprep.subr.mxu0 0.0
    %5552 = vmatpush1.msra.mxu0 0.0
    %5553 = vmatprep.subr.mxu0 0.0
    %5554 = vmatpush1.msra.mxu0 0.0
    %5555 = vmatprep.subr.mxu0 0.0
    %5556 = vmatpush1.msra.mxu0 0.0
    %5557 = vmatprep.subr.mxu0 0.0
    %5558 = vmatpush1.msra.mxu0 0.0
    %5559 = vmatprep.subr.mxu0 0.0
    %5560 = vmatpush1.msra.mxu0 0.0
    %5561 = vmatprep.subr.mxu0 0.0
    %5562 = vmatpush1.msra.mxu0 0.0
    %5563 = vmatprep.subr.mxu0 0.0
    %5564 = vmatpush1.msra.mxu0 0.0
    %5565 = vmatprep.subr.mxu0 0.0
    %5566 = vmatpush1.msra.mxu0 0.0
    %5567 = vmatprep.subr.mxu0 0.0
    %5568 = vmatpush1.msra.mxu0 0.0
    %5569 = vmatprep.subr.mxu0 0.0
    %5570 = vmatpush1.msra.mxu0 0.0
    %5571 = vmatprep.subr.mxu0 0.0
    %5572 = vmatpush1.msra.mxu0 0.0
    %5573 = vmatprep.subr.mxu0 0.0
    %5574 = vmatpush1.msra.mxu0 0.0
    %5575 = vmatprep.subr.mxu0 0.0
    %5576 = vmatpush1.msra.mxu0 0.0
    %5577 = vmatprep.mubr.f32.mxu0 0.0
    %v5578 = vand.u32 %v5097, 4294901760
    %5579 = vmatmul.mubr.f32.gmra.mrb[0].mxu0 %v5578
    %v5580 = vpop.f32.mrb[0].mxu0
    %v5581 = vadd.f32 %v5506, %v5580
    %v5582 = vpop.f32.mrb[0].mxu0
    %5583 = vdwg.mxu0
    %v5584 = vadd.f32 %v5092, %v5581
    %v5585 = vxor.u32 %v5584, 2147483648
    %v5586 = vmul.f32 %v5585, 1.442695
    %v5587 = vpow.pop %v5586
    %v5588 = vadd.f32 %v5587, 1.0
    %v5589 = vrcp.pop %v5588
    %v5590 = vmul.f32 1.0, %v5589
    %v5591 = vtanh.pop %v5584
    %v5592 = vmul.f32 %v5590, %v4364
    %5594 = vrot.lane.b32.xlu0 %v5591, 64
    %v5595 = vpop.permute.xlu0 %5594
    %v5597 = vmul.f32 %v5590, %v5595
    %5599 = vrot.lane.b32.xlu0 %v5597, 32
    %v5600 = vpop.permute.xlu0 %5599
    %v5602 = vadd.f32 %v5592, %v5600
    %v5603 = vtanh.pop %v5602
    %5605 = vrot.lane.b32.xlu0 %v5603, 64
    %v5606 = vpop.permute.xlu0 %5605
    %v5608 = vmul.f32 %v5590, %v5606
    %5610 = vrot.lane.b32.xlu0 %v5608, 32
    %v5611 = vpop.permute.xlu0 %5610
    %5613 = vst.msk [vmem:[#allocation2 + $0x3] sm:$0x1] %vm1901, %v5611
    %5614 = vst.msk [vmem:[#allocation2 + $0xa] sm:$0x2] %vm1903, %v5611
    %5615 = vrot.lane.b32.xlu0 %v5082, 32
    %v5616 = vpop.permute.xlu0 %5615
    %v5618 = vrot.slane %v5608, 2
    %5619 = vrot.lane.b32.xlu0 %v5618, 64
    %v5620 = vpop.permute.xlu0 %5619
    %v5622 = vsel %vm671, %v5616, %v5620
    %v5623 = vld [vmem:[#allocation6] sm:$0xff]
    %v5624 = vld [vmem:[#allocation6 + $0x8] sm:$0xff]
    %v5625 = vld [vmem:[#allocation6 + $0x10] sm:$0xff]
    %v5626 = vld [vmem:[#allocation6 + $0x18] sm:$0xff]
    %v5627 = vld [vmem:[#allocation6 + $0x20] sm:$0xff]
    %v5628 = vld [vmem:[#allocation6 + $0x28] sm:$0xff]
    %v5629 = vld [vmem:[#allocation6 + $0x30] sm:$0xff]
    %v5630 = vld [vmem:[#allocation6 + $0x38] sm:$0xff]
    %v5631 = vld [vmem:[#allocation6 + $0x40] sm:$0xff]
    %v5632 = vld [vmem:[#allocation6 + $0x48] sm:$0xff]
    %v5633 = vld [vmem:[#allocation6 + $0x50] sm:$0xff]
    %v5634 = vld [vmem:[#allocation6 + $0x58] sm:$0xff]
    %v5635 = vld [vmem:[#allocation6 + $0x60] sm:$0xff]
    %v5636 = vld [vmem:[#allocation6 + $0x68] sm:$0xff]
    %v5637 = vld [vmem:[#allocation6 + $0x70] sm:$0xff]
    %v5638 = vld [vmem:[#allocation6 + $0x78] sm:$0xff]
    %v5640 = vrot.slane %v5622, 6
    %v5641 = vsel %vm73, %v5640, 0
    %v5643 = vand.u32 %v5624, 4294901760
    %5644 = vmatprep.subr.mxu0 %v5643
    %v5645 = vand.u32 %v5623, 4294901760
    %5646 = vmatpush1.msra.mxu0 %v5645
    %v5647 = vand.u32 %v5626, 4294901760
    %5648 = vmatprep.subr.mxu0 %v5647
    %v5649 = vand.u32 %v5625, 4294901760
    %5650 = vmatpush1.msra.mxu0 %v5649
    %v5651 = vand.u32 %v5628, 4294901760
    %5652 = vmatprep.subr.mxu0 %v5651
    %v5653 = vand.u32 %v5627, 4294901760
    %5654 = vmatpush1.msra.mxu0 %v5653
    %v5655 = vand.u32 %v5630, 4294901760
    %5656 = vmatprep.subr.mxu0 %v5655
    %v5657 = vand.u32 %v5629, 4294901760
    %5658 = vmatpush1.msra.mxu0 %v5657
    %v5659 = vand.u32 %v5632, 4294901760
    %5660 = vmatprep.subr.mxu0 %v5659
    %v5661 = vand.u32 %v5631, 4294901760
    %5662 = vmatpush1.msra.mxu0 %v5661
    %v5663 = vand.u32 %v5634, 4294901760
    %5664 = vmatprep.subr.mxu0 %v5663
    %v5665 = vand.u32 %v5633, 4294901760
    %5666 = vmatpush1.msra.mxu0 %v5665
    %v5667 = vand.u32 %v5636, 4294901760
    %5668 = vmatprep.subr.mxu0 %v5667
    %v5669 = vand.u32 %v5635, 4294901760
    %5670 = vmatpush1.msra.mxu0 %v5669
    %v5671 = vand.u32 %v5638, 4294901760
    %5672 = vmatprep.subr.mxu0 %v5671
    %v5673 = vand.u32 %v5637, 4294901760
    %5674 = vmatpush1.msra.mxu0 %v5673
    %5675 = vmatprep.subr.mxu0 0.0
    %5676 = vmatpush1.msra.mxu0 0.0
    %5677 = vmatprep.subr.mxu0 0.0
    %5678 = vmatpush1.msra.mxu0 0.0
    %5679 = vmatprep.subr.mxu0 0.0
    %5680 = vmatpush1.msra.mxu0 0.0
    %5681 = vmatprep.subr.mxu0 0.0
    %5682 = vmatpush1.msra.mxu0 0.0
    %5683 = vmatprep.subr.mxu0 0.0
    %5684 = vmatpush1.msra.mxu0 0.0
    %5685 = vmatprep.subr.mxu0 0.0
    %5686 = vmatpush1.msra.mxu0 0.0
    %5687 = vmatprep.subr.mxu0 0.0
    %5688 = vmatpush1.msra.mxu0 0.0
    %5689 = vmatprep.subr.mxu0 0.0
    %5690 = vmatpush1.msra.mxu0 0.0
    %5691 = vmatprep.subr.mxu0 0.0
    %5692 = vmatpush1.msra.mxu0 0.0
    %5693 = vmatprep.subr.mxu0 0.0
    %5694 = vmatpush1.msra.mxu0 0.0
    %5695 = vmatprep.subr.mxu0 0.0
    %5696 = vmatpush1.msra.mxu0 0.0
    %5697 = vmatprep.subr.mxu0 0.0
    %5698 = vmatpush1.msra.mxu0 0.0
    %5699 = vmatprep.subr.mxu0 0.0
    %5700 = vmatpush1.msra.mxu0 0.0
    %5701 = vmatprep.subr.mxu0 0.0
    %5702 = vmatpush1.msra.mxu0 0.0
    %5703 = vmatprep.subr.mxu0 0.0
    %5704 = vmatpush1.msra.mxu0 0.0
    %5705 = vmatprep.subr.mxu0 0.0
    %5706 = vmatpush1.msra.mxu0 0.0
    %5707 = vmatprep.subr.mxu0 0.0
    %5708 = vmatpush1.msra.mxu0 0.0
    %5709 = vmatprep.subr.mxu0 0.0
    %5710 = vmatpush1.msra.mxu0 0.0
    %5711 = vmatprep.subr.mxu0 0.0
    %5712 = vmatpush1.msra.mxu0 0.0
    %5713 = vmatprep.subr.mxu0 0.0
    %5714 = vmatpush1.msra.mxu0 0.0
    %5715 = vmatprep.subr.mxu0 0.0
    %5716 = vmatpush1.msra.mxu0 0.0
    %5717 = vmatprep.subr.mxu0 0.0
    %5718 = vmatpush1.msra.mxu0 0.0
    %5719 = vmatprep.subr.mxu0 0.0
    %5720 = vmatpush1.msra.mxu0 0.0
    %5721 = vmatprep.subr.mxu0 0.0
    %5722 = vmatpush1.msra.mxu0 0.0
    %5723 = vmatprep.mubr.f32.mxu0 0.0
    %v5724 = vand.u32 %v5641, 4294901760
    %v5725 = vsub.f32 %v5641, %v5724
    %v5726 = vand.u32 %v5725, 4294901760
    %v5727 = vsub.f32 %v5725, %v5726
    %v5728 = vand.u32 %v5727, 4294901760
    %5729 = vmatmul.mubr.f32.gmra.mrb[0].mxu0 %v5728
    %v5730 = vpop.f32.mrb[0].mxu0
    %v5731 = vadd.f32 0.0, %v5730
    %v5732 = vpop.f32.mrb[0].mxu0
    %v5733 = vadd.f32 0.0, %v5732
    %5734 = vdwg.mxu0
    %v5735 = vand.u32 %v5624, 4294901760
    %v5736 = vsub.f32 %v5624, %v5735
    %v5737 = vand.u32 %v5736, 4294901760
    %v5738 = vsub.f32 %v5736, %v5737
    %v5739 = vand.u32 %v5738, 4294901760
    %5740 = vmatprep.subr.mxu0 %v5739
    %v5741 = vand.u32 %v5623, 4294901760
    %v5742 = vsub.f32 %v5623, %v5741
    %v5743 = vand.u32 %v5742, 4294901760
    %v5744 = vsub.f32 %v5742, %v5743
    %v5745 = vand.u32 %v5744, 4294901760
    %5746 = vmatpush1.msra.mxu0 %v5745
    %v5747 = vand.u32 %v5626, 4294901760
    %v5748 = vsub.f32 %v5626, %v5747
    %v5749 = vand.u32 %v5748, 4294901760
    %v5750 = vsub.f32 %v5748, %v5749
    %v5751 = vand.u32 %v5750, 4294901760
    %5752 = vmatprep.subr.mxu0 %v5751
    %v5753 = vand.u32 %v5625, 4294901760
    %v5754 = vsub.f32 %v5625, %v5753
    %v5755 = vand.u32 %v5754, 4294901760
    %v5756 = vsub.f32 %v5754, %v5755
    %v5757 = vand.u32 %v5756, 4294901760
    %5758 = vmatpush1.msra.mxu0 %v5757
    %v5759 = vand.u32 %v5628, 4294901760
    %v5760 = vsub.f32 %v5628, %v5759
    %v5761 = vand.u32 %v5760, 4294901760
    %v5762 = vsub.f32 %v5760, %v5761
    %v5763 = vand.u32 %v5762, 4294901760
    %5764 = vmatprep.subr.mxu0 %v5763
    %v5765 = vand.u32 %v5627, 4294901760
    %v5766 = vsub.f32 %v5627, %v5765
    %v5767 = vand.u32 %v5766, 4294901760
    %v5768 = vsub.f32 %v5766, %v5767
    %v5769 = vand.u32 %v5768, 4294901760
    %5770 = vmatpush1.msra.mxu0 %v5769
    %v5771 = vand.u32 %v5630, 4294901760
    %v5772 = vsub.f32 %v5630, %v5771
    %v5773 = vand.u32 %v5772, 4294901760
    %v5774 = vsub.f32 %v5772, %v5773
    %v5775 = vand.u32 %v5774, 4294901760
    %5776 = vmatprep.subr.mxu0 %v5775
    %v5777 = vand.u32 %v5629, 4294901760
    %v5778 = vsub.f32 %v5629, %v5777
    %v5779 = vand.u32 %v5778, 4294901760
    %v5780 = vsub.f32 %v5778, %v5779
    %v5781 = vand.u32 %v5780, 4294901760
    %5782 = vmatpush1.msra.mxu0 %v5781
    %v5783 = vand.u32 %v5632, 4294901760
    %v5784 = vsub.f32 %v5632, %v5783
    %v5785 = vand.u32 %v5784, 4294901760
    %v5786 = vsub.f32 %v5784, %v5785
    %v5787 = vand.u32 %v5786, 4294901760
    %5788 = vmatprep.subr.mxu0 %v5787
    %v5789 = vand.u32 %v5631, 4294901760
    %v5790 = vsub.f32 %v5631, %v5789
    %v5791 = vand.u32 %v5790, 4294901760
    %v5792 = vsub.f32 %v5790, %v5791
    %v5793 = vand.u32 %v5792, 4294901760
    %5794 = vmatpush1.msra.mxu0 %v5793
    %v5795 = vand.u32 %v5634, 4294901760
    %v5796 = vsub.f32 %v5634, %v5795
    %v5797 = vand.u32 %v5796, 4294901760
    %v5798 = vsub.f32 %v5796, %v5797
    %v5799 = vand.u32 %v5798, 4294901760
    %5800 = vmatprep.subr.mxu0 %v5799
    %v5801 = vand.u32 %v5633, 4294901760
    %v5802 = vsub.f32 %v5633, %v5801
    %v5803 = vand.u32 %v5802, 4294901760
    %v5804 = vsub.f32 %v5802, %v5803
    %v5805 = vand.u32 %v5804, 4294901760
    %5806 = vmatpush1.msra.mxu0 %v5805
    %v5807 = vand.u32 %v5636, 4294901760
    %v5808 = vsub.f32 %v5636, %v5807
    %v5809 = vand.u32 %v5808, 4294901760
    %v5810 = vsub.f32 %v5808, %v5809
    %v5811 = vand.u32 %v5810, 4294901760
    %5812 = vmatprep.subr.mxu0 %v5811
    %v5813 = vand.u32 %v5635, 4294901760
    %v5814 = vsub.f32 %v5635, %v5813
    %v5815 = vand.u32 %v5814, 4294901760
    %v5816 = vsub.f32 %v5814, %v5815
    %v5817 = vand.u32 %v5816, 4294901760
    %5818 = vmatpush1.msra.mxu0 %v5817
    %v5819 = vand.u32 %v5638, 4294901760
    %v5820 = vsub.f32 %v5638, %v5819
    %v5821 = vand.u32 %v5820, 4294901760
    %v5822 = vsub.f32 %v5820, %v5821
    %v5823 = vand.u32 %v5822, 4294901760
    %5824 = vmatprep.subr.mxu0 %v5823
    %v5825 = vand.u32 %v5637, 4294901760
    %v5826 = vsub.f32 %v5637, %v5825
    %v5827 = vand.u32 %v5826, 4294901760
    %v5828 = vsub.f32 %v5826, %v5827
    %v5829 = vand.u32 %v5828, 4294901760
    %5830 = vmatpush1.msra.mxu0 %v5829
    %5831 = vmatprep.subr.mxu0 0.0
    %5832 = vmatpush1.msra.mxu0 0.0
    %5833 = vmatprep.subr.mxu0 0.0
    %5834 = vmatpush1.msra.mxu0 0.0
    %5835 = vmatprep.subr.mxu0 0.0
    %5836 = vmatpush1.msra.mxu0 0.0
    %5837 = vmatprep.subr.mxu0 0.0
    %5838 = vmatpush1.msra.mxu0 0.0
    %5839 = vmatprep.subr.mxu0 0.0
    %5840 = vmatpush1.msra.mxu0 0.0
    %5841 = vmatprep.subr.mxu0 0.0
    %5842 = vmatpush1.msra.mxu0 0.0
    %5843 = vmatprep.subr.mxu0 0.0
    %5844 = vmatpush1.msra.mxu0 0.0
    %5845 = vmatprep.subr.mxu0 0.0
    %5846 = vmatpush1.msra.mxu0 0.0
    %5847 = vmatprep.subr.mxu0 0.0
    %5848 = vmatpush1.msra.mxu0 0.0
    %5849 = vmatprep.subr.mxu0 0.0
    %5850 = vmatpush1.msra.mxu0 0.0
    %5851 = vmatprep.subr.mxu0 0.0
    %5852 = vmatpush1.msra.mxu0 0.0
    %5853 = vmatprep.subr.mxu0 0.0
    %5854 = vmatpush1.msra.mxu0 0.0
    %5855 = vmatprep.subr.mxu0 0.0
    %5856 = vmatpush1.msra.mxu0 0.0
    %5857 = vmatprep.subr.mxu0 0.0
    %5858 = vmatpush1.msra.mxu0 0.0
    %5859 = vmatprep.subr.mxu0 0.0
    %5860 = vmatpush1.msra.mxu0 0.0
    %5861 = vmatprep.subr.mxu0 0.0
    %5862 = vmatpush1.msra.mxu0 0.0
    %5863 = vmatprep.subr.mxu0 0.0
    %5864 = vmatpush1.msra.mxu0 0.0
    %5865 = vmatprep.subr.mxu0 0.0
    %5866 = vmatpush1.msra.mxu0 0.0
    %5867 = vmatprep.subr.mxu0 0.0
    %5868 = vmatpush1.msra.mxu0 0.0
    %5869 = vmatprep.subr.mxu0 0.0
    %5870 = vmatpush1.msra.mxu0 0.0
    %5871 = vmatprep.subr.mxu0 0.0
    %5872 = vmatpush1.msra.mxu0 0.0
    %5873 = vmatprep.subr.mxu0 0.0
    %5874 = vmatpush1.msra.mxu0 0.0
    %5875 = vmatprep.subr.mxu0 0.0
    %5876 = vmatpush1.msra.mxu0 0.0
    %5877 = vmatprep.subr.mxu0 0.0
    %5878 = vmatpush1.msra.mxu0 0.0
    %5879 = vmatprep.mubr.f32.mxu0 0.0
    %v5880 = vand.u32 %v5641, 4294901760
    %5881 = vmatmul.mubr.f32.gmra.mrb[0].mxu0 %v5880
    %v5882 = vpop.f32.mrb[0].mxu0
    %v5883 = vadd.f32 %v5731, %v5882
    %v5884 = vpop.f32.mrb[0].mxu0
    %v5885 = vadd.f32 %v5733, %v5884
    %5886 = vdwg.mxu0
    %v5887 = vand.u32 %v5624, 4294901760
    %v5888 = vsub.f32 %v5624, %v5887
    %5889 = vmatprep.subr.mxu0 %v5888
    %v5890 = vand.u32 %v5623, 4294901760
    %v5891 = vsub.f32 %v5623, %v5890
    %5892 = vmatpush1.msra.mxu0 %v5891
    %v5893 = vand.u32 %v5626, 4294901760
    %v5894 = vsub.f32 %v5626, %v5893
    %5895 = vmatprep.subr.mxu0 %v5894
    %v5896 = vand.u32 %v5625, 4294901760
    %v5897 = vsub.f32 %v5625, %v5896
    %5898 = vmatpush1.msra.mxu0 %v5897
    %v5899 = vand.u32 %v5628, 4294901760
    %v5900 = vsub.f32 %v5628, %v5899
    %5901 = vmatprep.subr.mxu0 %v5900
    %v5902 = vand.u32 %v5627, 4294901760
    %v5903 = vsub.f32 %v5627, %v5902
    %5904 = vmatpush1.msra.mxu0 %v5903
    %v5905 = vand.u32 %v5630, 4294901760
    %v5906 = vsub.f32 %v5630, %v5905
    %5907 = vmatprep.subr.mxu0 %v5906
    %v5908 = vand.u32 %v5629, 4294901760
    %v5909 = vsub.f32 %v5629, %v5908
    %5910 = vmatpush1.msra.mxu0 %v5909
    %v5911 = vand.u32 %v5632, 4294901760
    %v5912 = vsub.f32 %v5632, %v5911
    %5913 = vmatprep.subr.mxu0 %v5912
    %v5914 = vand.u32 %v5631, 4294901760
    %v5915 = vsub.f32 %v5631, %v5914
    %5916 = vmatpush1.msra.mxu0 %v5915
    %v5917 = vand.u32 %v5634, 4294901760
    %v5918 = vsub.f32 %v5634, %v5917
    %5919 = vmatprep.subr.mxu0 %v5918
    %v5920 = vand.u32 %v5633, 4294901760
    %v5921 = vsub.f32 %v5633, %v5920
    %5922 = vmatpush1.msra.mxu0 %v5921
    %v5923 = vand.u32 %v5636, 4294901760
    %v5924 = vsub.f32 %v5636, %v5923
    %5925 = vmatprep.subr.mxu0 %v5924
    %v5926 = vand.u32 %v5635, 4294901760
    %v5927 = vsub.f32 %v5635, %v5926
    %5928 = vmatpush1.msra.mxu0 %v5927
    %v5929 = vand.u32 %v5638, 4294901760
    %v5930 = vsub.f32 %v5638, %v5929
    %5931 = vmatprep.subr.mxu0 %v5930
    %v5932 = vand.u32 %v5637, 4294901760
    %v5933 = vsub.f32 %v5637, %v5932
    %5934 = vmatpush1.msra.mxu0 %v5933
    %5935 = vmatprep.subr.mxu0 0.0
    %5936 = vmatpush1.msra.mxu0 0.0
    %5937 = vmatprep.subr.mxu0 0.0
    %5938 = vmatpush1.msra.mxu0 0.0
    %5939 = vmatprep.subr.mxu0 0.0
    %5940 = vmatpush1.msra.mxu0 0.0
    %5941 = vmatprep.subr.mxu0 0.0
    %5942 = vmatpush1.msra.mxu0 0.0
    %5943 = vmatprep.subr.mxu0 0.0
    %5944 = vmatpush1.msra.mxu0 0.0
    %5945 = vmatprep.subr.mxu0 0.0
    %5946 = vmatpush1.msra.mxu0 0.0
    %5947 = vmatprep.subr.mxu0 0.0
    %5948 = vmatpush1.msra.mxu0 0.0
    %5949 = vmatprep.subr.mxu0 0.0
    %5950 = vmatpush1.msra.mxu0 0.0
    %5951 = vmatprep.subr.mxu0 0.0
    %5952 = vmatpush1.msra.mxu0 0.0
    %5953 = vmatprep.subr.mxu0 0.0
    %5954 = vmatpush1.msra.mxu0 0.0
    %5955 = vmatprep.subr.mxu0 0.0
    %5956 = vmatpush1.msra.mxu0 0.0
    %5957 = vmatprep.subr.mxu0 0.0
    %5958 = vmatpush1.msra.mxu0 0.0
    %5959 = vmatprep.subr.mxu0 0.0
    %5960 = vmatpush1.msra.mxu0 0.0
    %5961 = vmatprep.subr.mxu0 0.0
    %5962 = vmatpush1.msra.mxu0 0.0
    %5963 = vmatprep.subr.mxu0 0.0
    %5964 = vmatpush1.msra.mxu0 0.0
    %5965 = vmatprep.subr.mxu0 0.0
    %5966 = vmatpush1.msra.mxu0 0.0
    %5967 = vmatprep.subr.mxu0 0.0
    %5968 = vmatpush1.msra.mxu0 0.0
    %5969 = vmatprep.subr.mxu0 0.0
    %5970 = vmatpush1.msra.mxu0 0.0
    %5971 = vmatprep.subr.mxu0 0.0
    %5972 = vmatpush1.msra.mxu0 0.0
    %5973 = vmatprep.subr.mxu0 0.0
    %5974 = vmatpush1.msra.mxu0 0.0
    %5975 = vmatprep.subr.mxu0 0.0
    %5976 = vmatpush1.msra.mxu0 0.0
    %5977 = vmatprep.subr.mxu0 0.0
    %5978 = vmatpush1.msra.mxu0 0.0
    %5979 = vmatprep.subr.mxu0 0.0
    %5980 = vmatpush1.msra.mxu0 0.0
    %5981 = vmatprep.subr.mxu0 0.0
    %5982 = vmatpush1.msra.mxu0 0.0
    %5983 = vmatprep.mubr.f32.mxu0 0.0
    %v5984 = vand.u32 %v5641, 4294901760
    %v5985 = vsub.f32 %v5641, %v5984
    %5986 = vmatmul.mubr.f32.gmra.mrb[0].mxu0 %v5985
    %v5987 = vpop.f32.mrb[0].mxu0
    %v5988 = vadd.f32 %v5883, %v5987
    %v5989 = vpop.f32.mrb[0].mxu0
    %v5990 = vadd.f32 %v5885, %v5989
    %5991 = vdwg.mxu0
    %v5992 = vand.u32 %v5624, 4294901760
    %5993 = vmatprep.subr.mxu0 %v5992
    %v5994 = vand.u32 %v5623, 4294901760
    %5995 = vmatpush1.msra.mxu0 %v5994
    %v5996 = vand.u32 %v5626, 4294901760
    %5997 = vmatprep.subr.mxu0 %v5996
    %v5998 = vand.u32 %v5625, 4294901760
    %5999 = vmatpush1.msra.mxu0 %v5998
    %v6000 = vand.u32 %v5628, 4294901760
    %6001 = vmatprep.subr.mxu0 %v6000
    %v6002 = vand.u32 %v5627, 4294901760
    %6003 = vmatpush1.msra.mxu0 %v6002
    %v6004 = vand.u32 %v5630, 4294901760
    %6005 = vmatprep.subr.mxu0 %v6004
    %v6006 = vand.u32 %v5629, 4294901760
    %6007 = vmatpush1.msra.mxu0 %v6006
    %v6008 = vand.u32 %v5632, 4294901760
    %6009 = vmatprep.subr.mxu0 %v6008
    %v6010 = vand.u32 %v5631, 4294901760
    %6011 = vmatpush1.msra.mxu0 %v6010
    %v6012 = vand.u32 %v5634, 4294901760
    %6013 = vmatprep.subr.mxu0 %v6012
    %v6014 = vand.u32 %v5633, 4294901760
    %6015 = vmatpush1.msra.mxu0 %v6014
    %v6016 = vand.u32 %v5636, 4294901760
    %6017 = vmatprep.subr.mxu0 %v6016
    %v6018 = vand.u32 %v5635, 4294901760
    %6019 = vmatpush1.msra.mxu0 %v6018
    %v6020 = vand.u32 %v5638, 4294901760
    %6021 = vmatprep.subr.mxu0 %v6020
    %v6022 = vand.u32 %v5637, 4294901760
    %6023 = vmatpush1.msra.mxu0 %v6022
    %6024 = vmatprep.subr.mxu0 0.0
    %6025 = vmatpush1.msra.mxu0 0.0
    %6026 = vmatprep.subr.mxu0 0.0
    %6027 = vmatpush1.msra.mxu0 0.0
    %6028 = vmatprep.subr.mxu0 0.0
    %6029 = vmatpush1.msra.mxu0 0.0
    %6030 = vmatprep.subr.mxu0 0.0
    %6031 = vmatpush1.msra.mxu0 0.0
    %6032 = vmatprep.subr.mxu0 0.0
    %6033 = vmatpush1.msra.mxu0 0.0
    %6034 = vmatprep.subr.mxu0 0.0
    %6035 = vmatpush1.msra.mxu0 0.0
    %6036 = vmatprep.subr.mxu0 0.0
    %6037 = vmatpush1.msra.mxu0 0.0
    %6038 = vmatprep.subr.mxu0 0.0
    %6039 = vmatpush1.msra.mxu0 0.0
    %6040 = vmatprep.subr.mxu0 0.0
    %6041 = vmatpush1.msra.mxu0 0.0
    %6042 = vmatprep.subr.mxu0 0.0
    %6043 = vmatpush1.msra.mxu0 0.0
    %6044 = vmatprep.subr.mxu0 0.0
    %6045 = vmatpush1.msra.mxu0 0.0
    %6046 = vmatprep.subr.mxu0 0.0
    %6047 = vmatpush1.msra.mxu0 0.0
    %6048 = vmatprep.subr.mxu0 0.0
    %6049 = vmatpush1.msra.mxu0 0.0
    %6050 = vmatprep.subr.mxu0 0.0
    %6051 = vmatpush1.msra.mxu0 0.0
    %6052 = vmatprep.subr.mxu0 0.0
    %6053 = vmatpush1.msra.mxu0 0.0
    %6054 = vmatprep.subr.mxu0 0.0
    %6055 = vmatpush1.msra.mxu0 0.0
    %6056 = vmatprep.subr.mxu0 0.0
    %6057 = vmatpush1.msra.mxu0 0.0
    %6058 = vmatprep.subr.mxu0 0.0
    %6059 = vmatpush1.msra.mxu0 0.0
    %6060 = vmatprep.subr.mxu0 0.0
    %6061 = vmatpush1.msra.mxu0 0.0
    %6062 = vmatprep.subr.mxu0 0.0
    %6063 = vmatpush1.msra.mxu0 0.0
    %6064 = vmatprep.subr.mxu0 0.0
    %6065 = vmatpush1.msra.mxu0 0.0
    %6066 = vmatprep.subr.mxu0 0.0
    %6067 = vmatpush1.msra.mxu0 0.0
    %6068 = vmatprep.subr.mxu0 0.0
    %6069 = vmatpush1.msra.mxu0 0.0
    %6070 = vmatprep.subr.mxu0 0.0
    %6071 = vmatpush1.msra.mxu0 0.0
    %6072 = vmatprep.mubr.f32.mxu0 0.0
    %v6073 = vand.u32 %v5641, 4294901760
    %v6074 = vsub.f32 %v5641, %v6073
    %v6075 = vand.u32 %v6074, 4294901760
    %6076 = vmatmul.mubr.f32.gmra.mrb[0].mxu0 %v6075
    %v6077 = vpop.f32.mrb[0].mxu0
    %v6078 = vadd.f32 %v5988, %v6077
    %v6079 = vpop.f32.mrb[0].mxu0
    %v6080 = vadd.f32 %v5990, %v6079
    %6081 = vdwg.mxu0
    %v6082 = vand.u32 %v5624, 4294901760
    %v6083 = vsub.f32 %v5624, %v6082
    %v6084 = vand.u32 %v6083, 4294901760
    %6085 = vmatprep.subr.mxu0 %v6084
    %v6086 = vand.u32 %v5623, 4294901760
    %v6087 = vsub.f32 %v5623, %v6086
    %v6088 = vand.u32 %v6087, 4294901760
    %6089 = vmatpush1.msra.mxu0 %v6088
    %v6090 = vand.u32 %v5626, 4294901760
    %v6091 = vsub.f32 %v5626, %v6090
    %v6092 = vand.u32 %v6091, 4294901760
    %6093 = vmatprep.subr.mxu0 %v6092
    %v6094 = vand.u32 %v5625, 4294901760
    %v6095 = vsub.f32 %v5625, %v6094
    %v6096 = vand.u32 %v6095, 4294901760
    %6097 = vmatpush1.msra.mxu0 %v6096
    %v6098 = vand.u32 %v5628, 4294901760
    %v6099 = vsub.f32 %v5628, %v6098
    %v6100 = vand.u32 %v6099, 4294901760
    %6101 = vmatprep.subr.mxu0 %v6100
    %v6102 = vand.u32 %v5627, 4294901760
    %v6103 = vsub.f32 %v5627, %v6102
    %v6104 = vand.u32 %v6103, 4294901760
    %6105 = vmatpush1.msra.mxu0 %v6104
    %v6106 = vand.u32 %v5630, 4294901760
    %v6107 = vsub.f32 %v5630, %v6106
    %v6108 = vand.u32 %v6107, 4294901760
    %6109 = vmatprep.subr.mxu0 %v6108
    %v6110 = vand.u32 %v5629, 4294901760
    %v6111 = vsub.f32 %v5629, %v6110
    %v6112 = vand.u32 %v6111, 4294901760
    %6113 = vmatpush1.msra.mxu0 %v6112
    %v6114 = vand.u32 %v5632, 4294901760
    %v6115 = vsub.f32 %v5632, %v6114
    %v6116 = vand.u32 %v6115, 4294901760
    %6117 = vmatprep.subr.mxu0 %v6116
    %v6118 = vand.u32 %v5631, 4294901760
    %v6119 = vsub.f32 %v5631, %v6118
    %v6120 = vand.u32 %v6119, 4294901760
    %6121 = vmatpush1.msra.mxu0 %v6120
    %v6122 = vand.u32 %v5634, 4294901760
    %v6123 = vsub.f32 %v5634, %v6122
    %v6124 = vand.u32 %v6123, 4294901760
    %6125 = vmatprep.subr.mxu0 %v6124
    %v6126 = vand.u32 %v5633, 4294901760
    %v6127 = vsub.f32 %v5633, %v6126
    %v6128 = vand.u32 %v6127, 4294901760
    %6129 = vmatpush1.msra.mxu0 %v6128
    %v6130 = vand.u32 %v5636, 4294901760
    %v6131 = vsub.f32 %v5636, %v6130
    %v6132 = vand.u32 %v6131, 4294901760
    %6133 = vmatprep.subr.mxu0 %v6132
    %v6134 = vand.u32 %v5635, 4294901760
    %v6135 = vsub.f32 %v5635, %v6134
    %v6136 = vand.u32 %v6135, 4294901760
    %6137 = vmatpush1.msra.mxu0 %v6136
    %v6138 = vand.u32 %v5638, 4294901760
    %v6139 = vsub.f32 %v5638, %v6138
    %v6140 = vand.u32 %v6139, 4294901760
    %6141 = vmatprep.subr.mxu0 %v6140
    %v6142 = vand.u32 %v5637, 4294901760
    %v6143 = vsub.f32 %v5637, %v6142
    %v6144 = vand.u32 %v6143, 4294901760
    %6145 = vmatpush1.msra.mxu0 %v6144
    %6146 = vmatprep.subr.mxu0 0.0
    %6147 = vmatpush1.msra.mxu0 0.0
    %6148 = vmatprep.subr.mxu0 0.0
    %6149 = vmatpush1.msra.mxu0 0.0
    %6150 = vmatprep.subr.mxu0 0.0
    %6151 = vmatpush1.msra.mxu0 0.0
    %6152 = vmatprep.subr.mxu0 0.0
    %6153 = vmatpush1.msra.mxu0 0.0
    %6154 = vmatprep.subr.mxu0 0.0
    %6155 = vmatpush1.msra.mxu0 0.0
    %6156 = vmatprep.subr.mxu0 0.0
    %6157 = vmatpush1.msra.mxu0 0.0
    %6158 = vmatprep.subr.mxu0 0.0
    %6159 = vmatpush1.msra.mxu0 0.0
    %6160 = vmatprep.subr.mxu0 0.0
    %6161 = vmatpush1.msra.mxu0 0.0
    %6162 = vmatprep.subr.mxu0 0.0
    %6163 = vmatpush1.msra.mxu0 0.0
    %6164 = vmatprep.subr.mxu0 0.0
    %6165 = vmatpush1.msra.mxu0 0.0
    %6166 = vmatprep.subr.mxu0 0.0
    %6167 = vmatpush1.msra.mxu0 0.0
    %6168 = vmatprep.subr.mxu0 0.0
    %6169 = vmatpush1.msra.mxu0 0.0
    %6170 = vmatprep.subr.mxu0 0.0
    %6171 = vmatpush1.msra.mxu0 0.0
    %6172 = vmatprep.subr.mxu0 0.0
    %6173 = vmatpush1.msra.mxu0 0.0
    %6174 = vmatprep.subr.mxu0 0.0
    %6175 = vmatpush1.msra.mxu0 0.0
    %6176 = vmatprep.subr.mxu0 0.0
    %6177 = vmatpush1.msra.mxu0 0.0
    %6178 = vmatprep.subr.mxu0 0.0
    %6179 = vmatpush1.msra.mxu0 0.0
    %6180 = vmatprep.subr.mxu0 0.0
    %6181 = vmatpush1.msra.mxu0 0.0
    %6182 = vmatprep.subr.mxu0 0.0
    %6183 = vmatpush1.msra.mxu0 0.0
    %6184 = vmatprep.subr.mxu0 0.0
    %6185 = vmatpush1.msra.mxu0 0.0
    %6186 = vmatprep.subr.mxu0 0.0
    %6187 = vmatpush1.msra.mxu0 0.0
    %6188 = vmatprep.subr.mxu0 0.0
    %6189 = vmatpush1.msra.mxu0 0.0
    %6190 = vmatprep.subr.mxu0 0.0
    %6191 = vmatpush1.msra.mxu0 0.0
    %6192 = vmatprep.subr.mxu0 0.0
    %6193 = vmatpush1.msra.mxu0 0.0
    %6194 = vmatprep.mubr.f32.mxu0 0.0
    %v6195 = vand.u32 %v5641, 4294901760
    %6196 = vmatmul.mubr.f32.gmra.mrb[0].mxu0 %v6195
    %v6197 = vpop.f32.mrb[0].mxu0
    %v6198 = vadd.f32 %v6078, %v6197
    %v6199 = vpop.f32.mrb[0].mxu0
    %v6200 = vadd.f32 %v6080, %v6199
    %6201 = vdwg.mxu0
    %v6202 = vand.u32 %v5624, 4294901760
    %6203 = vmatprep.subr.mxu0 %v6202
    %v6204 = vand.u32 %v5623, 4294901760
    %6205 = vmatpush1.msra.mxu0 %v6204
    %v6206 = vand.u32 %v5626, 4294901760
    %6207 = vmatprep.subr.mxu0 %v6206
    %v6208 = vand.u32 %v5625, 4294901760
    %6209 = vmatpush1.msra.mxu0 %v6208
    %v6210 = vand.u32 %v5628, 4294901760
    %6211 = vmatprep.subr.mxu0 %v6210
    %v6212 = vand.u32 %v5627, 4294901760
    %6213 = vmatpush1.msra.mxu0 %v6212
    %v6214 = vand.u32 %v5630, 4294901760
    %6215 = vmatprep.subr.mxu0 %v6214
    %v6216 = vand.u32 %v5629, 4294901760
    %6217 = vmatpush1.msra.mxu0 %v6216
    %v6218 = vand.u32 %v5632, 4294901760
    %6219 = vmatprep.subr.mxu0 %v6218
    %v6220 = vand.u32 %v5631, 4294901760
    %6221 = vmatpush1.msra.mxu0 %v6220
    %v6222 = vand.u32 %v5634, 4294901760
    %6223 = vmatprep.subr.mxu0 %v6222
    %v6224 = vand.u32 %v5633, 4294901760
    %6225 = vmatpush1.msra.mxu0 %v6224
    %v6226 = vand.u32 %v5636, 4294901760
    %6227 = vmatprep.subr.mxu0 %v6226
    %v6228 = vand.u32 %v5635, 4294901760
    %6229 = vmatpush1.msra.mxu0 %v6228
    %v6230 = vand.u32 %v5638, 4294901760
    %6231 = vmatprep.subr.mxu0 %v6230
    %v6232 = vand.u32 %v5637, 4294901760
    %6233 = vmatpush1.msra.mxu0 %v6232
    %6234 = vmatprep.subr.mxu0 0.0
    %6235 = vmatpush1.msra.mxu0 0.0
    %6236 = vmatprep.subr.mxu0 0.0
    %6237 = vmatpush1.msra.mxu0 0.0
    %6238 = vmatprep.subr.mxu0 0.0
    %6239 = vmatpush1.msra.mxu0 0.0
    %6240 = vmatprep.subr.mxu0 0.0
    %6241 = vmatpush1.msra.mxu0 0.0
    %6242 = vmatprep.subr.mxu0 0.0
    %6243 = vmatpush1.msra.mxu0 0.0
    %6244 = vmatprep.subr.mxu0 0.0
    %6245 = vmatpush1.msra.mxu0 0.0
    %6246 = vmatprep.subr.mxu0 0.0
    %6247 = vmatpush1.msra.mxu0 0.0
    %6248 = vmatprep.subr.mxu0 0.0
    %6249 = vmatpush1.msra.mxu0 0.0
    %6250 = vmatprep.subr.mxu0 0.0
    %6251 = vmatpush1.msra.mxu0 0.0
    %6252 = vmatprep.subr.mxu0 0.0
    %6253 = vmatpush1.msra.mxu0 0.0
    %6254 = vmatprep.subr.mxu0 0.0
    %6255 = vmatpush1.msra.mxu0 0.0
    %6256 = vmatprep.subr.mxu0 0.0
    %6257 = vmatpush1.msra.mxu0 0.0
    %6258 = vmatprep.subr.mxu0 0.0
    %6259 = vmatpush1.msra.mxu0 0.0
    %6260 = vmatprep.subr.mxu0 0.0
    %6261 = vmatpush1.msra.mxu0 0.0
    %6262 = vmatprep.subr.mxu0 0.0
    %6263 = vmatpush1.msra.mxu0 0.0
    %6264 = vmatprep.subr.mxu0 0.0
    %6265 = vmatpush1.msra.mxu0 0.0
    %6266 = vmatprep.subr.mxu0 0.0
    %6267 = vmatpush1.msra.mxu0 0.0
    %6268 = vmatprep.subr.mxu0 0.0
    %6269 = vmatpush1.msra.mxu0 0.0
    %6270 = vmatprep.subr.mxu0 0.0
    %6271 = vmatpush1.msra.mxu0 0.0
    %6272 = vmatprep.subr.mxu0 0.0
    %6273 = vmatpush1.msra.mxu0 0.0
    %6274 = vmatprep.subr.mxu0 0.0
    %6275 = vmatpush1.msra.mxu0 0.0
    %6276 = vmatprep.subr.mxu0 0.0
    %6277 = vmatpush1.msra.mxu0 0.0
    %6278 = vmatprep.subr.mxu0 0.0
    %6279 = vmatpush1.msra.mxu0 0.0
    %6280 = vmatprep.subr.mxu0 0.0
    %6281 = vmatpush1.msra.mxu0 0.0
    %6282 = vmatprep.mubr.f32.mxu0 0.0
    %v6283 = vand.u32 %v5641, 4294901760
    %6284 = vmatmul.mubr.f32.gmra.mrb[0].mxu0 %v6283
    %v6285 = vpop.f32.mrb[0].mxu0
    %v6286 = vadd.f32 %v6198, %v6285
    %v6287 = vpop.f32.mrb[0].mxu0
    %v6288 = vadd.f32 %v6200, %v6287
    %6289 = vdwg.mxu0
    %v6290 = vadd.f32 %v657, %v6286
    %v6291 = vxor.u32 %v6290, 2147483648
    %v6292 = vmul.f32 %v6291, 1.442695
    %v6293 = vpow.pop %v6292
    %v6294 = vadd.f32 %v6293, 1.0
    %v6295 = vrcp.pop %v6294
    %v6296 = vmul.f32 1.0, %v6295
    %v6297 = vtanh.pop %v6290
    %v6299 = vrot.slane %v5076, 6
    %v6301 = vmul.f32 %v6296, %v6299
    %6303 = vrot.lane.b32.xlu0 %v6297, 64
    %v6304 = vpop.permute.xlu0 %6303
    %v6306 = vmul.f32 %v6296, %v6304
    %6308 = vrot.lane.b32.xlu0 %v6306, 32
    %v6309 = vpop.permute.xlu0 %6308
    %v6311 = vadd.f32 %v6301, %v6309
    %v6312 = vtanh.pop %v6311
    %6314 = vrot.lane.b32.xlu0 %v6312, 64
    %v6315 = vpop.permute.xlu0 %6314
    %v6317 = vmul.f32 %v6296, %v6315
    %v6318 = vld [vmem:[#allocation3 + $0x40] sm:$0xff]
    %v6319 = vld [vmem:[#allocation3 + $0x48] sm:$0xff]
    %v6320 = vld [vmem:[#allocation3 + $0x50] sm:$0xff]
    %v6321 = vld [vmem:[#allocation3 + $0x58] sm:$0xff]
    %v6322 = vld [vmem:[#allocation3 + $0x80] sm:$0x1]
    %v6323 = vlaneseq
    %v6324 = vshrl.u32 %v6323, 7
    %v6325 = vsub.s32 0, %v6324
    %v6326 = vrot.slane %v6322, %v6325
    %v6327 = vadd.f32 %v6288, %v6326
    %6329 = vrot.lane.b32.xlu0 %v6317, 32
    %v6330 = vpop.permute.xlu0 %6329
    %v6331 = vsel %vm671, %v6330, 0
    %6333 = vmatprep.subr.mxu0 0.0
    %v6334 = vand.u32 %v6318, 4294901760
    %6335 = vmatpush1.msra.mxu0 %v6334
    %6336 = vmatprep.subr.mxu0 0.0
    %v6337 = vand.u32 %v6319, 4294901760
    %6338 = vmatpush1.msra.mxu0 %v6337
    %6339 = vmatprep.subr.mxu0 0.0
    %v6340 = vand.u32 %v6320, 4294901760
    %6341 = vmatpush1.msra.mxu0 %v6340
    %6342 = vmatprep.subr.mxu0 0.0
    %v6343 = vand.u32 %v6321, 4294901760
    %6344 = vmatpush1.msra.mxu0 %v6343
    %6345 = vmatprep.subr.mxu0 0.0
    %6346 = vmatpush1.msra.mxu0 0.0
    %6347 = vmatprep.subr.mxu0 0.0
    %6348 = vmatpush1.msra.mxu0 0.0
    %6349 = vmatprep.subr.mxu0 0.0
    %6350 = vmatpush1.msra.mxu0 0.0
    %6351 = vmatprep.subr.mxu0 0.0
    %6352 = vmatpush1.msra.mxu0 0.0
    %6353 = vmatprep.subr.mxu0 0.0
    %6354 = vmatpush1.msra.mxu0 0.0
    %6355 = vmatprep.subr.mxu0 0.0
    %6356 = vmatpush1.msra.mxu0 0.0
    %6357 = vmatprep.subr.mxu0 0.0
    %6358 = vmatpush1.msra.mxu0 0.0
    %6359 = vmatprep.subr.mxu0 0.0
    %6360 = vmatpush1.msra.mxu0 0.0
    %6361 = vmatprep.subr.mxu0 0.0
    %6362 = vmatpush1.msra.mxu0 0.0
    %6363 = vmatprep.subr.mxu0 0.0
    %6364 = vmatpush1.msra.mxu0 0.0
    %6365 = vmatprep.subr.mxu0 0.0
    %6366 = vmatpush1.msra.mxu0 0.0
    %6367 = vmatprep.subr.mxu0 0.0
    %6368 = vmatpush1.msra.mxu0 0.0
    %6369 = vmatprep.subr.mxu0 0.0
    %6370 = vmatpush1.msra.mxu0 0.0
    %6371 = vmatprep.subr.mxu0 0.0
    %6372 = vmatpush1.msra.mxu0 0.0
    %6373 = vmatprep.subr.mxu0 0.0
    %6374 = vmatpush1.msra.mxu0 0.0
    %6375 = vmatprep.subr.mxu0 0.0
    %6376 = vmatpush1.msra.mxu0 0.0
    %6377 = vmatprep.subr.mxu0 0.0
    %6378 = vmatpush1.msra.mxu0 0.0
    %6379 = vmatprep.subr.mxu0 0.0
    %6380 = vmatpush1.msra.mxu0 0.0
    %6381 = vmatprep.subr.mxu0 0.0
    %6382 = vmatpush1.msra.mxu0 0.0
    %6383 = vmatprep.subr.mxu0 0.0
    %6384 = vmatpush1.msra.mxu0 0.0
    %6385 = vmatprep.subr.mxu0 0.0
    %6386 = vmatpush1.msra.mxu0 0.0
    %6387 = vmatprep.subr.mxu0 0.0
    %6388 = vmatpush1.msra.mxu0 0.0
    %6389 = vmatprep.subr.mxu0 0.0
    %6390 = vmatpush1.msra.mxu0 0.0
    %6391 = vmatprep.subr.mxu0 0.0
    %6392 = vmatpush1.msra.mxu0 0.0
    %6393 = vmatprep.subr.mxu0 0.0
    %6394 = vmatpush1.msra.mxu0 0.0
    %6395 = vmatprep.subr.mxu0 0.0
    %6396 = vmatpush1.msra.mxu0 0.0
    %6397 = vmatprep.subr.mxu0 0.0
    %6398 = vmatpush1.msra.mxu0 0.0
    %6399 = vmatprep.subr.mxu0 0.0
    %6400 = vmatpush1.msra.mxu0 0.0
    %6401 = vmatprep.mubr.f32.mxu0 0.0
    %v6402 = vand.u32 %v6331, 4294901760
    %v6403 = vsub.f32 %v6331, %v6402
    %v6404 = vand.u32 %v6403, 4294901760
    %v6405 = vsub.f32 %v6403, %v6404
    %v6406 = vand.u32 %v6405, 4294901760
    %6407 = vmatmul.mubr.f32.gmra.mrb[0].mxu0 %v6406
    %v6408 = vpop.f32.mrb[0].mxu0
    %v6409 = vadd.f32 0.0, %v6408
    %v6410 = vpop.f32.mrb[0].mxu0
    %6411 = vdwg.mxu0
    %6412 = vmatprep.subr.mxu0 0.0
    %v6413 = vand.u32 %v6318, 4294901760
    %v6414 = vsub.f32 %v6318, %v6413
    %v6415 = vand.u32 %v6414, 4294901760
    %v6416 = vsub.f32 %v6414, %v6415
    %v6417 = vand.u32 %v6416, 4294901760
    %6418 = vmatpush1.msra.mxu0 %v6417
    %6419 = vmatprep.subr.mxu0 0.0
    %v6420 = vand.u32 %v6319, 4294901760
    %v6421 = vsub.f32 %v6319, %v6420
    %v6422 = vand.u32 %v6421, 4294901760
    %v6423 = vsub.f32 %v6421, %v6422
    %v6424 = vand.u32 %v6423, 4294901760
    %6425 = vmatpush1.msra.mxu0 %v6424
    %6426 = vmatprep.subr.mxu0 0.0
    %v6427 = vand.u32 %v6320, 4294901760
    %v6428 = vsub.f32 %v6320, %v6427
    %v6429 = vand.u32 %v6428, 4294901760
    %v6430 = vsub.f32 %v6428, %v6429
    %v6431 = vand.u32 %v6430, 4294901760
    %6432 = vmatpush1.msra.mxu0 %v6431
    %6433 = vmatprep.subr.mxu0 0.0
    %v6434 = vand.u32 %v6321, 4294901760
    %v6435 = vsub.f32 %v6321, %v6434
    %v6436 = vand.u32 %v6435, 4294901760
    %v6437 = vsub.f32 %v6435, %v6436
    %v6438 = vand.u32 %v6437, 4294901760
    %6439 = vmatpush1.msra.mxu0 %v6438
    %6440 = vmatprep.subr.mxu0 0.0
    %6441 = vmatpush1.msra.mxu0 0.0
    %6442 = vmatprep.subr.mxu0 0.0
    %6443 = vmatpush1.msra.mxu0 0.0
    %6444 = vmatprep.subr.mxu0 0.0
    %6445 = vmatpush1.msra.mxu0 0.0
    %6446 = vmatprep.subr.mxu0 0.0
    %6447 = vmatpush1.msra.mxu0 0.0
    %6448 = vmatprep.subr.mxu0 0.0
    %6449 = vmatpush1.msra.mxu0 0.0
    %6450 = vmatprep.subr.mxu0 0.0
    %6451 = vmatpush1.msra.mxu0 0.0
    %6452 = vmatprep.subr.mxu0 0.0
    %6453 = vmatpush1.msra.mxu0 0.0
    %6454 = vmatprep.subr.mxu0 0.0
    %6455 = vmatpush1.msra.mxu0 0.0
    %6456 = vmatprep.subr.mxu0 0.0
    %6457 = vmatpush1.msra.mxu0 0.0
    %6458 = vmatprep.subr.mxu0 0.0
    %6459 = vmatpush1.msra.mxu0 0.0
    %6460 = vmatprep.subr.mxu0 0.0
    %6461 = vmatpush1.msra.mxu0 0.0
    %6462 = vmatprep.subr.mxu0 0.0
    %6463 = vmatpush1.msra.mxu0 0.0
    %6464 = vmatprep.subr.mxu0 0.0
    %6465 = vmatpush1.msra.mxu0 0.0
    %6466 = vmatprep.subr.mxu0 0.0
    %6467 = vmatpush1.msra.mxu0 0.0
    %6468 = vmatprep.subr.mxu0 0.0
    %6469 = vmatpush1.msra.mxu0 0.0
    %6470 = vmatprep.subr.mxu0 0.0
    %6471 = vmatpush1.msra.mxu0 0.0
    %6472 = vmatprep.subr.mxu0 0.0
    %6473 = vmatpush1.msra.mxu0 0.0
    %6474 = vmatprep.subr.mxu0 0.0
    %6475 = vmatpush1.msra.mxu0 0.0
    %6476 = vmatprep.subr.mxu0 0.0
    %6477 = vmatpush1.msra.mxu0 0.0
    %6478 = vmatprep.subr.mxu0 0.0
    %6479 = vmatpush1.msra.mxu0 0.0
    %6480 = vmatprep.subr.mxu0 0.0
    %6481 = vmatpush1.msra.mxu0 0.0
    %6482 = vmatprep.subr.mxu0 0.0
    %6483 = vmatpush1.msra.mxu0 0.0
    %6484 = vmatprep.subr.mxu0 0.0
    %6485 = vmatpush1.msra.mxu0 0.0
    %6486 = vmatprep.subr.mxu0 0.0
    %6487 = vmatpush1.msra.mxu0 0.0
    %6488 = vmatprep.subr.mxu0 0.0
    %6489 = vmatpush1.msra.mxu0 0.0
    %6490 = vmatprep.subr.mxu0 0.0
    %6491 = vmatpush1.msra.mxu0 0.0
    %6492 = vmatprep.subr.mxu0 0.0
    %6493 = vmatpush1.msra.mxu0 0.0
    %6494 = vmatprep.subr.mxu0 0.0
    %6495 = vmatpush1.msra.mxu0 0.0
    %6496 = vmatprep.mubr.f32.mxu0 0.0
    %v6497 = vand.u32 %v6331, 4294901760
    %6498 = vmatmul.mubr.f32.gmra.mrb[0].mxu0 %v6497
    %v6499 = vpop.f32.mrb[0].mxu0
    %v6500 = vadd.f32 %v6409, %v6499
    %v6501 = vpop.f32.mrb[0].mxu0
    %6502 = vdwg.mxu0
    %6503 = vmatprep.subr.mxu0 0.0
    %v6504 = vand.u32 %v6318, 4294901760
    %v6505 = vsub.f32 %v6318, %v6504
    %6506 = vmatpush1.msra.mxu0 %v6505
    %6507 = vmatprep.subr.mxu0 0.0
    %v6508 = vand.u32 %v6319, 4294901760
    %v6509 = vsub.f32 %v6319, %v6508
    %6510 = vmatpush1.msra.mxu0 %v6509
    %6511 = vmatprep.subr.mxu0 0.0
    %v6512 = vand.u32 %v6320, 4294901760
    %v6513 = vsub.f32 %v6320, %v6512
    %6514 = vmatpush1.msra.mxu0 %v6513
    %6515 = vmatprep.subr.mxu0 0.0
    %v6516 = vand.u32 %v6321, 4294901760
    %v6517 = vsub.f32 %v6321, %v6516
    %6518 = vmatpush1.msra.mxu0 %v6517
    %6519 = vmatprep.subr.mxu0 0.0
    %6520 = vmatpush1.msra.mxu0 0.0
    %6521 = vmatprep.subr.mxu0 0.0
    %6522 = vmatpush1.msra.mxu0 0.0
    %6523 = vmatprep.subr.mxu0 0.0
    %6524 = vmatpush1.msra.mxu0 0.0
    %6525 = vmatprep.subr.mxu0 0.0
    %6526 = vmatpush1.msra.mxu0 0.0
    %6527 = vmatprep.subr.mxu0 0.0
    %6528 = vmatpush1.msra.mxu0 0.0
    %6529 = vmatprep.subr.mxu0 0.0
    %6530 = vmatpush1.msra.mxu0 0.0
    %6531 = vmatprep.subr.mxu0 0.0
    %6532 = vmatpush1.msra.mxu0 0.0
    %6533 = vmatprep.subr.mxu0 0.0
    %6534 = vmatpush1.msra.mxu0 0.0
    %6535 = vmatprep.subr.mxu0 0.0
    %6536 = vmatpush1.msra.mxu0 0.0
    %6537 = vmatprep.subr.mxu0 0.0
    %6538 = vmatpush1.msra.mxu0 0.0
    %6539 = vmatprep.subr.mxu0 0.0
    %6540 = vmatpush1.msra.mxu0 0.0
    %6541 = vmatprep.subr.mxu0 0.0
    %6542 = vmatpush1.msra.mxu0 0.0
    %6543 = vmatprep.subr.mxu0 0.0
    %6544 = vmatpush1.msra.mxu0 0.0
    %6545 = vmatprep.subr.mxu0 0.0
    %6546 = vmatpush1.msra.mxu0 0.0
    %6547 = vmatprep.subr.mxu0 0.0
    %6548 = vmatpush1.msra.mxu0 0.0
    %6549 = vmatprep.subr.mxu0 0.0
    %6550 = vmatpush1.msra.mxu0 0.0
    %6551 = vmatprep.subr.mxu0 0.0
    %6552 = vmatpush1.msra.mxu0 0.0
    %6553 = vmatprep.subr.mxu0 0.0
    %6554 = vmatpush1.msra.mxu0 0.0
    %6555 = vmatprep.subr.mxu0 0.0
    %6556 = vmatpush1.msra.mxu0 0.0
    %6557 = vmatprep.subr.mxu0 0.0
    %6558 = vmatpush1.msra.mxu0 0.0
    %6559 = vmatprep.subr.mxu0 0.0
    %6560 = vmatpush1.msra.mxu0 0.0
    %6561 = vmatprep.subr.mxu0 0.0
    %6562 = vmatpush1.msra.mxu0 0.0
    %6563 = vmatprep.subr.mxu0 0.0
    %6564 = vmatpush1.msra.mxu0 0.0
    %6565 = vmatprep.subr.mxu0 0.0
    %6566 = vmatpush1.msra.mxu0 0.0
    %6567 = vmatprep.subr.mxu0 0.0
    %6568 = vmatpush1.msra.mxu0 0.0
    %6569 = vmatprep.subr.mxu0 0.0
    %6570 = vmatpush1.msra.mxu0 0.0
    %6571 = vmatprep.subr.mxu0 0.0
    %6572 = vmatpush1.msra.mxu0 0.0
    %6573 = vmatprep.subr.mxu0 0.0
    %6574 = vmatpush1.msra.mxu0 0.0
    %6575 = vmatprep.mubr.f32.mxu0 0.0
    %v6576 = vand.u32 %v6331, 4294901760
    %v6577 = vsub.f32 %v6331, %v6576
    %6578 = vmatmul.mubr.f32.gmra.mrb[0].mxu0 %v6577
    %v6579 = vpop.f32.mrb[0].mxu0
    %v6580 = vadd.f32 %v6500, %v6579
    %v6581 = vpop.f32.mrb[0].mxu0
    %6582 = vdwg.mxu0
    %6583 = vmatprep.subr.mxu0 0.0
    %v6584 = vand.u32 %v6318, 4294901760
    %6585 = vmatpush1.msra.mxu0 %v6584
    %6586 = vmatprep.subr.mxu0 0.0
    %v6587 = vand.u32 %v6319, 4294901760
    %6588 = vmatpush1.msra.mxu0 %v6587
    %6589 = vmatprep.subr.mxu0 0.0
    %v6590 = vand.u32 %v6320, 4294901760
    %6591 = vmatpush1.msra.mxu0 %v6590
    %6592 = vmatprep.subr.mxu0 0.0
    %v6593 = vand.u32 %v6321, 4294901760
    %6594 = vmatpush1.msra.mxu0 %v6593
    %6595 = vmatprep.subr.mxu0 0.0
    %6596 = vmatpush1.msra.mxu0 0.0
    %6597 = vmatprep.subr.mxu0 0.0
    %6598 = vmatpush1.msra.mxu0 0.0
    %6599 = vmatprep.subr.mxu0 0.0
    %6600 = vmatpush1.msra.mxu0 0.0
    %6601 = vmatprep.subr.mxu0 0.0
    %6602 = vmatpush1.msra.mxu0 0.0
    %6603 = vmatprep.subr.mxu0 0.0
    %6604 = vmatpush1.msra.mxu0 0.0
    %6605 = vmatprep.subr.mxu0 0.0
    %6606 = vmatpush1.msra.mxu0 0.0
    %6607 = vmatprep.subr.mxu0 0.0
    %6608 = vmatpush1.msra.mxu0 0.0
    %6609 = vmatprep.subr.mxu0 0.0
    %6610 = vmatpush1.msra.mxu0 0.0
    %6611 = vmatprep.subr.mxu0 0.0
    %6612 = vmatpush1.msra.mxu0 0.0
    %6613 = vmatprep.subr.mxu0 0.0
    %6614 = vmatpush1.msra.mxu0 0.0
    %6615 = vmatprep.subr.mxu0 0.0
    %6616 = vmatpush1.msra.mxu0 0.0
    %6617 = vmatprep.subr.mxu0 0.0
    %6618 = vmatpush1.msra.mxu0 0.0
    %6619 = vmatprep.subr.mxu0 0.0
    %6620 = vmatpush1.msra.mxu0 0.0
    %6621 = vmatprep.subr.mxu0 0.0
    %6622 = vmatpush1.msra.mxu0 0.0
    %6623 = vmatprep.subr.mxu0 0.0
    %6624 = vmatpush1.msra.mxu0 0.0
    %6625 = vmatprep.subr.mxu0 0.0
    %6626 = vmatpush1.msra.mxu0 0.0
    %6627 = vmatprep.subr.mxu0 0.0
    %6628 = vmatpush1.msra.mxu0 0.0
    %6629 = vmatprep.subr.mxu0 0.0
    %6630 = vmatpush1.msra.mxu0 0.0
    %6631 = vmatprep.subr.mxu0 0.0
    %6632 = vmatpush1.msra.mxu0 0.0
    %6633 = vmatprep.subr.mxu0 0.0
    %6634 = vmatpush1.msra.mxu0 0.0
    %6635 = vmatprep.subr.mxu0 0.0
    %6636 = vmatpush1.msra.mxu0 0.0
    %6637 = vmatprep.subr.mxu0 0.0
    %6638 = vmatpush1.msra.mxu0 0.0
    %6639 = vmatprep.subr.mxu0 0.0
    %6640 = vmatpush1.msra.mxu0 0.0
    %6641 = vmatprep.subr.mxu0 0.0
    %6642 = vmatpush1.msra.mxu0 0.0
    %6643 = vmatprep.subr.mxu0 0.0
    %6644 = vmatpush1.msra.mxu0 0.0
    %6645 = vmatprep.subr.mxu0 0.0
    %6646 = vmatpush1.msra.mxu0 0.0
    %6647 = vmatprep.subr.mxu0 0.0
    %6648 = vmatpush1.msra.mxu0 0.0
    %6649 = vmatprep.subr.mxu0 0.0
    %6650 = vmatpush1.msra.mxu0 0.0
    %6651 = vmatprep.mubr.f32.mxu0 0.0
    %v6652 = vand.u32 %v6331, 4294901760
    %v6653 = vsub.f32 %v6331, %v6652
    %v6654 = vand.u32 %v6653, 4294901760
    %6655 = vmatmul.mubr.f32.gmra.mrb[0].mxu0 %v6654
    %v6656 = vpop.f32.mrb[0].mxu0
    %v6657 = vadd.f32 %v6580, %v6656
    %v6658 = vpop.f32.mrb[0].mxu0
    %6659 = vdwg.mxu0
    %6660 = vmatprep.subr.mxu0 0.0
    %v6661 = vand.u32 %v6318, 4294901760
    %v6662 = vsub.f32 %v6318, %v6661
    %v6663 = vand.u32 %v6662, 4294901760
    %6664 = vmatpush1.msra.mxu0 %v6663
    %6665 = vmatprep.subr.mxu0 0.0
    %v6666 = vand.u32 %v6319, 4294901760
    %v6667 = vsub.f32 %v6319, %v6666
    %v6668 = vand.u32 %v6667, 4294901760
    %6669 = vmatpush1.msra.mxu0 %v6668
    %6670 = vmatprep.subr.mxu0 0.0
    %v6671 = vand.u32 %v6320, 4294901760
    %v6672 = vsub.f32 %v6320, %v6671
    %v6673 = vand.u32 %v6672, 4294901760
    %6674 = vmatpush1.msra.mxu0 %v6673
    %6675 = vmatprep.subr.mxu0 0.0
    %v6676 = vand.u32 %v6321, 4294901760
    %v6677 = vsub.f32 %v6321, %v6676
    %v6678 = vand.u32 %v6677, 4294901760
    %6679 = vmatpush1.msra.mxu0 %v6678
    %6680 = vmatprep.subr.mxu0 0.0
    %6681 = vmatpush1.msra.mxu0 0.0
    %6682 = vmatprep.subr.mxu0 0.0
    %6683 = vmatpush1.msra.mxu0 0.0
    %6684 = vmatprep.subr.mxu0 0.0
    %6685 = vmatpush1.msra.mxu0 0.0
    %6686 = vmatprep.subr.mxu0 0.0
    %6687 = vmatpush1.msra.mxu0 0.0
    %6688 = vmatprep.subr.mxu0 0.0
    %6689 = vmatpush1.msra.mxu0 0.0
    %6690 = vmatprep.subr.mxu0 0.0
    %6691 = vmatpush1.msra.mxu0 0.0
    %6692 = vmatprep.subr.mxu0 0.0
    %6693 = vmatpush1.msra.mxu0 0.0
    %6694 = vmatprep.subr.mxu0 0.0
    %6695 = vmatpush1.msra.mxu0 0.0
    %6696 = vmatprep.subr.mxu0 0.0
    %6697 = vmatpush1.msra.mxu0 0.0
    %6698 = vmatprep.subr.mxu0 0.0
    %6699 = vmatpush1.msra.mxu0 0.0
    %6700 = vmatprep.subr.mxu0 0.0
    %6701 = vmatpush1.msra.mxu0 0.0
    %6702 = vmatprep.subr.mxu0 0.0
    %6703 = vmatpush1.msra.mxu0 0.0
    %6704 = vmatprep.subr.mxu0 0.0
    %6705 = vmatpush1.msra.mxu0 0.0
    %6706 = vmatprep.subr.mxu0 0.0
    %6707 = vmatpush1.msra.mxu0 0.0
    %6708 = vmatprep.subr.mxu0 0.0
    %6709 = vmatpush1.msra.mxu0 0.0
    %6710 = vmatprep.subr.mxu0 0.0
    %6711 = vmatpush1.msra.mxu0 0.0
    %6712 = vmatprep.subr.mxu0 0.0
    %6713 = vmatpush1.msra.mxu0 0.0
    %6714 = vmatprep.subr.mxu0 0.0
    %6715 = vmatpush1.msra.mxu0 0.0
    %6716 = vmatprep.subr.mxu0 0.0
    %6717 = vmatpush1.msra.mxu0 0.0
    %6718 = vmatprep.subr.mxu0 0.0
    %6719 = vmatpush1.msra.mxu0 0.0
    %6720 = vmatprep.subr.mxu0 0.0
    %6721 = vmatpush1.msra.mxu0 0.0
    %6722 = vmatprep.subr.mxu0 0.0
    %6723 = vmatpush1.msra.mxu0 0.0
    %6724 = vmatprep.subr.mxu0 0.0
    %6725 = vmatpush1.msra.mxu0 0.0
    %6726 = vmatprep.subr.mxu0 0.0
    %6727 = vmatpush1.msra.mxu0 0.0
    %6728 = vmatprep.subr.mxu0 0.0
    %6729 = vmatpush1.msra.mxu0 0.0
    %6730 = vmatprep.subr.mxu0 0.0
    %6731 = vmatpush1.msra.mxu0 0.0
    %6732 = vmatprep.subr.mxu0 0.0
    %6733 = vmatpush1.msra.mxu0 0.0
    %6734 = vmatprep.subr.mxu0 0.0
    %6735 = vmatpush1.msra.mxu0 0.0
    %6736 = vmatprep.mubr.f32.mxu0 0.0
    %v6737 = vand.u32 %v6331, 4294901760
    %6738 = vmatmul.mubr.f32.gmra.mrb[0].mxu0 %v6737
    %v6739 = vpop.f32.mrb[0].mxu0
    %v6740 = vadd.f32 %v6657, %v6739
    %v6741 = vpop.f32.mrb[0].mxu0
    %6742 = vdwg.mxu0
    %6743 = vmatprep.subr.mxu0 0.0
    %v6744 = vand.u32 %v6318, 4294901760
    %6745 = vmatpush1.msra.mxu0 %v6744
    %6746 = vmatprep.subr.mxu0 0.0
    %v6747 = vand.u32 %v6319, 4294901760
    %6748 = vmatpush1.msra.mxu0 %v6747
    %6749 = vmatprep.subr.mxu0 0.0
    %v6750 = vand.u32 %v6320, 4294901760
    %6751 = vmatpush1.msra.mxu0 %v6750
    %6752 = vmatprep.subr.mxu0 0.0
    %v6753 = vand.u32 %v6321, 4294901760
    %6754 = vmatpush1.msra.mxu0 %v6753
    %6755 = vmatprep.subr.mxu0 0.0
    %6756 = vmatpush1.msra.mxu0 0.0
    %6757 = vmatprep.subr.mxu0 0.0
    %6758 = vmatpush1.msra.mxu0 0.0
    %6759 = vmatprep.subr.mxu0 0.0
    %6760 = vmatpush1.msra.mxu0 0.0
    %6761 = vmatprep.subr.mxu0 0.0
    %6762 = vmatpush1.msra.mxu0 0.0
    %6763 = vmatprep.subr.mxu0 0.0
    %6764 = vmatpush1.msra.mxu0 0.0
    %6765 = vmatprep.subr.mxu0 0.0
    %6766 = vmatpush1.msra.mxu0 0.0
    %6767 = vmatprep.subr.mxu0 0.0
    %6768 = vmatpush1.msra.mxu0 0.0
    %6769 = vmatprep.subr.mxu0 0.0
    %6770 = vmatpush1.msra.mxu0 0.0
    %6771 = vmatprep.subr.mxu0 0.0
    %6772 = vmatpush1.msra.mxu0 0.0
    %6773 = vmatprep.subr.mxu0 0.0
    %6774 = vmatpush1.msra.mxu0 0.0
    %6775 = vmatprep.subr.mxu0 0.0
    %6776 = vmatpush1.msra.mxu0 0.0
    %6777 = vmatprep.subr.mxu0 0.0
    %6778 = vmatpush1.msra.mxu0 0.0
    %6779 = vmatprep.subr.mxu0 0.0
    %6780 = vmatpush1.msra.mxu0 0.0
    %6781 = vmatprep.subr.mxu0 0.0
    %6782 = vmatpush1.msra.mxu0 0.0
    %6783 = vmatprep.subr.mxu0 0.0
    %6784 = vmatpush1.msra.mxu0 0.0
    %6785 = vmatprep.subr.mxu0 0.0
    %6786 = vmatpush1.msra.mxu0 0.0
    %6787 = vmatprep.subr.mxu0 0.0
    %6788 = vmatpush1.msra.mxu0 0.0
    %6789 = vmatprep.subr.mxu0 0.0
    %6790 = vmatpush1.msra.mxu0 0.0
    %6791 = vmatprep.subr.mxu0 0.0
    %6792 = vmatpush1.msra.mxu0 0.0
    %6793 = vmatprep.subr.mxu0 0.0
    %6794 = vmatpush1.msra.mxu0 0.0
    %6795 = vmatprep.subr.mxu0 0.0
    %6796 = vmatpush1.msra.mxu0 0.0
    %6797 = vmatprep.subr.mxu0 0.0
    %6798 = vmatpush1.msra.mxu0 0.0
    %6799 = vmatprep.subr.mxu0 0.0
    %6800 = vmatpush1.msra.mxu0 0.0
    %6801 = vmatprep.subr.mxu0 0.0
    %6802 = vmatpush1.msra.mxu0 0.0
    %6803 = vmatprep.subr.mxu0 0.0
    %6804 = vmatpush1.msra.mxu0 0.0
    %6805 = vmatprep.subr.mxu0 0.0
    %6806 = vmatpush1.msra.mxu0 0.0
    %6807 = vmatprep.subr.mxu0 0.0
    %6808 = vmatpush1.msra.mxu0 0.0
    %6809 = vmatprep.subr.mxu0 0.0
    %6810 = vmatpush1.msra.mxu0 0.0
    %6811 = vmatprep.mubr.f32.mxu0 0.0
    %v6812 = vand.u32 %v6331, 4294901760
    %6813 = vmatmul.mubr.f32.gmra.mrb[0].mxu0 %v6812
    %v6814 = vpop.f32.mrb[0].mxu0
    %v6815 = vadd.f32 %v6740, %v6814
    %v6816 = vpop.f32.mrb[0].mxu0
    %6817 = vdwg.mxu0
    %v6818 = vadd.f32 %v6327, %v6815
    %v6819 = vxor.u32 %v6818, 2147483648
    %v6820 = vmul.f32 %v6819, 1.442695
    %v6821 = vpow.pop %v6820
    %v6822 = vadd.f32 %v6821, 1.0
    %v6823 = vrcp.pop %v6822
    %v6824 = vmul.f32 1.0, %v6823
    %v6825 = vtanh.pop %v6818
    %v6826 = vmul.f32 %v6824, %v5602
    %6828 = vrot.lane.b32.xlu0 %v6825, 64
    %v6829 = vpop.permute.xlu0 %6828
    %v6831 = vmul.f32 %v6824, %v6829
    %6833 = vrot.lane.b32.xlu0 %v6831, 32
    %v6834 = vpop.permute.xlu0 %6833
    %v6836 = vadd.f32 %v6826, %v6834
    %v6837 = vtanh.pop %v6836
    %6839 = vrot.lane.b32.xlu0 %v6837, 64
    %v6840 = vpop.permute.xlu0 %6839
    %v6842 = vmul.f32 %v6824, %v6840
    %6844 = vrot.lane.b32.xlu0 %v6842, 32
    %v6845 = vpop.permute.xlu0 %6844
    %6847 = vst.msk [vmem:[#allocation2 + $0x4] sm:$0x1] %vm1901, %v6845
    %6848 = vst.msk [vmem:[#allocation2 + $0xb] sm:$0x2] %vm1903, %v6845
    %6850 = vrot.lane.b32.xlu0 %v6842, 64
    %v6851 = vpop.permute.xlu0 %6850
    %v6853 = vsel %vm671, %v6330, %v6851
    %v6854 = vld [vmem:[#allocation6] sm:$0xff]
    %v6855 = vld [vmem:[#allocation6 + $0x8] sm:$0xff]
    %v6856 = vld [vmem:[#allocation6 + $0x10] sm:$0xff]
    %v6857 = vld [vmem:[#allocation6 + $0x18] sm:$0xff]
    %v6858 = vld [vmem:[#allocation6 + $0x20] sm:$0xff]
    %v6859 = vld [vmem:[#allocation6 + $0x28] sm:$0xff]
    %v6860 = vld [vmem:[#allocation6 + $0x30] sm:$0xff]
    %v6861 = vld [vmem:[#allocation6 + $0x38] sm:$0xff]
    %v6862 = vld [vmem:[#allocation6 + $0x40] sm:$0xff]
    %v6863 = vld [vmem:[#allocation6 + $0x48] sm:$0xff]
    %v6864 = vld [vmem:[#allocation6 + $0x50] sm:$0xff]
    %v6865 = vld [vmem:[#allocation6 + $0x58] sm:$0xff]
    %v6866 = vld [vmem:[#allocation6 + $0x60] sm:$0xff]
    %v6867 = vld [vmem:[#allocation6 + $0x68] sm:$0xff]
    %v6868 = vld [vmem:[#allocation6 + $0x70] sm:$0xff]
    %v6869 = vld [vmem:[#allocation6 + $0x78] sm:$0xff]
    %v6871 = vsel %vm73, %v6853, 0
    %v6873 = vand.u32 %v6855, 4294901760
    %6874 = vmatprep.subr.mxu0 %v6873
    %v6875 = vand.u32 %v6854, 4294901760
    %6876 = vmatpush1.msra.mxu0 %v6875
    %v6877 = vand.u32 %v6857, 4294901760
    %6878 = vmatprep.subr.mxu0 %v6877
    %v6879 = vand.u32 %v6856, 4294901760
    %6880 = vmatpush1.msra.mxu0 %v6879
    %v6881 = vand.u32 %v6859, 4294901760
    %6882 = vmatprep.subr.mxu0 %v6881
    %v6883 = vand.u32 %v6858, 4294901760
    %6884 = vmatpush1.msra.mxu0 %v6883
    %v6885 = vand.u32 %v6861, 4294901760
    %6886 = vmatprep.subr.mxu0 %v6885
    %v6887 = vand.u32 %v6860, 4294901760
    %6888 = vmatpush1.msra.mxu0 %v6887
    %v6889 = vand.u32 %v6863, 4294901760
    %6890 = vmatprep.subr.mxu0 %v6889
    %v6891 = vand.u32 %v6862, 4294901760
    %6892 = vmatpush1.msra.mxu0 %v6891
    %v6893 = vand.u32 %v6865, 4294901760
    %6894 = vmatprep.subr.mxu0 %v6893
    %v6895 = vand.u32 %v6864, 4294901760
    %6896 = vmatpush1.msra.mxu0 %v6895
    %v6897 = vand.u32 %v6867, 4294901760
    %6898 = vmatprep.subr.mxu0 %v6897
    %v6899 = vand.u32 %v6866, 4294901760
    %6900 = vmatpush1.msra.mxu0 %v6899
    %v6901 = vand.u32 %v6869, 4294901760
    %6902 = vmatprep.subr.mxu0 %v6901
    %v6903 = vand.u32 %v6868, 4294901760
    %6904 = vmatpush1.msra.mxu0 %v6903
    %6905 = vmatprep.subr.mxu0 0.0
    %6906 = vmatpush1.msra.mxu0 0.0
    %6907 = vmatprep.subr.mxu0 0.0
    %6908 = vmatpush1.msra.mxu0 0.0
    %6909 = vmatprep.subr.mxu0 0.0
    %6910 = vmatpush1.msra.mxu0 0.0
    %6911 = vmatprep.subr.mxu0 0.0
    %6912 = vmatpush1.msra.mxu0 0.0
    %6913 = vmatprep.subr.mxu0 0.0
    %6914 = vmatpush1.msra.mxu0 0.0
    %6915 = vmatprep.subr.mxu0 0.0
    %6916 = vmatpush1.msra.mxu0 0.0
    %6917 = vmatprep.subr.mxu0 0.0
    %6918 = vmatpush1.msra.mxu0 0.0
    %6919 = vmatprep.subr.mxu0 0.0
    %6920 = vmatpush1.msra.mxu0 0.0
    %6921 = vmatprep.subr.mxu0 0.0
    %6922 = vmatpush1.msra.mxu0 0.0
    %6923 = vmatprep.subr.mxu0 0.0
    %6924 = vmatpush1.msra.mxu0 0.0
    %6925 = vmatprep.subr.mxu0 0.0
    %6926 = vmatpush1.msra.mxu0 0.0
    %6927 = vmatprep.subr.mxu0 0.0
    %6928 = vmatpush1.msra.mxu0 0.0
    %6929 = vmatprep.subr.mxu0 0.0
    %6930 = vmatpush1.msra.mxu0 0.0
    %6931 = vmatprep.subr.mxu0 0.0
    %6932 = vmatpush1.msra.mxu0 0.0
    %6933 = vmatprep.subr.mxu0 0.0
    %6934 = vmatpush1.msra.mxu0 0.0
    %6935 = vmatprep.subr.mxu0 0.0
    %6936 = vmatpush1.msra.mxu0 0.0
    %6937 = vmatprep.subr.mxu0 0.0
    %6938 = vmatpush1.msra.mxu0 0.0
    %6939 = vmatprep.subr.mxu0 0.0
    %6940 = vmatpush1.msra.mxu0 0.0
    %6941 = vmatprep.subr.mxu0 0.0
    %6942 = vmatpush1.msra.mxu0 0.0
    %6943 = vmatprep.subr.mxu0 0.0
    %6944 = vmatpush1.msra.mxu0 0.0
    %6945 = vmatprep.subr.mxu0 0.0
    %6946 = vmatpush1.msra.mxu0 0.0
    %6947 = vmatprep.subr.mxu0 0.0
    %6948 = vmatpush1.msra.mxu0 0.0
    %6949 = vmatprep.subr.mxu0 0.0
    %6950 = vmatpush1.msra.mxu0 0.0
    %6951 = vmatprep.subr.mxu0 0.0
    %6952 = vmatpush1.msra.mxu0 0.0
    %6953 = vmatprep.mubr.f32.mxu0 0.0
    %v6954 = vand.u32 %v6871, 4294901760
    %v6955 = vsub.f32 %v6871, %v6954
    %v6956 = vand.u32 %v6955, 4294901760
    %v6957 = vsub.f32 %v6955, %v6956
    %v6958 = vand.u32 %v6957, 4294901760
    %6959 = vmatmul.mubr.f32.gmra.mrb[0].mxu0 %v6958
    %v6960 = vpop.f32.mrb[0].mxu0
    %v6961 = vadd.f32 0.0, %v6960
    %v6962 = vpop.f32.mrb[0].mxu0
    %v6963 = vadd.f32 0.0, %v6962
    %6964 = vdwg.mxu0
    %v6965 = vand.u32 %v6855, 4294901760
    %v6966 = vsub.f32 %v6855, %v6965
    %v6967 = vand.u32 %v6966, 4294901760
    %v6968 = vsub.f32 %v6966, %v6967
    %v6969 = vand.u32 %v6968, 4294901760
    %6970 = vmatprep.subr.mxu0 %v6969
    %v6971 = vand.u32 %v6854, 4294901760
    %v6972 = vsub.f32 %v6854, %v6971
    %v6973 = vand.u32 %v6972, 4294901760
    %v6974 = vsub.f32 %v6972, %v6973
    %v6975 = vand.u32 %v6974, 4294901760
    %6976 = vmatpush1.msra.mxu0 %v6975
    %v6977 = vand.u32 %v6857, 4294901760
    %v6978 = vsub.f32 %v6857, %v6977
    %v6979 = vand.u32 %v6978, 4294901760
    %v6980 = vsub.f32 %v6978, %v6979
    %v6981 = vand.u32 %v6980, 4294901760
    %6982 = vmatprep.subr.mxu0 %v6981
    %v6983 = vand.u32 %v6856, 4294901760
    %v6984 = vsub.f32 %v6856, %v6983
    %v6985 = vand.u32 %v6984, 4294901760
    %v6986 = vsub.f32 %v6984, %v6985
    %v6987 = vand.u32 %v6986, 4294901760
    %6988 = vmatpush1.msra.mxu0 %v6987
    %v6989 = vand.u32 %v6859, 4294901760
    %v6990 = vsub.f32 %v6859, %v6989
    %v6991 = vand.u32 %v6990, 4294901760
    %v6992 = vsub.f32 %v6990, %v6991
    %v6993 = vand.u32 %v6992, 4294901760
    %6994 = vmatprep.subr.mxu0 %v6993
    %v6995 = vand.u32 %v6858, 4294901760
    %v6996 = vsub.f32 %v6858, %v6995
    %v6997 = vand.u32 %v6996, 4294901760
    %v6998 = vsub.f32 %v6996, %v6997
    %v6999 = vand.u32 %v6998, 4294901760
    %7000 = vmatpush1.msra.mxu0 %v6999
    %v7001 = vand.u32 %v6861, 4294901760
    %v7002 = vsub.f32 %v6861, %v7001
    %v7003 = vand.u32 %v7002, 4294901760
    %v7004 = vsub.f32 %v7002, %v7003
    %v7005 = vand.u32 %v7004, 4294901760
    %7006 = vmatprep.subr.mxu0 %v7005
    %v7007 = vand.u32 %v6860, 4294901760
    %v7008 = vsub.f32 %v6860, %v7007
    %v7009 = vand.u32 %v7008, 4294901760
    %v7010 = vsub.f32 %v7008, %v7009
    %v7011 = vand.u32 %v7010, 4294901760
    %7012 = vmatpush1.msra.mxu0 %v7011
    %v7013 = vand.u32 %v6863, 4294901760
    %v7014 = vsub.f32 %v6863, %v7013
    %v7015 = vand.u32 %v7014, 4294901760
    %v7016 = vsub.f32 %v7014, %v7015
    %v7017 = vand.u32 %v7016, 4294901760
    %7018 = vmatprep.subr.mxu0 %v7017
    %v7019 = vand.u32 %v6862, 4294901760
    %v7020 = vsub.f32 %v6862, %v7019
    %v7021 = vand.u32 %v7020, 4294901760
    %v7022 = vsub.f32 %v7020, %v7021
    %v7023 = vand.u32 %v7022, 4294901760
    %7024 = vmatpush1.msra.mxu0 %v7023
    %v7025 = vand.u32 %v6865, 4294901760
    %v7026 = vsub.f32 %v6865, %v7025
    %v7027 = vand.u32 %v7026, 4294901760
    %v7028 = vsub.f32 %v7026, %v7027
    %v7029 = vand.u32 %v7028, 4294901760
    %7030 = vmatprep.subr.mxu0 %v7029
    %v7031 = vand.u32 %v6864, 4294901760
    %v7032 = vsub.f32 %v6864, %v7031
    %v7033 = vand.u32 %v7032, 4294901760
    %v7034 = vsub.f32 %v7032, %v7033
    %v7035 = vand.u32 %v7034, 4294901760
    %7036 = vmatpush1.msra.mxu0 %v7035
    %v7037 = vand.u32 %v6867, 4294901760
    %v7038 = vsub.f32 %v6867, %v7037
    %v7039 = vand.u32 %v7038, 4294901760
    %v7040 = vsub.f32 %v7038, %v7039
    %v7041 = vand.u32 %v7040, 4294901760
    %7042 = vmatprep.subr.mxu0 %v7041
    %v7043 = vand.u32 %v6866, 4294901760
    %v7044 = vsub.f32 %v6866, %v7043
    %v7045 = vand.u32 %v7044, 4294901760
    %v7046 = vsub.f32 %v7044, %v7045
    %v7047 = vand.u32 %v7046, 4294901760
    %7048 = vmatpush1.msra.mxu0 %v7047
    %v7049 = vand.u32 %v6869, 4294901760
    %v7050 = vsub.f32 %v6869, %v7049
    %v7051 = vand.u32 %v7050, 4294901760
    %v7052 = vsub.f32 %v7050, %v7051
    %v7053 = vand.u32 %v7052, 4294901760
    %7054 = vmatprep.subr.mxu0 %v7053
    %v7055 = vand.u32 %v6868, 4294901760
    %v7056 = vsub.f32 %v6868, %v7055
    %v7057 = vand.u32 %v7056, 4294901760
    %v7058 = vsub.f32 %v7056, %v7057
    %v7059 = vand.u32 %v7058, 4294901760
    %7060 = vmatpush1.msra.mxu0 %v7059
    %7061 = vmatprep.subr.mxu0 0.0
    %7062 = vmatpush1.msra.mxu0 0.0
    %7063 = vmatprep.subr.mxu0 0.0
    %7064 = vmatpush1.msra.mxu0 0.0
    %7065 = vmatprep.subr.mxu0 0.0
    %7066 = vmatpush1.msra.mxu0 0.0
    %7067 = vmatprep.subr.mxu0 0.0
    %7068 = vmatpush1.msra.mxu0 0.0
    %7069 = vmatprep.subr.mxu0 0.0
    %7070 = vmatpush1.msra.mxu0 0.0
    %7071 = vmatprep.subr.mxu0 0.0
    %7072 = vmatpush1.msra.mxu0 0.0
    %7073 = vmatprep.subr.mxu0 0.0
    %7074 = vmatpush1.msra.mxu0 0.0
    %7075 = vmatprep.subr.mxu0 0.0
    %7076 = vmatpush1.msra.mxu0 0.0
    %7077 = vmatprep.subr.mxu0 0.0
    %7078 = vmatpush1.msra.mxu0 0.0
    %7079 = vmatprep.subr.mxu0 0.0
    %7080 = vmatpush1.msra.mxu0 0.0
    %7081 = vmatprep.subr.mxu0 0.0
    %7082 = vmatpush1.msra.mxu0 0.0
    %7083 = vmatprep.subr.mxu0 0.0
    %7084 = vmatpush1.msra.mxu0 0.0
    %7085 = vmatprep.subr.mxu0 0.0
    %7086 = vmatpush1.msra.mxu0 0.0
    %7087 = vmatprep.subr.mxu0 0.0
    %7088 = vmatpush1.msra.mxu0 0.0
    %7089 = vmatprep.subr.mxu0 0.0
    %7090 = vmatpush1.msra.mxu0 0.0
    %7091 = vmatprep.subr.mxu0 0.0
    %7092 = vmatpush1.msra.mxu0 0.0
    %7093 = vmatprep.subr.mxu0 0.0
    %7094 = vmatpush1.msra.mxu0 0.0
    %7095 = vmatprep.subr.mxu0 0.0
    %7096 = vmatpush1.msra.mxu0 0.0
    %7097 = vmatprep.subr.mxu0 0.0
    %7098 = vmatpush1.msra.mxu0 0.0
    %7099 = vmatprep.subr.mxu0 0.0
    %7100 = vmatpush1.msra.mxu0 0.0
    %7101 = vmatprep.subr.mxu0 0.0
    %7102 = vmatpush1.msra.mxu0 0.0
    %7103 = vmatprep.subr.mxu0 0.0
    %7104 = vmatpush1.msra.mxu0 0.0
    %7105 = vmatprep.subr.mxu0 0.0
    %7106 = vmatpush1.msra.mxu0 0.0
    %7107 = vmatprep.subr.mxu0 0.0
    %7108 = vmatpush1.msra.mxu0 0.0
    %7109 = vmatprep.mubr.f32.mxu0 0.0
    %v7110 = vand.u32 %v6871, 4294901760
    %7111 = vmatmul.mubr.f32.gmra.mrb[0].mxu0 %v7110
    %v7112 = vpop.f32.mrb[0].mxu0
    %v7113 = vadd.f32 %v6961, %v7112
    %v7114 = vpop.f32.mrb[0].mxu0
    %v7115 = vadd.f32 %v6963, %v7114
    %7116 = vdwg.mxu0
    %v7117 = vand.u32 %v6855, 4294901760
    %v7118 = vsub.f32 %v6855, %v7117
    %7119 = vmatprep.subr.mxu0 %v7118
    %v7120 = vand.u32 %v6854, 4294901760
    %v7121 = vsub.f32 %v6854, %v7120
    %7122 = vmatpush1.msra.mxu0 %v7121
    %v7123 = vand.u32 %v6857, 4294901760
    %v7124 = vsub.f32 %v6857, %v7123
    %7125 = vmatprep.subr.mxu0 %v7124
    %v7126 = vand.u32 %v6856, 4294901760
    %v7127 = vsub.f32 %v6856, %v7126
    %7128 = vmatpush1.msra.mxu0 %v7127
    %v7129 = vand.u32 %v6859, 4294901760
    %v7130 = vsub.f32 %v6859, %v7129
    %7131 = vmatprep.subr.mxu0 %v7130
    %v7132 = vand.u32 %v6858, 4294901760
    %v7133 = vsub.f32 %v6858, %v7132
    %7134 = vmatpush1.msra.mxu0 %v7133
    %v7135 = vand.u32 %v6861, 4294901760
    %v7136 = vsub.f32 %v6861, %v7135
    %7137 = vmatprep.subr.mxu0 %v7136
    %v7138 = vand.u32 %v6860, 4294901760
    %v7139 = vsub.f32 %v6860, %v7138
    %7140 = vmatpush1.msra.mxu0 %v7139
    %v7141 = vand.u32 %v6863, 4294901760
    %v7142 = vsub.f32 %v6863, %v7141
    %7143 = vmatprep.subr.mxu0 %v7142
    %v7144 = vand.u32 %v6862, 4294901760
    %v7145 = vsub.f32 %v6862, %v7144
    %7146 = vmatpush1.msra.mxu0 %v7145
    %v7147 = vand.u32 %v6865, 4294901760
    %v7148 = vsub.f32 %v6865, %v7147
    %7149 = vmatprep.subr.mxu0 %v7148
    %v7150 = vand.u32 %v6864, 4294901760
    %v7151 = vsub.f32 %v6864, %v7150
    %7152 = vmatpush1.msra.mxu0 %v7151
    %v7153 = vand.u32 %v6867, 4294901760
    %v7154 = vsub.f32 %v6867, %v7153
    %7155 = vmatprep.subr.mxu0 %v7154
    %v7156 = vand.u32 %v6866, 4294901760
    %v7157 = vsub.f32 %v6866, %v7156
    %7158 = vmatpush1.msra.mxu0 %v7157
    %v7159 = vand.u32 %v6869, 4294901760
    %v7160 = vsub.f32 %v6869, %v7159
    %7161 = vmatprep.subr.mxu0 %v7160
    %v7162 = vand.u32 %v6868, 4294901760
    %v7163 = vsub.f32 %v6868, %v7162
    %7164 = vmatpush1.msra.mxu0 %v7163
    %7165 = vmatprep.subr.mxu0 0.0
    %7166 = vmatpush1.msra.mxu0 0.0
    %7167 = vmatprep.subr.mxu0 0.0
    %7168 = vmatpush1.msra.mxu0 0.0
    %7169 = vmatprep.subr.mxu0 0.0
    %7170 = vmatpush1.msra.mxu0 0.0
    %7171 = vmatprep.subr.mxu0 0.0
    %7172 = vmatpush1.msra.mxu0 0.0
    %7173 = vmatprep.subr.mxu0 0.0
    %7174 = vmatpush1.msra.mxu0 0.0
    %7175 = vmatprep.subr.mxu0 0.0
    %7176 = vmatpush1.msra.mxu0 0.0
    %7177 = vmatprep.subr.mxu0 0.0
    %7178 = vmatpush1.msra.mxu0 0.0
    %7179 = vmatprep.subr.mxu0 0.0
    %7180 = vmatpush1.msra.mxu0 0.0
    %7181 = vmatprep.subr.mxu0 0.0
    %7182 = vmatpush1.msra.mxu0 0.0
    %7183 = vmatprep.subr.mxu0 0.0
    %7184 = vmatpush1.msra.mxu0 0.0
    %7185 = vmatprep.subr.mxu0 0.0
    %7186 = vmatpush1.msra.mxu0 0.0
    %7187 = vmatprep.subr.mxu0 0.0
    %7188 = vmatpush1.msra.mxu0 0.0
    %7189 = vmatprep.subr.mxu0 0.0
    %7190 = vmatpush1.msra.mxu0 0.0
    %7191 = vmatprep.subr.mxu0 0.0
    %7192 = vmatpush1.msra.mxu0 0.0
    %7193 = vmatprep.subr.mxu0 0.0
    %7194 = vmatpush1.msra.mxu0 0.0
    %7195 = vmatprep.subr.mxu0 0.0
    %7196 = vmatpush1.msra.mxu0 0.0
    %7197 = vmatprep.subr.mxu0 0.0
    %7198 = vmatpush1.msra.mxu0 0.0
    %7199 = vmatprep.subr.mxu0 0.0
    %7200 = vmatpush1.msra.mxu0 0.0
    %7201 = vmatprep.subr.mxu0 0.0
    %7202 = vmatpush1.msra.mxu0 0.0
    %7203 = vmatprep.subr.mxu0 0.0
    %7204 = vmatpush1.msra.mxu0 0.0
    %7205 = vmatprep.subr.mxu0 0.0
    %7206 = vmatpush1.msra.mxu0 0.0
    %7207 = vmatprep.subr.mxu0 0.0
    %7208 = vmatpush1.msra.mxu0 0.0
    %7209 = vmatprep.subr.mxu0 0.0
    %7210 = vmatpush1.msra.mxu0 0.0
    %7211 = vmatprep.subr.mxu0 0.0
    %7212 = vmatpush1.msra.mxu0 0.0
    %7213 = vmatprep.mubr.f32.mxu0 0.0
    %v7214 = vand.u32 %v6871, 4294901760
    %v7215 = vsub.f32 %v6871, %v7214
    %7216 = vmatmul.mubr.f32.gmra.mrb[0].mxu0 %v7215
    %v7217 = vpop.f32.mrb[0].mxu0
    %v7218 = vadd.f32 %v7113, %v7217
    %v7219 = vpop.f32.mrb[0].mxu0
    %v7220 = vadd.f32 %v7115, %v7219
    %7221 = vdwg.mxu0
    %v7222 = vand.u32 %v6855, 4294901760
    %7223 = vmatprep.subr.mxu0 %v7222
    %v7224 = vand.u32 %v6854, 4294901760
    %7225 = vmatpush1.msra.mxu0 %v7224
    %v7226 = vand.u32 %v6857, 4294901760
    %7227 = vmatprep.subr.mxu0 %v7226
    %v7228 = vand.u32 %v6856, 4294901760
    %7229 = vmatpush1.msra.mxu0 %v7228
    %v7230 = vand.u32 %v6859, 4294901760
    %7231 = vmatprep.subr.mxu0 %v7230
    %v7232 = vand.u32 %v6858, 4294901760
    %7233 = vmatpush1.msra.mxu0 %v7232
    %v7234 = vand.u32 %v6861, 4294901760
    %7235 = vmatprep.subr.mxu0 %v7234
    %v7236 = vand.u32 %v6860, 4294901760
    %7237 = vmatpush1.msra.mxu0 %v7236
    %v7238 = vand.u32 %v6863, 4294901760
    %7239 = vmatprep.subr.mxu0 %v7238
    %v7240 = vand.u32 %v6862, 4294901760
    %7241 = vmatpush1.msra.mxu0 %v7240
    %v7242 = vand.u32 %v6865, 4294901760
    %7243 = vmatprep.subr.mxu0 %v7242
    %v7244 = vand.u32 %v6864, 4294901760
    %7245 = vmatpush1.msra.mxu0 %v7244
    %v7246 = vand.u32 %v6867, 4294901760
    %7247 = vmatprep.subr.mxu0 %v7246
    %v7248 = vand.u32 %v6866, 4294901760
    %7249 = vmatpush1.msra.mxu0 %v7248
    %v7250 = vand.u32 %v6869, 4294901760
    %7251 = vmatprep.subr.mxu0 %v7250
    %v7252 = vand.u32 %v6868, 4294901760
    %7253 = vmatpush1.msra.mxu0 %v7252
    %7254 = vmatprep.subr.mxu0 0.0
    %7255 = vmatpush1.msra.mxu0 0.0
    %7256 = vmatprep.subr.mxu0 0.0
    %7257 = vmatpush1.msra.mxu0 0.0
    %7258 = vmatprep.subr.mxu0 0.0
    %7259 = vmatpush1.msra.mxu0 0.0
    %7260 = vmatprep.subr.mxu0 0.0
    %7261 = vmatpush1.msra.mxu0 0.0
    %7262 = vmatprep.subr.mxu0 0.0
    %7263 = vmatpush1.msra.mxu0 0.0
    %7264 = vmatprep.subr.mxu0 0.0
    %7265 = vmatpush1.msra.mxu0 0.0
    %7266 = vmatprep.subr.mxu0 0.0
    %7267 = vmatpush1.msra.mxu0 0.0
    %7268 = vmatprep.subr.mxu0 0.0
    %7269 = vmatpush1.msra.mxu0 0.0
    %7270 = vmatprep.subr.mxu0 0.0
    %7271 = vmatpush1.msra.mxu0 0.0
    %7272 = vmatprep.subr.mxu0 0.0
    %7273 = vmatpush1.msra.mxu0 0.0
    %7274 = vmatprep.subr.mxu0 0.0
    %7275 = vmatpush1.msra.mxu0 0.0
    %7276 = vmatprep.subr.mxu0 0.0
    %7277 = vmatpush1.msra.mxu0 0.0
    %7278 = vmatprep.subr.mxu0 0.0
    %7279 = vmatpush1.msra.mxu0 0.0
    %7280 = vmatprep.subr.mxu0 0.0
    %7281 = vmatpush1.msra.mxu0 0.0
    %7282 = vmatprep.subr.mxu0 0.0
    %7283 = vmatpush1.msra.mxu0 0.0
    %7284 = vmatprep.subr.mxu0 0.0
    %7285 = vmatpush1.msra.mxu0 0.0
    %7286 = vmatprep.subr.mxu0 0.0
    %7287 = vmatpush1.msra.mxu0 0.0
    %7288 = vmatprep.subr.mxu0 0.0
    %7289 = vmatpush1.msra.mxu0 0.0
    %7290 = vmatprep.subr.mxu0 0.0
    %7291 = vmatpush1.msra.mxu0 0.0
    %7292 = vmatprep.subr.mxu0 0.0
    %7293 = vmatpush1.msra.mxu0 0.0
    %7294 = vmatprep.subr.mxu0 0.0
    %7295 = vmatpush1.msra.mxu0 0.0
    %7296 = vmatprep.subr.mxu0 0.0
    %7297 = vmatpush1.msra.mxu0 0.0
    %7298 = vmatprep.subr.mxu0 0.0
    %7299 = vmatpush1.msra.mxu0 0.0
    %7300 = vmatprep.subr.mxu0 0.0
    %7301 = vmatpush1.msra.mxu0 0.0
    %7302 = vmatprep.mubr.f32.mxu0 0.0
    %v7303 = vand.u32 %v6871, 4294901760
    %v7304 = vsub.f32 %v6871, %v7303
    %v7305 = vand.u32 %v7304, 4294901760
    %7306 = vmatmul.mubr.f32.gmra.mrb[0].mxu0 %v7305
    %v7307 = vpop.f32.mrb[0].mxu0
    %v7308 = vadd.f32 %v7218, %v7307
    %v7309 = vpop.f32.mrb[0].mxu0
    %v7310 = vadd.f32 %v7220, %v7309
    %7311 = vdwg.mxu0
    %v7312 = vand.u32 %v6855, 4294901760
    %v7313 = vsub.f32 %v6855, %v7312
    %v7314 = vand.u32 %v7313, 4294901760
    %7315 = vmatprep.subr.mxu0 %v7314
    %v7316 = vand.u32 %v6854, 4294901760
    %v7317 = vsub.f32 %v6854, %v7316
    %v7318 = vand.u32 %v7317, 4294901760
    %7319 = vmatpush1.msra.mxu0 %v7318
    %v7320 = vand.u32 %v6857, 4294901760
    %v7321 = vsub.f32 %v6857, %v7320
    %v7322 = vand.u32 %v7321, 4294901760
    %7323 = vmatprep.subr.mxu0 %v7322
    %v7324 = vand.u32 %v6856, 4294901760
    %v7325 = vsub.f32 %v6856, %v7324
    %v7326 = vand.u32 %v7325, 4294901760
    %7327 = vmatpush1.msra.mxu0 %v7326
    %v7328 = vand.u32 %v6859, 4294901760
    %v7329 = vsub.f32 %v6859, %v7328
    %v7330 = vand.u32 %v7329, 4294901760
    %7331 = vmatprep.subr.mxu0 %v7330
    %v7332 = vand.u32 %v6858, 4294901760
    %v7333 = vsub.f32 %v6858, %v7332
    %v7334 = vand.u32 %v7333, 4294901760
    %7335 = vmatpush1.msra.mxu0 %v7334
    %v7336 = vand.u32 %v6861, 4294901760
    %v7337 = vsub.f32 %v6861, %v7336
    %v7338 = vand.u32 %v7337, 4294901760
    %7339 = vmatprep.subr.mxu0 %v7338
    %v7340 = vand.u32 %v6860, 4294901760
    %v7341 = vsub.f32 %v6860, %v7340
    %v7342 = vand.u32 %v7341, 4294901760
    %7343 = vmatpush1.msra.mxu0 %v7342
    %v7344 = vand.u32 %v6863, 4294901760
    %v7345 = vsub.f32 %v6863, %v7344
    %v7346 = vand.u32 %v7345, 4294901760
    %7347 = vmatprep.subr.mxu0 %v7346
    %v7348 = vand.u32 %v6862, 4294901760
    %v7349 = vsub.f32 %v6862, %v7348
    %v7350 = vand.u32 %v7349, 4294901760
    %7351 = vmatpush1.msra.mxu0 %v7350
    %v7352 = vand.u32 %v6865, 4294901760
    %v7353 = vsub.f32 %v6865, %v7352
    %v7354 = vand.u32 %v7353, 4294901760
    %7355 = vmatprep.subr.mxu0 %v7354
    %v7356 = vand.u32 %v6864, 4294901760
    %v7357 = vsub.f32 %v6864, %v7356
    %v7358 = vand.u32 %v7357, 4294901760
    %7359 = vmatpush1.msra.mxu0 %v7358
    %v7360 = vand.u32 %v6867, 4294901760
    %v7361 = vsub.f32 %v6867, %v7360
    %v7362 = vand.u32 %v7361, 4294901760
    %7363 = vmatprep.subr.mxu0 %v7362
    %v7364 = vand.u32 %v6866, 4294901760
    %v7365 = vsub.f32 %v6866, %v7364
    %v7366 = vand.u32 %v7365, 4294901760
    %7367 = vmatpush1.msra.mxu0 %v7366
    %v7368 = vand.u32 %v6869, 4294901760
    %v7369 = vsub.f32 %v6869, %v7368
    %v7370 = vand.u32 %v7369, 4294901760
    %7371 = vmatprep.subr.mxu0 %v7370
    %v7372 = vand.u32 %v6868, 4294901760
    %v7373 = vsub.f32 %v6868, %v7372
    %v7374 = vand.u32 %v7373, 4294901760
    %7375 = vmatpush1.msra.mxu0 %v7374
    %7376 = vmatprep.subr.mxu0 0.0
    %7377 = vmatpush1.msra.mxu0 0.0
    %7378 = vmatprep.subr.mxu0 0.0
    %7379 = vmatpush1.msra.mxu0 0.0
    %7380 = vmatprep.subr.mxu0 0.0
    %7381 = vmatpush1.msra.mxu0 0.0
    %7382 = vmatprep.subr.mxu0 0.0
    %7383 = vmatpush1.msra.mxu0 0.0
    %7384 = vmatprep.subr.mxu0 0.0
    %7385 = vmatpush1.msra.mxu0 0.0
    %7386 = vmatprep.subr.mxu0 0.0
    %7387 = vmatpush1.msra.mxu0 0.0
    %7388 = vmatprep.subr.mxu0 0.0
    %7389 = vmatpush1.msra.mxu0 0.0
    %7390 = vmatprep.subr.mxu0 0.0
    %7391 = vmatpush1.msra.mxu0 0.0
    %7392 = vmatprep.subr.mxu0 0.0
    %7393 = vmatpush1.msra.mxu0 0.0
    %7394 = vmatprep.subr.mxu0 0.0
    %7395 = vmatpush1.msra.mxu0 0.0
    %7396 = vmatprep.subr.mxu0 0.0
    %7397 = vmatpush1.msra.mxu0 0.0
    %7398 = vmatprep.subr.mxu0 0.0
    %7399 = vmatpush1.msra.mxu0 0.0
    %7400 = vmatprep.subr.mxu0 0.0
    %7401 = vmatpush1.msra.mxu0 0.0
    %7402 = vmatprep.subr.mxu0 0.0
    %7403 = vmatpush1.msra.mxu0 0.0
    %7404 = vmatprep.subr.mxu0 0.0
    %7405 = vmatpush1.msra.mxu0 0.0
    %7406 = vmatprep.subr.mxu0 0.0
    %7407 = vmatpush1.msra.mxu0 0.0
    %7408 = vmatprep.subr.mxu0 0.0
    %7409 = vmatpush1.msra.mxu0 0.0
    %7410 = vmatprep.subr.mxu0 0.0
    %7411 = vmatpush1.msra.mxu0 0.0
    %7412 = vmatprep.subr.mxu0 0.0
    %7413 = vmatpush1.msra.mxu0 0.0
    %7414 = vmatprep.subr.mxu0 0.0
    %7415 = vmatpush1.msra.mxu0 0.0
    %7416 = vmatprep.subr.mxu0 0.0
    %7417 = vmatpush1.msra.mxu0 0.0
    %7418 = vmatprep.subr.mxu0 0.0
    %7419 = vmatpush1.msra.mxu0 0.0
    %7420 = vmatprep.subr.mxu0 0.0
    %7421 = vmatpush1.msra.mxu0 0.0
    %7422 = vmatprep.subr.mxu0 0.0
    %7423 = vmatpush1.msra.mxu0 0.0
    %7424 = vmatprep.mubr.f32.mxu0 0.0
    %v7425 = vand.u32 %v6871, 4294901760
    %7426 = vmatmul.mubr.f32.gmra.mrb[0].mxu0 %v7425
    %v7427 = vpop.f32.mrb[0].mxu0
    %v7428 = vadd.f32 %v7308, %v7427
    %v7429 = vpop.f32.mrb[0].mxu0
    %v7430 = vadd.f32 %v7310, %v7429
    %7431 = vdwg.mxu0
    %v7432 = vand.u32 %v6855, 4294901760
    %7433 = vmatprep.subr.mxu0 %v7432
    %v7434 = vand.u32 %v6854, 4294901760
    %7435 = vmatpush1.msra.mxu0 %v7434
    %v7436 = vand.u32 %v6857, 4294901760
    %7437 = vmatprep.subr.mxu0 %v7436
    %v7438 = vand.u32 %v6856, 4294901760
    %7439 = vmatpush1.msra.mxu0 %v7438
    %v7440 = vand.u32 %v6859, 4294901760
    %7441 = vmatprep.subr.mxu0 %v7440
    %v7442 = vand.u32 %v6858, 4294901760
    %7443 = vmatpush1.msra.mxu0 %v7442
    %v7444 = vand.u32 %v6861, 4294901760
    %7445 = vmatprep.subr.mxu0 %v7444
    %v7446 = vand.u32 %v6860, 4294901760
    %7447 = vmatpush1.msra.mxu0 %v7446
    %v7448 = vand.u32 %v6863, 4294901760
    %7449 = vmatprep.subr.mxu0 %v7448
    %v7450 = vand.u32 %v6862, 4294901760
    %7451 = vmatpush1.msra.mxu0 %v7450
    %v7452 = vand.u32 %v6865, 4294901760
    %7453 = vmatprep.subr.mxu0 %v7452
    %v7454 = vand.u32 %v6864, 4294901760
    %7455 = vmatpush1.msra.mxu0 %v7454
    %v7456 = vand.u32 %v6867, 4294901760
    %7457 = vmatprep.subr.mxu0 %v7456
    %v7458 = vand.u32 %v6866, 4294901760
    %7459 = vmatpush1.msra.mxu0 %v7458
    %v7460 = vand.u32 %v6869, 4294901760
    %7461 = vmatprep.subr.mxu0 %v7460
    %v7462 = vand.u32 %v6868, 4294901760
    %7463 = vmatpush1.msra.mxu0 %v7462
    %7464 = vmatprep.subr.mxu0 0.0
    %7465 = vmatpush1.msra.mxu0 0.0
    %7466 = vmatprep.subr.mxu0 0.0
    %7467 = vmatpush1.msra.mxu0 0.0
    %7468 = vmatprep.subr.mxu0 0.0
    %7469 = vmatpush1.msra.mxu0 0.0
    %7470 = vmatprep.subr.mxu0 0.0
    %7471 = vmatpush1.msra.mxu0 0.0
    %7472 = vmatprep.subr.mxu0 0.0
    %7473 = vmatpush1.msra.mxu0 0.0
    %7474 = vmatprep.subr.mxu0 0.0
    %7475 = vmatpush1.msra.mxu0 0.0
    %7476 = vmatprep.subr.mxu0 0.0
    %7477 = vmatpush1.msra.mxu0 0.0
    %7478 = vmatprep.subr.mxu0 0.0
    %7479 = vmatpush1.msra.mxu0 0.0
    %7480 = vmatprep.subr.mxu0 0.0
    %7481 = vmatpush1.msra.mxu0 0.0
    %7482 = vmatprep.subr.mxu0 0.0
    %7483 = vmatpush1.msra.mxu0 0.0
    %7484 = vmatprep.subr.mxu0 0.0
    %7485 = vmatpush1.msra.mxu0 0.0
    %7486 = vmatprep.subr.mxu0 0.0
    %7487 = vmatpush1.msra.mxu0 0.0
    %7488 = vmatprep.subr.mxu0 0.0
    %7489 = vmatpush1.msra.mxu0 0.0
    %7490 = vmatprep.subr.mxu0 0.0
    %7491 = vmatpush1.msra.mxu0 0.0
    %7492 = vmatprep.subr.mxu0 0.0
    %7493 = vmatpush1.msra.mxu0 0.0
    %7494 = vmatprep.subr.mxu0 0.0
    %7495 = vmatpush1.msra.mxu0 0.0
    %7496 = vmatprep.subr.mxu0 0.0
    %7497 = vmatpush1.msra.mxu0 0.0
    %7498 = vmatprep.subr.mxu0 0.0
    %7499 = vmatpush1.msra.mxu0 0.0
    %7500 = vmatprep.subr.mxu0 0.0
    %7501 = vmatpush1.msra.mxu0 0.0
    %7502 = vmatprep.subr.mxu0 0.0
    %7503 = vmatpush1.msra.mxu0 0.0
    %7504 = vmatprep.subr.mxu0 0.0
    %7505 = vmatpush1.msra.mxu0 0.0
    %7506 = vmatprep.subr.mxu0 0.0
    %7507 = vmatpush1.msra.mxu0 0.0
    %7508 = vmatprep.subr.mxu0 0.0
    %7509 = vmatpush1.msra.mxu0 0.0
    %7510 = vmatprep.subr.mxu0 0.0
    %7511 = vmatpush1.msra.mxu0 0.0
    %7512 = vmatprep.mubr.f32.mxu0 0.0
    %v7513 = vand.u32 %v6871, 4294901760
    %7514 = vmatmul.mubr.f32.gmra.mrb[0].mxu0 %v7513
    %v7515 = vpop.f32.mrb[0].mxu0
    %v7516 = vadd.f32 %v7428, %v7515
    %v7517 = vpop.f32.mrb[0].mxu0
    %v7518 = vadd.f32 %v7430, %v7517
    %7519 = vdwg.mxu0
    %v7521 = vrot.slane %v7516, 6
    %v7523 = vadd.f32 %v657, %v7521
    %v7524 = vxor.u32 %v7523, 2147483648
    %v7525 = vmul.f32 %v7524, 1.442695
    %v7526 = vpow.pop %v7525
    %v7527 = vadd.f32 %v7526, 1.0
    %v7528 = vrcp.pop %v7527
    %v7529 = vmul.f32 1.0, %v7528
    %v7530 = vtanh.pop %v7523
    %v7532 = vrot.slane %v6311, 6
    %v7534 = vmul.f32 %v7529, %v7532
    %7536 = vrot.lane.b32.xlu0 %v7530, 64
    %v7537 = vpop.permute.xlu0 %7536
    %v7539 = vmul.f32 %v7529, %v7537
    %7541 = vrot.lane.b32.xlu0 %v7539, 32
    %v7542 = vpop.permute.xlu0 %7541
    %v7544 = vadd.f32 %v7534, %v7542
    %v7545 = vtanh.pop %v7544
    %7547 = vrot.lane.b32.xlu0 %v7545, 64
    %v7548 = vpop.permute.xlu0 %7547
    %v7550 = vmul.f32 %v7529, %v7548
    %v7551 = vld [vmem:[#allocation3 + $0x40] sm:$0xff]
    %v7552 = vld [vmem:[#allocation3 + $0x48] sm:$0xff]
    %v7553 = vld [vmem:[#allocation3 + $0x50] sm:$0xff]
    %v7554 = vld [vmem:[#allocation3 + $0x58] sm:$0xff]
    %v7555 = vld [vmem:[#allocation3 + $0x80] sm:$0x1]
    %v7556 = vlaneseq
    %v7557 = vshrl.u32 %v7556, 7
    %v7558 = vsub.s32 0, %v7557
    %v7559 = vrot.slane %v7555, %v7558
    %v7560 = vadd.f32 %v7518, %v7559
    %v7562 = vrot.slane %v7550, 2
    %7563 = vrot.lane.b32.xlu0 %v7562, 32
    %v7564 = vpop.permute.xlu0 %7563
    %v7565 = vsel %vm671, %v7564, 0
    %7567 = vmatprep.subr.mxu0 0.0
    %v7568 = vand.u32 %v7551, 4294901760
    %7569 = vmatpush1.msra.mxu0 %v7568
    %7570 = vmatprep.subr.mxu0 0.0
    %v7571 = vand.u32 %v7552, 4294901760
    %7572 = vmatpush1.msra.mxu0 %v7571
    %7573 = vmatprep.subr.mxu0 0.0
    %v7574 = vand.u32 %v7553, 4294901760
    %7575 = vmatpush1.msra.mxu0 %v7574
    %7576 = vmatprep.subr.mxu0 0.0
    %v7577 = vand.u32 %v7554, 4294901760
    %7578 = vmatpush1.msra.mxu0 %v7577
    %7579 = vmatprep.subr.mxu0 0.0
    %7580 = vmatpush1.msra.mxu0 0.0
    %7581 = vmatprep.subr.mxu0 0.0
    %7582 = vmatpush1.msra.mxu0 0.0
    %7583 = vmatprep.subr.mxu0 0.0
    %7584 = vmatpush1.msra.mxu0 0.0
    %7585 = vmatprep.subr.mxu0 0.0
    %7586 = vmatpush1.msra.mxu0 0.0
    %7587 = vmatprep.subr.mxu0 0.0
    %7588 = vmatpush1.msra.mxu0 0.0
    %7589 = vmatprep.subr.mxu0 0.0
    %7590 = vmatpush1.msra.mxu0 0.0
    %7591 = vmatprep.subr.mxu0 0.0
    %7592 = vmatpush1.msra.mxu0 0.0
    %7593 = vmatprep.subr.mxu0 0.0
    %7594 = vmatpush1.msra.mxu0 0.0
    %7595 = vmatprep.subr.mxu0 0.0
    %7596 = vmatpush1.msra.mxu0 0.0
    %7597 = vmatprep.subr.mxu0 0.0
    %7598 = vmatpush1.msra.mxu0 0.0
    %7599 = vmatprep.subr.mxu0 0.0
    %7600 = vmatpush1.msra.mxu0 0.0
    %7601 = vmatprep.subr.mxu0 0.0
    %7602 = vmatpush1.msra.mxu0 0.0
    %7603 = vmatprep.subr.mxu0 0.0
    %7604 = vmatpush1.msra.mxu0 0.0
    %7605 = vmatprep.subr.mxu0 0.0
    %7606 = vmatpush1.msra.mxu0 0.0
    %7607 = vmatprep.subr.mxu0 0.0
    %7608 = vmatpush1.msra.mxu0 0.0
    %7609 = vmatprep.subr.mxu0 0.0
    %7610 = vmatpush1.msra.mxu0 0.0
    %7611 = vmatprep.subr.mxu0 0.0
    %7612 = vmatpush1.msra.mxu0 0.0
    %7613 = vmatprep.subr.mxu0 0.0
    %7614 = vmatpush1.msra.mxu0 0.0
    %7615 = vmatprep.subr.mxu0 0.0
    %7616 = vmatpush1.msra.mxu0 0.0
    %7617 = vmatprep.subr.mxu0 0.0
    %7618 = vmatpush1.msra.mxu0 0.0
    %7619 = vmatprep.subr.mxu0 0.0
    %7620 = vmatpush1.msra.mxu0 0.0
    %7621 = vmatprep.subr.mxu0 0.0
    %7622 = vmatpush1.msra.mxu0 0.0
    %7623 = vmatprep.subr.mxu0 0.0
    %7624 = vmatpush1.msra.mxu0 0.0
    %7625 = vmatprep.subr.mxu0 0.0
    %7626 = vmatpush1.msra.mxu0 0.0
    %7627 = vmatprep.subr.mxu0 0.0
    %7628 = vmatpush1.msra.mxu0 0.0
    %7629 = vmatprep.subr.mxu0 0.0
    %7630 = vmatpush1.msra.mxu0 0.0
    %7631 = vmatprep.subr.mxu0 0.0
    %7632 = vmatpush1.msra.mxu0 0.0
    %7633 = vmatprep.subr.mxu0 0.0
    %7634 = vmatpush1.msra.mxu0 0.0
    %7635 = vmatprep.mubr.f32.mxu0 0.0
    %v7636 = vand.u32 %v7565, 4294901760
    %v7637 = vsub.f32 %v7565, %v7636
    %v7638 = vand.u32 %v7637, 4294901760
    %v7639 = vsub.f32 %v7637, %v7638
    %v7640 = vand.u32 %v7639, 4294901760
    %7641 = vmatmul.mubr.f32.gmra.mrb[0].mxu0 %v7640
    %v7642 = vpop.f32.mrb[0].mxu0
    %v7643 = vadd.f32 0.0, %v7642
    %v7644 = vpop.f32.mrb[0].mxu0
    %7645 = vdwg.mxu0
    %7646 = vmatprep.subr.mxu0 0.0
    %v7647 = vand.u32 %v7551, 4294901760
    %v7648 = vsub.f32 %v7551, %v7647
    %v7649 = vand.u32 %v7648, 4294901760
    %v7650 = vsub.f32 %v7648, %v7649
    %v7651 = vand.u32 %v7650, 4294901760
    %7652 = vmatpush1.msra.mxu0 %v7651
    %7653 = vmatprep.subr.mxu0 0.0
    %v7654 = vand.u32 %v7552, 4294901760
    %v7655 = vsub.f32 %v7552, %v7654
    %v7656 = vand.u32 %v7655, 4294901760
    %v7657 = vsub.f32 %v7655, %v7656
    %v7658 = vand.u32 %v7657, 4294901760
    %7659 = vmatpush1.msra.mxu0 %v7658
    %7660 = vmatprep.subr.mxu0 0.0
    %v7661 = vand.u32 %v7553, 4294901760
    %v7662 = vsub.f32 %v7553, %v7661
    %v7663 = vand.u32 %v7662, 4294901760
    %v7664 = vsub.f32 %v7662, %v7663
    %v7665 = vand.u32 %v7664, 4294901760
    %7666 = vmatpush1.msra.mxu0 %v7665
    %7667 = vmatprep.subr.mxu0 0.0
    %v7668 = vand.u32 %v7554, 4294901760
    %v7669 = vsub.f32 %v7554, %v7668
    %v7670 = vand.u32 %v7669, 4294901760
    %v7671 = vsub.f32 %v7669, %v7670
    %v7672 = vand.u32 %v7671, 4294901760
    %7673 = vmatpush1.msra.mxu0 %v7672
    %7674 = vmatprep.subr.mxu0 0.0
    %7675 = vmatpush1.msra.mxu0 0.0
    %7676 = vmatprep.subr.mxu0 0.0
    %7677 = vmatpush1.msra.mxu0 0.0
    %7678 = vmatprep.subr.mxu0 0.0
    %7679 = vmatpush1.msra.mxu0 0.0
    %7680 = vmatprep.subr.mxu0 0.0
    %7681 = vmatpush1.msra.mxu0 0.0
    %7682 = vmatprep.subr.mxu0 0.0
    %7683 = vmatpush1.msra.mxu0 0.0
    %7684 = vmatprep.subr.mxu0 0.0
    %7685 = vmatpush1.msra.mxu0 0.0
    %7686 = vmatprep.subr.mxu0 0.0
    %7687 = vmatpush1.msra.mxu0 0.0
    %7688 = vmatprep.subr.mxu0 0.0
    %7689 = vmatpush1.msra.mxu0 0.0
    %7690 = vmatprep.subr.mxu0 0.0
    %7691 = vmatpush1.msra.mxu0 0.0
    %7692 = vmatprep.subr.mxu0 0.0
    %7693 = vmatpush1.msra.mxu0 0.0
    %7694 = vmatprep.subr.mxu0 0.0
    %7695 = vmatpush1.msra.mxu0 0.0
    %7696 = vmatprep.subr.mxu0 0.0
    %7697 = vmatpush1.msra.mxu0 0.0
    %7698 = vmatprep.subr.mxu0 0.0
    %7699 = vmatpush1.msra.mxu0 0.0
    %7700 = vmatprep.subr.mxu0 0.0
    %7701 = vmatpush1.msra.mxu0 0.0
    %7702 = vmatprep.subr.mxu0 0.0
    %7703 = vmatpush1.msra.mxu0 0.0
    %7704 = vmatprep.subr.mxu0 0.0
    %7705 = vmatpush1.msra.mxu0 0.0
    %7706 = vmatprep.subr.mxu0 0.0
    %7707 = vmatpush1.msra.mxu0 0.0
    %7708 = vmatprep.subr.mxu0 0.0
    %7709 = vmatpush1.msra.mxu0 0.0
    %7710 = vmatprep.subr.mxu0 0.0
    %7711 = vmatpush1.msra.mxu0 0.0
    %7712 = vmatprep.subr.mxu0 0.0
    %7713 = vmatpush1.msra.mxu0 0.0
    %7714 = vmatprep.subr.mxu0 0.0
    %7715 = vmatpush1.msra.mxu0 0.0
    %7716 = vmatprep.subr.mxu0 0.0
    %7717 = vmatpush1.msra.mxu0 0.0
    %7718 = vmatprep.subr.mxu0 0.0
    %7719 = vmatpush1.msra.mxu0 0.0
    %7720 = vmatprep.subr.mxu0 0.0
    %7721 = vmatpush1.msra.mxu0 0.0
    %7722 = vmatprep.subr.mxu0 0.0
    %7723 = vmatpush1.msra.mxu0 0.0
    %7724 = vmatprep.subr.mxu0 0.0
    %7725 = vmatpush1.msra.mxu0 0.0
    %7726 = vmatprep.subr.mxu0 0.0
    %7727 = vmatpush1.msra.mxu0 0.0
    %7728 = vmatprep.subr.mxu0 0.0
    %7729 = vmatpush1.msra.mxu0 0.0
    %7730 = vmatprep.mubr.f32.mxu0 0.0
    %v7731 = vand.u32 %v7565, 4294901760
    %7732 = vmatmul.mubr.f32.gmra.mrb[0].mxu0 %v7731
    %v7733 = vpop.f32.mrb[0].mxu0
    %v7734 = vadd.f32 %v7643, %v7733
    %v7735 = vpop.f32.mrb[0].mxu0
    %7736 = vdwg.mxu0
    %7737 = vmatprep.subr.mxu0 0.0
    %v7738 = vand.u32 %v7551, 4294901760
    %v7739 = vsub.f32 %v7551, %v7738
    %7740 = vmatpush1.msra.mxu0 %v7739
    %7741 = vmatprep.subr.mxu0 0.0
    %v7742 = vand.u32 %v7552, 4294901760
    %v7743 = vsub.f32 %v7552, %v7742
    %7744 = vmatpush1.msra.mxu0 %v7743
    %7745 = vmatprep.subr.mxu0 0.0
    %v7746 = vand.u32 %v7553, 4294901760
    %v7747 = vsub.f32 %v7553, %v7746
    %7748 = vmatpush1.msra.mxu0 %v7747
    %7749 = vmatprep.subr.mxu0 0.0
    %v7750 = vand.u32 %v7554, 4294901760
    %v7751 = vsub.f32 %v7554, %v7750
    %7752 = vmatpush1.msra.mxu0 %v7751
    %7753 = vmatprep.subr.mxu0 0.0
    %7754 = vmatpush1.msra.mxu0 0.0
    %7755 = vmatprep.subr.mxu0 0.0
    %7756 = vmatpush1.msra.mxu0 0.0
    %7757 = vmatprep.subr.mxu0 0.0
    %7758 = vmatpush1.msra.mxu0 0.0
    %7759 = vmatprep.subr.mxu0 0.0
    %7760 = vmatpush1.msra.mxu0 0.0
    %7761 = vmatprep.subr.mxu0 0.0
    %7762 = vmatpush1.msra.mxu0 0.0
    %7763 = vmatprep.subr.mxu0 0.0
    %7764 = vmatpush1.msra.mxu0 0.0
    %7765 = vmatprep.subr.mxu0 0.0
    %7766 = vmatpush1.msra.mxu0 0.0
    %7767 = vmatprep.subr.mxu0 0.0
    %7768 = vmatpush1.msra.mxu0 0.0
    %7769 = vmatprep.subr.mxu0 0.0
    %7770 = vmatpush1.msra.mxu0 0.0
    %7771 = vmatprep.subr.mxu0 0.0
    %7772 = vmatpush1.msra.mxu0 0.0
    %7773 = vmatprep.subr.mxu0 0.0
    %7774 = vmatpush1.msra.mxu0 0.0
    %7775 = vmatprep.subr.mxu0 0.0
    %7776 = vmatpush1.msra.mxu0 0.0
    %7777 = vmatprep.subr.mxu0 0.0
    %7778 = vmatpush1.msra.mxu0 0.0
    %7779 = vmatprep.subr.mxu0 0.0
    %7780 = vmatpush1.msra.mxu0 0.0
    %7781 = vmatprep.subr.mxu0 0.0
    %7782 = vmatpush1.msra.mxu0 0.0
    %7783 = vmatprep.subr.mxu0 0.0
    %7784 = vmatpush1.msra.mxu0 0.0
    %7785 = vmatprep.subr.mxu0 0.0
    %7786 = vmatpush1.msra.mxu0 0.0
    %7787 = vmatprep.subr.mxu0 0.0
    %7788 = vmatpush1.msra.mxu0 0.0
    %7789 = vmatprep.subr.mxu0 0.0
    %7790 = vmatpush1.msra.mxu0 0.0
    %7791 = vmatprep.subr.mxu0 0.0
    %7792 = vmatpush1.msra.mxu0 0.0
    %7793 = vmatprep.subr.mxu0 0.0
    %7794 = vmatpush1.msra.mxu0 0.0
    %7795 = vmatprep.subr.mxu0 0.0
    %7796 = vmatpush1.msra.mxu0 0.0
    %7797 = vmatprep.subr.mxu0 0.0
    %7798 = vmatpush1.msra.mxu0 0.0
    %7799 = vmatprep.subr.mxu0 0.0
    %7800 = vmatpush1.msra.mxu0 0.0
    %7801 = vmatprep.subr.mxu0 0.0
    %7802 = vmatpush1.msra.mxu0 0.0
    %7803 = vmatprep.subr.mxu0 0.0
    %7804 = vmatpush1.msra.mxu0 0.0
    %7805 = vmatprep.subr.mxu0 0.0
    %7806 = vmatpush1.msra.mxu0 0.0
    %7807 = vmatprep.subr.mxu0 0.0
    %7808 = vmatpush1.msra.mxu0 0.0
    %7809 = vmatprep.mubr.f32.mxu0 0.0
    %v7810 = vand.u32 %v7565, 4294901760
    %v7811 = vsub.f32 %v7565, %v7810
    %7812 = vmatmul.mubr.f32.gmra.mrb[0].mxu0 %v7811
    %v7813 = vpop.f32.mrb[0].mxu0
    %v7814 = vadd.f32 %v7734, %v7813
    %v7815 = vpop.f32.mrb[0].mxu0
    %7816 = vdwg.mxu0
    %7817 = vmatprep.subr.mxu0 0.0
    %v7818 = vand.u32 %v7551, 4294901760
    %7819 = vmatpush1.msra.mxu0 %v7818
    %7820 = vmatprep.subr.mxu0 0.0
    %v7821 = vand.u32 %v7552, 4294901760
    %7822 = vmatpush1.msra.mxu0 %v7821
    %7823 = vmatprep.subr.mxu0 0.0
    %v7824 = vand.u32 %v7553, 4294901760
    %7825 = vmatpush1.msra.mxu0 %v7824
    %7826 = vmatprep.subr.mxu0 0.0
    %v7827 = vand.u32 %v7554, 4294901760
    %7828 = vmatpush1.msra.mxu0 %v7827
    %7829 = vmatprep.subr.mxu0 0.0
    %7830 = vmatpush1.msra.mxu0 0.0
    %7831 = vmatprep.subr.mxu0 0.0
    %7832 = vmatpush1.msra.mxu0 0.0
    %7833 = vmatprep.subr.mxu0 0.0
    %7834 = vmatpush1.msra.mxu0 0.0
    %7835 = vmatprep.subr.mxu0 0.0
    %7836 = vmatpush1.msra.mxu0 0.0
    %7837 = vmatprep.subr.mxu0 0.0
    %7838 = vmatpush1.msra.mxu0 0.0
    %7839 = vmatprep.subr.mxu0 0.0
    %7840 = vmatpush1.msra.mxu0 0.0
    %7841 = vmatprep.subr.mxu0 0.0
    %7842 = vmatpush1.msra.mxu0 0.0
    %7843 = vmatprep.subr.mxu0 0.0
    %7844 = vmatpush1.msra.mxu0 0.0
    %7845 = vmatprep.subr.mxu0 0.0
    %7846 = vmatpush1.msra.mxu0 0.0
    %7847 = vmatprep.subr.mxu0 0.0
    %7848 = vmatpush1.msra.mxu0 0.0
    %7849 = vmatprep.subr.mxu0 0.0
    %7850 = vmatpush1.msra.mxu0 0.0
    %7851 = vmatprep.subr.mxu0 0.0
    %7852 = vmatpush1.msra.mxu0 0.0
    %7853 = vmatprep.subr.mxu0 0.0
    %7854 = vmatpush1.msra.mxu0 0.0
    %7855 = vmatprep.subr.mxu0 0.0
    %7856 = vmatpush1.msra.mxu0 0.0
    %7857 = vmatprep.subr.mxu0 0.0
    %7858 = vmatpush1.msra.mxu0 0.0
    %7859 = vmatprep.subr.mxu0 0.0
    %7860 = vmatpush1.msra.mxu0 0.0
    %7861 = vmatprep.subr.mxu0 0.0
    %7862 = vmatpush1.msra.mxu0 0.0
    %7863 = vmatprep.subr.mxu0 0.0
    %7864 = vmatpush1.msra.mxu0 0.0
    %7865 = vmatprep.subr.mxu0 0.0
    %7866 = vmatpush1.msra.mxu0 0.0
    %7867 = vmatprep.subr.mxu0 0.0
    %7868 = vmatpush1.msra.mxu0 0.0
    %7869 = vmatprep.subr.mxu0 0.0
    %7870 = vmatpush1.msra.mxu0 0.0
    %7871 = vmatprep.subr.mxu0 0.0
    %7872 = vmatpush1.msra.mxu0 0.0
    %7873 = vmatprep.subr.mxu0 0.0
    %7874 = vmatpush1.msra.mxu0 0.0
    %7875 = vmatprep.subr.mxu0 0.0
    %7876 = vmatpush1.msra.mxu0 0.0
    %7877 = vmatprep.subr.mxu0 0.0
    %7878 = vmatpush1.msra.mxu0 0.0
    %7879 = vmatprep.subr.mxu0 0.0
    %7880 = vmatpush1.msra.mxu0 0.0
    %7881 = vmatprep.subr.mxu0 0.0
    %7882 = vmatpush1.msra.mxu0 0.0
    %7883 = vmatprep.subr.mxu0 0.0
    %7884 = vmatpush1.msra.mxu0 0.0
    %7885 = vmatprep.mubr.f32.mxu0 0.0
    %v7886 = vand.u32 %v7565, 4294901760
    %v7887 = vsub.f32 %v7565, %v7886
    %v7888 = vand.u32 %v7887, 4294901760
    %7889 = vmatmul.mubr.f32.gmra.mrb[0].mxu0 %v7888
    %v7890 = vpop.f32.mrb[0].mxu0
    %v7891 = vadd.f32 %v7814, %v7890
    %v7892 = vpop.f32.mrb[0].mxu0
    %7893 = vdwg.mxu0
    %7894 = vmatprep.subr.mxu0 0.0
    %v7895 = vand.u32 %v7551, 4294901760
    %v7896 = vsub.f32 %v7551, %v7895
    %v7897 = vand.u32 %v7896, 4294901760
    %7898 = vmatpush1.msra.mxu0 %v7897
    %7899 = vmatprep.subr.mxu0 0.0
    %v7900 = vand.u32 %v7552, 4294901760
    %v7901 = vsub.f32 %v7552, %v7900
    %v7902 = vand.u32 %v7901, 4294901760
    %7903 = vmatpush1.msra.mxu0 %v7902
    %7904 = vmatprep.subr.mxu0 0.0
    %v7905 = vand.u32 %v7553, 4294901760
    %v7906 = vsub.f32 %v7553, %v7905
    %v7907 = vand.u32 %v7906, 4294901760
    %7908 = vmatpush1.msra.mxu0 %v7907
    %7909 = vmatprep.subr.mxu0 0.0
    %v7910 = vand.u32 %v7554, 4294901760
    %v7911 = vsub.f32 %v7554, %v7910
    %v7912 = vand.u32 %v7911, 4294901760
    %7913 = vmatpush1.msra.mxu0 %v7912
    %7914 = vmatprep.subr.mxu0 0.0
    %7915 = vmatpush1.msra.mxu0 0.0
    %7916 = vmatprep.subr.mxu0 0.0
    %7917 = vmatpush1.msra.mxu0 0.0
    %7918 = vmatprep.subr.mxu0 0.0
    %7919 = vmatpush1.msra.mxu0 0.0
    %7920 = vmatprep.subr.mxu0 0.0
    %7921 = vmatpush1.msra.mxu0 0.0
    %7922 = vmatprep.subr.mxu0 0.0
    %7923 = vmatpush1.msra.mxu0 0.0
    %7924 = vmatprep.subr.mxu0 0.0
    %7925 = vmatpush1.msra.mxu0 0.0
    %7926 = vmatprep.subr.mxu0 0.0
    %7927 = vmatpush1.msra.mxu0 0.0
    %7928 = vmatprep.subr.mxu0 0.0
    %7929 = vmatpush1.msra.mxu0 0.0
    %7930 = vmatprep.subr.mxu0 0.0
    %7931 = vmatpush1.msra.mxu0 0.0
    %7932 = vmatprep.subr.mxu0 0.0
    %7933 = vmatpush1.msra.mxu0 0.0
    %7934 = vmatprep.subr.mxu0 0.0
    %7935 = vmatpush1.msra.mxu0 0.0
    %7936 = vmatprep.subr.mxu0 0.0
    %7937 = vmatpush1.msra.mxu0 0.0
    %7938 = vmatprep.subr.mxu0 0.0
    %7939 = vmatpush1.msra.mxu0 0.0
    %7940 = vmatprep.subr.mxu0 0.0
    %7941 = vmatpush1.msra.mxu0 0.0
    %7942 = vmatprep.subr.mxu0 0.0
    %7943 = vmatpush1.msra.mxu0 0.0
    %7944 = vmatprep.subr.mxu0 0.0
    %7945 = vmatpush1.msra.mxu0 0.0
    %7946 = vmatprep.subr.mxu0 0.0
    %7947 = vmatpush1.msra.mxu0 0.0
    %7948 = vmatprep.subr.mxu0 0.0
    %7949 = vmatpush1.msra.mxu0 0.0
    %7950 = vmatprep.subr.mxu0 0.0
    %7951 = vmatpush1.msra.mxu0 0.0
    %7952 = vmatprep.subr.mxu0 0.0
    %7953 = vmatpush1.msra.mxu0 0.0
    %7954 = vmatprep.subr.mxu0 0.0
    %7955 = vmatpush1.msra.mxu0 0.0
    %7956 = vmatprep.subr.mxu0 0.0
    %7957 = vmatpush1.msra.mxu0 0.0
    %7958 = vmatprep.subr.mxu0 0.0
    %7959 = vmatpush1.msra.mxu0 0.0
    %7960 = vmatprep.subr.mxu0 0.0
    %7961 = vmatpush1.msra.mxu0 0.0
    %7962 = vmatprep.subr.mxu0 0.0
    %7963 = vmatpush1.msra.mxu0 0.0
    %7964 = vmatprep.subr.mxu0 0.0
    %7965 = vmatpush1.msra.mxu0 0.0
    %7966 = vmatprep.subr.mxu0 0.0
    %7967 = vmatpush1.msra.mxu0 0.0
    %7968 = vmatprep.subr.mxu0 0.0
    %7969 = vmatpush1.msra.mxu0 0.0
    %7970 = vmatprep.mubr.f32.mxu0 0.0
    %v7971 = vand.u32 %v7565, 4294901760
    %7972 = vmatmul.mubr.f32.gmra.mrb[0].mxu0 %v7971
    %v7973 = vpop.f32.mrb[0].mxu0
    %v7974 = vadd.f32 %v7891, %v7973
    %v7975 = vpop.f32.mrb[0].mxu0
    %7976 = vdwg.mxu0
    %7977 = vmatprep.subr.mxu0 0.0
    %v7978 = vand.u32 %v7551, 4294901760
    %7979 = vmatpush1.msra.mxu0 %v7978
    %7980 = vmatprep.subr.mxu0 0.0
    %v7981 = vand.u32 %v7552, 4294901760
    %7982 = vmatpush1.msra.mxu0 %v7981
    %7983 = vmatprep.subr.mxu0 0.0
    %v7984 = vand.u32 %v7553, 4294901760
    %7985 = vmatpush1.msra.mxu0 %v7984
    %7986 = vmatprep.subr.mxu0 0.0
    %v7987 = vand.u32 %v7554, 4294901760
    %7988 = vmatpush1.msra.mxu0 %v7987
    %7989 = vmatprep.subr.mxu0 0.0
    %7990 = vmatpush1.msra.mxu0 0.0
    %7991 = vmatprep.subr.mxu0 0.0
    %7992 = vmatpush1.msra.mxu0 0.0
    %7993 = vmatprep.subr.mxu0 0.0
    %7994 = vmatpush1.msra.mxu0 0.0
    %7995 = vmatprep.subr.mxu0 0.0
    %7996 = vmatpush1.msra.mxu0 0.0
    %7997 = vmatprep.subr.mxu0 0.0
    %7998 = vmatpush1.msra.mxu0 0.0
    %7999 = vmatprep.subr.mxu0 0.0
    %8000 = vmatpush1.msra.mxu0 0.0
    %8001 = vmatprep.subr.mxu0 0.0
    %8002 = vmatpush1.msra.mxu0 0.0
    %8003 = vmatprep.subr.mxu0 0.0
    %8004 = vmatpush1.msra.mxu0 0.0
    %8005 = vmatprep.subr.mxu0 0.0
    %8006 = vmatpush1.msra.mxu0 0.0
    %8007 = vmatprep.subr.mxu0 0.0
    %8008 = vmatpush1.msra.mxu0 0.0
    %8009 = vmatprep.subr.mxu0 0.0
    %8010 = vmatpush1.msra.mxu0 0.0
    %8011 = vmatprep.subr.mxu0 0.0
    %8012 = vmatpush1.msra.mxu0 0.0
    %8013 = vmatprep.subr.mxu0 0.0
    %8014 = vmatpush1.msra.mxu0 0.0
    %8015 = vmatprep.subr.mxu0 0.0
    %8016 = vmatpush1.msra.mxu0 0.0
    %8017 = vmatprep.subr.mxu0 0.0
    %8018 = vmatpush1.msra.mxu0 0.0
    %8019 = vmatprep.subr.mxu0 0.0
    %8020 = vmatpush1.msra.mxu0 0.0
    %8021 = vmatprep.subr.mxu0 0.0
    %8022 = vmatpush1.msra.mxu0 0.0
    %8023 = vmatprep.subr.mxu0 0.0
    %8024 = vmatpush1.msra.mxu0 0.0
    %8025 = vmatprep.subr.mxu0 0.0
    %8026 = vmatpush1.msra.mxu0 0.0
    %8027 = vmatprep.subr.mxu0 0.0
    %8028 = vmatpush1.msra.mxu0 0.0
    %8029 = vmatprep.subr.mxu0 0.0
    %8030 = vmatpush1.msra.mxu0 0.0
    %8031 = vmatprep.subr.mxu0 0.0
    %8032 = vmatpush1.msra.mxu0 0.0
    %8033 = vmatprep.subr.mxu0 0.0
    %8034 = vmatpush1.msra.mxu0 0.0
    %8035 = vmatprep.subr.mxu0 0.0
    %8036 = vmatpush1.msra.mxu0 0.0
    %8037 = vmatprep.subr.mxu0 0.0
    %8038 = vmatpush1.msra.mxu0 0.0
    %8039 = vmatprep.subr.mxu0 0.0
    %8040 = vmatpush1.msra.mxu0 0.0
    %8041 = vmatprep.subr.mxu0 0.0
    %8042 = vmatpush1.msra.mxu0 0.0
    %8043 = vmatprep.subr.mxu0 0.0
    %8044 = vmatpush1.msra.mxu0 0.0
    %8045 = vmatprep.mubr.f32.mxu0 0.0
    %v8046 = vand.u32 %v7565, 4294901760
    %8047 = vmatmul.mubr.f32.gmra.mrb[0].mxu0 %v8046
    %v8048 = vpop.f32.mrb[0].mxu0
    %v8049 = vadd.f32 %v7974, %v8048
    %v8050 = vpop.f32.mrb[0].mxu0
    %8051 = vdwg.mxu0
    %v8052 = vadd.f32 %v7560, %v8049
    %v8053 = vxor.u32 %v8052, 2147483648
    %v8054 = vmul.f32 %v8053, 1.442695
    %v8055 = vpow.pop %v8054
    %v8056 = vadd.f32 %v8055, 1.0
    %v8057 = vrcp.pop %v8056
    %v8058 = vmul.f32 1.0, %v8057
    %v8059 = vtanh.pop %v8052
    %v8060 = vmul.f32 %v8058, %v6836
    %8062 = vrot.lane.b32.xlu0 %v8059, 64
    %v8063 = vpop.permute.xlu0 %8062
    %v8065 = vmul.f32 %v8058, %v8063
    %8067 = vrot.lane.b32.xlu0 %v8065, 32
    %v8068 = vpop.permute.xlu0 %8067
    %v8070 = vadd.f32 %v8060, %v8068
    %v8071 = vtanh.pop %v8070
    %8073 = vrot.lane.b32.xlu0 %v8071, 64
    %v8074 = vpop.permute.xlu0 %8073
    %v8076 = vmul.f32 %v8058, %v8074
    %8078 = vrot.lane.b32.xlu0 %v8076, 32
    %v8079 = vpop.permute.xlu0 %8078
    %8081 = vst.msk [vmem:[#allocation2 + $0x5] sm:$0x1] %vm1901, %v8079
    %8082 = vst.msk [vmem:[#allocation2 + $0xc] sm:$0x2] %vm1903, %v8079
    %8083 = vrot.lane.b32.xlu0 %v7550, 32
    %v8084 = vpop.permute.xlu0 %8083
    %v8086 = vrot.slane %v8076, 6
    %8087 = vrot.lane.b32.xlu0 %v8086, 64
    %v8088 = vpop.permute.xlu0 %8087
    %v8090 = vsel %vm671, %v8084, %v8088
    %v8091 = vld [vmem:[#allocation6] sm:$0xff]
    %v8092 = vld [vmem:[#allocation6 + $0x8] sm:$0xff]
    %v8093 = vld [vmem:[#allocation6 + $0x10] sm:$0xff]
    %v8094 = vld [vmem:[#allocation6 + $0x18] sm:$0xff]
    %v8095 = vld [vmem:[#allocation6 + $0x20] sm:$0xff]
    %v8096 = vld [vmem:[#allocation6 + $0x28] sm:$0xff]
    %v8097 = vld [vmem:[#allocation6 + $0x30] sm:$0xff]
    %v8098 = vld [vmem:[#allocation6 + $0x38] sm:$0xff]
    %v8099 = vld [vmem:[#allocation6 + $0x40] sm:$0xff]
    %v8100 = vld [vmem:[#allocation6 + $0x48] sm:$0xff]
    %v8101 = vld [vmem:[#allocation6 + $0x50] sm:$0xff]
    %v8102 = vld [vmem:[#allocation6 + $0x58] sm:$0xff]
    %v8103 = vld [vmem:[#allocation6 + $0x60] sm:$0xff]
    %v8104 = vld [vmem:[#allocation6 + $0x68] sm:$0xff]
    %v8105 = vld [vmem:[#allocation6 + $0x70] sm:$0xff]
    %v8106 = vld [vmem:[#allocation6 + $0x78] sm:$0xff]
    %v8108 = vrot.slane %v8090, 2
    %v8109 = vsel %vm73, %v8108, 0
    %v8111 = vand.u32 %v8092, 4294901760
    %8112 = vmatprep.subr.mxu0 %v8111
    %v8113 = vand.u32 %v8091, 4294901760
    %8114 = vmatpush1.msra.mxu0 %v8113
    %v8115 = vand.u32 %v8094, 4294901760
    %8116 = vmatprep.subr.mxu0 %v8115
    %v8117 = vand.u32 %v8093, 4294901760
    %8118 = vmatpush1.msra.mxu0 %v8117
    %v8119 = vand.u32 %v8096, 4294901760
    %8120 = vmatprep.subr.mxu0 %v8119
    %v8121 = vand.u32 %v8095, 4294901760
    %8122 = vmatpush1.msra.mxu0 %v8121
    %v8123 = vand.u32 %v8098, 4294901760
    %8124 = vmatprep.subr.mxu0 %v8123
    %v8125 = vand.u32 %v8097, 4294901760
    %8126 = vmatpush1.msra.mxu0 %v8125
    %v8127 = vand.u32 %v8100, 4294901760
    %8128 = vmatprep.subr.mxu0 %v8127
    %v8129 = vand.u32 %v8099, 4294901760
    %8130 = vmatpush1.msra.mxu0 %v8129
    %v8131 = vand.u32 %v8102, 4294901760
    %8132 = vmatprep.subr.mxu0 %v8131
    %v8133 = vand.u32 %v8101, 4294901760
    %8134 = vmatpush1.msra.mxu0 %v8133
    %v8135 = vand.u32 %v8104, 4294901760
    %8136 = vmatprep.subr.mxu0 %v8135
    %v8137 = vand.u32 %v8103, 4294901760
    %8138 = vmatpush1.msra.mxu0 %v8137
    %v8139 = vand.u32 %v8106, 4294901760
    %8140 = vmatprep.subr.mxu0 %v8139
    %v8141 = vand.u32 %v8105, 4294901760
    %8142 = vmatpush1.msra.mxu0 %v8141
    %8143 = vmatprep.subr.mxu0 0.0
    %8144 = vmatpush1.msra.mxu0 0.0
    %8145 = vmatprep.subr.mxu0 0.0
    %8146 = vmatpush1.msra.mxu0 0.0
    %8147 = vmatprep.subr.mxu0 0.0
    %8148 = vmatpush1.msra.mxu0 0.0
    %8149 = vmatprep.subr.mxu0 0.0
    %8150 = vmatpush1.msra.mxu0 0.0
    %8151 = vmatprep.subr.mxu0 0.0
    %8152 = vmatpush1.msra.mxu0 0.0
    %8153 = vmatprep.subr.mxu0 0.0
    %8154 = vmatpush1.msra.mxu0 0.0
    %8155 = vmatprep.subr.mxu0 0.0
    %8156 = vmatpush1.msra.mxu0 0.0
    %8157 = vmatprep.subr.mxu0 0.0
    %8158 = vmatpush1.msra.mxu0 0.0
    %8159 = vmatprep.subr.mxu0 0.0
    %8160 = vmatpush1.msra.mxu0 0.0
    %8161 = vmatprep.subr.mxu0 0.0
    %8162 = vmatpush1.msra.mxu0 0.0
    %8163 = vmatprep.subr.mxu0 0.0
    %8164 = vmatpush1.msra.mxu0 0.0
    %8165 = vmatprep.subr.mxu0 0.0
    %8166 = vmatpush1.msra.mxu0 0.0
    %8167 = vmatprep.subr.mxu0 0.0
    %8168 = vmatpush1.msra.mxu0 0.0
    %8169 = vmatprep.subr.mxu0 0.0
    %8170 = vmatpush1.msra.mxu0 0.0
    %8171 = vmatprep.subr.mxu0 0.0
    %8172 = vmatpush1.msra.mxu0 0.0
    %8173 = vmatprep.subr.mxu0 0.0
    %8174 = vmatpush1.msra.mxu0 0.0
    %8175 = vmatprep.subr.mxu0 0.0
    %8176 = vmatpush1.msra.mxu0 0.0
    %8177 = vmatprep.subr.mxu0 0.0
    %8178 = vmatpush1.msra.mxu0 0.0
    %8179 = vmatprep.subr.mxu0 0.0
    %8180 = vmatpush1.msra.mxu0 0.0
    %8181 = vmatprep.subr.mxu0 0.0
    %8182 = vmatpush1.msra.mxu0 0.0
    %8183 = vmatprep.subr.mxu0 0.0
    %8184 = vmatpush1.msra.mxu0 0.0
    %8185 = vmatprep.subr.mxu0 0.0
    %8186 = vmatpush1.msra.mxu0 0.0
    %8187 = vmatprep.subr.mxu0 0.0
    %8188 = vmatpush1.msra.mxu0 0.0
    %8189 = vmatprep.subr.mxu0 0.0
    %8190 = vmatpush1.msra.mxu0 0.0
    %8191 = vmatprep.mubr.f32.mxu0 0.0
    %v8192 = vand.u32 %v8109, 4294901760
    %v8193 = vsub.f32 %v8109, %v8192
    %v8194 = vand.u32 %v8193, 4294901760
    %v8195 = vsub.f32 %v8193, %v8194
    %v8196 = vand.u32 %v8195, 4294901760
    %8197 = vmatmul.mubr.f32.gmra.mrb[0].mxu0 %v8196
    %v8198 = vpop.f32.mrb[0].mxu0
    %v8199 = vadd.f32 0.0, %v8198
    %v8200 = vpop.f32.mrb[0].mxu0
    %v8201 = vadd.f32 0.0, %v8200
    %8202 = vdwg.mxu0
    %v8203 = vand.u32 %v8092, 4294901760
    %v8204 = vsub.f32 %v8092, %v8203
    %v8205 = vand.u32 %v8204, 4294901760
    %v8206 = vsub.f32 %v8204, %v8205
    %v8207 = vand.u32 %v8206, 4294901760
    %8208 = vmatprep.subr.mxu0 %v8207
    %v8209 = vand.u32 %v8091, 4294901760
    %v8210 = vsub.f32 %v8091, %v8209
    %v8211 = vand.u32 %v8210, 4294901760
    %v8212 = vsub.f32 %v8210, %v8211
    %v8213 = vand.u32 %v8212, 4294901760
    %8214 = vmatpush1.msra.mxu0 %v8213
    %v8215 = vand.u32 %v8094, 4294901760
    %v8216 = vsub.f32 %v8094, %v8215
    %v8217 = vand.u32 %v8216, 4294901760
    %v8218 = vsub.f32 %v8216, %v8217
    %v8219 = vand.u32 %v8218, 4294901760
    %8220 = vmatprep.subr.mxu0 %v8219
    %v8221 = vand.u32 %v8093, 4294901760
    %v8222 = vsub.f32 %v8093, %v8221
    %v8223 = vand.u32 %v8222, 4294901760
    %v8224 = vsub.f32 %v8222, %v8223
    %v8225 = vand.u32 %v8224, 4294901760
    %8226 = vmatpush1.msra.mxu0 %v8225
    %v8227 = vand.u32 %v8096, 4294901760
    %v8228 = vsub.f32 %v8096, %v8227
    %v8229 = vand.u32 %v8228, 4294901760
    %v8230 = vsub.f32 %v8228, %v8229
    %v8231 = vand.u32 %v8230, 4294901760
    %8232 = vmatprep.subr.mxu0 %v8231
    %v8233 = vand.u32 %v8095, 4294901760
    %v8234 = vsub.f32 %v8095, %v8233
    %v8235 = vand.u32 %v8234, 4294901760
    %v8236 = vsub.f32 %v8234, %v8235
    %v8237 = vand.u32 %v8236, 4294901760
    %8238 = vmatpush1.msra.mxu0 %v8237
    %v8239 = vand.u32 %v8098, 4294901760
    %v8240 = vsub.f32 %v8098, %v8239
    %v8241 = vand.u32 %v8240, 4294901760
    %v8242 = vsub.f32 %v8240, %v8241
    %v8243 = vand.u32 %v8242, 4294901760
    %8244 = vmatprep.subr.mxu0 %v8243
    %v8245 = vand.u32 %v8097, 4294901760
    %v8246 = vsub.f32 %v8097, %v8245
    %v8247 = vand.u32 %v8246, 4294901760
    %v8248 = vsub.f32 %v8246, %v8247
    %v8249 = vand.u32 %v8248, 4294901760
    %8250 = vmatpush1.msra.mxu0 %v8249
    %v8251 = vand.u32 %v8100, 4294901760
    %v8252 = vsub.f32 %v8100, %v8251
    %v8253 = vand.u32 %v8252, 4294901760
    %v8254 = vsub.f32 %v8252, %v8253
    %v8255 = vand.u32 %v8254, 4294901760
    %8256 = vmatprep.subr.mxu0 %v8255
    %v8257 = vand.u32 %v8099, 4294901760
    %v8258 = vsub.f32 %v8099, %v8257
    %v8259 = vand.u32 %v8258, 4294901760
    %v8260 = vsub.f32 %v8258, %v8259
    %v8261 = vand.u32 %v8260, 4294901760
    %8262 = vmatpush1.msra.mxu0 %v8261
    %v8263 = vand.u32 %v8102, 4294901760
    %v8264 = vsub.f32 %v8102, %v8263
    %v8265 = vand.u32 %v8264, 4294901760
    %v8266 = vsub.f32 %v8264, %v8265
    %v8267 = vand.u32 %v8266, 4294901760
    %8268 = vmatprep.subr.mxu0 %v8267
    %v8269 = vand.u32 %v8101, 4294901760
    %v8270 = vsub.f32 %v8101, %v8269
    %v8271 = vand.u32 %v8270, 4294901760
    %v8272 = vsub.f32 %v8270, %v8271
    %v8273 = vand.u32 %v8272, 4294901760
    %8274 = vmatpush1.msra.mxu0 %v8273
    %v8275 = vand.u32 %v8104, 4294901760
    %v8276 = vsub.f32 %v8104, %v8275
    %v8277 = vand.u32 %v8276, 4294901760
    %v8278 = vsub.f32 %v8276, %v8277
    %v8279 = vand.u32 %v8278, 4294901760
    %8280 = vmatprep.subr.mxu0 %v8279
    %v8281 = vand.u32 %v8103, 4294901760
    %v8282 = vsub.f32 %v8103, %v8281
    %v8283 = vand.u32 %v8282, 4294901760
    %v8284 = vsub.f32 %v8282, %v8283
    %v8285 = vand.u32 %v8284, 4294901760
    %8286 = vmatpush1.msra.mxu0 %v8285
    %v8287 = vand.u32 %v8106, 4294901760
    %v8288 = vsub.f32 %v8106, %v8287
    %v8289 = vand.u32 %v8288, 4294901760
    %v8290 = vsub.f32 %v8288, %v8289
    %v8291 = vand.u32 %v8290, 4294901760
    %8292 = vmatprep.subr.mxu0 %v8291
    %v8293 = vand.u32 %v8105, 4294901760
    %v8294 = vsub.f32 %v8105, %v8293
    %v8295 = vand.u32 %v8294, 4294901760
    %v8296 = vsub.f32 %v8294, %v8295
    %v8297 = vand.u32 %v8296, 4294901760
    %8298 = vmatpush1.msra.mxu0 %v8297
    %8299 = vmatprep.subr.mxu0 0.0
    %8300 = vmatpush1.msra.mxu0 0.0
    %8301 = vmatprep.subr.mxu0 0.0
    %8302 = vmatpush1.msra.mxu0 0.0
    %8303 = vmatprep.subr.mxu0 0.0
    %8304 = vmatpush1.msra.mxu0 0.0
    %8305 = vmatprep.subr.mxu0 0.0
    %8306 = vmatpush1.msra.mxu0 0.0
    %8307 = vmatprep.subr.mxu0 0.0
    %8308 = vmatpush1.msra.mxu0 0.0
    %8309 = vmatprep.subr.mxu0 0.0
    %8310 = vmatpush1.msra.mxu0 0.0
    %8311 = vmatprep.subr.mxu0 0.0
    %8312 = vmatpush1.msra.mxu0 0.0
    %8313 = vmatprep.subr.mxu0 0.0
    %8314 = vmatpush1.msra.mxu0 0.0
    %8315 = vmatprep.subr.mxu0 0.0
    %8316 = vmatpush1.msra.mxu0 0.0
    %8317 = vmatprep.subr.mxu0 0.0
    %8318 = vmatpush1.msra.mxu0 0.0
    %8319 = vmatprep.subr.mxu0 0.0
    %8320 = vmatpush1.msra.mxu0 0.0
    %8321 = vmatprep.subr.mxu0 0.0
    %8322 = vmatpush1.msra.mxu0 0.0
    %8323 = vmatprep.subr.mxu0 0.0
    %8324 = vmatpush1.msra.mxu0 0.0
    %8325 = vmatprep.subr.mxu0 0.0
    %8326 = vmatpush1.msra.mxu0 0.0
    %8327 = vmatprep.subr.mxu0 0.0
    %8328 = vmatpush1.msra.mxu0 0.0
    %8329 = vmatprep.subr.mxu0 0.0
    %8330 = vmatpush1.msra.mxu0 0.0
    %8331 = vmatprep.subr.mxu0 0.0
    %8332 = vmatpush1.msra.mxu0 0.0
    %8333 = vmatprep.subr.mxu0 0.0
    %8334 = vmatpush1.msra.mxu0 0.0
    %8335 = vmatprep.subr.mxu0 0.0
    %8336 = vmatpush1.msra.mxu0 0.0
    %8337 = vmatprep.subr.mxu0 0.0
    %8338 = vmatpush1.msra.mxu0 0.0
    %8339 = vmatprep.subr.mxu0 0.0
    %8340 = vmatpush1.msra.mxu0 0.0
    %8341 = vmatprep.subr.mxu0 0.0
    %8342 = vmatpush1.msra.mxu0 0.0
    %8343 = vmatprep.subr.mxu0 0.0
    %8344 = vmatpush1.msra.mxu0 0.0
    %8345 = vmatprep.subr.mxu0 0.0
    %8346 = vmatpush1.msra.mxu0 0.0
    %8347 = vmatprep.mubr.f32.mxu0 0.0
    %v8348 = vand.u32 %v8109, 4294901760
    %8349 = vmatmul.mubr.f32.gmra.mrb[0].mxu0 %v8348
    %v8350 = vpop.f32.mrb[0].mxu0
    %v8351 = vadd.f32 %v8199, %v8350
    %v8352 = vpop.f32.mrb[0].mxu0
    %v8353 = vadd.f32 %v8201, %v8352
    %8354 = vdwg.mxu0
    %v8355 = vand.u32 %v8092, 4294901760
    %v8356 = vsub.f32 %v8092, %v8355
    %8357 = vmatprep.subr.mxu0 %v8356
    %v8358 = vand.u32 %v8091, 4294901760
    %v8359 = vsub.f32 %v8091, %v8358
    %8360 = vmatpush1.msra.mxu0 %v8359
    %v8361 = vand.u32 %v8094, 4294901760
    %v8362 = vsub.f32 %v8094, %v8361
    %8363 = vmatprep.subr.mxu0 %v8362
    %v8364 = vand.u32 %v8093, 4294901760
    %v8365 = vsub.f32 %v8093, %v8364
    %8366 = vmatpush1.msra.mxu0 %v8365
    %v8367 = vand.u32 %v8096, 4294901760
    %v8368 = vsub.f32 %v8096, %v8367
    %8369 = vmatprep.subr.mxu0 %v8368
    %v8370 = vand.u32 %v8095, 4294901760
    %v8371 = vsub.f32 %v8095, %v8370
    %8372 = vmatpush1.msra.mxu0 %v8371
    %v8373 = vand.u32 %v8098, 4294901760
    %v8374 = vsub.f32 %v8098, %v8373
    %8375 = vmatprep.subr.mxu0 %v8374
    %v8376 = vand.u32 %v8097, 4294901760
    %v8377 = vsub.f32 %v8097, %v8376
    %8378 = vmatpush1.msra.mxu0 %v8377
    %v8379 = vand.u32 %v8100, 4294901760
    %v8380 = vsub.f32 %v8100, %v8379
    %8381 = vmatprep.subr.mxu0 %v8380
    %v8382 = vand.u32 %v8099, 4294901760
    %v8383 = vsub.f32 %v8099, %v8382
    %8384 = vmatpush1.msra.mxu0 %v8383
    %v8385 = vand.u32 %v8102, 4294901760
    %v8386 = vsub.f32 %v8102, %v8385
    %8387 = vmatprep.subr.mxu0 %v8386
    %v8388 = vand.u32 %v8101, 4294901760
    %v8389 = vsub.f32 %v8101, %v8388
    %8390 = vmatpush1.msra.mxu0 %v8389
    %v8391 = vand.u32 %v8104, 4294901760
    %v8392 = vsub.f32 %v8104, %v8391
    %8393 = vmatprep.subr.mxu0 %v8392
    %v8394 = vand.u32 %v8103, 4294901760
    %v8395 = vsub.f32 %v8103, %v8394
    %8396 = vmatpush1.msra.mxu0 %v8395
    %v8397 = vand.u32 %v8106, 4294901760
    %v8398 = vsub.f32 %v8106, %v8397
    %8399 = vmatprep.subr.mxu0 %v8398
    %v8400 = vand.u32 %v8105, 4294901760
    %v8401 = vsub.f32 %v8105, %v8400
    %8402 = vmatpush1.msra.mxu0 %v8401
    %8403 = vmatprep.subr.mxu0 0.0
    %8404 = vmatpush1.msra.mxu0 0.0
    %8405 = vmatprep.subr.mxu0 0.0
    %8406 = vmatpush1.msra.mxu0 0.0
    %8407 = vmatprep.subr.mxu0 0.0
    %8408 = vmatpush1.msra.mxu0 0.0
    %8409 = vmatprep.subr.mxu0 0.0
    %8410 = vmatpush1.msra.mxu0 0.0
    %8411 = vmatprep.subr.mxu0 0.0
    %8412 = vmatpush1.msra.mxu0 0.0
    %8413 = vmatprep.subr.mxu0 0.0
    %8414 = vmatpush1.msra.mxu0 0.0
    %8415 = vmatprep.subr.mxu0 0.0
    %8416 = vmatpush1.msra.mxu0 0.0
    %8417 = vmatprep.subr.mxu0 0.0
    %8418 = vmatpush1.msra.mxu0 0.0
    %8419 = vmatprep.subr.mxu0 0.0
    %8420 = vmatpush1.msra.mxu0 0.0
    %8421 = vmatprep.subr.mxu0 0.0
    %8422 = vmatpush1.msra.mxu0 0.0
    %8423 = vmatprep.subr.mxu0 0.0
    %8424 = vmatpush1.msra.mxu0 0.0
    %8425 = vmatprep.subr.mxu0 0.0
    %8426 = vmatpush1.msra.mxu0 0.0
    %8427 = vmatprep.subr.mxu0 0.0
    %8428 = vmatpush1.msra.mxu0 0.0
    %8429 = vmatprep.subr.mxu0 0.0
    %8430 = vmatpush1.msra.mxu0 0.0
    %8431 = vmatprep.subr.mxu0 0.0
    %8432 = vmatpush1.msra.mxu0 0.0
    %8433 = vmatprep.subr.mxu0 0.0
    %8434 = vmatpush1.msra.mxu0 0.0
    %8435 = vmatprep.subr.mxu0 0.0
    %8436 = vmatpush1.msra.mxu0 0.0
    %8437 = vmatprep.subr.mxu0 0.0
    %8438 = vmatpush1.msra.mxu0 0.0
    %8439 = vmatprep.subr.mxu0 0.0
    %8440 = vmatpush1.msra.mxu0 0.0
    %8441 = vmatprep.subr.mxu0 0.0
    %8442 = vmatpush1.msra.mxu0 0.0
    %8443 = vmatprep.subr.mxu0 0.0
    %8444 = vmatpush1.msra.mxu0 0.0
    %8445 = vmatprep.subr.mxu0 0.0
    %8446 = vmatpush1.msra.mxu0 0.0
    %8447 = vmatprep.subr.mxu0 0.0
    %8448 = vmatpush1.msra.mxu0 0.0
    %8449 = vmatprep.subr.mxu0 0.0
    %8450 = vmatpush1.msra.mxu0 0.0
    %8451 = vmatprep.mubr.f32.mxu0 0.0
    %v8452 = vand.u32 %v8109, 4294901760
    %v8453 = vsub.f32 %v8109, %v8452
    %8454 = vmatmul.mubr.f32.gmra.mrb[0].mxu0 %v8453
    %v8455 = vpop.f32.mrb[0].mxu0
    %v8456 = vadd.f32 %v8351, %v8455
    %v8457 = vpop.f32.mrb[0].mxu0
    %v8458 = vadd.f32 %v8353, %v8457
    %8459 = vdwg.mxu0
    %v8460 = vand.u32 %v8092, 4294901760
    %8461 = vmatprep.subr.mxu0 %v8460
    %v8462 = vand.u32 %v8091, 4294901760
    %8463 = vmatpush1.msra.mxu0 %v8462
    %v8464 = vand.u32 %v8094, 4294901760
    %8465 = vmatprep.subr.mxu0 %v8464
    %v8466 = vand.u32 %v8093, 4294901760
    %8467 = vmatpush1.msra.mxu0 %v8466
    %v8468 = vand.u32 %v8096, 4294901760
    %8469 = vmatprep.subr.mxu0 %v8468
    %v8470 = vand.u32 %v8095, 4294901760
    %8471 = vmatpush1.msra.mxu0 %v8470
    %v8472 = vand.u32 %v8098, 4294901760
    %8473 = vmatprep.subr.mxu0 %v8472
    %v8474 = vand.u32 %v8097, 4294901760
    %8475 = vmatpush1.msra.mxu0 %v8474
    %v8476 = vand.u32 %v8100, 4294901760
    %8477 = vmatprep.subr.mxu0 %v8476
    %v8478 = vand.u32 %v8099, 4294901760
    %8479 = vmatpush1.msra.mxu0 %v8478
    %v8480 = vand.u32 %v8102, 4294901760
    %8481 = vmatprep.subr.mxu0 %v8480
    %v8482 = vand.u32 %v8101, 4294901760
    %8483 = vmatpush1.msra.mxu0 %v8482
    %v8484 = vand.u32 %v8104, 4294901760
    %8485 = vmatprep.subr.mxu0 %v8484
    %v8486 = vand.u32 %v8103, 4294901760
    %8487 = vmatpush1.msra.mxu0 %v8486
    %v8488 = vand.u32 %v8106, 4294901760
    %8489 = vmatprep.subr.mxu0 %v8488
    %v8490 = vand.u32 %v8105, 4294901760
    %8491 = vmatpush1.msra.mxu0 %v8490
    %8492 = vmatprep.subr.mxu0 0.0
    %8493 = vmatpush1.msra.mxu0 0.0
    %8494 = vmatprep.subr.mxu0 0.0
    %8495 = vmatpush1.msra.mxu0 0.0
    %8496 = vmatprep.subr.mxu0 0.0
    %8497 = vmatpush1.msra.mxu0 0.0
    %8498 = vmatprep.subr.mxu0 0.0
    %8499 = vmatpush1.msra.mxu0 0.0
    %8500 = vmatprep.subr.mxu0 0.0
    %8501 = vmatpush1.msra.mxu0 0.0
    %8502 = vmatprep.subr.mxu0 0.0
    %8503 = vmatpush1.msra.mxu0 0.0
    %8504 = vmatprep.subr.mxu0 0.0
    %8505 = vmatpush1.msra.mxu0 0.0
    %8506 = vmatprep.subr.mxu0 0.0
    %8507 = vmatpush1.msra.mxu0 0.0
    %8508 = vmatprep.subr.mxu0 0.0
    %8509 = vmatpush1.msra.mxu0 0.0
    %8510 = vmatprep.subr.mxu0 0.0
    %8511 = vmatpush1.msra.mxu0 0.0
    %8512 = vmatprep.subr.mxu0 0.0
    %8513 = vmatpush1.msra.mxu0 0.0
    %8514 = vmatprep.subr.mxu0 0.0
    %8515 = vmatpush1.msra.mxu0 0.0
    %8516 = vmatprep.subr.mxu0 0.0
    %8517 = vmatpush1.msra.mxu0 0.0
    %8518 = vmatprep.subr.mxu0 0.0
    %8519 = vmatpush1.msra.mxu0 0.0
    %8520 = vmatprep.subr.mxu0 0.0
    %8521 = vmatpush1.msra.mxu0 0.0
    %8522 = vmatprep.subr.mxu0 0.0
    %8523 = vmatpush1.msra.mxu0 0.0
    %8524 = vmatprep.subr.mxu0 0.0
    %8525 = vmatpush1.msra.mxu0 0.0
    %8526 = vmatprep.subr.mxu0 0.0
    %8527 = vmatpush1.msra.mxu0 0.0
    %8528 = vmatprep.subr.mxu0 0.0
    %8529 = vmatpush1.msra.mxu0 0.0
    %8530 = vmatprep.subr.mxu0 0.0
    %8531 = vmatpush1.msra.mxu0 0.0
    %8532 = vmatprep.subr.mxu0 0.0
    %8533 = vmatpush1.msra.mxu0 0.0
    %8534 = vmatprep.subr.mxu0 0.0
    %8535 = vmatpush1.msra.mxu0 0.0
    %8536 = vmatprep.subr.mxu0 0.0
    %8537 = vmatpush1.msra.mxu0 0.0
    %8538 = vmatprep.subr.mxu0 0.0
    %8539 = vmatpush1.msra.mxu0 0.0
    %8540 = vmatprep.mubr.f32.mxu0 0.0
    %v8541 = vand.u32 %v8109, 4294901760
    %v8542 = vsub.f32 %v8109, %v8541
    %v8543 = vand.u32 %v8542, 4294901760
    %8544 = vmatmul.mubr.f32.gmra.mrb[0].mxu0 %v8543
    %v8545 = vpop.f32.mrb[0].mxu0
    %v8546 = vadd.f32 %v8456, %v8545
    %v8547 = vpop.f32.mrb[0].mxu0
    %v8548 = vadd.f32 %v8458, %v8547
    %8549 = vdwg.mxu0
    %v8550 = vand.u32 %v8092, 4294901760
    %v8551 = vsub.f32 %v8092, %v8550
    %v8552 = vand.u32 %v8551, 4294901760
    %8553 = vmatprep.subr.mxu0 %v8552
    %v8554 = vand.u32 %v8091, 4294901760
    %v8555 = vsub.f32 %v8091, %v8554
    %v8556 = vand.u32 %v8555, 4294901760
    %8557 = vmatpush1.msra.mxu0 %v8556
    %v8558 = vand.u32 %v8094, 4294901760
    %v8559 = vsub.f32 %v8094, %v8558
    %v8560 = vand.u32 %v8559, 4294901760
    %8561 = vmatprep.subr.mxu0 %v8560
    %v8562 = vand.u32 %v8093, 4294901760
    %v8563 = vsub.f32 %v8093, %v8562
    %v8564 = vand.u32 %v8563, 4294901760
    %8565 = vmatpush1.msra.mxu0 %v8564
    %v8566 = vand.u32 %v8096, 4294901760
    %v8567 = vsub.f32 %v8096, %v8566
    %v8568 = vand.u32 %v8567, 4294901760
    %8569 = vmatprep.subr.mxu0 %v8568
    %v8570 = vand.u32 %v8095, 4294901760
    %v8571 = vsub.f32 %v8095, %v8570
    %v8572 = vand.u32 %v8571, 4294901760
    %8573 = vmatpush1.msra.mxu0 %v8572
    %v8574 = vand.u32 %v8098, 4294901760
    %v8575 = vsub.f32 %v8098, %v8574
    %v8576 = vand.u32 %v8575, 4294901760
    %8577 = vmatprep.subr.mxu0 %v8576
    %v8578 = vand.u32 %v8097, 4294901760
    %v8579 = vsub.f32 %v8097, %v8578
    %v8580 = vand.u32 %v8579, 4294901760
    %8581 = vmatpush1.msra.mxu0 %v8580
    %v8582 = vand.u32 %v8100, 4294901760
    %v8583 = vsub.f32 %v8100, %v8582
    %v8584 = vand.u32 %v8583, 4294901760
    %8585 = vmatprep.subr.mxu0 %v8584
    %v8586 = vand.u32 %v8099, 4294901760
    %v8587 = vsub.f32 %v8099, %v8586
    %v8588 = vand.u32 %v8587, 4294901760
    %8589 = vmatpush1.msra.mxu0 %v8588
    %v8590 = vand.u32 %v8102, 4294901760
    %v8591 = vsub.f32 %v8102, %v8590
    %v8592 = vand.u32 %v8591, 4294901760
    %8593 = vmatprep.subr.mxu0 %v8592
    %v8594 = vand.u32 %v8101, 4294901760
    %v8595 = vsub.f32 %v8101, %v8594
    %v8596 = vand.u32 %v8595, 4294901760
    %8597 = vmatpush1.msra.mxu0 %v8596
    %v8598 = vand.u32 %v8104, 4294901760
    %v8599 = vsub.f32 %v8104, %v8598
    %v8600 = vand.u32 %v8599, 4294901760
    %8601 = vmatprep.subr.mxu0 %v8600
    %v8602 = vand.u32 %v8103, 4294901760
    %v8603 = vsub.f32 %v8103, %v8602
    %v8604 = vand.u32 %v8603, 4294901760
    %8605 = vmatpush1.msra.mxu0 %v8604
    %v8606 = vand.u32 %v8106, 4294901760
    %v8607 = vsub.f32 %v8106, %v8606
    %v8608 = vand.u32 %v8607, 4294901760
    %8609 = vmatprep.subr.mxu0 %v8608
    %v8610 = vand.u32 %v8105, 4294901760
    %v8611 = vsub.f32 %v8105, %v8610
    %v8612 = vand.u32 %v8611, 4294901760
    %8613 = vmatpush1.msra.mxu0 %v8612
    %8614 = vmatprep.subr.mxu0 0.0
    %8615 = vmatpush1.msra.mxu0 0.0
    %8616 = vmatprep.subr.mxu0 0.0
    %8617 = vmatpush1.msra.mxu0 0.0
    %8618 = vmatprep.subr.mxu0 0.0
    %8619 = vmatpush1.msra.mxu0 0.0
    %8620 = vmatprep.subr.mxu0 0.0
    %8621 = vmatpush1.msra.mxu0 0.0
    %8622 = vmatprep.subr.mxu0 0.0
    %8623 = vmatpush1.msra.mxu0 0.0
    %8624 = vmatprep.subr.mxu0 0.0
    %8625 = vmatpush1.msra.mxu0 0.0
    %8626 = vmatprep.subr.mxu0 0.0
    %8627 = vmatpush1.msra.mxu0 0.0
    %8628 = vmatprep.subr.mxu0 0.0
    %8629 = vmatpush1.msra.mxu0 0.0
    %8630 = vmatprep.subr.mxu0 0.0
    %8631 = vmatpush1.msra.mxu0 0.0
    %8632 = vmatprep.subr.mxu0 0.0
    %8633 = vmatpush1.msra.mxu0 0.0
    %8634 = vmatprep.subr.mxu0 0.0
    %8635 = vmatpush1.msra.mxu0 0.0
    %8636 = vmatprep.subr.mxu0 0.0
    %8637 = vmatpush1.msra.mxu0 0.0
    %8638 = vmatprep.subr.mxu0 0.0
    %8639 = vmatpush1.msra.mxu0 0.0
    %8640 = vmatprep.subr.mxu0 0.0
    %8641 = vmatpush1.msra.mxu0 0.0
    %8642 = vmatprep.subr.mxu0 0.0
    %8643 = vmatpush1.msra.mxu0 0.0
    %8644 = vmatprep.subr.mxu0 0.0
    %8645 = vmatpush1.msra.mxu0 0.0
    %8646 = vmatprep.subr.mxu0 0.0
    %8647 = vmatpush1.msra.mxu0 0.0
    %8648 = vmatprep.subr.mxu0 0.0
    %8649 = vmatpush1.msra.mxu0 0.0
    %8650 = vmatprep.subr.mxu0 0.0
    %8651 = vmatpush1.msra.mxu0 0.0
    %8652 = vmatprep.subr.mxu0 0.0
    %8653 = vmatpush1.msra.mxu0 0.0
    %8654 = vmatprep.subr.mxu0 0.0
    %8655 = vmatpush1.msra.mxu0 0.0
    %8656 = vmatprep.subr.mxu0 0.0
    %8657 = vmatpush1.msra.mxu0 0.0
    %8658 = vmatprep.subr.mxu0 0.0
    %8659 = vmatpush1.msra.mxu0 0.0
    %8660 = vmatprep.subr.mxu0 0.0
    %8661 = vmatpush1.msra.mxu0 0.0
    %8662 = vmatprep.mubr.f32.mxu0 0.0
    %v8663 = vand.u32 %v8109, 4294901760
    %8664 = vmatmul.mubr.f32.gmra.mrb[0].mxu0 %v8663
    %v8665 = vpop.f32.mrb[0].mxu0
    %v8666 = vadd.f32 %v8546, %v8665
    %v8667 = vpop.f32.mrb[0].mxu0
    %v8668 = vadd.f32 %v8548, %v8667
    %8669 = vdwg.mxu0
    %v8670 = vand.u32 %v8092, 4294901760
    %8671 = vmatprep.subr.mxu0 %v8670
    %v8672 = vand.u32 %v8091, 4294901760
    %8673 = vmatpush1.msra.mxu0 %v8672
    %v8674 = vand.u32 %v8094, 4294901760
    %8675 = vmatprep.subr.mxu0 %v8674
    %v8676 = vand.u32 %v8093, 4294901760
    %8677 = vmatpush1.msra.mxu0 %v8676
    %v8678 = vand.u32 %v8096, 4294901760
    %8679 = vmatprep.subr.mxu0 %v8678
    %v8680 = vand.u32 %v8095, 4294901760
    %8681 = vmatpush1.msra.mxu0 %v8680
    %v8682 = vand.u32 %v8098, 4294901760
    %8683 = vmatprep.subr.mxu0 %v8682
    %v8684 = vand.u32 %v8097, 4294901760
    %8685 = vmatpush1.msra.mxu0 %v8684
    %v8686 = vand.u32 %v8100, 4294901760
    %8687 = vmatprep.subr.mxu0 %v8686
    %v8688 = vand.u32 %v8099, 4294901760
    %8689 = vmatpush1.msra.mxu0 %v8688
    %v8690 = vand.u32 %v8102, 4294901760
    %8691 = vmatprep.subr.mxu0 %v8690
    %v8692 = vand.u32 %v8101, 4294901760
    %8693 = vmatpush1.msra.mxu0 %v8692
    %v8694 = vand.u32 %v8104, 4294901760
    %8695 = vmatprep.subr.mxu0 %v8694
    %v8696 = vand.u32 %v8103, 4294901760
    %8697 = vmatpush1.msra.mxu0 %v8696
    %v8698 = vand.u32 %v8106, 4294901760
    %8699 = vmatprep.subr.mxu0 %v8698
    %v8700 = vand.u32 %v8105, 4294901760
    %8701 = vmatpush1.msra.mxu0 %v8700
    %8702 = vmatprep.subr.mxu0 0.0
    %8703 = vmatpush1.msra.mxu0 0.0
    %8704 = vmatprep.subr.mxu0 0.0
    %8705 = vmatpush1.msra.mxu0 0.0
    %8706 = vmatprep.subr.mxu0 0.0
    %8707 = vmatpush1.msra.mxu0 0.0
    %8708 = vmatprep.subr.mxu0 0.0
    %8709 = vmatpush1.msra.mxu0 0.0
    %8710 = vmatprep.subr.mxu0 0.0
    %8711 = vmatpush1.msra.mxu0 0.0
    %8712 = vmatprep.subr.mxu0 0.0
    %8713 = vmatpush1.msra.mxu0 0.0
    %8714 = vmatprep.subr.mxu0 0.0
    %8715 = vmatpush1.msra.mxu0 0.0
    %8716 = vmatprep.subr.mxu0 0.0
    %8717 = vmatpush1.msra.mxu0 0.0
    %8718 = vmatprep.subr.mxu0 0.0
    %8719 = vmatpush1.msra.mxu0 0.0
    %8720 = vmatprep.subr.mxu0 0.0
    %8721 = vmatpush1.msra.mxu0 0.0
    %8722 = vmatprep.subr.mxu0 0.0
    %8723 = vmatpush1.msra.mxu0 0.0
    %8724 = vmatprep.subr.mxu0 0.0
    %8725 = vmatpush1.msra.mxu0 0.0
    %8726 = vmatprep.subr.mxu0 0.0
    %8727 = vmatpush1.msra.mxu0 0.0
    %8728 = vmatprep.subr.mxu0 0.0
    %8729 = vmatpush1.msra.mxu0 0.0
    %8730 = vmatprep.subr.mxu0 0.0
    %8731 = vmatpush1.msra.mxu0 0.0
    %8732 = vmatprep.subr.mxu0 0.0
    %8733 = vmatpush1.msra.mxu0 0.0
    %8734 = vmatprep.subr.mxu0 0.0
    %8735 = vmatpush1.msra.mxu0 0.0
    %8736 = vmatprep.subr.mxu0 0.0
    %8737 = vmatpush1.msra.mxu0 0.0
    %8738 = vmatprep.subr.mxu0 0.0
    %8739 = vmatpush1.msra.mxu0 0.0
    %8740 = vmatprep.subr.mxu0 0.0
    %8741 = vmatpush1.msra.mxu0 0.0
    %8742 = vmatprep.subr.mxu0 0.0
    %8743 = vmatpush1.msra.mxu0 0.0
    %8744 = vmatprep.subr.mxu0 0.0
    %8745 = vmatpush1.msra.mxu0 0.0
    %8746 = vmatprep.subr.mxu0 0.0
    %8747 = vmatpush1.msra.mxu0 0.0
    %8748 = vmatprep.subr.mxu0 0.0
    %8749 = vmatpush1.msra.mxu0 0.0
    %8750 = vmatprep.mubr.f32.mxu0 0.0
    %v8751 = vand.u32 %v8109, 4294901760
    %8752 = vmatmul.mubr.f32.gmra.mrb[0].mxu0 %v8751
    %v8753 = vpop.f32.mrb[0].mxu0
    %v8754 = vadd.f32 %v8666, %v8753
    %v8755 = vpop.f32.mrb[0].mxu0
    %v8756 = vadd.f32 %v8668, %v8755
    %8757 = vdwg.mxu0
    %v8759 = vrot.slane %v8754, 4
    %v8761 = vadd.f32 %v657, %v8759
    %v8762 = vxor.u32 %v8761, 2147483648
    %v8763 = vmul.f32 %v8762, 1.442695
    %v8764 = vpow.pop %v8763
    %v8765 = vadd.f32 %v8764, 1.0
    %v8766 = vrcp.pop %v8765
    %v8767 = vmul.f32 1.0, %v8766
    %v8768 = vtanh.pop %v8761
    %v8770 = vrot.slane %v7544, 6
    %v8772 = vmul.f32 %v8767, %v8770
    %8774 = vrot.lane.b32.xlu0 %v8768, 64
    %v8775 = vpop.permute.xlu0 %8774
    %v8777 = vmul.f32 %v8767, %v8775
    %8779 = vrot.lane.b32.xlu0 %v8777, 32
    %v8780 = vpop.permute.xlu0 %8779
    %v8782 = vadd.f32 %v8772, %v8780
    %v8783 = vtanh.pop %v8782
    %8785 = vrot.lane.b32.xlu0 %v8783, 64
    %v8786 = vpop.permute.xlu0 %8785
    %v8788 = vmul.f32 %v8767, %v8786
    %v8789 = vld [vmem:[#allocation3 + $0x40] sm:$0xff]
    %v8790 = vld [vmem:[#allocation3 + $0x48] sm:$0xff]
    %v8791 = vld [vmem:[#allocation3 + $0x50] sm:$0xff]
    %v8792 = vld [vmem:[#allocation3 + $0x58] sm:$0xff]
    %v8793 = vld [vmem:[#allocation3 + $0x80] sm:$0x1]
    %v8794 = vlaneseq
    %v8795 = vshrl.u32 %v8794, 7
    %v8796 = vsub.s32 0, %v8795
    %v8797 = vrot.slane %v8793, %v8796
    %v8798 = vadd.f32 %v8756, %v8797
    %v8800 = vrot.slane %v8788, 4
    %8801 = vrot.lane.b32.xlu0 %v8800, 32
    %v8802 = vpop.permute.xlu0 %8801
    %v8803 = vsel %vm671, %v8802, 0
    %8805 = vmatprep.subr.mxu0 0.0
    %v8806 = vand.u32 %v8789, 4294901760
    %8807 = vmatpush1.msra.mxu0 %v8806
    %8808 = vmatprep.subr.mxu0 0.0
    %v8809 = vand.u32 %v8790, 4294901760
    %8810 = vmatpush1.msra.mxu0 %v8809
    %8811 = vmatprep.subr.mxu0 0.0
    %v8812 = vand.u32 %v8791, 4294901760
    %8813 = vmatpush1.msra.mxu0 %v8812
    %8814 = vmatprep.subr.mxu0 0.0
    %v8815 = vand.u32 %v8792, 4294901760
    %8816 = vmatpush1.msra.mxu0 %v8815
    %8817 = vmatprep.subr.mxu0 0.0
    %8818 = vmatpush1.msra.mxu0 0.0
    %8819 = vmatprep.subr.mxu0 0.0
    %8820 = vmatpush1.msra.mxu0 0.0
    %8821 = vmatprep.subr.mxu0 0.0
    %8822 = vmatpush1.msra.mxu0 0.0
    %8823 = vmatprep.subr.mxu0 0.0
    %8824 = vmatpush1.msra.mxu0 0.0
    %8825 = vmatprep.subr.mxu0 0.0
    %8826 = vmatpush1.msra.mxu0 0.0
    %8827 = vmatprep.subr.mxu0 0.0
    %8828 = vmatpush1.msra.mxu0 0.0
    %8829 = vmatprep.subr.mxu0 0.0
    %8830 = vmatpush1.msra.mxu0 0.0
    %8831 = vmatprep.subr.mxu0 0.0
    %8832 = vmatpush1.msra.mxu0 0.0
    %8833 = vmatprep.subr.mxu0 0.0
    %8834 = vmatpush1.msra.mxu0 0.0
    %8835 = vmatprep.subr.mxu0 0.0
    %8836 = vmatpush1.msra.mxu0 0.0
    %8837 = vmatprep.subr.mxu0 0.0
    %8838 = vmatpush1.msra.mxu0 0.0
    %8839 = vmatprep.subr.mxu0 0.0
    %8840 = vmatpush1.msra.mxu0 0.0
    %8841 = vmatprep.subr.mxu0 0.0
    %8842 = vmatpush1.msra.mxu0 0.0
    %8843 = vmatprep.subr.mxu0 0.0
    %8844 = vmatpush1.msra.mxu0 0.0
    %8845 = vmatprep.subr.mxu0 0.0
    %8846 = vmatpush1.msra.mxu0 0.0
    %8847 = vmatprep.subr.mxu0 0.0
    %8848 = vmatpush1.msra.mxu0 0.0
    %8849 = vmatprep.subr.mxu0 0.0
    %8850 = vmatpush1.msra.mxu0 0.0
    %8851 = vmatprep.subr.mxu0 0.0
    %8852 = vmatpush1.msra.mxu0 0.0
    %8853 = vmatprep.subr.mxu0 0.0
    %8854 = vmatpush1.msra.mxu0 0.0
    %8855 = vmatprep.subr.mxu0 0.0
    %8856 = vmatpush1.msra.mxu0 0.0
    %8857 = vmatprep.subr.mxu0 0.0
    %8858 = vmatpush1.msra.mxu0 0.0
    %8859 = vmatprep.subr.mxu0 0.0
    %8860 = vmatpush1.msra.mxu0 0.0
    %8861 = vmatprep.subr.mxu0 0.0
    %8862 = vmatpush1.msra.mxu0 0.0
    %8863 = vmatprep.subr.mxu0 0.0
    %8864 = vmatpush1.msra.mxu0 0.0
    %8865 = vmatprep.subr.mxu0 0.0
    %8866 = vmatpush1.msra.mxu0 0.0
    %8867 = vmatprep.subr.mxu0 0.0
    %8868 = vmatpush1.msra.mxu0 0.0
    %8869 = vmatprep.subr.mxu0 0.0
    %8870 = vmatpush1.msra.mxu0 0.0
    %8871 = vmatprep.subr.mxu0 0.0
    %8872 = vmatpush1.msra.mxu0 0.0
    %8873 = vmatprep.mubr.f32.mxu0 0.0
    %v8874 = vand.u32 %v8803, 4294901760
    %v8875 = vsub.f32 %v8803, %v8874
    %v8876 = vand.u32 %v8875, 4294901760
    %v8877 = vsub.f32 %v8875, %v8876
    %v8878 = vand.u32 %v8877, 4294901760
    %8879 = vmatmul.mubr.f32.gmra.mrb[0].mxu0 %v8878
    %v8880 = vpop.f32.mrb[0].mxu0
    %v8881 = vadd.f32 0.0, %v8880
    %v8882 = vpop.f32.mrb[0].mxu0
    %8883 = vdwg.mxu0
    %8884 = vmatprep.subr.mxu0 0.0
    %v8885 = vand.u32 %v8789, 4294901760
    %v8886 = vsub.f32 %v8789, %v8885
    %v8887 = vand.u32 %v8886, 4294901760
    %v8888 = vsub.f32 %v8886, %v8887
    %v8889 = vand.u32 %v8888, 4294901760
    %8890 = vmatpush1.msra.mxu0 %v8889
    %8891 = vmatprep.subr.mxu0 0.0
    %v8892 = vand.u32 %v8790, 4294901760
    %v8893 = vsub.f32 %v8790, %v8892
    %v8894 = vand.u32 %v8893, 4294901760
    %v8895 = vsub.f32 %v8893, %v8894
    %v8896 = vand.u32 %v8895, 4294901760
    %8897 = vmatpush1.msra.mxu0 %v8896
    %8898 = vmatprep.subr.mxu0 0.0
    %v8899 = vand.u32 %v8791, 4294901760
    %v8900 = vsub.f32 %v8791, %v8899
    %v8901 = vand.u32 %v8900, 4294901760
    %v8902 = vsub.f32 %v8900, %v8901
    %v8903 = vand.u32 %v8902, 4294901760
    %8904 = vmatpush1.msra.mxu0 %v8903
    %8905 = vmatprep.subr.mxu0 0.0
    %v8906 = vand.u32 %v8792, 4294901760
    %v8907 = vsub.f32 %v8792, %v8906
    %v8908 = vand.u32 %v8907, 4294901760
    %v8909 = vsub.f32 %v8907, %v8908
    %v8910 = vand.u32 %v8909, 4294901760
    %8911 = vmatpush1.msra.mxu0 %v8910
    %8912 = vmatprep.subr.mxu0 0.0
    %8913 = vmatpush1.msra.mxu0 0.0
    %8914 = vmatprep.subr.mxu0 0.0
    %8915 = vmatpush1.msra.mxu0 0.0
    %8916 = vmatprep.subr.mxu0 0.0
    %8917 = vmatpush1.msra.mxu0 0.0
    %8918 = vmatprep.subr.mxu0 0.0
    %8919 = vmatpush1.msra.mxu0 0.0
    %8920 = vmatprep.subr.mxu0 0.0
    %8921 = vmatpush1.msra.mxu0 0.0
    %8922 = vmatprep.subr.mxu0 0.0
    %8923 = vmatpush1.msra.mxu0 0.0
    %8924 = vmatprep.subr.mxu0 0.0
    %8925 = vmatpush1.msra.mxu0 0.0
    %8926 = vmatprep.subr.mxu0 0.0
    %8927 = vmatpush1.msra.mxu0 0.0
    %8928 = vmatprep.subr.mxu0 0.0
    %8929 = vmatpush1.msra.mxu0 0.0
    %8930 = vmatprep.subr.mxu0 0.0
    %8931 = vmatpush1.msra.mxu0 0.0
    %8932 = vmatprep.subr.mxu0 0.0
    %8933 = vmatpush1.msra.mxu0 0.0
    %8934 = vmatprep.subr.mxu0 0.0
    %8935 = vmatpush1.msra.mxu0 0.0
    %8936 = vmatprep.subr.mxu0 0.0
    %8937 = vmatpush1.msra.mxu0 0.0
    %8938 = vmatprep.subr.mxu0 0.0
    %8939 = vmatpush1.msra.mxu0 0.0
    %8940 = vmatprep.subr.mxu0 0.0
    %8941 = vmatpush1.msra.mxu0 0.0
    %8942 = vmatprep.subr.mxu0 0.0
    %8943 = vmatpush1.msra.mxu0 0.0
    %8944 = vmatprep.subr.mxu0 0.0
    %8945 = vmatpush1.msra.mxu0 0.0
    %8946 = vmatprep.subr.mxu0 0.0
    %8947 = vmatpush1.msra.mxu0 0.0
    %8948 = vmatprep.subr.mxu0 0.0
    %8949 = vmatpush1.msra.mxu0 0.0
    %8950 = vmatprep.subr.mxu0 0.0
    %8951 = vmatpush1.msra.mxu0 0.0
    %8952 = vmatprep.subr.mxu0 0.0
    %8953 = vmatpush1.msra.mxu0 0.0
    %8954 = vmatprep.subr.mxu0 0.0
    %8955 = vmatpush1.msra.mxu0 0.0
    %8956 = vmatprep.subr.mxu0 0.0
    %8957 = vmatpush1.msra.mxu0 0.0
    %8958 = vmatprep.subr.mxu0 0.0
    %8959 = vmatpush1.msra.mxu0 0.0
    %8960 = vmatprep.subr.mxu0 0.0
    %8961 = vmatpush1.msra.mxu0 0.0
    %8962 = vmatprep.subr.mxu0 0.0
    %8963 = vmatpush1.msra.mxu0 0.0
    %8964 = vmatprep.subr.mxu0 0.0
    %8965 = vmatpush1.msra.mxu0 0.0
    %8966 = vmatprep.subr.mxu0 0.0
    %8967 = vmatpush1.msra.mxu0 0.0
    %8968 = vmatprep.mubr.f32.mxu0 0.0
    %v8969 = vand.u32 %v8803, 4294901760
    %8970 = vmatmul.mubr.f32.gmra.mrb[0].mxu0 %v8969
    %v8971 = vpop.f32.mrb[0].mxu0
    %v8972 = vadd.f32 %v8881, %v8971
    %v8973 = vpop.f32.mrb[0].mxu0
    %8974 = vdwg.mxu0
    %8975 = vmatprep.subr.mxu0 0.0
    %v8976 = vand.u32 %v8789, 4294901760
    %v8977 = vsub.f32 %v8789, %v8976
    %8978 = vmatpush1.msra.mxu0 %v8977
    %8979 = vmatprep.subr.mxu0 0.0
    %v8980 = vand.u32 %v8790, 4294901760
    %v8981 = vsub.f32 %v8790, %v8980
    %8982 = vmatpush1.msra.mxu0 %v8981
    %8983 = vmatprep.subr.mxu0 0.0
    %v8984 = vand.u32 %v8791, 4294901760
    %v8985 = vsub.f32 %v8791, %v8984
    %8986 = vmatpush1.msra.mxu0 %v8985
    %8987 = vmatprep.subr.mxu0 0.0
    %v8988 = vand.u32 %v8792, 4294901760
    %v8989 = vsub.f32 %v8792, %v8988
    %8990 = vmatpush1.msra.mxu0 %v8989
    %8991 = vmatprep.subr.mxu0 0.0
    %8992 = vmatpush1.msra.mxu0 0.0
    %8993 = vmatprep.subr.mxu0 0.0
    %8994 = vmatpush1.msra.mxu0 0.0
    %8995 = vmatprep.subr.mxu0 0.0
    %8996 = vmatpush1.msra.mxu0 0.0
    %8997 = vmatprep.subr.mxu0 0.0
    %8998 = vmatpush1.msra.mxu0 0.0
    %8999 = vmatprep.subr.mxu0 0.0
    %9000 = vmatpush1.msra.mxu0 0.0
    %9001 = vmatprep.subr.mxu0 0.0
    %9002 = vmatpush1.msra.mxu0 0.0
    %9003 = vmatprep.subr.mxu0 0.0
    %9004 = vmatpush1.msra.mxu0 0.0
    %9005 = vmatprep.subr.mxu0 0.0
    %9006 = vmatpush1.msra.mxu0 0.0
    %9007 = vmatprep.subr.mxu0 0.0
    %9008 = vmatpush1.msra.mxu0 0.0
    %9009 = vmatprep.subr.mxu0 0.0
    %9010 = vmatpush1.msra.mxu0 0.0
    %9011 = vmatprep.subr.mxu0 0.0
    %9012 = vmatpush1.msra.mxu0 0.0
    %9013 = vmatprep.subr.mxu0 0.0
    %9014 = vmatpush1.msra.mxu0 0.0
    %9015 = vmatprep.subr.mxu0 0.0
    %9016 = vmatpush1.msra.mxu0 0.0
    %9017 = vmatprep.subr.mxu0 0.0
    %9018 = vmatpush1.msra.mxu0 0.0
    %9019 = vmatprep.subr.mxu0 0.0
    %9020 = vmatpush1.msra.mxu0 0.0
    %9021 = vmatprep.subr.mxu0 0.0
    %9022 = vmatpush1.msra.mxu0 0.0
    %9023 = vmatprep.subr.mxu0 0.0
    %9024 = vmatpush1.msra.mxu0 0.0
    %9025 = vmatprep.subr.mxu0 0.0
    %9026 = vmatpush1.msra.mxu0 0.0
    %9027 = vmatprep.subr.mxu0 0.0
    %9028 = vmatpush1.msra.mxu0 0.0
    %9029 = vmatprep.subr.mxu0 0.0
    %9030 = vmatpush1.msra.mxu0 0.0
    %9031 = vmatprep.subr.mxu0 0.0
    %9032 = vmatpush1.msra.mxu0 0.0
    %9033 = vmatprep.subr.mxu0 0.0
    %9034 = vmatpush1.msra.mxu0 0.0
    %9035 = vmatprep.subr.mxu0 0.0
    %9036 = vmatpush1.msra.mxu0 0.0
    %9037 = vmatprep.subr.mxu0 0.0
    %9038 = vmatpush1.msra.mxu0 0.0
    %9039 = vmatprep.subr.mxu0 0.0
    %9040 = vmatpush1.msra.mxu0 0.0
    %9041 = vmatprep.subr.mxu0 0.0
    %9042 = vmatpush1.msra.mxu0 0.0
    %9043 = vmatprep.subr.mxu0 0.0
    %9044 = vmatpush1.msra.mxu0 0.0
    %9045 = vmatprep.subr.mxu0 0.0
    %9046 = vmatpush1.msra.mxu0 0.0
    %9047 = vmatprep.mubr.f32.mxu0 0.0
    %v9048 = vand.u32 %v8803, 4294901760
    %v9049 = vsub.f32 %v8803, %v9048
    %9050 = vmatmul.mubr.f32.gmra.mrb[0].mxu0 %v9049
    %v9051 = vpop.f32.mrb[0].mxu0
    %v9052 = vadd.f32 %v8972, %v9051
    %v9053 = vpop.f32.mrb[0].mxu0
    %9054 = vdwg.mxu0
    %9055 = vmatprep.subr.mxu0 0.0
    %v9056 = vand.u32 %v8789, 4294901760
    %9057 = vmatpush1.msra.mxu0 %v9056
    %9058 = vmatprep.subr.mxu0 0.0
    %v9059 = vand.u32 %v8790, 4294901760
    %9060 = vmatpush1.msra.mxu0 %v9059
    %9061 = vmatprep.subr.mxu0 0.0
    %v9062 = vand.u32 %v8791, 4294901760
    %9063 = vmatpush1.msra.mxu0 %v9062
    %9064 = vmatprep.subr.mxu0 0.0
    %v9065 = vand.u32 %v8792, 4294901760
    %9066 = vmatpush1.msra.mxu0 %v9065
    %9067 = vmatprep.subr.mxu0 0.0
    %9068 = vmatpush1.msra.mxu0 0.0
    %9069 = vmatprep.subr.mxu0 0.0
    %9070 = vmatpush1.msra.mxu0 0.0
    %9071 = vmatprep.subr.mxu0 0.0
    %9072 = vmatpush1.msra.mxu0 0.0
    %9073 = vmatprep.subr.mxu0 0.0
    %9074 = vmatpush1.msra.mxu0 0.0
    %9075 = vmatprep.subr.mxu0 0.0
    %9076 = vmatpush1.msra.mxu0 0.0
    %9077 = vmatprep.subr.mxu0 0.0
    %9078 = vmatpush1.msra.mxu0 0.0
    %9079 = vmatprep.subr.mxu0 0.0
    %9080 = vmatpush1.msra.mxu0 0.0
    %9081 = vmatprep.subr.mxu0 0.0
    %9082 = vmatpush1.msra.mxu0 0.0
    %9083 = vmatprep.subr.mxu0 0.0
    %9084 = vmatpush1.msra.mxu0 0.0
    %9085 = vmatprep.subr.mxu0 0.0
    %9086 = vmatpush1.msra.mxu0 0.0
    %9087 = vmatprep.subr.mxu0 0.0
    %9088 = vmatpush1.msra.mxu0 0.0
    %9089 = vmatprep.subr.mxu0 0.0
    %9090 = vmatpush1.msra.mxu0 0.0
    %9091 = vmatprep.subr.mxu0 0.0
    %9092 = vmatpush1.msra.mxu0 0.0
    %9093 = vmatprep.subr.mxu0 0.0
    %9094 = vmatpush1.msra.mxu0 0.0
    %9095 = vmatprep.subr.mxu0 0.0
    %9096 = vmatpush1.msra.mxu0 0.0
    %9097 = vmatprep.subr.mxu0 0.0
    %9098 = vmatpush1.msra.mxu0 0.0
    %9099 = vmatprep.subr.mxu0 0.0
    %9100 = vmatpush1.msra.mxu0 0.0
    %9101 = vmatprep.subr.mxu0 0.0
    %9102 = vmatpush1.msra.mxu0 0.0
    %9103 = vmatprep.subr.mxu0 0.0
    %9104 = vmatpush1.msra.mxu0 0.0
    %9105 = vmatprep.subr.mxu0 0.0
    %9106 = vmatpush1.msra.mxu0 0.0
    %9107 = vmatprep.subr.mxu0 0.0
    %9108 = vmatpush1.msra.mxu0 0.0
    %9109 = vmatprep.subr.mxu0 0.0
    %9110 = vmatpush1.msra.mxu0 0.0
    %9111 = vmatprep.subr.mxu0 0.0
    %9112 = vmatpush1.msra.mxu0 0.0
    %9113 = vmatprep.subr.mxu0 0.0
    %9114 = vmatpush1.msra.mxu0 0.0
    %9115 = vmatprep.subr.mxu0 0.0
    %9116 = vmatpush1.msra.mxu0 0.0
    %9117 = vmatprep.subr.mxu0 0.0
    %9118 = vmatpush1.msra.mxu0 0.0
    %9119 = vmatprep.subr.mxu0 0.0
    %9120 = vmatpush1.msra.mxu0 0.0
    %9121 = vmatprep.subr.mxu0 0.0
    %9122 = vmatpush1.msra.mxu0 0.0
    %9123 = vmatprep.mubr.f32.mxu0 0.0
    %v9124 = vand.u32 %v8803, 4294901760
    %v9125 = vsub.f32 %v8803, %v9124
    %v9126 = vand.u32 %v9125, 4294901760
    %9127 = vmatmul.mubr.f32.gmra.mrb[0].mxu0 %v9126
    %v9128 = vpop.f32.mrb[0].mxu0
    %v9129 = vadd.f32 %v9052, %v9128
    %v9130 = vpop.f32.mrb[0].mxu0
    %9131 = vdwg.mxu0
    %9132 = vmatprep.subr.mxu0 0.0
    %v9133 = vand.u32 %v8789, 4294901760
    %v9134 = vsub.f32 %v8789, %v9133
    %v9135 = vand.u32 %v9134, 4294901760
    %9136 = vmatpush1.msra.mxu0 %v9135
    %9137 = vmatprep.subr.mxu0 0.0
    %v9138 = vand.u32 %v8790, 4294901760
    %v9139 = vsub.f32 %v8790, %v9138
    %v9140 = vand.u32 %v9139, 4294901760
    %9141 = vmatpush1.msra.mxu0 %v9140
    %9142 = vmatprep.subr.mxu0 0.0
    %v9143 = vand.u32 %v8791, 4294901760
    %v9144 = vsub.f32 %v8791, %v9143
    %v9145 = vand.u32 %v9144, 4294901760
    %9146 = vmatpush1.msra.mxu0 %v9145
    %9147 = vmatprep.subr.mxu0 0.0
    %v9148 = vand.u32 %v8792, 4294901760
    %v9149 = vsub.f32 %v8792, %v9148
    %v9150 = vand.u32 %v9149, 4294901760
    %9151 = vmatpush1.msra.mxu0 %v9150
    %9152 = vmatprep.subr.mxu0 0.0
    %9153 = vmatpush1.msra.mxu0 0.0
    %9154 = vmatprep.subr.mxu0 0.0
    %9155 = vmatpush1.msra.mxu0 0.0
    %9156 = vmatprep.subr.mxu0 0.0
    %9157 = vmatpush1.msra.mxu0 0.0
    %9158 = vmatprep.subr.mxu0 0.0
    %9159 = vmatpush1.msra.mxu0 0.0
    %9160 = vmatprep.subr.mxu0 0.0
    %9161 = vmatpush1.msra.mxu0 0.0
    %9162 = vmatprep.subr.mxu0 0.0
    %9163 = vmatpush1.msra.mxu0 0.0
    %9164 = vmatprep.subr.mxu0 0.0
    %9165 = vmatpush1.msra.mxu0 0.0
    %9166 = vmatprep.subr.mxu0 0.0
    %9167 = vmatpush1.msra.mxu0 0.0
    %9168 = vmatprep.subr.mxu0 0.0
    %9169 = vmatpush1.msra.mxu0 0.0
    %9170 = vmatprep.subr.mxu0 0.0
    %9171 = vmatpush1.msra.mxu0 0.0
    %9172 = vmatprep.subr.mxu0 0.0
    %9173 = vmatpush1.msra.mxu0 0.0
    %9174 = vmatprep.subr.mxu0 0.0
    %9175 = vmatpush1.msra.mxu0 0.0
    %9176 = vmatprep.subr.mxu0 0.0
    %9177 = vmatpush1.msra.mxu0 0.0
    %9178 = vmatprep.subr.mxu0 0.0
    %9179 = vmatpush1.msra.mxu0 0.0
    %9180 = vmatprep.subr.mxu0 0.0
    %9181 = vmatpush1.msra.mxu0 0.0
    %9182 = vmatprep.subr.mxu0 0.0
    %9183 = vmatpush1.msra.mxu0 0.0
    %9184 = vmatprep.subr.mxu0 0.0
    %9185 = vmatpush1.msra.mxu0 0.0
    %9186 = vmatprep.subr.mxu0 0.0
    %9187 = vmatpush1.msra.mxu0 0.0
    %9188 = vmatprep.subr.mxu0 0.0
    %9189 = vmatpush1.msra.mxu0 0.0
    %9190 = vmatprep.subr.mxu0 0.0
    %9191 = vmatpush1.msra.mxu0 0.0
    %9192 = vmatprep.subr.mxu0 0.0
    %9193 = vmatpush1.msra.mxu0 0.0
    %9194 = vmatprep.subr.mxu0 0.0
    %9195 = vmatpush1.msra.mxu0 0.0
    %9196 = vmatprep.subr.mxu0 0.0
    %9197 = vmatpush1.msra.mxu0 0.0
    %9198 = vmatprep.subr.mxu0 0.0
    %9199 = vmatpush1.msra.mxu0 0.0
    %9200 = vmatprep.subr.mxu0 0.0
    %9201 = vmatpush1.msra.mxu0 0.0
    %9202 = vmatprep.subr.mxu0 0.0
    %9203 = vmatpush1.msra.mxu0 0.0
    %9204 = vmatprep.subr.mxu0 0.0
    %9205 = vmatpush1.msra.mxu0 0.0
    %9206 = vmatprep.subr.mxu0 0.0
    %9207 = vmatpush1.msra.mxu0 0.0
    %9208 = vmatprep.mubr.f32.mxu0 0.0
    %v9209 = vand.u32 %v8803, 4294901760
    %9210 = vmatmul.mubr.f32.gmra.mrb[0].mxu0 %v9209
    %v9211 = vpop.f32.mrb[0].mxu0
    %v9212 = vadd.f32 %v9129, %v9211
    %v9213 = vpop.f32.mrb[0].mxu0
    %9214 = vdwg.mxu0
    %9215 = vmatprep.subr.mxu0 0.0
    %v9216 = vand.u32 %v8789, 4294901760
    %9217 = vmatpush1.msra.mxu0 %v9216
    %9218 = vmatprep.subr.mxu0 0.0
    %v9219 = vand.u32 %v8790, 4294901760
    %9220 = vmatpush1.msra.mxu0 %v9219
    %9221 = vmatprep.subr.mxu0 0.0
    %v9222 = vand.u32 %v8791, 4294901760
    %9223 = vmatpush1.msra.mxu0 %v9222
    %9224 = vmatprep.subr.mxu0 0.0
    %v9225 = vand.u32 %v8792, 4294901760
    %9226 = vmatpush1.msra.mxu0 %v9225
    %9227 = vmatprep.subr.mxu0 0.0
    %9228 = vmatpush1.msra.mxu0 0.0
    %9229 = vmatprep.subr.mxu0 0.0
    %9230 = vmatpush1.msra.mxu0 0.0
    %9231 = vmatprep.subr.mxu0 0.0
    %9232 = vmatpush1.msra.mxu0 0.0
    %9233 = vmatprep.subr.mxu0 0.0
    %9234 = vmatpush1.msra.mxu0 0.0
    %9235 = vmatprep.subr.mxu0 0.0
    %9236 = vmatpush1.msra.mxu0 0.0
    %9237 = vmatprep.subr.mxu0 0.0
    %9238 = vmatpush1.msra.mxu0 0.0
    %9239 = vmatprep.subr.mxu0 0.0
    %9240 = vmatpush1.msra.mxu0 0.0
    %9241 = vmatprep.subr.mxu0 0.0
    %9242 = vmatpush1.msra.mxu0 0.0
    %9243 = vmatprep.subr.mxu0 0.0
    %9244 = vmatpush1.msra.mxu0 0.0
    %9245 = vmatprep.subr.mxu0 0.0
    %9246 = vmatpush1.msra.mxu0 0.0
    %9247 = vmatprep.subr.mxu0 0.0
    %9248 = vmatpush1.msra.mxu0 0.0
    %9249 = vmatprep.subr.mxu0 0.0
    %9250 = vmatpush1.msra.mxu0 0.0
    %9251 = vmatprep.subr.mxu0 0.0
    %9252 = vmatpush1.msra.mxu0 0.0
    %9253 = vmatprep.subr.mxu0 0.0
    %9254 = vmatpush1.msra.mxu0 0.0
    %9255 = vmatprep.subr.mxu0 0.0
    %9256 = vmatpush1.msra.mxu0 0.0
    %9257 = vmatprep.subr.mxu0 0.0
    %9258 = vmatpush1.msra.mxu0 0.0
    %9259 = vmatprep.subr.mxu0 0.0
    %9260 = vmatpush1.msra.mxu0 0.0
    %9261 = vmatprep.subr.mxu0 0.0
    %9262 = vmatpush1.msra.mxu0 0.0
    %9263 = vmatprep.subr.mxu0 0.0
    %9264 = vmatpush1.msra.mxu0 0.0
    %9265 = vmatprep.subr.mxu0 0.0
    %9266 = vmatpush1.msra.mxu0 0.0
    %9267 = vmatprep.subr.mxu0 0.0
    %9268 = vmatpush1.msra.mxu0 0.0
    %9269 = vmatprep.subr.mxu0 0.0
    %9270 = vmatpush1.msra.mxu0 0.0
    %9271 = vmatprep.subr.mxu0 0.0
    %9272 = vmatpush1.msra.mxu0 0.0
    %9273 = vmatprep.subr.mxu0 0.0
    %9274 = vmatpush1.msra.mxu0 0.0
    %9275 = vmatprep.subr.mxu0 0.0
    %9276 = vmatpush1.msra.mxu0 0.0
    %9277 = vmatprep.subr.mxu0 0.0
    %9278 = vmatpush1.msra.mxu0 0.0
    %9279 = vmatprep.subr.mxu0 0.0
    %9280 = vmatpush1.msra.mxu0 0.0
    %9281 = vmatprep.subr.mxu0 0.0
    %9282 = vmatpush1.msra.mxu0 0.0
    %9283 = vmatprep.mubr.f32.mxu0 0.0
    %v9284 = vand.u32 %v8803, 4294901760
    %9285 = vmatmul.mubr.f32.gmra.mrb[0].mxu0 %v9284
    %v9286 = vpop.f32.mrb[0].mxu0
    %v9287 = vadd.f32 %v9212, %v9286
    %v9288 = vpop.f32.mrb[0].mxu0
    %9289 = vdwg.mxu0
    %v9290 = vadd.f32 %v8798, %v9287
    %v9291 = vxor.u32 %v9290, 2147483648
    %v9292 = vmul.f32 %v9291, 1.442695
    %v9293 = vpow.pop %v9292
    %v9294 = vadd.f32 %v9293, 1.0
    %v9295 = vrcp.pop %v9294
    %v9296 = vmul.f32 1.0, %v9295
    %v9297 = vtanh.pop %v9290
    %v9298 = vmul.f32 %v9296, %v8070
    %9300 = vrot.lane.b32.xlu0 %v9297, 64
    %v9301 = vpop.permute.xlu0 %9300
    %v9303 = vmul.f32 %v9296, %v9301
    %9305 = vrot.lane.b32.xlu0 %v9303, 32
    %v9306 = vpop.permute.xlu0 %9305
    %v9308 = vadd.f32 %v9298, %v9306
    %v9309 = vtanh.pop %v9308
    %9311 = vrot.lane.b32.xlu0 %v9309, 64
    %v9312 = vpop.permute.xlu0 %9311
    %v9314 = vmul.f32 %v9296, %v9312
    %9316 = vrot.lane.b32.xlu0 %v9314, 32
    %v9317 = vpop.permute.xlu0 %9316
    %9319 = vst.msk [vmem:[#allocation2 + $0x6] sm:$0x1] %vm1901, %v9317
    %9320 = vst.msk [vmem:[#allocation2 + $0xd] sm:$0x2] %vm1903, %v9317
    %9321 = vrot.lane.b32.xlu0 %v8788, 32
    %v9322 = vpop.permute.xlu0 %9321
    %v9324 = vrot.slane %v9314, 4
    %9325 = vrot.lane.b32.xlu0 %v9324, 64
    %v9326 = vpop.permute.xlu0 %9325
    %v9328 = vsel %vm671, %v9322, %v9326
    %v9329 = vld [vmem:[#allocation6] sm:$0xff]
    %v9330 = vld [vmem:[#allocation6 + $0x8] sm:$0xff]
    %v9331 = vld [vmem:[#allocation6 + $0x10] sm:$0xff]
    %v9332 = vld [vmem:[#allocation6 + $0x18] sm:$0xff]
    %v9333 = vld [vmem:[#allocation6 + $0x20] sm:$0xff]
    %v9334 = vld [vmem:[#allocation6 + $0x28] sm:$0xff]
    %v9335 = vld [vmem:[#allocation6 + $0x30] sm:$0xff]
    %v9336 = vld [vmem:[#allocation6 + $0x38] sm:$0xff]
    %v9337 = vld [vmem:[#allocation6 + $0x40] sm:$0xff]
    %v9338 = vld [vmem:[#allocation6 + $0x48] sm:$0xff]
    %v9339 = vld [vmem:[#allocation6 + $0x50] sm:$0xff]
    %v9340 = vld [vmem:[#allocation6 + $0x58] sm:$0xff]
    %v9341 = vld [vmem:[#allocation6 + $0x60] sm:$0xff]
    %v9342 = vld [vmem:[#allocation6 + $0x68] sm:$0xff]
    %v9343 = vld [vmem:[#allocation6 + $0x70] sm:$0xff]
    %v9344 = vld [vmem:[#allocation6 + $0x78] sm:$0xff]
    %v9346 = vrot.slane %v9328, 4
    %v9347 = vsel %vm73, %v9346, 0
    %v9349 = vand.u32 %v9330, 4294901760
    %9350 = vmatprep.subr.mxu0 %v9349
    %v9351 = vand.u32 %v9329, 4294901760
    %9352 = vmatpush1.msra.mxu0 %v9351
    %v9353 = vand.u32 %v9332, 4294901760
    %9354 = vmatprep.subr.mxu0 %v9353
    %v9355 = vand.u32 %v9331, 4294901760
    %9356 = vmatpush1.msra.mxu0 %v9355
    %v9357 = vand.u32 %v9334, 4294901760
    %9358 = vmatprep.subr.mxu0 %v9357
    %v9359 = vand.u32 %v9333, 4294901760
    %9360 = vmatpush1.msra.mxu0 %v9359
    %v9361 = vand.u32 %v9336, 4294901760
    %9362 = vmatprep.subr.mxu0 %v9361
    %v9363 = vand.u32 %v9335, 4294901760
    %9364 = vmatpush1.msra.mxu0 %v9363
    %v9365 = vand.u32 %v9338, 4294901760
    %9366 = vmatprep.subr.mxu0 %v9365
    %v9367 = vand.u32 %v9337, 4294901760
    %9368 = vmatpush1.msra.mxu0 %v9367
    %v9369 = vand.u32 %v9340, 4294901760
    %9370 = vmatprep.subr.mxu0 %v9369
    %v9371 = vand.u32 %v9339, 4294901760
    %9372 = vmatpush1.msra.mxu0 %v9371
    %v9373 = vand.u32 %v9342, 4294901760
    %9374 = vmatprep.subr.mxu0 %v9373
    %v9375 = vand.u32 %v9341, 4294901760
    %9376 = vmatpush1.msra.mxu0 %v9375
    %v9377 = vand.u32 %v9344, 4294901760
    %9378 = vmatprep.subr.mxu0 %v9377
    %v9379 = vand.u32 %v9343, 4294901760
    %9380 = vmatpush1.msra.mxu0 %v9379
    %9381 = vmatprep.subr.mxu0 0.0
    %9382 = vmatpush1.msra.mxu0 0.0
    %9383 = vmatprep.subr.mxu0 0.0
    %9384 = vmatpush1.msra.mxu0 0.0
    %9385 = vmatprep.subr.mxu0 0.0
    %9386 = vmatpush1.msra.mxu0 0.0
    %9387 = vmatprep.subr.mxu0 0.0
    %9388 = vmatpush1.msra.mxu0 0.0
    %9389 = vmatprep.subr.mxu0 0.0
    %9390 = vmatpush1.msra.mxu0 0.0
    %9391 = vmatprep.subr.mxu0 0.0
    %9392 = vmatpush1.msra.mxu0 0.0
    %9393 = vmatprep.subr.mxu0 0.0
    %9394 = vmatpush1.msra.mxu0 0.0
    %9395 = vmatprep.subr.mxu0 0.0
    %9396 = vmatpush1.msra.mxu0 0.0
    %9397 = vmatprep.subr.mxu0 0.0
    %9398 = vmatpush1.msra.mxu0 0.0
    %9399 = vmatprep.subr.mxu0 0.0
    %9400 = vmatpush1.msra.mxu0 0.0
    %9401 = vmatprep.subr.mxu0 0.0
    %9402 = vmatpush1.msra.mxu0 0.0
    %9403 = vmatprep.subr.mxu0 0.0
    %9404 = vmatpush1.msra.mxu0 0.0
    %9405 = vmatprep.subr.mxu0 0.0
    %9406 = vmatpush1.msra.mxu0 0.0
    %9407 = vmatprep.subr.mxu0 0.0
    %9408 = vmatpush1.msra.mxu0 0.0
    %9409 = vmatprep.subr.mxu0 0.0
    %9410 = vmatpush1.msra.mxu0 0.0
    %9411 = vmatprep.subr.mxu0 0.0
    %9412 = vmatpush1.msra.mxu0 0.0
    %9413 = vmatprep.subr.mxu0 0.0
    %9414 = vmatpush1.msra.mxu0 0.0
    %9415 = vmatprep.subr.mxu0 0.0
    %9416 = vmatpush1.msra.mxu0 0.0
    %9417 = vmatprep.subr.mxu0 0.0
    %9418 = vmatpush1.msra.mxu0 0.0
    %9419 = vmatprep.subr.mxu0 0.0
    %9420 = vmatpush1.msra.mxu0 0.0
    %9421 = vmatprep.subr.mxu0 0.0
    %9422 = vmatpush1.msra.mxu0 0.0
    %9423 = vmatprep.subr.mxu0 0.0
    %9424 = vmatpush1.msra.mxu0 0.0
    %9425 = vmatprep.subr.mxu0 0.0
    %9426 = vmatpush1.msra.mxu0 0.0
    %9427 = vmatprep.subr.mxu0 0.0
    %9428 = vmatpush1.msra.mxu0 0.0
    %9429 = vmatprep.mubr.f32.mxu0 0.0
    %v9430 = vand.u32 %v9347, 4294901760
    %v9431 = vsub.f32 %v9347, %v9430
    %v9432 = vand.u32 %v9431, 4294901760
    %v9433 = vsub.f32 %v9431, %v9432
    %v9434 = vand.u32 %v9433, 4294901760
    %9435 = vmatmul.mubr.f32.gmra.mrb[0].mxu0 %v9434
    %v9436 = vpop.f32.mrb[0].mxu0
    %v9437 = vadd.f32 0.0, %v9436
    %v9438 = vpop.f32.mrb[0].mxu0
    %v9439 = vadd.f32 0.0, %v9438
    %9440 = vdwg.mxu0
    %v9441 = vand.u32 %v9330, 4294901760
    %v9442 = vsub.f32 %v9330, %v9441
    %v9443 = vand.u32 %v9442, 4294901760
    %v9444 = vsub.f32 %v9442, %v9443
    %v9445 = vand.u32 %v9444, 4294901760
    %9446 = vmatprep.subr.mxu0 %v9445
    %v9447 = vand.u32 %v9329, 4294901760
    %v9448 = vsub.f32 %v9329, %v9447
    %v9449 = vand.u32 %v9448, 4294901760
    %v9450 = vsub.f32 %v9448, %v9449
    %v9451 = vand.u32 %v9450, 4294901760
    %9452 = vmatpush1.msra.mxu0 %v9451
    %v9453 = vand.u32 %v9332, 4294901760
    %v9454 = vsub.f32 %v9332, %v9453
    %v9455 = vand.u32 %v9454, 4294901760
    %v9456 = vsub.f32 %v9454, %v9455
    %v9457 = vand.u32 %v9456, 4294901760
    %9458 = vmatprep.subr.mxu0 %v9457
    %v9459 = vand.u32 %v9331, 4294901760
    %v9460 = vsub.f32 %v9331, %v9459
    %v9461 = vand.u32 %v9460, 4294901760
    %v9462 = vsub.f32 %v9460, %v9461
    %v9463 = vand.u32 %v9462, 4294901760
    %9464 = vmatpush1.msra.mxu0 %v9463
    %v9465 = vand.u32 %v9334, 4294901760
    %v9466 = vsub.f32 %v9334, %v9465
    %v9467 = vand.u32 %v9466, 4294901760
    %v9468 = vsub.f32 %v9466, %v9467
    %v9469 = vand.u32 %v9468, 4294901760
    %9470 = vmatprep.subr.mxu0 %v9469
    %v9471 = vand.u32 %v9333, 4294901760
    %v9472 = vsub.f32 %v9333, %v9471
    %v9473 = vand.u32 %v9472, 4294901760
    %v9474 = vsub.f32 %v9472, %v9473
    %v9475 = vand.u32 %v9474, 4294901760
    %9476 = vmatpush1.msra.mxu0 %v9475
    %v9477 = vand.u32 %v9336, 4294901760
    %v9478 = vsub.f32 %v9336, %v9477
    %v9479 = vand.u32 %v9478, 4294901760
    %v9480 = vsub.f32 %v9478, %v9479
    %v9481 = vand.u32 %v9480, 4294901760
    %9482 = vmatprep.subr.mxu0 %v9481
    %v9483 = vand.u32 %v9335, 4294901760
    %v9484 = vsub.f32 %v9335, %v9483
    %v9485 = vand.u32 %v9484, 4294901760
    %v9486 = vsub.f32 %v9484, %v9485
    %v9487 = vand.u32 %v9486, 4294901760
    %9488 = vmatpush1.msra.mxu0 %v9487
    %v9489 = vand.u32 %v9338, 4294901760
    %v9490 = vsub.f32 %v9338, %v9489
    %v9491 = vand.u32 %v9490, 4294901760
    %v9492 = vsub.f32 %v9490, %v9491
    %v9493 = vand.u32 %v9492, 4294901760
    %9494 = vmatprep.subr.mxu0 %v9493
    %v9495 = vand.u32 %v9337, 4294901760
    %v9496 = vsub.f32 %v9337, %v9495
    %v9497 = vand.u32 %v9496, 4294901760
    %v9498 = vsub.f32 %v9496, %v9497
    %v9499 = vand.u32 %v9498, 4294901760
    %9500 = vmatpush1.msra.mxu0 %v9499
    %v9501 = vand.u32 %v9340, 4294901760
    %v9502 = vsub.f32 %v9340, %v9501
    %v9503 = vand.u32 %v9502, 4294901760
    %v9504 = vsub.f32 %v9502, %v9503
    %v9505 = vand.u32 %v9504, 4294901760
    %9506 = vmatprep.subr.mxu0 %v9505
    %v9507 = vand.u32 %v9339, 4294901760
    %v9508 = vsub.f32 %v9339, %v9507
    %v9509 = vand.u32 %v9508, 4294901760
    %v9510 = vsub.f32 %v9508, %v9509
    %v9511 = vand.u32 %v9510, 4294901760
    %9512 = vmatpush1.msra.mxu0 %v9511
    %v9513 = vand.u32 %v9342, 4294901760
    %v9514 = vsub.f32 %v9342, %v9513
    %v9515 = vand.u32 %v9514, 4294901760
    %v9516 = vsub.f32 %v9514, %v9515
    %v9517 = vand.u32 %v9516, 4294901760
    %9518 = vmatprep.subr.mxu0 %v9517
    %v9519 = vand.u32 %v9341, 4294901760
    %v9520 = vsub.f32 %v9341, %v9519
    %v9521 = vand.u32 %v9520, 4294901760
    %v9522 = vsub.f32 %v9520, %v9521
    %v9523 = vand.u32 %v9522, 4294901760
    %9524 = vmatpush1.msra.mxu0 %v9523
    %v9525 = vand.u32 %v9344, 4294901760
    %v9526 = vsub.f32 %v9344, %v9525
    %v9527 = vand.u32 %v9526, 4294901760
    %v9528 = vsub.f32 %v9526, %v9527
    %v9529 = vand.u32 %v9528, 4294901760
    %9530 = vmatprep.subr.mxu0 %v9529
    %v9531 = vand.u32 %v9343, 4294901760
    %v9532 = vsub.f32 %v9343, %v9531
    %v9533 = vand.u32 %v9532, 4294901760
    %v9534 = vsub.f32 %v9532, %v9533
    %v9535 = vand.u32 %v9534, 4294901760
    %9536 = vmatpush1.msra.mxu0 %v9535
    %9537 = vmatprep.subr.mxu0 0.0
    %9538 = vmatpush1.msra.mxu0 0.0
    %9539 = vmatprep.subr.mxu0 0.0
    %9540 = vmatpush1.msra.mxu0 0.0
    %9541 = vmatprep.subr.mxu0 0.0
    %9542 = vmatpush1.msra.mxu0 0.0
    %9543 = vmatprep.subr.mxu0 0.0
    %9544 = vmatpush1.msra.mxu0 0.0
    %9545 = vmatprep.subr.mxu0 0.0
    %9546 = vmatpush1.msra.mxu0 0.0
    %9547 = vmatprep.subr.mxu0 0.0
    %9548 = vmatpush1.msra.mxu0 0.0
    %9549 = vmatprep.subr.mxu0 0.0
    %9550 = vmatpush1.msra.mxu0 0.0
    %9551 = vmatprep.subr.mxu0 0.0
    %9552 = vmatpush1.msra.mxu0 0.0
    %9553 = vmatprep.subr.mxu0 0.0
    %9554 = vmatpush1.msra.mxu0 0.0
    %9555 = vmatprep.subr.mxu0 0.0
    %9556 = vmatpush1.msra.mxu0 0.0
    %9557 = vmatprep.subr.mxu0 0.0
    %9558 = vmatpush1.msra.mxu0 0.0
    %9559 = vmatprep.subr.mxu0 0.0
    %9560 = vmatpush1.msra.mxu0 0.0
    %9561 = vmatprep.subr.mxu0 0.0
    %9562 = vmatpush1.msra.mxu0 0.0
    %9563 = vmatprep.subr.mxu0 0.0
    %9564 = vmatpush1.msra.mxu0 0.0
    %9565 = vmatprep.subr.mxu0 0.0
    %9566 = vmatpush1.msra.mxu0 0.0
    %9567 = vmatprep.subr.mxu0 0.0
    %9568 = vmatpush1.msra.mxu0 0.0
    %9569 = vmatprep.subr.mxu0 0.0
    %9570 = vmatpush1.msra.mxu0 0.0
    %9571 = vmatprep.subr.mxu0 0.0
    %9572 = vmatpush1.msra.mxu0 0.0
    %9573 = vmatprep.subr.mxu0 0.0
    %9574 = vmatpush1.msra.mxu0 0.0
    %9575 = vmatprep.subr.mxu0 0.0
    %9576 = vmatpush1.msra.mxu0 0.0
    %9577 = vmatprep.subr.mxu0 0.0
    %9578 = vmatpush1.msra.mxu0 0.0
    %9579 = vmatprep.subr.mxu0 0.0
    %9580 = vmatpush1.msra.mxu0 0.0
    %9581 = vmatprep.subr.mxu0 0.0
    %9582 = vmatpush1.msra.mxu0 0.0
    %9583 = vmatprep.subr.mxu0 0.0
    %9584 = vmatpush1.msra.mxu0 0.0
    %9585 = vmatprep.mubr.f32.mxu0 0.0
    %v9586 = vand.u32 %v9347, 4294901760
    %9587 = vmatmul.mubr.f32.gmra.mrb[0].mxu0 %v9586
    %v9588 = vpop.f32.mrb[0].mxu0
    %v9589 = vadd.f32 %v9437, %v9588
    %v9590 = vpop.f32.mrb[0].mxu0
    %v9591 = vadd.f32 %v9439, %v9590
    %9592 = vdwg.mxu0
    %v9593 = vand.u32 %v9330, 4294901760
    %v9594 = vsub.f32 %v9330, %v9593
    %9595 = vmatprep.subr.mxu0 %v9594
    %v9596 = vand.u32 %v9329, 4294901760
    %v9597 = vsub.f32 %v9329, %v9596
    %9598 = vmatpush1.msra.mxu0 %v9597
    %v9599 = vand.u32 %v9332, 4294901760
    %v9600 = vsub.f32 %v9332, %v9599
    %9601 = vmatprep.subr.mxu0 %v9600
    %v9602 = vand.u32 %v9331, 4294901760
    %v9603 = vsub.f32 %v9331, %v9602
    %9604 = vmatpush1.msra.mxu0 %v9603
    %v9605 = vand.u32 %v9334, 4294901760
    %v9606 = vsub.f32 %v9334, %v9605
    %9607 = vmatprep.subr.mxu0 %v9606
    %v9608 = vand.u32 %v9333, 4294901760
    %v9609 = vsub.f32 %v9333, %v9608
    %9610 = vmatpush1.msra.mxu0 %v9609
    %v9611 = vand.u32 %v9336, 4294901760
    %v9612 = vsub.f32 %v9336, %v9611
    %9613 = vmatprep.subr.mxu0 %v9612
    %v9614 = vand.u32 %v9335, 4294901760
    %v9615 = vsub.f32 %v9335, %v9614
    %9616 = vmatpush1.msra.mxu0 %v9615
    %v9617 = vand.u32 %v9338, 4294901760
    %v9618 = vsub.f32 %v9338, %v9617
    %9619 = vmatprep.subr.mxu0 %v9618
    %v9620 = vand.u32 %v9337, 4294901760
    %v9621 = vsub.f32 %v9337, %v9620
    %9622 = vmatpush1.msra.mxu0 %v9621
    %v9623 = vand.u32 %v9340, 4294901760
    %v9624 = vsub.f32 %v9340, %v9623
    %9625 = vmatprep.subr.mxu0 %v9624
    %v9626 = vand.u32 %v9339, 4294901760
    %v9627 = vsub.f32 %v9339, %v9626
    %9628 = vmatpush1.msra.mxu0 %v9627
    %v9629 = vand.u32 %v9342, 4294901760
    %v9630 = vsub.f32 %v9342, %v9629
    %9631 = vmatprep.subr.mxu0 %v9630
    %v9632 = vand.u32 %v9341, 4294901760
    %v9633 = vsub.f32 %v9341, %v9632
    %9634 = vmatpush1.msra.mxu0 %v9633
    %v9635 = vand.u32 %v9344, 4294901760
    %v9636 = vsub.f32 %v9344, %v9635
    %9637 = vmatprep.subr.mxu0 %v9636
    %v9638 = vand.u32 %v9343, 4294901760
    %v9639 = vsub.f32 %v9343, %v9638
    %9640 = vmatpush1.msra.mxu0 %v9639
    %9641 = vmatprep.subr.mxu0 0.0
    %9642 = vmatpush1.msra.mxu0 0.0
    %9643 = vmatprep.subr.mxu0 0.0
    %9644 = vmatpush1.msra.mxu0 0.0
    %9645 = vmatprep.subr.mxu0 0.0
    %9646 = vmatpush1.msra.mxu0 0.0
    %9647 = vmatprep.subr.mxu0 0.0
    %9648 = vmatpush1.msra.mxu0 0.0
    %9649 = vmatprep.subr.mxu0 0.0
    %9650 = vmatpush1.msra.mxu0 0.0
    %9651 = vmatprep.subr.mxu0 0.0
    %9652 = vmatpush1.msra.mxu0 0.0
    %9653 = vmatprep.subr.mxu0 0.0
    %9654 = vmatpush1.msra.mxu0 0.0
    %9655 = vmatprep.subr.mxu0 0.0
    %9656 = vmatpush1.msra.mxu0 0.0
    %9657 = vmatprep.subr.mxu0 0.0
    %9658 = vmatpush1.msra.mxu0 0.0
    %9659 = vmatprep.subr.mxu0 0.0
    %9660 = vmatpush1.msra.mxu0 0.0
    %9661 = vmatprep.subr.mxu0 0.0
    %9662 = vmatpush1.msra.mxu0 0.0
    %9663 = vmatprep.subr.mxu0 0.0
    %9664 = vmatpush1.msra.mxu0 0.0
    %9665 = vmatprep.subr.mxu0 0.0
    %9666 = vmatpush1.msra.mxu0 0.0
    %9667 = vmatprep.subr.mxu0 0.0
    %9668 = vmatpush1.msra.mxu0 0.0
    %9669 = vmatprep.subr.mxu0 0.0
    %9670 = vmatpush1.msra.mxu0 0.0
    %9671 = vmatprep.subr.mxu0 0.0
    %9672 = vmatpush1.msra.mxu0 0.0
    %9673 = vmatprep.subr.mxu0 0.0
    %9674 = vmatpush1.msra.mxu0 0.0
    %9675 = vmatprep.subr.mxu0 0.0
    %9676 = vmatpush1.msra.mxu0 0.0
    %9677 = vmatprep.subr.mxu0 0.0
    %9678 = vmatpush1.msra.mxu0 0.0
    %9679 = vmatprep.subr.mxu0 0.0
    %9680 = vmatpush1.msra.mxu0 0.0
    %9681 = vmatprep.subr.mxu0 0.0
    %9682 = vmatpush1.msra.mxu0 0.0
    %9683 = vmatprep.subr.mxu0 0.0
    %9684 = vmatpush1.msra.mxu0 0.0
    %9685 = vmatprep.subr.mxu0 0.0
    %9686 = vmatpush1.msra.mxu0 0.0
    %9687 = vmatprep.subr.mxu0 0.0
    %9688 = vmatpush1.msra.mxu0 0.0
    %9689 = vmatprep.mubr.f32.mxu0 0.0
    %v9690 = vand.u32 %v9347, 4294901760
    %v9691 = vsub.f32 %v9347, %v9690
    %9692 = vmatmul.mubr.f32.gmra.mrb[0].mxu0 %v9691
    %v9693 = vpop.f32.mrb[0].mxu0
    %v9694 = vadd.f32 %v9589, %v9693
    %v9695 = vpop.f32.mrb[0].mxu0
    %v9696 = vadd.f32 %v9591, %v9695
    %9697 = vdwg.mxu0
    %v9698 = vand.u32 %v9330, 4294901760
    %9699 = vmatprep.subr.mxu0 %v9698
    %v9700 = vand.u32 %v9329, 4294901760
    %9701 = vmatpush1.msra.mxu0 %v9700
    %v9702 = vand.u32 %v9332, 4294901760
    %9703 = vmatprep.subr.mxu0 %v9702
    %v9704 = vand.u32 %v9331, 4294901760
    %9705 = vmatpush1.msra.mxu0 %v9704
    %v9706 = vand.u32 %v9334, 4294901760
    %9707 = vmatprep.subr.mxu0 %v9706
    %v9708 = vand.u32 %v9333, 4294901760
    %9709 = vmatpush1.msra.mxu0 %v9708
    %v9710 = vand.u32 %v9336, 4294901760
    %9711 = vmatprep.subr.mxu0 %v9710
    %v9712 = vand.u32 %v9335, 4294901760
    %9713 = vmatpush1.msra.mxu0 %v9712
    %v9714 = vand.u32 %v9338, 4294901760
    %9715 = vmatprep.subr.mxu0 %v9714
    %v9716 = vand.u32 %v9337, 4294901760
    %9717 = vmatpush1.msra.mxu0 %v9716
    %v9718 = vand.u32 %v9340, 4294901760
    %9719 = vmatprep.subr.mxu0 %v9718
    %v9720 = vand.u32 %v9339, 4294901760
    %9721 = vmatpush1.msra.mxu0 %v9720
    %v9722 = vand.u32 %v9342, 4294901760
    %9723 = vmatprep.subr.mxu0 %v9722
    %v9724 = vand.u32 %v9341, 4294901760
    %9725 = vmatpush1.msra.mxu0 %v9724
    %v9726 = vand.u32 %v9344, 4294901760
    %9727 = vmatprep.subr.mxu0 %v9726
    %v9728 = vand.u32 %v9343, 4294901760
    %9729 = vmatpush1.msra.mxu0 %v9728
    %9730 = vmatprep.subr.mxu0 0.0
    %9731 = vmatpush1.msra.mxu0 0.0
    %9732 = vmatprep.subr.mxu0 0.0
    %9733 = vmatpush1.msra.mxu0 0.0
    %9734 = vmatprep.subr.mxu0 0.0
    %9735 = vmatpush1.msra.mxu0 0.0
    %9736 = vmatprep.subr.mxu0 0.0
    %9737 = vmatpush1.msra.mxu0 0.0
    %9738 = vmatprep.subr.mxu0 0.0
    %9739 = vmatpush1.msra.mxu0 0.0
    %9740 = vmatprep.subr.mxu0 0.0
    %9741 = vmatpush1.msra.mxu0 0.0
    %9742 = vmatprep.subr.mxu0 0.0
    %9743 = vmatpush1.msra.mxu0 0.0
    %9744 = vmatprep.subr.mxu0 0.0
    %9745 = vmatpush1.msra.mxu0 0.0
    %9746 = vmatprep.subr.mxu0 0.0
    %9747 = vmatpush1.msra.mxu0 0.0
    %9748 = vmatprep.subr.mxu0 0.0
    %9749 = vmatpush1.msra.mxu0 0.0
    %9750 = vmatprep.subr.mxu0 0.0
    %9751 = vmatpush1.msra.mxu0 0.0
    %9752 = vmatprep.subr.mxu0 0.0
    %9753 = vmatpush1.msra.mxu0 0.0
    %9754 = vmatprep.subr.mxu0 0.0
    %9755 = vmatpush1.msra.mxu0 0.0
    %9756 = vmatprep.subr.mxu0 0.0
    %9757 = vmatpush1.msra.mxu0 0.0
    %9758 = vmatprep.subr.mxu0 0.0
    %9759 = vmatpush1.msra.mxu0 0.0
    %9760 = vmatprep.subr.mxu0 0.0
    %9761 = vmatpush1.msra.mxu0 0.0
    %9762 = vmatprep.subr.mxu0 0.0
    %9763 = vmatpush1.msra.mxu0 0.0
    %9764 = vmatprep.subr.mxu0 0.0
    %9765 = vmatpush1.msra.mxu0 0.0
    %9766 = vmatprep.subr.mxu0 0.0
    %9767 = vmatpush1.msra.mxu0 0.0
    %9768 = vmatprep.subr.mxu0 0.0
    %9769 = vmatpush1.msra.mxu0 0.0
    %9770 = vmatprep.subr.mxu0 0.0
    %9771 = vmatpush1.msra.mxu0 0.0
    %9772 = vmatprep.subr.mxu0 0.0
    %9773 = vmatpush1.msra.mxu0 0.0
    %9774 = vmatprep.subr.mxu0 0.0
    %9775 = vmatpush1.msra.mxu0 0.0
    %9776 = vmatprep.subr.mxu0 0.0
    %9777 = vmatpush1.msra.mxu0 0.0
    %9778 = vmatprep.mubr.f32.mxu0 0.0
    %v9779 = vand.u32 %v9347, 4294901760
    %v9780 = vsub.f32 %v9347, %v9779
    %v9781 = vand.u32 %v9780, 4294901760
    %9782 = vmatmul.mubr.f32.gmra.mrb[0].mxu0 %v9781
    %v9783 = vpop.f32.mrb[0].mxu0
    %v9784 = vadd.f32 %v9694, %v9783
    %v9785 = vpop.f32.mrb[0].mxu0
    %v9786 = vadd.f32 %v9696, %v9785
    %9787 = vdwg.mxu0
    %v9788 = vand.u32 %v9330, 4294901760
    %v9789 = vsub.f32 %v9330, %v9788
    %v9790 = vand.u32 %v9789, 4294901760
    %9791 = vmatprep.subr.mxu0 %v9790
    %v9792 = vand.u32 %v9329, 4294901760
    %v9793 = vsub.f32 %v9329, %v9792
    %v9794 = vand.u32 %v9793, 4294901760
    %9795 = vmatpush1.msra.mxu0 %v9794
    %v9796 = vand.u32 %v9332, 4294901760
    %v9797 = vsub.f32 %v9332, %v9796
    %v9798 = vand.u32 %v9797, 4294901760
    %9799 = vmatprep.subr.mxu0 %v9798
    %v9800 = vand.u32 %v9331, 4294901760
    %v9801 = vsub.f32 %v9331, %v9800
    %v9802 = vand.u32 %v9801, 4294901760
    %9803 = vmatpush1.msra.mxu0 %v9802
    %v9804 = vand.u32 %v9334, 4294901760
    %v9805 = vsub.f32 %v9334, %v9804
    %v9806 = vand.u32 %v9805, 4294901760
    %9807 = vmatprep.subr.mxu0 %v9806
    %v9808 = vand.u32 %v9333, 4294901760
    %v9809 = vsub.f32 %v9333, %v9808
    %v9810 = vand.u32 %v9809, 4294901760
    %9811 = vmatpush1.msra.mxu0 %v9810
    %v9812 = vand.u32 %v9336, 4294901760
    %v9813 = vsub.f32 %v9336, %v9812
    %v9814 = vand.u32 %v9813, 4294901760
    %9815 = vmatprep.subr.mxu0 %v9814
    %v9816 = vand.u32 %v9335, 4294901760
    %v9817 = vsub.f32 %v9335, %v9816
    %v9818 = vand.u32 %v9817, 4294901760
    %9819 = vmatpush1.msra.mxu0 %v9818
    %v9820 = vand.u32 %v9338, 4294901760
    %v9821 = vsub.f32 %v9338, %v9820
    %v9822 = vand.u32 %v9821, 4294901760
    %9823 = vmatprep.subr.mxu0 %v9822
    %v9824 = vand.u32 %v9337, 4294901760
    %v9825 = vsub.f32 %v9337, %v9824
    %v9826 = vand.u32 %v9825, 4294901760
    %9827 = vmatpush1.msra.mxu0 %v9826
    %v9828 = vand.u32 %v9340, 4294901760
    %v9829 = vsub.f32 %v9340, %v9828
    %v9830 = vand.u32 %v9829, 4294901760
    %9831 = vmatprep.subr.mxu0 %v9830
    %v9832 = vand.u32 %v9339, 4294901760
    %v9833 = vsub.f32 %v9339, %v9832
    %v9834 = vand.u32 %v9833, 4294901760
    %9835 = vmatpush1.msra.mxu0 %v9834
    %v9836 = vand.u32 %v9342, 4294901760
    %v9837 = vsub.f32 %v9342, %v9836
    %v9838 = vand.u32 %v9837, 4294901760
    %9839 = vmatprep.subr.mxu0 %v9838
    %v9840 = vand.u32 %v9341, 4294901760
    %v9841 = vsub.f32 %v9341, %v9840
    %v9842 = vand.u32 %v9841, 4294901760
    %9843 = vmatpush1.msra.mxu0 %v9842
    %v9844 = vand.u32 %v9344, 4294901760
    %v9845 = vsub.f32 %v9344, %v9844
    %v9846 = vand.u32 %v9845, 4294901760
    %9847 = vmatprep.subr.mxu0 %v9846
    %v9848 = vand.u32 %v9343, 4294901760
    %v9849 = vsub.f32 %v9343, %v9848
    %v9850 = vand.u32 %v9849, 4294901760
    %9851 = vmatpush1.msra.mxu0 %v9850
    %9852 = vmatprep.subr.mxu0 0.0
    %9853 = vmatpush1.msra.mxu0 0.0
    %9854 = vmatprep.subr.mxu0 0.0
    %9855 = vmatpush1.msra.mxu0 0.0
    %9856 = vmatprep.subr.mxu0 0.0
    %9857 = vmatpush1.msra.mxu0 0.0
    %9858 = vmatprep.subr.mxu0 0.0
    %9859 = vmatpush1.msra.mxu0 0.0
    %9860 = vmatprep.subr.mxu0 0.0
    %9861 = vmatpush1.msra.mxu0 0.0
    %9862 = vmatprep.subr.mxu0 0.0
    %9863 = vmatpush1.msra.mxu0 0.0
    %9864 = vmatprep.subr.mxu0 0.0
    %9865 = vmatpush1.msra.mxu0 0.0
    %9866 = vmatprep.subr.mxu0 0.0
    %9867 = vmatpush1.msra.mxu0 0.0
    %9868 = vmatprep.subr.mxu0 0.0
    %9869 = vmatpush1.msra.mxu0 0.0
    %9870 = vmatprep.subr.mxu0 0.0
    %9871 = vmatpush1.msra.mxu0 0.0
    %9872 = vmatprep.subr.mxu0 0.0
    %9873 = vmatpush1.msra.mxu0 0.0
    %9874 = vmatprep.subr.mxu0 0.0
    %9875 = vmatpush1.msra.mxu0 0.0
    %9876 = vmatprep.subr.mxu0 0.0
    %9877 = vmatpush1.msra.mxu0 0.0
    %9878 = vmatprep.subr.mxu0 0.0
    %9879 = vmatpush1.msra.mxu0 0.0
    %9880 = vmatprep.subr.mxu0 0.0
    %9881 = vmatpush1.msra.mxu0 0.0
    %9882 = vmatprep.subr.mxu0 0.0
    %9883 = vmatpush1.msra.mxu0 0.0
    %9884 = vmatprep.subr.mxu0 0.0
    %9885 = vmatpush1.msra.mxu0 0.0
    %9886 = vmatprep.subr.mxu0 0.0
    %9887 = vmatpush1.msra.mxu0 0.0
    %9888 = vmatprep.subr.mxu0 0.0
    %9889 = vmatpush1.msra.mxu0 0.0
    %9890 = vmatprep.subr.mxu0 0.0
    %9891 = vmatpush1.msra.mxu0 0.0
    %9892 = vmatprep.subr.mxu0 0.0
    %9893 = vmatpush1.msra.mxu0 0.0
    %9894 = vmatprep.subr.mxu0 0.0
    %9895 = vmatpush1.msra.mxu0 0.0
    %9896 = vmatprep.subr.mxu0 0.0
    %9897 = vmatpush1.msra.mxu0 0.0
    %9898 = vmatprep.subr.mxu0 0.0
    %9899 = vmatpush1.msra.mxu0 0.0
    %9900 = vmatprep.mubr.f32.mxu0 0.0
    %v9901 = vand.u32 %v9347, 4294901760
    %9902 = vmatmul.mubr.f32.gmra.mrb[0].mxu0 %v9901
    %v9903 = vpop.f32.mrb[0].mxu0
    %v9904 = vadd.f32 %v9784, %v9903
    %v9905 = vpop.f32.mrb[0].mxu0
    %v9906 = vadd.f32 %v9786, %v9905
    %9907 = vdwg.mxu0
    %v9908 = vand.u32 %v9330, 4294901760
    %9909 = vmatprep.subr.mxu0 %v9908
    %v9910 = vand.u32 %v9329, 4294901760
    %9911 = vmatpush1.msra.mxu0 %v9910
    %v9912 = vand.u32 %v9332, 4294901760
    %9913 = vmatprep.subr.mxu0 %v9912
    %v9914 = vand.u32 %v9331, 4294901760
    %9915 = vmatpush1.msra.mxu0 %v9914
    %v9916 = vand.u32 %v9334, 4294901760
    %9917 = vmatprep.subr.mxu0 %v9916
    %v9918 = vand.u32 %v9333, 4294901760
    %9919 = vmatpush1.msra.mxu0 %v9918
    %v9920 = vand.u32 %v9336, 4294901760
    %9921 = vmatprep.subr.mxu0 %v9920
    %v9922 = vand.u32 %v9335, 4294901760
    %9923 = vmatpush1.msra.mxu0 %v9922
    %v9924 = vand.u32 %v9338, 4294901760
    %9925 = vmatprep.subr.mxu0 %v9924
    %v9926 = vand.u32 %v9337, 4294901760
    %9927 = vmatpush1.msra.mxu0 %v9926
    %v9928 = vand.u32 %v9340, 4294901760
    %9929 = vmatprep.subr.mxu0 %v9928
    %v9930 = vand.u32 %v9339, 4294901760
    %9931 = vmatpush1.msra.mxu0 %v9930
    %v9932 = vand.u32 %v9342, 4294901760
    %9933 = vmatprep.subr.mxu0 %v9932
    %v9934 = vand.u32 %v9341, 4294901760
    %9935 = vmatpush1.msra.mxu0 %v9934
    %v9936 = vand.u32 %v9344, 4294901760
    %9937 = vmatprep.subr.mxu0 %v9936
    %v9938 = vand.u32 %v9343, 4294901760
    %9939 = vmatpush1.msra.mxu0 %v9938
    %9940 = vmatprep.subr.mxu0 0.0
    %9941 = vmatpush1.msra.mxu0 0.0
    %9942 = vmatprep.subr.mxu0 0.0
    %9943 = vmatpush1.msra.mxu0 0.0
    %9944 = vmatprep.subr.mxu0 0.0
    %9945 = vmatpush1.msra.mxu0 0.0
    %9946 = vmatprep.subr.mxu0 0.0
    %9947 = vmatpush1.msra.mxu0 0.0
    %9948 = vmatprep.subr.mxu0 0.0
    %9949 = vmatpush1.msra.mxu0 0.0
    %9950 = vmatprep.subr.mxu0 0.0
    %9951 = vmatpush1.msra.mxu0 0.0
    %9952 = vmatprep.subr.mxu0 0.0
    %9953 = vmatpush1.msra.mxu0 0.0
    %9954 = vmatprep.subr.mxu0 0.0
    %9955 = vmatpush1.msra.mxu0 0.0
    %9956 = vmatprep.subr.mxu0 0.0
    %9957 = vmatpush1.msra.mxu0 0.0
    %9958 = vmatprep.subr.mxu0 0.0
    %9959 = vmatpush1.msra.mxu0 0.0
    %9960 = vmatprep.subr.mxu0 0.0
    %9961 = vmatpush1.msra.mxu0 0.0
    %9962 = vmatprep.subr.mxu0 0.0
    %9963 = vmatpush1.msra.mxu0 0.0
    %9964 = vmatprep.subr.mxu0 0.0
    %9965 = vmatpush1.msra.mxu0 0.0
    %9966 = vmatprep.subr.mxu0 0.0
    %9967 = vmatpush1.msra.mxu0 0.0
    %9968 = vmatprep.subr.mxu0 0.0
    %9969 = vmatpush1.msra.mxu0 0.0
    %9970 = vmatprep.subr.mxu0 0.0
    %9971 = vmatpush1.msra.mxu0 0.0
    %9972 = vmatprep.subr.mxu0 0.0
    %9973 = vmatpush1.msra.mxu0 0.0
    %9974 = vmatprep.subr.mxu0 0.0
    %9975 = vmatpush1.msra.mxu0 0.0
    %9976 = vmatprep.subr.mxu0 0.0
    %9977 = vmatpush1.msra.mxu0 0.0
    %9978 = vmatprep.subr.mxu0 0.0
    %9979 = vmatpush1.msra.mxu0 0.0
    %9980 = vmatprep.subr.mxu0 0.0
    %9981 = vmatpush1.msra.mxu0 0.0
    %9982 = vmatprep.subr.mxu0 0.0
    %9983 = vmatpush1.msra.mxu0 0.0
    %9984 = vmatprep.subr.mxu0 0.0
    %9985 = vmatpush1.msra.mxu0 0.0
    %9986 = vmatprep.subr.mxu0 0.0
    %9987 = vmatpush1.msra.mxu0 0.0
    %9988 = vmatprep.mubr.f32.mxu0 0.0
    %v9989 = vand.u32 %v9347, 4294901760
    %9990 = vmatmul.mubr.f32.gmra.mrb[0].mxu0 %v9989
    %v9991 = vpop.f32.mrb[0].mxu0
    %v9992 = vadd.f32 %v9904, %v9991
    %v9993 = vpop.f32.mrb[0].mxu0
    %v9994 = vadd.f32 %v9906, %v9993
    %9995 = vdwg.mxu0
    %v9997 = vrot.slane %v9992, 2
    %v9999 = vadd.f32 %v657, %v9997
    %v10000 = vxor.u32 %v9999, 2147483648
    %v10001 = vmul.f32 %v10000, 1.442695
    %v10002 = vpow.pop %v10001
    %v10003 = vadd.f32 %v10002, 1.0
    %v10004 = vrcp.pop %v10003
    %v10005 = vmul.f32 1.0, %v10004
    %v10006 = vtanh.pop %v9999
    %v10008 = vrot.slane %v8782, 6
    %v10010 = vmul.f32 %v10005, %v10008
    %10012 = vrot.lane.b32.xlu0 %v10006, 64
    %v10013 = vpop.permute.xlu0 %10012
    %v10015 = vmul.f32 %v10005, %v10013
    %10017 = vrot.lane.b32.xlu0 %v10015, 32
    %v10018 = vpop.permute.xlu0 %10017
    %v10020 = vadd.f32 %v10010, %v10018
    %v10021 = vtanh.pop %v10020
    %10023 = vrot.lane.b32.xlu0 %v10021, 64
    %v10024 = vpop.permute.xlu0 %10023
    %v10026 = vmul.f32 %v10005, %v10024
    %v10027 = vld [vmem:[#allocation3 + $0x40] sm:$0xff]
    %v10028 = vld [vmem:[#allocation3 + $0x48] sm:$0xff]
    %v10029 = vld [vmem:[#allocation3 + $0x50] sm:$0xff]
    %v10030 = vld [vmem:[#allocation3 + $0x58] sm:$0xff]
    %v10031 = vld [vmem:[#allocation3 + $0x80] sm:$0x1]
    %v10032 = vlaneseq
    %v10033 = vshrl.u32 %v10032, 7
    %v10034 = vsub.s32 0, %v10033
    %v10035 = vrot.slane %v10031, %v10034
    %v10036 = vadd.f32 %v9994, %v10035
    %v10038 = vrot.slane %v10026, 6
    %10039 = vrot.lane.b32.xlu0 %v10038, 32
    %v10040 = vpop.permute.xlu0 %10039
    %v10041 = vsel %vm671, %v10040, 0
    %10043 = vmatprep.subr.mxu0 0.0
    %v10044 = vand.u32 %v10027, 4294901760
    %10045 = vmatpush1.msra.mxu0 %v10044
    %10046 = vmatprep.subr.mxu0 0.0
    %v10047 = vand.u32 %v10028, 4294901760
    %10048 = vmatpush1.msra.mxu0 %v10047
    %10049 = vmatprep.subr.mxu0 0.0
    %v10050 = vand.u32 %v10029, 4294901760
    %10051 = vmatpush1.msra.mxu0 %v10050
    %10052 = vmatprep.subr.mxu0 0.0
    %v10053 = vand.u32 %v10030, 4294901760
    %10054 = vmatpush1.msra.mxu0 %v10053
    %10055 = vmatprep.subr.mxu0 0.0
    %10056 = vmatpush1.msra.mxu0 0.0
    %10057 = vmatprep.subr.mxu0 0.0
    %10058 = vmatpush1.msra.mxu0 0.0
    %10059 = vmatprep.subr.mxu0 0.0
    %10060 = vmatpush1.msra.mxu0 0.0
    %10061 = vmatprep.subr.mxu0 0.0
    %10062 = vmatpush1.msra.mxu0 0.0
    %10063 = vmatprep.subr.mxu0 0.0
    %10064 = vmatpush1.msra.mxu0 0.0
    %10065 = vmatprep.subr.mxu0 0.0
    %10066 = vmatpush1.msra.mxu0 0.0
    %10067 = vmatprep.subr.mxu0 0.0
    %10068 = vmatpush1.msra.mxu0 0.0
    %10069 = vmatprep.subr.mxu0 0.0
    %10070 = vmatpush1.msra.mxu0 0.0
    %10071 = vmatprep.subr.mxu0 0.0
    %10072 = vmatpush1.msra.mxu0 0.0
    %10073 = vmatprep.subr.mxu0 0.0
    %10074 = vmatpush1.msra.mxu0 0.0
    %10075 = vmatprep.subr.mxu0 0.0
    %10076 = vmatpush1.msra.mxu0 0.0
    %10077 = vmatprep.subr.mxu0 0.0
    %10078 = vmatpush1.msra.mxu0 0.0
    %10079 = vmatprep.subr.mxu0 0.0
    %10080 = vmatpush1.msra.mxu0 0.0
    %10081 = vmatprep.subr.mxu0 0.0
    %10082 = vmatpush1.msra.mxu0 0.0
    %10083 = vmatprep.subr.mxu0 0.0
    %10084 = vmatpush1.msra.mxu0 0.0
    %10085 = vmatprep.subr.mxu0 0.0
    %10086 = vmatpush1.msra.mxu0 0.0
    %10087 = vmatprep.subr.mxu0 0.0
    %10088 = vmatpush1.msra.mxu0 0.0
    %10089 = vmatprep.subr.mxu0 0.0
    %10090 = vmatpush1.msra.mxu0 0.0
    %10091 = vmatprep.subr.mxu0 0.0
    %10092 = vmatpush1.msra.mxu0 0.0
    %10093 = vmatprep.subr.mxu0 0.0
    %10094 = vmatpush1.msra.mxu0 0.0
    %10095 = vmatprep.subr.mxu0 0.0
    %10096 = vmatpush1.msra.mxu0 0.0
    %10097 = vmatprep.subr.mxu0 0.0
    %10098 = vmatpush1.msra.mxu0 0.0
    %10099 = vmatprep.subr.mxu0 0.0
    %10100 = vmatpush1.msra.mxu0 0.0
    %10101 = vmatprep.subr.mxu0 0.0
    %10102 = vmatpush1.msra.mxu0 0.0
    %10103 = vmatprep.subr.mxu0 0.0
    %10104 = vmatpush1.msra.mxu0 0.0
    %10105 = vmatprep.subr.mxu0 0.0
    %10106 = vmatpush1.msra.mxu0 0.0
    %10107 = vmatprep.subr.mxu0 0.0
    %10108 = vmatpush1.msra.mxu0 0.0
    %10109 = vmatprep.subr.mxu0 0.0
    %10110 = vmatpush1.msra.mxu0 0.0
    %10111 = vmatprep.mubr.f32.mxu0 0.0
    %v10112 = vand.u32 %v10041, 4294901760
    %v10113 = vsub.f32 %v10041, %v10112
    %v10114 = vand.u32 %v10113, 4294901760
    %v10115 = vsub.f32 %v10113, %v10114
    %v10116 = vand.u32 %v10115, 4294901760
    %10117 = vmatmul.mubr.f32.gmra.mrb[0].mxu0 %v10116
    %v10118 = vpop.f32.mrb[0].mxu0
    %v10119 = vadd.f32 0.0, %v10118
    %v10120 = vpop.f32.mrb[0].mxu0
    %10121 = vdwg.mxu0
    %10122 = vmatprep.subr.mxu0 0.0
    %v10123 = vand.u32 %v10027, 4294901760
    %v10124 = vsub.f32 %v10027, %v10123
    %v10125 = vand.u32 %v10124, 4294901760
    %v10126 = vsub.f32 %v10124, %v10125
    %v10127 = vand.u32 %v10126, 4294901760
    %10128 = vmatpush1.msra.mxu0 %v10127
    %10129 = vmatprep.subr.mxu0 0.0
    %v10130 = vand.u32 %v10028, 4294901760
    %v10131 = vsub.f32 %v10028, %v10130
    %v10132 = vand.u32 %v10131, 4294901760
    %v10133 = vsub.f32 %v10131, %v10132
    %v10134 = vand.u32 %v10133, 4294901760
    %10135 = vmatpush1.msra.mxu0 %v10134
    %10136 = vmatprep.subr.mxu0 0.0
    %v10137 = vand.u32 %v10029, 4294901760
    %v10138 = vsub.f32 %v10029, %v10137
    %v10139 = vand.u32 %v10138, 4294901760
    %v10140 = vsub.f32 %v10138, %v10139
    %v10141 = vand.u32 %v10140, 4294901760
    %10142 = vmatpush1.msra.mxu0 %v10141
    %10143 = vmatprep.subr.mxu0 0.0
    %v10144 = vand.u32 %v10030, 4294901760
    %v10145 = vsub.f32 %v10030, %v10144
    %v10146 = vand.u32 %v10145, 4294901760
    %v10147 = vsub.f32 %v10145, %v10146
    %v10148 = vand.u32 %v10147, 4294901760
    %10149 = vmatpush1.msra.mxu0 %v10148
    %10150 = vmatprep.subr.mxu0 0.0
    %10151 = vmatpush1.msra.mxu0 0.0
    %10152 = vmatprep.subr.mxu0 0.0
    %10153 = vmatpush1.msra.mxu0 0.0
    %10154 = vmatprep.subr.mxu0 0.0
    %10155 = vmatpush1.msra.mxu0 0.0
    %10156 = vmatprep.subr.mxu0 0.0
    %10157 = vmatpush1.msra.mxu0 0.0
    %10158 = vmatprep.subr.mxu0 0.0
    %10159 = vmatpush1.msra.mxu0 0.0
    %10160 = vmatprep.subr.mxu0 0.0
    %10161 = vmatpush1.msra.mxu0 0.0
    %10162 = vmatprep.subr.mxu0 0.0
    %10163 = vmatpush1.msra.mxu0 0.0
    %10164 = vmatprep.subr.mxu0 0.0
    %10165 = vmatpush1.msra.mxu0 0.0
    %10166 = vmatprep.subr.mxu0 0.0
    %10167 = vmatpush1.msra.mxu0 0.0
    %10168 = vmatprep.subr.mxu0 0.0
    %10169 = vmatpush1.msra.mxu0 0.0
    %10170 = vmatprep.subr.mxu0 0.0
    %10171 = vmatpush1.msra.mxu0 0.0
    %10172 = vmatprep.subr.mxu0 0.0
    %10173 = vmatpush1.msra.mxu0 0.0
    %10174 = vmatprep.subr.mxu0 0.0
    %10175 = vmatpush1.msra.mxu0 0.0
    %10176 = vmatprep.subr.mxu0 0.0
    %10177 = vmatpush1.msra.mxu0 0.0
    %10178 = vmatprep.subr.mxu0 0.0
    %10179 = vmatpush1.msra.mxu0 0.0
    %10180 = vmatprep.subr.mxu0 0.0
    %10181 = vmatpush1.msra.mxu0 0.0
    %10182 = vmatprep.subr.mxu0 0.0
    %10183 = vmatpush1.msra.mxu0 0.0
    %10184 = vmatprep.subr.mxu0 0.0
    %10185 = vmatpush1.msra.mxu0 0.0
    %10186 = vmatprep.subr.mxu0 0.0
    %10187 = vmatpush1.msra.mxu0 0.0
    %10188 = vmatprep.subr.mxu0 0.0
    %10189 = vmatpush1.msra.mxu0 0.0
    %10190 = vmatprep.subr.mxu0 0.0
    %10191 = vmatpush1.msra.mxu0 0.0
    %10192 = vmatprep.subr.mxu0 0.0
    %10193 = vmatpush1.msra.mxu0 0.0
    %10194 = vmatprep.subr.mxu0 0.0
    %10195 = vmatpush1.msra.mxu0 0.0
    %10196 = vmatprep.subr.mxu0 0.0
    %10197 = vmatpush1.msra.mxu0 0.0
    %10198 = vmatprep.subr.mxu0 0.0
    %10199 = vmatpush1.msra.mxu0 0.0
    %10200 = vmatprep.subr.mxu0 0.0
    %10201 = vmatpush1.msra.mxu0 0.0
    %10202 = vmatprep.subr.mxu0 0.0
    %10203 = vmatpush1.msra.mxu0 0.0
    %10204 = vmatprep.subr.mxu0 0.0
    %10205 = vmatpush1.msra.mxu0 0.0
    %10206 = vmatprep.mubr.f32.mxu0 0.0
    %v10207 = vand.u32 %v10041, 4294901760
    %10208 = vmatmul.mubr.f32.gmra.mrb[0].mxu0 %v10207
    %v10209 = vpop.f32.mrb[0].mxu0
    %v10210 = vadd.f32 %v10119, %v10209
    %v10211 = vpop.f32.mrb[0].mxu0
    %10212 = vdwg.mxu0
    %10213 = vmatprep.subr.mxu0 0.0
    %v10214 = vand.u32 %v10027, 4294901760
    %v10215 = vsub.f32 %v10027, %v10214
    %10216 = vmatpush1.msra.mxu0 %v10215
    %10217 = vmatprep.subr.mxu0 0.0
    %v10218 = vand.u32 %v10028, 4294901760
    %v10219 = vsub.f32 %v10028, %v10218
    %10220 = vmatpush1.msra.mxu0 %v10219
    %10221 = vmatprep.subr.mxu0 0.0
    %v10222 = vand.u32 %v10029, 4294901760
    %v10223 = vsub.f32 %v10029, %v10222
    %10224 = vmatpush1.msra.mxu0 %v10223
    %10225 = vmatprep.subr.mxu0 0.0
    %v10226 = vand.u32 %v10030, 4294901760
    %v10227 = vsub.f32 %v10030, %v10226
    %10228 = vmatpush1.msra.mxu0 %v10227
    %10229 = vmatprep.subr.mxu0 0.0
    %10230 = vmatpush1.msra.mxu0 0.0
    %10231 = vmatprep.subr.mxu0 0.0
    %10232 = vmatpush1.msra.mxu0 0.0
    %10233 = vmatprep.subr.mxu0 0.0
    %10234 = vmatpush1.msra.mxu0 0.0
    %10235 = vmatprep.subr.mxu0 0.0
    %10236 = vmatpush1.msra.mxu0 0.0
    %10237 = vmatprep.subr.mxu0 0.0
    %10238 = vmatpush1.msra.mxu0 0.0
    %10239 = vmatprep.subr.mxu0 0.0
    %10240 = vmatpush1.msra.mxu0 0.0
    %10241 = vmatprep.subr.mxu0 0.0
    %10242 = vmatpush1.msra.mxu0 0.0
    %10243 = vmatprep.subr.mxu0 0.0
    %10244 = vmatpush1.msra.mxu0 0.0
    %10245 = vmatprep.subr.mxu0 0.0
    %10246 = vmatpush1.msra.mxu0 0.0
    %10247 = vmatprep.subr.mxu0 0.0
    %10248 = vmatpush1.msra.mxu0 0.0
    %10249 = vmatprep.subr.mxu0 0.0
    %10250 = vmatpush1.msra.mxu0 0.0
    %10251 = vmatprep.subr.mxu0 0.0
    %10252 = vmatpush1.msra.mxu0 0.0
    %10253 = vmatprep.subr.mxu0 0.0
    %10254 = vmatpush1.msra.mxu0 0.0
    %10255 = vmatprep.subr.mxu0 0.0
    %10256 = vmatpush1.msra.mxu0 0.0
    %10257 = vmatprep.subr.mxu0 0.0
    %10258 = vmatpush1.msra.mxu0 0.0
    %10259 = vmatprep.subr.mxu0 0.0
    %10260 = vmatpush1.msra.mxu0 0.0
    %10261 = vmatprep.subr.mxu0 0.0
    %10262 = vmatpush1.msra.mxu0 0.0
    %10263 = vmatprep.subr.mxu0 0.0
    %10264 = vmatpush1.msra.mxu0 0.0
    %10265 = vmatprep.subr.mxu0 0.0
    %10266 = vmatpush1.msra.mxu0 0.0
    %10267 = vmatprep.subr.mxu0 0.0
    %10268 = vmatpush1.msra.mxu0 0.0
    %10269 = vmatprep.subr.mxu0 0.0
    %10270 = vmatpush1.msra.mxu0 0.0
    %10271 = vmatprep.subr.mxu0 0.0
    %10272 = vmatpush1.msra.mxu0 0.0
    %10273 = vmatprep.subr.mxu0 0.0
    %10274 = vmatpush1.msra.mxu0 0.0
    %10275 = vmatprep.subr.mxu0 0.0
    %10276 = vmatpush1.msra.mxu0 0.0
    %10277 = vmatprep.subr.mxu0 0.0
    %10278 = vmatpush1.msra.mxu0 0.0
    %10279 = vmatprep.subr.mxu0 0.0
    %10280 = vmatpush1.msra.mxu0 0.0
    %10281 = vmatprep.subr.mxu0 0.0
    %10282 = vmatpush1.msra.mxu0 0.0
    %10283 = vmatprep.subr.mxu0 0.0
    %10284 = vmatpush1.msra.mxu0 0.0
    %10285 = vmatprep.mubr.f32.mxu0 0.0
    %v10286 = vand.u32 %v10041, 4294901760
    %v10287 = vsub.f32 %v10041, %v10286
    %10288 = vmatmul.mubr.f32.gmra.mrb[0].mxu0 %v10287
    %v10289 = vpop.f32.mrb[0].mxu0
    %v10290 = vadd.f32 %v10210, %v10289
    %v10291 = vpop.f32.mrb[0].mxu0
    %10292 = vdwg.mxu0
    %10293 = vmatprep.subr.mxu0 0.0
    %v10294 = vand.u32 %v10027, 4294901760
    %10295 = vmatpush1.msra.mxu0 %v10294
    %10296 = vmatprep.subr.mxu0 0.0
    %v10297 = vand.u32 %v10028, 4294901760
    %10298 = vmatpush1.msra.mxu0 %v10297
    %10299 = vmatprep.subr.mxu0 0.0
    %v10300 = vand.u32 %v10029, 4294901760
    %10301 = vmatpush1.msra.mxu0 %v10300
    %10302 = vmatprep.subr.mxu0 0.0
    %v10303 = vand.u32 %v10030, 4294901760
    %10304 = vmatpush1.msra.mxu0 %v10303
    %10305 = vmatprep.subr.mxu0 0.0
    %10306 = vmatpush1.msra.mxu0 0.0
    %10307 = vmatprep.subr.mxu0 0.0
    %10308 = vmatpush1.msra.mxu0 0.0
    %10309 = vmatprep.subr.mxu0 0.0
    %10310 = vmatpush1.msra.mxu0 0.0
    %10311 = vmatprep.subr.mxu0 0.0
    %10312 = vmatpush1.msra.mxu0 0.0
    %10313 = vmatprep.subr.mxu0 0.0
    %10314 = vmatpush1.msra.mxu0 0.0
    %10315 = vmatprep.subr.mxu0 0.0
    %10316 = vmatpush1.msra.mxu0 0.0
    %10317 = vmatprep.subr.mxu0 0.0
    %10318 = vmatpush1.msra.mxu0 0.0
    %10319 = vmatprep.subr.mxu0 0.0
    %10320 = vmatpush1.msra.mxu0 0.0
    %10321 = vmatprep.subr.mxu0 0.0
    %10322 = vmatpush1.msra.mxu0 0.0
    %10323 = vmatprep.subr.mxu0 0.0
    %10324 = vmatpush1.msra.mxu0 0.0
    %10325 = vmatprep.subr.mxu0 0.0
    %10326 = vmatpush1.msra.mxu0 0.0
    %10327 = vmatprep.subr.mxu0 0.0
    %10328 = vmatpush1.msra.mxu0 0.0
    %10329 = vmatprep.subr.mxu0 0.0
    %10330 = vmatpush1.msra.mxu0 0.0
    %10331 = vmatprep.subr.mxu0 0.0
    %10332 = vmatpush1.msra.mxu0 0.0
    %10333 = vmatprep.subr.mxu0 0.0
    %10334 = vmatpush1.msra.mxu0 0.0
    %10335 = vmatprep.subr.mxu0 0.0
    %10336 = vmatpush1.msra.mxu0 0.0
    %10337 = vmatprep.subr.mxu0 0.0
    %10338 = vmatpush1.msra.mxu0 0.0
    %10339 = vmatprep.subr.mxu0 0.0
    %10340 = vmatpush1.msra.mxu0 0.0
    %10341 = vmatprep.subr.mxu0 0.0
    %10342 = vmatpush1.msra.mxu0 0.0
    %10343 = vmatprep.subr.mxu0 0.0
    %10344 = vmatpush1.msra.mxu0 0.0
    %10345 = vmatprep.subr.mxu0 0.0
    %10346 = vmatpush1.msra.mxu0 0.0
    %10347 = vmatprep.subr.mxu0 0.0
    %10348 = vmatpush1.msra.mxu0 0.0
    %10349 = vmatprep.subr.mxu0 0.0
    %10350 = vmatpush1.msra.mxu0 0.0
    %10351 = vmatprep.subr.mxu0 0.0
    %10352 = vmatpush1.msra.mxu0 0.0
    %10353 = vmatprep.subr.mxu0 0.0
    %10354 = vmatpush1.msra.mxu0 0.0
    %10355 = vmatprep.subr.mxu0 0.0
    %10356 = vmatpush1.msra.mxu0 0.0
    %10357 = vmatprep.subr.mxu0 0.0
    %10358 = vmatpush1.msra.mxu0 0.0
    %10359 = vmatprep.subr.mxu0 0.0
    %10360 = vmatpush1.msra.mxu0 0.0
    %10361 = vmatprep.mubr.f32.mxu0 0.0
    %v10362 = vand.u32 %v10041, 4294901760
    %v10363 = vsub.f32 %v10041, %v10362
    %v10364 = vand.u32 %v10363, 4294901760
    %10365 = vmatmul.mubr.f32.gmra.mrb[0].mxu0 %v10364
    %v10366 = vpop.f32.mrb[0].mxu0
    %v10367 = vadd.f32 %v10290, %v10366
    %v10368 = vpop.f32.mrb[0].mxu0
    %10369 = vdwg.mxu0
    %10370 = vmatprep.subr.mxu0 0.0
    %v10371 = vand.u32 %v10027, 4294901760
    %v10372 = vsub.f32 %v10027, %v10371
    %v10373 = vand.u32 %v10372, 4294901760
    %10374 = vmatpush1.msra.mxu0 %v10373
    %10375 = vmatprep.subr.mxu0 0.0
    %v10376 = vand.u32 %v10028, 4294901760
    %v10377 = vsub.f32 %v10028, %v10376
    %v10378 = vand.u32 %v10377, 4294901760
    %10379 = vmatpush1.msra.mxu0 %v10378
    %10380 = vmatprep.subr.mxu0 0.0
    %v10381 = vand.u32 %v10029, 4294901760
    %v10382 = vsub.f32 %v10029, %v10381
    %v10383 = vand.u32 %v10382, 4294901760
    %10384 = vmatpush1.msra.mxu0 %v10383
    %10385 = vmatprep.subr.mxu0 0.0
    %v10386 = vand.u32 %v10030, 4294901760
    %v10387 = vsub.f32 %v10030, %v10386
    %v10388 = vand.u32 %v10387, 4294901760
    %10389 = vmatpush1.msra.mxu0 %v10388
    %10390 = vmatprep.subr.mxu0 0.0
    %10391 = vmatpush1.msra.mxu0 0.0
    %10392 = vmatprep.subr.mxu0 0.0
    %10393 = vmatpush1.msra.mxu0 0.0
    %10394 = vmatprep.subr.mxu0 0.0
    %10395 = vmatpush1.msra.mxu0 0.0
    %10396 = vmatprep.subr.mxu0 0.0
    %10397 = vmatpush1.msra.mxu0 0.0
    %10398 = vmatprep.subr.mxu0 0.0
    %10399 = vmatpush1.msra.mxu0 0.0
    %10400 = vmatprep.subr.mxu0 0.0
    %10401 = vmatpush1.msra.mxu0 0.0
    %10402 = vmatprep.subr.mxu0 0.0
    %10403 = vmatpush1.msra.mxu0 0.0
    %10404 = vmatprep.subr.mxu0 0.0
    %10405 = vmatpush1.msra.mxu0 0.0
    %10406 = vmatprep.subr.mxu0 0.0
    %10407 = vmatpush1.msra.mxu0 0.0
    %10408 = vmatprep.subr.mxu0 0.0
    %10409 = vmatpush1.msra.mxu0 0.0
    %10410 = vmatprep.subr.mxu0 0.0
    %10411 = vmatpush1.msra.mxu0 0.0
    %10412 = vmatprep.subr.mxu0 0.0
    %10413 = vmatpush1.msra.mxu0 0.0
    %10414 = vmatprep.subr.mxu0 0.0
    %10415 = vmatpush1.msra.mxu0 0.0
    %10416 = vmatprep.subr.mxu0 0.0
    %10417 = vmatpush1.msra.mxu0 0.0
    %10418 = vmatprep.subr.mxu0 0.0
    %10419 = vmatpush1.msra.mxu0 0.0
    %10420 = vmatprep.subr.mxu0 0.0
    %10421 = vmatpush1.msra.mxu0 0.0
    %10422 = vmatprep.subr.mxu0 0.0
    %10423 = vmatpush1.msra.mxu0 0.0
    %10424 = vmatprep.subr.mxu0 0.0
    %10425 = vmatpush1.msra.mxu0 0.0
    %10426 = vmatprep.subr.mxu0 0.0
    %10427 = vmatpush1.msra.mxu0 0.0
    %10428 = vmatprep.subr.mxu0 0.0
    %10429 = vmatpush1.msra.mxu0 0.0
    %10430 = vmatprep.subr.mxu0 0.0
    %10431 = vmatpush1.msra.mxu0 0.0
    %10432 = vmatprep.subr.mxu0 0.0
    %10433 = vmatpush1.msra.mxu0 0.0
    %10434 = vmatprep.subr.mxu0 0.0
    %10435 = vmatpush1.msra.mxu0 0.0
    %10436 = vmatprep.subr.mxu0 0.0
    %10437 = vmatpush1.msra.mxu0 0.0
    %10438 = vmatprep.subr.mxu0 0.0
    %10439 = vmatpush1.msra.mxu0 0.0
    %10440 = vmatprep.subr.mxu0 0.0
    %10441 = vmatpush1.msra.mxu0 0.0
    %10442 = vmatprep.subr.mxu0 0.0
    %10443 = vmatpush1.msra.mxu0 0.0
    %10444 = vmatprep.subr.mxu0 0.0
    %10445 = vmatpush1.msra.mxu0 0.0
    %10446 = vmatprep.mubr.f32.mxu0 0.0
    %v10447 = vand.u32 %v10041, 4294901760
    %10448 = vmatmul.mubr.f32.gmra.mrb[0].mxu0 %v10447
    %v10449 = vpop.f32.mrb[0].mxu0
    %v10450 = vadd.f32 %v10367, %v10449
    %v10451 = vpop.f32.mrb[0].mxu0
    %10452 = vdwg.mxu0
    %10453 = vmatprep.subr.mxu0 0.0
    %v10454 = vand.u32 %v10027, 4294901760
    %10455 = vmatpush1.msra.mxu0 %v10454
    %10456 = vmatprep.subr.mxu0 0.0
    %v10457 = vand.u32 %v10028, 4294901760
    %10458 = vmatpush1.msra.mxu0 %v10457
    %10459 = vmatprep.subr.mxu0 0.0
    %v10460 = vand.u32 %v10029, 4294901760
    %10461 = vmatpush1.msra.mxu0 %v10460
    %10462 = vmatprep.subr.mxu0 0.0
    %v10463 = vand.u32 %v10030, 4294901760
    %10464 = vmatpush1.msra.mxu0 %v10463
    %10465 = vmatprep.subr.mxu0 0.0
    %10466 = vmatpush1.msra.mxu0 0.0
    %10467 = vmatprep.subr.mxu0 0.0
    %10468 = vmatpush1.msra.mxu0 0.0
    %10469 = vmatprep.subr.mxu0 0.0
    %10470 = vmatpush1.msra.mxu0 0.0
    %10471 = vmatprep.subr.mxu0 0.0
    %10472 = vmatpush1.msra.mxu0 0.0
    %10473 = vmatprep.subr.mxu0 0.0
    %10474 = vmatpush1.msra.mxu0 0.0
    %10475 = vmatprep.subr.mxu0 0.0
    %10476 = vmatpush1.msra.mxu0 0.0
    %10477 = vmatprep.subr.mxu0 0.0
    %10478 = vmatpush1.msra.mxu0 0.0
    %10479 = vmatprep.subr.mxu0 0.0
    %10480 = vmatpush1.msra.mxu0 0.0
    %10481 = vmatprep.subr.mxu0 0.0
    %10482 = vmatpush1.msra.mxu0 0.0
    %10483 = vmatprep.subr.mxu0 0.0
    %10484 = vmatpush1.msra.mxu0 0.0
    %10485 = vmatprep.subr.mxu0 0.0
    %10486 = vmatpush1.msra.mxu0 0.0
    %10487 = vmatprep.subr.mxu0 0.0
    %10488 = vmatpush1.msra.mxu0 0.0
    %10489 = vmatprep.subr.mxu0 0.0
    %10490 = vmatpush1.msra.mxu0 0.0
    %10491 = vmatprep.subr.mxu0 0.0
    %10492 = vmatpush1.msra.mxu0 0.0
    %10493 = vmatprep.subr.mxu0 0.0
    %10494 = vmatpush1.msra.mxu0 0.0
    %10495 = vmatprep.subr.mxu0 0.0
    %10496 = vmatpush1.msra.mxu0 0.0
    %10497 = vmatprep.subr.mxu0 0.0
    %10498 = vmatpush1.msra.mxu0 0.0
    %10499 = vmatprep.subr.mxu0 0.0
    %10500 = vmatpush1.msra.mxu0 0.0
    %10501 = vmatprep.subr.mxu0 0.0
    %10502 = vmatpush1.msra.mxu0 0.0
    %10503 = vmatprep.subr.mxu0 0.0
    %10504 = vmatpush1.msra.mxu0 0.0
    %10505 = vmatprep.subr.mxu0 0.0
    %10506 = vmatpush1.msra.mxu0 0.0
    %10507 = vmatprep.subr.mxu0 0.0
    %10508 = vmatpush1.msra.mxu0 0.0
    %10509 = vmatprep.subr.mxu0 0.0
    %10510 = vmatpush1.msra.mxu0 0.0
    %10511 = vmatprep.subr.mxu0 0.0
    %10512 = vmatpush1.msra.mxu0 0.0
    %10513 = vmatprep.subr.mxu0 0.0
    %10514 = vmatpush1.msra.mxu0 0.0
    %10515 = vmatprep.subr.mxu0 0.0
    %10516 = vmatpush1.msra.mxu0 0.0
    %10517 = vmatprep.subr.mxu0 0.0
    %10518 = vmatpush1.msra.mxu0 0.0
    %10519 = vmatprep.subr.mxu0 0.0
    %10520 = vmatpush1.msra.mxu0 0.0
    %10521 = vmatprep.mubr.f32.mxu0 0.0
    %v10522 = vand.u32 %v10041, 4294901760
    %10523 = vmatmul.mubr.f32.gmra.mrb[0].mxu0 %v10522
    %v10524 = vpop.f32.mrb[0].mxu0
    %v10525 = vadd.f32 %v10450, %v10524
    %v10526 = vpop.f32.mrb[0].mxu0
    %10527 = vdwg.mxu0
    %v10528 = vadd.f32 %v10036, %v10525
    %v10529 = vxor.u32 %v10528, 2147483648
    %v10530 = vmul.f32 %v10529, 1.442695
    %v10531 = vpow.pop %v10530
    %v10532 = vadd.f32 %v10531, 1.0
    %v10533 = vrcp.pop %v10532
    %v10534 = vmul.f32 1.0, %v10533
    %v10535 = vtanh.pop %v10528
    %v10536 = vmul.f32 %v10534, %v9308
    %10538 = vrot.lane.b32.xlu0 %v10535, 64
    %v10539 = vpop.permute.xlu0 %10538
    %v10541 = vmul.f32 %v10534, %v10539
    %10543 = vrot.lane.b32.xlu0 %v10541, 32
    %v10544 = vpop.permute.xlu0 %10543
    %v10546 = vadd.f32 %v10536, %v10544
    %v10547 = vtanh.pop %v10546
    %10549 = vrot.lane.b32.xlu0 %v10547, 64
    %v10550 = vpop.permute.xlu0 %10549
    %v10552 = vmul.f32 %v10534, %v10550
    %10554 = vrot.lane.b32.xlu0 %v10552, 32
    %v10555 = vpop.permute.xlu0 %10554
    %10557 = vst.msk [vmem:[#allocation2 + $0x7] sm:$0x1] %vm1901, %v10555
    %10558 = vst.msk [vmem:[#allocation2 + $0xe] sm:$0x2] %vm1903, %v10555
    %v10559 = vld [vmem:[#allocation3 + $0x60] sm:$0xff]
    %v10560 = vld [vmem:[#allocation3 + $0x68] sm:$0xff]
    %v10561 = vld [vmem:[#allocation3 + $0x70] sm:$0xff]
    %v10562 = vld [vmem:[#allocation3 + $0x78] sm:$0xff]
    %v10563 = vld [vmem:[#allocation3 + $0x88] sm:$0x1]
    %v10564 = vld [vmem:[#allocation2] sm:$0xff]
    %v10565 = vld [vmem:[#allocation2 + $0x8] sm:$0xff]
    %v10566 = vlaneseq
    %v10567 = vshrl.u32 %v10566, 7
    %v10568 = vsub.s32 0, %v10567
    %v10569 = vrot.slane %v10563, %v10568
    %v10571 = vsel %vm671, %v10564, 0
    %v10574 = vsel %vm671, %v10565, 0
    %10576 = vmatprep.subr.mxu0 0.0
    %v10577 = vand.u32 %v10559, 4294901760
    %10578 = vmatpush1.msra.mxu0 %v10577
    %10579 = vmatprep.subr.mxu0 0.0
    %v10580 = vand.u32 %v10560, 4294901760
    %10581 = vmatpush1.msra.mxu0 %v10580
    %10582 = vmatprep.subr.mxu0 0.0
    %v10583 = vand.u32 %v10561, 4294901760
    %10584 = vmatpush1.msra.mxu0 %v10583
    %10585 = vmatprep.subr.mxu0 0.0
    %v10586 = vand.u32 %v10562, 4294901760
    %10587 = vmatpush1.msra.mxu0 %v10586
    %10588 = vmatprep.subr.mxu0 0.0
    %10589 = vmatpush1.msra.mxu0 0.0
    %10590 = vmatprep.subr.mxu0 0.0
    %10591 = vmatpush1.msra.mxu0 0.0
    %10592 = vmatprep.subr.mxu0 0.0
    %10593 = vmatpush1.msra.mxu0 0.0
    %10594 = vmatprep.subr.mxu0 0.0
    %10595 = vmatpush1.msra.mxu0 0.0
    %10596 = vmatprep.subr.mxu0 0.0
    %10597 = vmatpush1.msra.mxu0 0.0
    %10598 = vmatprep.subr.mxu0 0.0
    %10599 = vmatpush1.msra.mxu0 0.0
    %10600 = vmatprep.subr.mxu0 0.0
    %10601 = vmatpush1.msra.mxu0 0.0
    %10602 = vmatprep.subr.mxu0 0.0
    %10603 = vmatpush1.msra.mxu0 0.0
    %10604 = vmatprep.subr.mxu0 0.0
    %10605 = vmatpush1.msra.mxu0 0.0
    %10606 = vmatprep.subr.mxu0 0.0
    %10607 = vmatpush1.msra.mxu0 0.0
    %10608 = vmatprep.subr.mxu0 0.0
    %10609 = vmatpush1.msra.mxu0 0.0
    %10610 = vmatprep.subr.mxu0 0.0
    %10611 = vmatpush1.msra.mxu0 0.0
    %10612 = vmatprep.subr.mxu0 0.0
    %10613 = vmatpush1.msra.mxu0 0.0
    %10614 = vmatprep.subr.mxu0 0.0
    %10615 = vmatpush1.msra.mxu0 0.0
    %10616 = vmatprep.subr.mxu0 0.0
    %10617 = vmatpush1.msra.mxu0 0.0
    %10618 = vmatprep.subr.mxu0 0.0
    %10619 = vmatpush1.msra.mxu0 0.0
    %10620 = vmatprep.subr.mxu0 0.0
    %10621 = vmatpush1.msra.mxu0 0.0
    %10622 = vmatprep.subr.mxu0 0.0
    %10623 = vmatpush1.msra.mxu0 0.0
    %10624 = vmatprep.subr.mxu0 0.0
    %10625 = vmatpush1.msra.mxu0 0.0
    %10626 = vmatprep.subr.mxu0 0.0
    %10627 = vmatpush1.msra.mxu0 0.0
    %10628 = vmatprep.subr.mxu0 0.0
    %10629 = vmatpush1.msra.mxu0 0.0
    %10630 = vmatprep.subr.mxu0 0.0
    %10631 = vmatpush1.msra.mxu0 0.0
    %10632 = vmatprep.subr.mxu0 0.0
    %10633 = vmatpush1.msra.mxu0 0.0
    %10634 = vmatprep.subr.mxu0 0.0
    %10635 = vmatpush1.msra.mxu0 0.0
    %10636 = vmatprep.subr.mxu0 0.0
    %10637 = vmatpush1.msra.mxu0 0.0
    %10638 = vmatprep.subr.mxu0 0.0
    %10639 = vmatpush1.msra.mxu0 0.0
    %10640 = vmatprep.subr.mxu0 0.0
    %10641 = vmatpush1.msra.mxu0 0.0
    %10642 = vmatprep.subr.mxu0 0.0
    %10643 = vmatpush1.msra.mxu0 0.0
    %10644 = vmatprep.mubr.f32.mxu0 0.0
    %v10645 = vand.u32 %v10571, 4294901760
    %v10646 = vsub.f32 %v10571, %v10645
    %v10647 = vand.u32 %v10646, 4294901760
    %v10648 = vsub.f32 %v10646, %v10647
    %v10649 = vand.u32 %v10648, 4294901760
    %10650 = vmatmul.mubr.f32.gmra.mrb[0].mxu0 %v10649
    %v10651 = vpop.f32.mrb[0].mxu0
    %v10652 = vadd.f32 %v10569, %v10651
    %v10653 = vpop.f32.mrb[0].mxu0
    %10654 = vmatprep.mubr.f32.mxu0 0.0
    %v10655 = vand.u32 %v10574, 4294901760
    %v10656 = vsub.f32 %v10574, %v10655
    %v10657 = vand.u32 %v10656, 4294901760
    %v10658 = vsub.f32 %v10656, %v10657
    %v10659 = vand.u32 %v10658, 4294901760
    %10660 = vmatmul.mubr.f32.gmra.mrb[0].mxu0 %v10659
    %v10661 = vpop.f32.mrb[0].mxu0
    %v10662 = vadd.f32 %v10569, %v10661
    %v10663 = vpop.f32.mrb[0].mxu0
    %10664 = vdwg.mxu0
    %10665 = vmatprep.subr.mxu0 0.0
    %v10666 = vand.u32 %v10559, 4294901760
    %v10667 = vsub.f32 %v10559, %v10666
    %v10668 = vand.u32 %v10667, 4294901760
    %v10669 = vsub.f32 %v10667, %v10668
    %v10670 = vand.u32 %v10669, 4294901760
    %10671 = vmatpush1.msra.mxu0 %v10670
    %10672 = vmatprep.subr.mxu0 0.0
    %v10673 = vand.u32 %v10560, 4294901760
    %v10674 = vsub.f32 %v10560, %v10673
    %v10675 = vand.u32 %v10674, 4294901760
    %v10676 = vsub.f32 %v10674, %v10675
    %v10677 = vand.u32 %v10676, 4294901760
    %10678 = vmatpush1.msra.mxu0 %v10677
    %10679 = vmatprep.subr.mxu0 0.0
    %v10680 = vand.u32 %v10561, 4294901760
    %v10681 = vsub.f32 %v10561, %v10680
    %v10682 = vand.u32 %v10681, 4294901760
    %v10683 = vsub.f32 %v10681, %v10682
    %v10684 = vand.u32 %v10683, 4294901760
    %10685 = vmatpush1.msra.mxu0 %v10684
    %10686 = vmatprep.subr.mxu0 0.0
    %v10687 = vand.u32 %v10562, 4294901760
    %v10688 = vsub.f32 %v10562, %v10687
    %v10689 = vand.u32 %v10688, 4294901760
    %v10690 = vsub.f32 %v10688, %v10689
    %v10691 = vand.u32 %v10690, 4294901760
    %10692 = vmatpush1.msra.mxu0 %v10691
    %10693 = vmatprep.subr.mxu0 0.0
    %10694 = vmatpush1.msra.mxu0 0.0
    %10695 = vmatprep.subr.mxu0 0.0
    %10696 = vmatpush1.msra.mxu0 0.0
    %10697 = vmatprep.subr.mxu0 0.0
    %10698 = vmatpush1.msra.mxu0 0.0
    %10699 = vmatprep.subr.mxu0 0.0
    %10700 = vmatpush1.msra.mxu0 0.0
    %10701 = vmatprep.subr.mxu0 0.0
    %10702 = vmatpush1.msra.mxu0 0.0
    %10703 = vmatprep.subr.mxu0 0.0
    %10704 = vmatpush1.msra.mxu0 0.0
    %10705 = vmatprep.subr.mxu0 0.0
    %10706 = vmatpush1.msra.mxu0 0.0
    %10707 = vmatprep.subr.mxu0 0.0
    %10708 = vmatpush1.msra.mxu0 0.0
    %10709 = vmatprep.subr.mxu0 0.0
    %10710 = vmatpush1.msra.mxu0 0.0
    %10711 = vmatprep.subr.mxu0 0.0
    %10712 = vmatpush1.msra.mxu0 0.0
    %10713 = vmatprep.subr.mxu0 0.0
    %10714 = vmatpush1.msra.mxu0 0.0
    %10715 = vmatprep.subr.mxu0 0.0
    %10716 = vmatpush1.msra.mxu0 0.0
    %10717 = vmatprep.subr.mxu0 0.0
    %10718 = vmatpush1.msra.mxu0 0.0
    %10719 = vmatprep.subr.mxu0 0.0
    %10720 = vmatpush1.msra.mxu0 0.0
    %10721 = vmatprep.subr.mxu0 0.0
    %10722 = vmatpush1.msra.mxu0 0.0
    %10723 = vmatprep.subr.mxu0 0.0
    %10724 = vmatpush1.msra.mxu0 0.0
    %10725 = vmatprep.subr.mxu0 0.0
    %10726 = vmatpush1.msra.mxu0 0.0
    %10727 = vmatprep.subr.mxu0 0.0
    %10728 = vmatpush1.msra.mxu0 0.0
    %10729 = vmatprep.subr.mxu0 0.0
    %10730 = vmatpush1.msra.mxu0 0.0
    %10731 = vmatprep.subr.mxu0 0.0
    %10732 = vmatpush1.msra.mxu0 0.0
    %10733 = vmatprep.subr.mxu0 0.0
    %10734 = vmatpush1.msra.mxu0 0.0
    %10735 = vmatprep.subr.mxu0 0.0
    %10736 = vmatpush1.msra.mxu0 0.0
    %10737 = vmatprep.subr.mxu0 0.0
    %10738 = vmatpush1.msra.mxu0 0.0
    %10739 = vmatprep.subr.mxu0 0.0
    %10740 = vmatpush1.msra.mxu0 0.0
    %10741 = vmatprep.subr.mxu0 0.0
    %10742 = vmatpush1.msra.mxu0 0.0
    %10743 = vmatprep.subr.mxu0 0.0
    %10744 = vmatpush1.msra.mxu0 0.0
    %10745 = vmatprep.subr.mxu0 0.0
    %10746 = vmatpush1.msra.mxu0 0.0
    %10747 = vmatprep.subr.mxu0 0.0
    %10748 = vmatpush1.msra.mxu0 0.0
    %10749 = vmatprep.mubr.f32.mxu0 0.0
    %v10750 = vand.u32 %v10571, 4294901760
    %10751 = vmatmul.mubr.f32.gmra.mrb[0].mxu0 %v10750
    %v10752 = vpop.f32.mrb[0].mxu0
    %v10753 = vadd.f32 %v10652, %v10752
    %v10754 = vpop.f32.mrb[0].mxu0
    %10755 = vmatprep.mubr.f32.mxu0 0.0
    %v10756 = vand.u32 %v10574, 4294901760
    %10757 = vmatmul.mubr.f32.gmra.mrb[0].mxu0 %v10756
    %v10758 = vpop.f32.mrb[0].mxu0
    %v10759 = vadd.f32 %v10662, %v10758
    %v10760 = vpop.f32.mrb[0].mxu0
    %10761 = vdwg.mxu0
    %10762 = vmatprep.subr.mxu0 0.0
    %v10763 = vand.u32 %v10559, 4294901760
    %v10764 = vsub.f32 %v10559, %v10763
    %10765 = vmatpush1.msra.mxu0 %v10764
    %10766 = vmatprep.subr.mxu0 0.0
    %v10767 = vand.u32 %v10560, 4294901760
    %v10768 = vsub.f32 %v10560, %v10767
    %10769 = vmatpush1.msra.mxu0 %v10768
    %10770 = vmatprep.subr.mxu0 0.0
    %v10771 = vand.u32 %v10561, 4294901760
    %v10772 = vsub.f32 %v10561, %v10771
    %10773 = vmatpush1.msra.mxu0 %v10772
    %10774 = vmatprep.subr.mxu0 0.0
    %v10775 = vand.u32 %v10562, 4294901760
    %v10776 = vsub.f32 %v10562, %v10775
    %10777 = vmatpush1.msra.mxu0 %v10776
    %10778 = vmatprep.subr.mxu0 0.0
    %10779 = vmatpush1.msra.mxu0 0.0
    %10780 = vmatprep.subr.mxu0 0.0
    %10781 = vmatpush1.msra.mxu0 0.0
    %10782 = vmatprep.subr.mxu0 0.0
    %10783 = vmatpush1.msra.mxu0 0.0
    %10784 = vmatprep.subr.mxu0 0.0
    %10785 = vmatpush1.msra.mxu0 0.0
    %10786 = vmatprep.subr.mxu0 0.0
    %10787 = vmatpush1.msra.mxu0 0.0
    %10788 = vmatprep.subr.mxu0 0.0
    %10789 = vmatpush1.msra.mxu0 0.0
    %10790 = vmatprep.subr.mxu0 0.0
    %10791 = vmatpush1.msra.mxu0 0.0
    %10792 = vmatprep.subr.mxu0 0.0
    %10793 = vmatpush1.msra.mxu0 0.0
    %10794 = vmatprep.subr.mxu0 0.0
    %10795 = vmatpush1.msra.mxu0 0.0
    %10796 = vmatprep.subr.mxu0 0.0
    %10797 = vmatpush1.msra.mxu0 0.0
    %10798 = vmatprep.subr.mxu0 0.0
    %10799 = vmatpush1.msra.mxu0 0.0
    %10800 = vmatprep.subr.mxu0 0.0
    %10801 = vmatpush1.msra.mxu0 0.0
    %10802 = vmatprep.subr.mxu0 0.0
    %10803 = vmatpush1.msra.mxu0 0.0
    %10804 = vmatprep.subr.mxu0 0.0
    %10805 = vmatpush1.msra.mxu0 0.0
    %10806 = vmatprep.subr.mxu0 0.0
    %10807 = vmatpush1.msra.mxu0 0.0
    %10808 = vmatprep.subr.mxu0 0.0
    %10809 = vmatpush1.msra.mxu0 0.0
    %10810 = vmatprep.subr.mxu0 0.0
    %10811 = vmatpush1.msra.mxu0 0.0
    %10812 = vmatprep.subr.mxu0 0.0
    %10813 = vmatpush1.msra.mxu0 0.0
    %10814 = vmatprep.subr.mxu0 0.0
    %10815 = vmatpush1.msra.mxu0 0.0
    %10816 = vmatprep.subr.mxu0 0.0
    %10817 = vmatpush1.msra.mxu0 0.0
    %10818 = vmatprep.subr.mxu0 0.0
    %10819 = vmatpush1.msra.mxu0 0.0
    %10820 = vmatprep.subr.mxu0 0.0
    %10821 = vmatpush1.msra.mxu0 0.0
    %10822 = vmatprep.subr.mxu0 0.0
    %10823 = vmatpush1.msra.mxu0 0.0
    %10824 = vmatprep.subr.mxu0 0.0
    %10825 = vmatpush1.msra.mxu0 0.0
    %10826 = vmatprep.subr.mxu0 0.0
    %10827 = vmatpush1.msra.mxu0 0.0
    %10828 = vmatprep.subr.mxu0 0.0
    %10829 = vmatpush1.msra.mxu0 0.0
    %10830 = vmatprep.subr.mxu0 0.0
    %10831 = vmatpush1.msra.mxu0 0.0
    %10832 = vmatprep.subr.mxu0 0.0
    %10833 = vmatpush1.msra.mxu0 0.0
    %10834 = vmatprep.mubr.f32.mxu0 0.0
    %v10835 = vand.u32 %v10571, 4294901760
    %v10836 = vsub.f32 %v10571, %v10835
    %10837 = vmatmul.mubr.f32.gmra.mrb[0].mxu0 %v10836
    %v10838 = vpop.f32.mrb[0].mxu0
    %v10839 = vadd.f32 %v10753, %v10838
    %v10840 = vpop.f32.mrb[0].mxu0
    %10841 = vmatprep.mubr.f32.mxu0 0.0
    %v10842 = vand.u32 %v10574, 4294901760
    %v10843 = vsub.f32 %v10574, %v10842
    %10844 = vmatmul.mubr.f32.gmra.mrb[0].mxu0 %v10843
    %v10845 = vpop.f32.mrb[0].mxu0
    %v10846 = vadd.f32 %v10759, %v10845
    %v10847 = vpop.f32.mrb[0].mxu0
    %10848 = vdwg.mxu0
    %10849 = vmatprep.subr.mxu0 0.0
    %v10850 = vand.u32 %v10559, 4294901760
    %10851 = vmatpush1.msra.mxu0 %v10850
    %10852 = vmatprep.subr.mxu0 0.0
    %v10853 = vand.u32 %v10560, 4294901760
    %10854 = vmatpush1.msra.mxu0 %v10853
    %10855 = vmatprep.subr.mxu0 0.0
    %v10856 = vand.u32 %v10561, 4294901760
    %10857 = vmatpush1.msra.mxu0 %v10856
    %10858 = vmatprep.subr.mxu0 0.0
    %v10859 = vand.u32 %v10562, 4294901760
    %10860 = vmatpush1.msra.mxu0 %v10859
    %10861 = vmatprep.subr.mxu0 0.0
    %10862 = vmatpush1.msra.mxu0 0.0
    %10863 = vmatprep.subr.mxu0 0.0
    %10864 = vmatpush1.msra.mxu0 0.0
    %10865 = vmatprep.subr.mxu0 0.0
    %10866 = vmatpush1.msra.mxu0 0.0
    %10867 = vmatprep.subr.mxu0 0.0
    %10868 = vmatpush1.msra.mxu0 0.0
    %10869 = vmatprep.subr.mxu0 0.0
    %10870 = vmatpush1.msra.mxu0 0.0
    %10871 = vmatprep.subr.mxu0 0.0
    %10872 = vmatpush1.msra.mxu0 0.0
    %10873 = vmatprep.subr.mxu0 0.0
    %10874 = vmatpush1.msra.mxu0 0.0
    %10875 = vmatprep.subr.mxu0 0.0
    %10876 = vmatpush1.msra.mxu0 0.0
    %10877 = vmatprep.subr.mxu0 0.0
    %10878 = vmatpush1.msra.mxu0 0.0
    %10879 = vmatprep.subr.mxu0 0.0
    %10880 = vmatpush1.msra.mxu0 0.0
    %10881 = vmatprep.subr.mxu0 0.0
    %10882 = vmatpush1.msra.mxu0 0.0
    %10883 = vmatprep.subr.mxu0 0.0
    %10884 = vmatpush1.msra.mxu0 0.0
    %10885 = vmatprep.subr.mxu0 0.0
    %10886 = vmatpush1.msra.mxu0 0.0
    %10887 = vmatprep.subr.mxu0 0.0
    %10888 = vmatpush1.msra.mxu0 0.0
    %10889 = vmatprep.subr.mxu0 0.0
    %10890 = vmatpush1.msra.mxu0 0.0
    %10891 = vmatprep.subr.mxu0 0.0
    %10892 = vmatpush1.msra.mxu0 0.0
    %10893 = vmatprep.subr.mxu0 0.0
    %10894 = vmatpush1.msra.mxu0 0.0
    %10895 = vmatprep.subr.mxu0 0.0
    %10896 = vmatpush1.msra.mxu0 0.0
    %10897 = vmatprep.subr.mxu0 0.0
    %10898 = vmatpush1.msra.mxu0 0.0
    %10899 = vmatprep.subr.mxu0 0.0
    %10900 = vmatpush1.msra.mxu0 0.0
    %10901 = vmatprep.subr.mxu0 0.0
    %10902 = vmatpush1.msra.mxu0 0.0
    %10903 = vmatprep.subr.mxu0 0.0
    %10904 = vmatpush1.msra.mxu0 0.0
    %10905 = vmatprep.subr.mxu0 0.0
    %10906 = vmatpush1.msra.mxu0 0.0
    %10907 = vmatprep.subr.mxu0 0.0
    %10908 = vmatpush1.msra.mxu0 0.0
    %10909 = vmatprep.subr.mxu0 0.0
    %10910 = vmatpush1.msra.mxu0 0.0
    %10911 = vmatprep.subr.mxu0 0.0
    %10912 = vmatpush1.msra.mxu0 0.0
    %10913 = vmatprep.subr.mxu0 0.0
    %10914 = vmatpush1.msra.mxu0 0.0
    %10915 = vmatprep.subr.mxu0 0.0
    %10916 = vmatpush1.msra.mxu0 0.0
    %10917 = vmatprep.mubr.f32.mxu0 0.0
    %v10918 = vand.u32 %v10571, 4294901760
    %v10919 = vsub.f32 %v10571, %v10918
    %v10920 = vand.u32 %v10919, 4294901760
    %10921 = vmatmul.mubr.f32.gmra.mrb[0].mxu0 %v10920
    %v10922 = vpop.f32.mrb[0].mxu0
    %v10923 = vadd.f32 %v10839, %v10922
    %v10924 = vpop.f32.mrb[0].mxu0
    %10925 = vmatprep.mubr.f32.mxu0 0.0
    %v10926 = vand.u32 %v10574, 4294901760
    %v10927 = vsub.f32 %v10574, %v10926
    %v10928 = vand.u32 %v10927, 4294901760
    %10929 = vmatmul.mubr.f32.gmra.mrb[0].mxu0 %v10928
    %v10930 = vpop.f32.mrb[0].mxu0
    %v10931 = vadd.f32 %v10846, %v10930
    %v10932 = vpop.f32.mrb[0].mxu0
    %10933 = vdwg.mxu0
    %10934 = vmatprep.subr.mxu0 0.0
    %v10935 = vand.u32 %v10559, 4294901760
    %v10936 = vsub.f32 %v10559, %v10935
    %v10937 = vand.u32 %v10936, 4294901760
    %10938 = vmatpush1.msra.mxu0 %v10937
    %10939 = vmatprep.subr.mxu0 0.0
    %v10940 = vand.u32 %v10560, 4294901760
    %v10941 = vsub.f32 %v10560, %v10940
    %v10942 = vand.u32 %v10941, 4294901760
    %10943 = vmatpush1.msra.mxu0 %v10942
    %10944 = vmatprep.subr.mxu0 0.0
    %v10945 = vand.u32 %v10561, 4294901760
    %v10946 = vsub.f32 %v10561, %v10945
    %v10947 = vand.u32 %v10946, 4294901760
    %10948 = vmatpush1.msra.mxu0 %v10947
    %10949 = vmatprep.subr.mxu0 0.0
    %v10950 = vand.u32 %v10562, 4294901760
    %v10951 = vsub.f32 %v10562, %v10950
    %v10952 = vand.u32 %v10951, 4294901760
    %10953 = vmatpush1.msra.mxu0 %v10952
    %10954 = vmatprep.subr.mxu0 0.0
    %10955 = vmatpush1.msra.mxu0 0.0
    %10956 = vmatprep.subr.mxu0 0.0
    %10957 = vmatpush1.msra.mxu0 0.0
    %10958 = vmatprep.subr.mxu0 0.0
    %10959 = vmatpush1.msra.mxu0 0.0
    %10960 = vmatprep.subr.mxu0 0.0
    %10961 = vmatpush1.msra.mxu0 0.0
    %10962 = vmatprep.subr.mxu0 0.0
    %10963 = vmatpush1.msra.mxu0 0.0
    %10964 = vmatprep.subr.mxu0 0.0
    %10965 = vmatpush1.msra.mxu0 0.0
    %10966 = vmatprep.subr.mxu0 0.0
    %10967 = vmatpush1.msra.mxu0 0.0
    %10968 = vmatprep.subr.mxu0 0.0
    %10969 = vmatpush1.msra.mxu0 0.0
    %10970 = vmatprep.subr.mxu0 0.0
    %10971 = vmatpush1.msra.mxu0 0.0
    %10972 = vmatprep.subr.mxu0 0.0
    %10973 = vmatpush1.msra.mxu0 0.0
    %10974 = vmatprep.subr.mxu0 0.0
    %10975 = vmatpush1.msra.mxu0 0.0
    %10976 = vmatprep.subr.mxu0 0.0
    %10977 = vmatpush1.msra.mxu0 0.0
    %10978 = vmatprep.subr.mxu0 0.0
    %10979 = vmatpush1.msra.mxu0 0.0
    %10980 = vmatprep.subr.mxu0 0.0
    %10981 = vmatpush1.msra.mxu0 0.0
    %10982 = vmatprep.subr.mxu0 0.0
    %10983 = vmatpush1.msra.mxu0 0.0
    %10984 = vmatprep.subr.mxu0 0.0
    %10985 = vmatpush1.msra.mxu0 0.0
    %10986 = vmatprep.subr.mxu0 0.0
    %10987 = vmatpush1.msra.mxu0 0.0
    %10988 = vmatprep.subr.mxu0 0.0
    %10989 = vmatpush1.msra.mxu0 0.0
    %10990 = vmatprep.subr.mxu0 0.0
    %10991 = vmatpush1.msra.mxu0 0.0
    %10992 = vmatprep.subr.mxu0 0.0
    %10993 = vmatpush1.msra.mxu0 0.0
    %10994 = vmatprep.subr.mxu0 0.0
    %10995 = vmatpush1.msra.mxu0 0.0
    %10996 = vmatprep.subr.mxu0 0.0
    %10997 = vmatpush1.msra.mxu0 0.0
    %10998 = vmatprep.subr.mxu0 0.0
    %10999 = vmatpush1.msra.mxu0 0.0
    %11000 = vmatprep.subr.mxu0 0.0
    %11001 = vmatpush1.msra.mxu0 0.0
    %11002 = vmatprep.subr.mxu0 0.0
    %11003 = vmatpush1.msra.mxu0 0.0
    %11004 = vmatprep.subr.mxu0 0.0
    %11005 = vmatpush1.msra.mxu0 0.0
    %11006 = vmatprep.subr.mxu0 0.0
    %11007 = vmatpush1.msra.mxu0 0.0
    %11008 = vmatprep.subr.mxu0 0.0
    %11009 = vmatpush1.msra.mxu0 0.0
    %11010 = vmatprep.mubr.f32.mxu0 0.0
    %v11011 = vand.u32 %v10571, 4294901760
    %11012 = vmatmul.mubr.f32.gmra.mrb[0].mxu0 %v11011
    %v11013 = vpop.f32.mrb[0].mxu0
    %v11014 = vadd.f32 %v10923, %v11013
    %v11015 = vpop.f32.mrb[0].mxu0
    %11016 = vmatprep.mubr.f32.mxu0 0.0
    %v11017 = vand.u32 %v10574, 4294901760
    %11018 = vmatmul.mubr.f32.gmra.mrb[0].mxu0 %v11017
    %v11019 = vpop.f32.mrb[0].mxu0
    %v11020 = vadd.f32 %v10931, %v11019
    %v11021 = vpop.f32.mrb[0].mxu0
    %11022 = vdwg.mxu0
    %11023 = vmatprep.subr.mxu0 0.0
    %v11024 = vand.u32 %v10559, 4294901760
    %11025 = vmatpush1.msra.mxu0 %v11024
    %11026 = vmatprep.subr.mxu0 0.0
    %v11027 = vand.u32 %v10560, 4294901760
    %11028 = vmatpush1.msra.mxu0 %v11027
    %11029 = vmatprep.subr.mxu0 0.0
    %v11030 = vand.u32 %v10561, 4294901760
    %11031 = vmatpush1.msra.mxu0 %v11030
    %11032 = vmatprep.subr.mxu0 0.0
    %v11033 = vand.u32 %v10562, 4294901760
    %11034 = vmatpush1.msra.mxu0 %v11033
    %11035 = vmatprep.subr.mxu0 0.0
    %11036 = vmatpush1.msra.mxu0 0.0
    %11037 = vmatprep.subr.mxu0 0.0
    %11038 = vmatpush1.msra.mxu0 0.0
    %11039 = vmatprep.subr.mxu0 0.0
    %11040 = vmatpush1.msra.mxu0 0.0
    %11041 = vmatprep.subr.mxu0 0.0
    %11042 = vmatpush1.msra.mxu0 0.0
    %11043 = vmatprep.subr.mxu0 0.0
    %11044 = vmatpush1.msra.mxu0 0.0
    %11045 = vmatprep.subr.mxu0 0.0
    %11046 = vmatpush1.msra.mxu0 0.0
    %11047 = vmatprep.subr.mxu0 0.0
    %11048 = vmatpush1.msra.mxu0 0.0
    %11049 = vmatprep.subr.mxu0 0.0
    %11050 = vmatpush1.msra.mxu0 0.0
    %11051 = vmatprep.subr.mxu0 0.0
    %11052 = vmatpush1.msra.mxu0 0.0
    %11053 = vmatprep.subr.mxu0 0.0
    %11054 = vmatpush1.msra.mxu0 0.0
    %11055 = vmatprep.subr.mxu0 0.0
    %11056 = vmatpush1.msra.mxu0 0.0
    %11057 = vmatprep.subr.mxu0 0.0
    %11058 = vmatpush1.msra.mxu0 0.0
    %11059 = vmatprep.subr.mxu0 0.0
    %11060 = vmatpush1.msra.mxu0 0.0
    %11061 = vmatprep.subr.mxu0 0.0
    %11062 = vmatpush1.msra.mxu0 0.0
    %11063 = vmatprep.subr.mxu0 0.0
    %11064 = vmatpush1.msra.mxu0 0.0
    %11065 = vmatprep.subr.mxu0 0.0
    %11066 = vmatpush1.msra.mxu0 0.0
    %11067 = vmatprep.subr.mxu0 0.0
    %11068 = vmatpush1.msra.mxu0 0.0
    %11069 = vmatprep.subr.mxu0 0.0
    %11070 = vmatpush1.msra.mxu0 0.0
    %11071 = vmatprep.subr.mxu0 0.0
    %11072 = vmatpush1.msra.mxu0 0.0
    %11073 = vmatprep.subr.mxu0 0.0
    %11074 = vmatpush1.msra.mxu0 0.0
    %11075 = vmatprep.subr.mxu0 0.0
    %11076 = vmatpush1.msra.mxu0 0.0
    %11077 = vmatprep.subr.mxu0 0.0
    %11078 = vmatpush1.msra.mxu0 0.0
    %11079 = vmatprep.subr.mxu0 0.0
    %11080 = vmatpush1.msra.mxu0 0.0
    %11081 = vmatprep.subr.mxu0 0.0
    %11082 = vmatpush1.msra.mxu0 0.0
    %11083 = vmatprep.subr.mxu0 0.0
    %11084 = vmatpush1.msra.mxu0 0.0
    %11085 = vmatprep.subr.mxu0 0.0
    %11086 = vmatpush1.msra.mxu0 0.0
    %11087 = vmatprep.subr.mxu0 0.0
    %11088 = vmatpush1.msra.mxu0 0.0
    %11089 = vmatprep.subr.mxu0 0.0
    %11090 = vmatpush1.msra.mxu0 0.0
    %11091 = vmatprep.mubr.f32.mxu0 0.0
    %v11092 = vand.u32 %v10571, 4294901760
    %11093 = vmatmul.mubr.f32.gmra.mrb[0].mxu0 %v11092
    %v11094 = vpop.f32.mrb[0].mxu0
    %v11095 = vadd.f32 %v11014, %v11094
    %v11096 = vpop.f32.mrb[0].mxu0
    %11097 = vmatprep.mubr.f32.mxu0 0.0
    %v11098 = vand.u32 %v10574, 4294901760
    %11099 = vmatmul.mubr.f32.gmra.mrb[0].mxu0 %v11098
    %v11100 = vpop.f32.mrb[0].mxu0
    %v11101 = vadd.f32 %v11020, %v11100
    %v11102 = vpop.f32.mrb[0].mxu0
    %11103 = vdwg.mxu0
    %11104 = vst [vmem:[#allocation8] sm:$0xff] %v11095
    %11105 = vst [vmem:[#allocation8 + $0x8] sm:$0xff] %v11101
    %11106 = vrot.lane.b32.xlu0 %v10026, 32
    %v11107 = vpop.permute.xlu0 %11106
    %vm11109 = vcmask 261126
    %11110 = vst.msk [vmem:[#allocation9 - $0x6] sm:$0xc0] %vm11109, %v11107
    %11112 = vrot.lane.b32.xlu0 %v10020, 96
    %v11113 = vpop.permute.xlu0 %11112
    %s11115 = scalar_lea.vmem [#allocation9], 4
    %11116 = vst.msk [vmem:[%s11115 - $0x6] sm:$0xc0] %vm11109, %v11113
    %s11117 = scalar_lea.vmem [#allocation9], 2
    %vm11118 = vcmask 254976
    %11119 = vst.msk [vmem:[%s11117] sm:$0x3] %vm11118, %v10555
    %11121 = vrot.lane.b32.xlu0 %v10546, 96
    %v11122 = vpop.permute.xlu0 %11121
    %s11124 = scalar_lea.vmem [#allocation9], 6
    %11125 = vst.msk [vmem:[%s11124] sm:$0x3] %vm11118, %v11122
    // Predicated region
    $region26: #{tpu_custom_call.1} parent=1 // pred_check
      _
    $region27: #{tpu_custom_call.1} parent=1 // pred_check_branch
      %11127 = sbr.rel (0) target = $region29
    $region28: #{tpu_custom_call.1} parent=1 // pred_region
      %s11129 = ssub.s32 256, 256
      %11130 = vsyncadd [#allocation5], %s11129
      %s11131 = sshll.u32 [#allocation8], 4
      %s11132 = int_to_ptr.vmem [resolvable:$true] %s11131
      %11137 = dma.vmem_to_hbm [thread:$0]  %s11132, 256, %s4, [#allocation5], 128, 128, 8
    $region29: #{tpu_custom_call.1} parent=1 // pred_fallthru
      _
    // Predicated region
    $region30: #{tpu_custom_call.1} parent=1 // pred_check
      _
    $region31: #{tpu_custom_call.1} parent=1 // pred_check_branch
      %11139 = sbr.rel (0) target = $region33
    $region32: #{tpu_custom_call.1} parent=1 // pred_region
      %s11141 = ssub.s32 128, 128
      %11142 = vsyncadd [#allocation10], %s11141
      %s11143 = sshll.u32 [#allocation9], 4
      %s11144 = int_to_ptr.vmem [resolvable:$true] %s11143
      %11149 = dma.vmem_to_hbm [thread:$0]  %s11144, 128, %s5, [#allocation10], 32, 32, 2
    $region33: #{tpu_custom_call.1} parent=1 // pred_fallthru
      _
    // Predicated region
    $region34: #{tpu_custom_call.1} parent=1 // pred_check
      _
    $region35: #{tpu_custom_call.1} parent=1 // pred_check_branch
      %11151 = sbr.rel (0) target = $region37
    $region36: #{tpu_custom_call.1} parent=1 // pred_region
      %11152 = dma.done [#allocation5], 256
    $region37: #{tpu_custom_call.1} parent=1 // pred_fallthru
      _
    // Predicated region
    $region38: #{tpu_custom_call.1} parent=1 // pred_check
      _
    $region39: #{tpu_custom_call.1} parent=1 // pred_check_branch
      %11154 = sbr.rel (0) target = $region41
    $region40: #{tpu_custom_call.1} parent=1 // pred_region
      %11155 = dma.done [#allocation10], 128
    $region41: #{tpu_custom_call.1} parent=1 // pred_fallthru
      _
    %11156 = vsyncpa [#allocation4], 1
    %11157 = vsyncpa [#allocation7], 1
    %11158 = vsyncpa [#allocation5], 1
    %11159 = vsyncpa [#allocation10], 1

</llo_original>
